<compile_context>
chip_gen: v7x
topology: tpu7x:2x2x1
jax: 0.10.0
libtpu: 0.0.40
codegen_flags: <defaults>
</compile_context>

<pallas_src>
import functools

import jax
import jax.numpy as jnp
from jax import lax
from jax.experimental import pallas as pl
from jax.experimental.pallas import tpu as pltpu

# -------------------- config (small synthetic shapes) --------------------
B = 2            # batch
C = 8            # channels
H = W = 16       # input_size (spatial)
HEADS = 2
D = 8            # d_h = d_v = d_w
HD = HEADS * D
STAGE = 0
# Exact divide instead of the EUP approximate reciprocal in softmax if False.
APPROX_SOFTMAX_RECIP = True
# TODO(synk): stage=1 branch of Dual_axis is not implemented (module used with stage=0).


# ============================ fused kernel ============================
def dual_axis_kernel(q_ref, k_ref, v_ref, cwp_ref, cwv_ref, cb_ref,
                     fw_ref, fb_ref, ow_ref, ob_ref, o_ref, vpad_ref, *,
                     nb, c, h, w, heads, d, approx_recip):
    """Full Dual_axis forward (stage=0, eval) for `nb` batches per grid step."""
    f32 = jnp.float32
    hw = h * w

    # ---------- hoisted constants (shared by all nb batches of this step) ----------
    lane_ix = lax.broadcasted_iota(jnp.int32, (c, h, w), 2)   # index along W
    sub_ix = lax.broadcasted_iota(jnp.int32, (c, h, w), 1)    # index along H

    def shift_mats(n):
        # prev(X) = X @ sp  (X[:, i-1], zero at i=0);  next(X) = X @ sn  (X[:, i+1]).
        ii = lax.broadcasted_iota(jnp.int32, (n, n), 0)
        jj = lax.broadcasted_iota(jnp.int32, (n, n), 1)
        return (jj == ii + 1).astype(f32), (jj == ii - 1).astype(f32)

    sp_h, sn_h = shift_mats(h)
    sp_w, sn_w = (sp_h, sn_h) if w == h else shift_mats(w)

    # Zero the padded-v scratch once per grid step: the border stays zero, the
    # interior is overwritten for every batch below.
    vpad_ref[...] = jnp.zeros_like(vpad_ref)

    ow = ow_ref[...]                          # (C, HD)  fc_o weight (torch layout)
    ob = ob_ref[...]                          # (C, 1)
    wv = cwv_ref[...]                         # (C, 1, 9) dwconv_v taps, t = di*3+dj

    # ---------- helpers ----------
    def pooled_dwconv(terms, bidx, transpose_taps, scale, sprev, snext):
        """avg-pool(one axis)( depthwise 3x3 conv(x) ), computed pool-first.

        `terms` are the three per-position sums over the pooled axis (full sum,
        minus-last, minus-first) that the three tap columns/rows see; the 3x3
        conv then collapses to a 9-tap 1-D conv along the remaining axis."""
        wb = cwp_ref[bidx]                    # (C, 9), taps t = di*3+dj
        A = []
        for s in range(3):                    # s = shift (-1, 0, +1) along kept axis
            acc = None
            for m in range(3):                # m = which modified pooled sum
                t = (m * 3 + s) if transpose_taps else (s * 3 + m)
                term = terms[m] * wb[:, t:t + 1]          # (C, L) * (C, 1)
                acc = term if acc is None else acc + term
            A.append(acc)
        res = (A[1]
               + jnp.dot(A[0], sprev, preferred_element_type=f32)
               + jnp.dot(A[2], snext, preferred_element_type=f32))
        return res * scale + cb_ref[bidx]     # (C, L)

    def pool_over_w(x):   # for qh/kh: per-row sums seen by tap columns dj=0,1,2
        t1 = jnp.sum(x, axis=2)                                          # full
        t0 = jnp.sum(jnp.where(lane_ix < w - 1, x, 0.0), axis=2)         # - last col
        t2 = jnp.sum(jnp.where(lane_ix > 0, x, 0.0), axis=2)             # - first col
        return (t0, t1, t2)                   # each (C, H)

    def pool_over_h(x):   # for qw/kw: per-column sums seen by tap rows di=0,1,2
        s1 = jnp.sum(x, axis=1)
        s0 = jnp.sum(jnp.where(sub_ix < h - 1, x, 0.0), axis=1)          # - last row
        s2 = jnp.sum(jnp.where(sub_ix > 0, x, 0.0), axis=1)              # - first row
        return (s0, s1, s2)                   # each (C, W)

    def proj(idx, pooled):                    # torch Linear, transposed orientation
        return (jnp.dot(fw_ref[idx], pooled, preferred_element_type=f32)
                + fb_ref[idx])                # (HD, L)

    def l2norm_rows(x):                       # F.normalize(dim=-1), eps=1e-12
        n2 = jnp.sum(x * x, axis=-1, keepdims=True)
        return x * lax.rsqrt(jnp.maximum(n2, 1e-24))

    def softmax_rows(x):
        mx = jnp.max(x, axis=-1, keepdims=True)
        e = jnp.exp(x - mx)
        ssum = jnp.sum(e, axis=-1, keepdims=True)
        if approx_recip:
            return e * pl.reciprocal(ssum, approx=True)
        return e / ssum

    dn_nt = (((1,), (1,)), ((), ()))          # (m,k)x(n,k) -> (m,n)   == a @ b.T
    dn_tn = (((0,), (0,)), ((), ()))          # (k,m)x(k,n) -> (m,n)   == a.T @ b

    # ---------- per-batch work ----------
    for bi in range(nb):
        xq = q_ref[bi]                        # (C, H, W)
        xk = k_ref[bi]
        xv = v_ref[bi]

        # pooled conv branches (0=qh, 1=kh, 2=qw, 3=kw)
        qh_pool = pooled_dwconv(pool_over_w(xq), 0, False, 1.0 / w, sp_h, sn_h)
        kh_pool = pooled_dwconv(pool_over_w(xk), 1, False, 1.0 / w, sp_h, sn_h)
        qw_pool = pooled_dwconv(pool_over_h(xq), 2, True, 1.0 / h, sp_w, sn_w)
        kw_pool = pooled_dwconv(pool_over_h(xk), 3, True, 1.0 / h, sp_w, sn_w)

        # v branch: full depthwise 3x3 conv, padding done in-kernel, output
        # emitted lane-dense as (C, H*W).
        vpad_ref[:, 1:h + 1, 1:w + 1] = xv
        xp = vpad_ref[...]                    # (C, H+2, W+2) with zero border
        accv = None
        for t in range(9):
            di, dj = divmod(t, 3)
            term = xp[:, di:di + h, dj:dj + w] * wv[:, :, t:t + 1]   # (C,H,W)*(C,1,1)
            accv = term if accv is None else accv + term
        v_flat = accv.reshape(c, hw) + cb_ref[4]                     # (C, 256)

        # fc projections (branch order 0=fc_qh,1=fc_kh,2=fc_qw,3=fc_kw,4=fc_v);
        # F.normalize hoisted out of the head loop (row-wise, identical result).
        qh = l2norm_rows(proj(0, qh_pool))    # (HD, H)
        kh = l2norm_rows(proj(1, kh_pool))
        qw = l2norm_rows(proj(2, qw_pool))    # (HD, W)
        kw = l2norm_rows(proj(3, kw_pool))
        vT = proj(4, v_flat)                  # (HD, H*W)

        # stage-0 dual-axis attention, heads unrolled.
        # TODO(synk): attn_drop = nn.Dropout(0.1) is identity in eval mode; omitted.
        r_heads = []
        for hi in range(heads):
            s = hi * d
            attn_h = softmax_rows(lax.dot_general(
                qh[s:s + d], kh[s:s + d], dn_nt, preferred_element_type=f32))  # (d,d)
            attn_w = softmax_rows(lax.dot_general(
                qw[s:s + d], kw[s:s + d], dn_nt, preferred_element_type=f32))  # (d,d)
            r = jnp.dot(attn_h, vT[s:s + d], preferred_element_type=f32)       # (d,HW)
            r = lax.dot_general(attn_w, r, dn_tn, preferred_element_type=f32)  # attn_w^T @ r
            r_heads.append(r)
        r_all = jnp.concatenate(r_heads, axis=0)                               # (HD, HW)

        # fc_o, single matmul, lane-dense (C, 256) store.
        o_ref[bi] = jnp.dot(ow, r_all, preferred_element_type=f32) + ob


# ============================ wrapper ============================
def _batches_per_grid_step(batch):
    """v5e/v6e have one TensorCore -> fold the batch into one grid step (a grid
    of B there is just a serial loop with per-step overhead).  v7x (2 TCs) and
    anything unrecognized keep grid=(B,) 'parallel' so both cores stay busy."""
    try:
        kind = jax.devices()[0].device_kind.lower()
    except Exception:
        return 1
    if any(s in kind for s in ("v5e", "v5 lite", "v5lite", "v6e", "v6 lite", "v6lite")):
        return batch
    return 1


def dual_axis_forward(q, k, v, p):
    b, c, h, w = q.shape
    hw = h * w
    nb = _batches_per_grid_step(b)
    if b % nb:
        nb = 1

    kern = functools.partial(dual_axis_kernel, nb=nb, c=c, h=h, w=w,
                             heads=HEADS, d=D, approx_recip=APPROX_SOFTMAX_RECIP)
    img_spec = pl.BlockSpec((nb, c, h, w), lambda i: (i, 0, 0, 0))
    const3 = lambda i: (0, 0, 0)
    const2 = lambda i: (0, 0)

    outT = pl.pallas_call(
        kern,
        out_shape=jax.ShapeDtypeStruct((b, c, hw), jnp.float32),
        grid=(b // nb,),
        in_specs=[
            img_spec, img_spec, img_spec,
            pl.BlockSpec(p["conv_w_pool"].shape, const3),
            pl.BlockSpec(p["conv_w_v"].shape, const3),
            pl.BlockSpec(p["conv_b"].shape, const3),
            pl.BlockSpec(p["fc_w"].shape, const3),
            pl.BlockSpec(p["fc_b"].shape, const3),
            pl.BlockSpec(p["fc_o_w"].shape, const2),
            pl.BlockSpec(p["fc_o_b"].shape, const2),
        ],
        out_specs=pl.BlockSpec((nb, c, hw), lambda i: (i, 0, 0)),
        scratch_shapes=[pltpu.VMEM((c, h + 2, w + 2), jnp.float32)],
        compiler_params=pltpu.CompilerParams(dimension_semantics=("parallel",)),
    )(q, k, v, p["conv_w_pool"], p["conv_w_v"], p["conv_b"],
      p["fc_w"], p["fc_b"], p["fc_o_w"], p["fc_o_b"])

    # fc_o output comes back transposed as (B, C, H*W).  PyTorch then does
    # `.view(b, channels, h, w)` on the contiguous (b, h*w, c) tensor (a raw
    # reinterpretation); reproduce that exactly.
    return jnp.transpose(outT, (0, 2, 1)).reshape(b, c, h, w)


# -------------------- deterministic parameter init --------------------
def init_params(key):
    ks = jax.random.split(key, 6)
    # Depthwise 3x3 weights, torch layout (C,1,3,3) per branch, squeezed.
    # Branch order: 0=qh, 1=kh, 2=qw, 3=kw, 4=v.  Tap order t = di*3 + dj.
    cw_full = jax.random.normal(ks[0], (5, C, 3, 3), jnp.float32) * 0.1
    conv_b = jax.random.normal(ks[1], (5, C, 1), jnp.float32) * 0.01
    # nn.Linear weights in torch (out_features, in_features) orientation.
    # Branch order: 0=fc_qh, 1=fc_kh, 2=fc_qw, 3=fc_kw, 4=fc_v.
    fc_w = jax.random.normal(ks[2], (5, HD, C), jnp.float32) * (C ** -0.5)
    fc_b = jax.random.normal(ks[3], (5, HD, 1), jnp.float32) * 0.01
    fc_o_w = jax.random.normal(ks[4], (C, HD), jnp.float32) * (HD ** -0.5)
    fc_o_b = jax.random.normal(ks[5], (C, 1), jnp.float32) * 0.01
    # Note: the module's Bh / Bw parameters are declared but never used in forward().
    return dict(
        conv_w_pool=cw_full[:4].reshape(4, C, 9),   # compact, no (1,1) tile padding
        conv_w_v=cw_full[4].reshape(C, 1, 9),       # per-tap (C,1,1) slices in-kernel
        conv_b=conv_b,
        fc_w=fc_w, fc_b=fc_b, fc_o_w=fc_o_w, fc_o_b=fc_o_b,
        _cw_full=cw_full,                           # reference check only
    )


# -------------------- pure-JAX reference (mirrors the PyTorch module) --------------------
def _reference_forward(q, k, v, p):
    b, c, h, w = q.shape
    hp = lax.Precision.HIGHEST
    cw = p["_cw_full"]                       # (5, C, 3, 3)
    cb = p["conv_b"][..., 0]                 # (5, C)
    fcw, fcb = p["fc_w"], p["fc_b"][..., 0]  # (5, HD, C), (5, HD)

    def dwconv(x, idx):
        xp = jnp.pad(x, ((0, 0), (0, 0), (1, 1), (1, 1)))
        out = jnp.zeros_like(x)
        for di in range(3):
            for dj in range(3):
                out = out + xp[:, :, di:di + h, dj:dj + w] * cw[idx, :, di, dj][None, :, None, None]
        return out + cb[idx][None, :, None, None]

    def lin(idx, x):
        return jnp.einsum('...c,fc->...f', x, fcw[idx], precision=hp) + fcb[idx]

    def norm(x):
        return x / jnp.maximum(jnp.sqrt(jnp.sum(x * x, axis=3, keepdims=True)), 1e-12)

    qh = lin(0, dwconv(q, 0).mean(axis=3).transpose(0, 2, 1)).reshape(b, h, HEADS, D).transpose(0, 2, 1, 3)
    kh = lin(1, dwconv(k, 1).mean(axis=3).transpose(0, 2, 1)).reshape(b, h, HEADS, D).transpose(0, 2, 1, 3)
    qw = lin(2, dwconv(q, 2).mean(axis=2).transpose(0, 2, 1)).reshape(b, w, HEADS, D).transpose(0, 2, 1, 3)
    kw = lin(3, dwconv(k, 3).mean(axis=2).transpose(0, 2, 1)).reshape(b, w, HEADS, D).transpose(0, 2, 1, 3)
    vv = lin(4, dwconv(v, 4).reshape(b, c, h * w).transpose(0, 2, 1)).reshape(b, h * w, HEADS, D).transpose(0, 2, 1, 3)

    qh, kh = norm(qh.transpose(0, 1, 3, 2)), norm(kh.transpose(0, 1, 3, 2))
    qw, kw = norm(qw.transpose(0, 1, 3, 2)), norm(kw.transpose(0, 1, 3, 2))
    attn_h = jax.nn.softmax(jnp.einsum('bndx,bnex->bnde', qh, kh, precision=hp), axis=-1)
    attn_w = jax.nn.softmax(jnp.einsum('bndx,bnex->bnde', qw, kw, precision=hp), axis=-1)
    vv = vv.transpose(0, 1, 3, 2)                                              # (b, heads, d, hw)
    res = jnp.einsum('bnde,bnep->bndp', attn_h, vv, precision=hp).transpose(0, 1, 3, 2)
    res = jnp.einsum('bnpd,bnde->bnpe', res, attn_w, precision=hp).transpose(0, 2, 1, 3)
    res = res.reshape(b, h * w, HEADS * D)
    out = jnp.einsum('bpf,cf->bpc', res, p["fc_o_w"], precision=hp) + p["fc_o_b"][:, 0][None, None, :]
    return out.reshape(b, c, h, w)           # same raw .view() as the module


if __name__ == "__main__":
    key = jax.random.PRNGKey(0)
    kq, kk, kv, kp = jax.random.split(key, 4)
    q = jax.random.normal(kq, (B, C, H, W), jnp.float32)
    k = jax.random.normal(kk, (B, C, H, W), jnp.float32)
    v = jax.random.normal(kv, (B, C, H, W), jnp.float32)
    params = init_params(kp)

    out = jax.jit(dual_axis_forward)(q, k, v, params)
    jax.block_until_ready(out)
    assert out.shape == (B, C, H, W)
    assert bool(jnp.all(jnp.isfinite(out)))

    ref = _reference_forward(q, k, v, params)
    max_err = float(jnp.max(jnp.abs(out - ref)))
    assert max_err < 5e-2, f"kernel deviates from reference: max_err={max_err}"
    print("KERNEL_OK")
</pallas_src>

<mosaic_0001>
module attributes {stable_mosaic.version = 11 : i64} {
  func.func @dual_axis_kernel(%arg0: i32, %arg1: memref<1x8x16x16xf32, #tpu.memory_space<vmem>>, %arg2: memref<1x8x16x16xf32, #tpu.memory_space<vmem>>, %arg3: memref<1x8x16x16xf32, #tpu.memory_space<vmem>>, %arg4: memref<4x8x9xf32, #tpu.memory_space<vmem>>, %arg5: memref<8x1x9xf32, #tpu.memory_space<vmem>>, %arg6: memref<5x8x1xf32, #tpu.memory_space<vmem>>, %arg7: memref<5x16x8xf32, #tpu.memory_space<vmem>>, %arg8: memref<5x16x1xf32, #tpu.memory_space<vmem>>, %arg9: memref<8x16xf32, #tpu.memory_space<vmem>>, %arg10: memref<8x1xf32, #tpu.memory_space<vmem>>, %arg11: memref<1x8x256xf32, #tpu.memory_space<vmem>>, %arg12: memref<8x18x18xf32, #tpu.memory_space<vmem>>) attributes {dimension_semantics = [#tpu.dimension_semantics<parallel>], iteration_bounds = array<i64: 2>, scalar_prefetch = 0 : i64, scratch_operands = 1 : i64, tpu.core_type = #tpu.core_type<tc>, window_params = [{transform_indices = @transform_0, window_bounds = array<i64: 1, 8, 16, 16>}, {transform_indices = @transform_1, window_bounds = array<i64: 1, 8, 16, 16>}, {transform_indices = @transform_2, window_bounds = array<i64: 1, 8, 16, 16>}, {pipeline_mode = #tpu.pipeline_mode<synchronous>, transform_indices = @transform_3, window_bounds = array<i64: 4, 8, 9>}, {pipeline_mode = #tpu.pipeline_mode<synchronous>, transform_indices = @transform_4, window_bounds = array<i64: 8, 1, 9>}, {pipeline_mode = #tpu.pipeline_mode<synchronous>, transform_indices = @transform_5, window_bounds = array<i64: 5, 8, 1>}, {pipeline_mode = #tpu.pipeline_mode<synchronous>, transform_indices = @transform_6, window_bounds = array<i64: 5, 16, 8>}, {pipeline_mode = #tpu.pipeline_mode<synchronous>, transform_indices = @transform_7, window_bounds = array<i64: 5, 16, 1>}, {pipeline_mode = #tpu.pipeline_mode<synchronous>, transform_indices = @transform_8, window_bounds = array<i64: 8, 16>}, {pipeline_mode = #tpu.pipeline_mode<synchronous>, transform_indices = @transform_9, window_bounds = array<i64: 8, 1>}, {transform_indices = @transform_10, window_bounds = array<i64: 1, 8, 256>}]} {
    %0 = tpu.iota {dimensions = array<i32: 2>} : vector<8x16x16xi32>
    %1 = tpu.iota {dimensions = array<i32: 1>} : vector<8x16x16xi32>
    %2 = tpu.iota {dimensions = array<i32: 0>} : vector<16x16xi32>
    %3 = tpu.iota {dimensions = array<i32: 1>} : vector<16x16xi32>
    %c1_i32 = arith.constant 1 : i32
    %4 = vector.broadcast %c1_i32 : i32 to vector<16x16xi32>
    %5 = arith.addi %2, %4 : vector<16x16xi32>
    %6 = arith.cmpi eq, %3, %5 : vector<16x16xi32>
    %7 = arith.extui %6 : vector<16x16xi1> to vector<16x16xi32>
    %8 = arith.sitofp %7 : vector<16x16xi32> to vector<16x16xf32>
    %c1_i32_0 = arith.constant 1 : i32
    %9 = vector.broadcast %c1_i32_0 : i32 to vector<16x16xi32>
    %10 = arith.subi %2, %9 : vector<16x16xi32>
    %11 = arith.cmpi eq, %3, %10 : vector<16x16xi32>
    %12 = arith.extui %11 : vector<16x16xi1> to vector<16x16xi32>
    %13 = arith.sitofp %12 : vector<16x16xi32> to vector<16x16xf32>
    %cst = arith.constant 0.000000e+00 : f32
    %14 = vector.broadcast %cst : f32 to vector<8x18x18xf32>
    %c0 = arith.constant 0 : index
    %c0_1 = arith.constant 0 : index
    %c0_2 = arith.constant 0 : index
    %15 = vector.load %arg12[%c0, %c0_1, %c0_2] : memref<8x18x18xf32, #tpu.memory_space<vmem>>, vector<8x18x18xf32>
    tpu.vector_store %arg12[%c0, %c0_1, %c0_2], %14 {strides = array<i32>} : memref<8x18x18xf32, #tpu.memory_space<vmem>>, vector<8x18x18xf32>,
    %c0_3 = arith.constant 0 : index
    %c0_4 = arith.constant 0 : index
    %16 = vector.load %arg9[%c0_3, %c0_4] : memref<8x16xf32, #tpu.memory_space<vmem>>, vector<8x16xf32>
    %c0_5 = arith.constant 0 : index
    %c0_6 = arith.constant 0 : index
    %17 = vector.load %arg10[%c0_5, %c0_6] : memref<8x1xf32, #tpu.memory_space<vmem>>, vector<8x1xf32>
    %c0_7 = arith.constant 0 : index
    %c0_8 = arith.constant 0 : index
    %c0_9 = arith.constant 0 : index
    %18 = vector.load %arg5[%c0_7, %c0_8, %c0_9] : memref<8x1x9xf32, #tpu.memory_space<vmem>>, vector<8x1x9xf32>
    %c0_10 = arith.constant 0 : index
    %c0_11 = arith.constant 0 : index
    %c0_12 = arith.constant 0 : index
    %c0_13 = arith.constant 0 : index
    %19 = vector.load %arg1[%c0_10, %c0_11, %c0_12, %c0_13] : memref<1x8x16x16xf32, #tpu.memory_space<vmem>>, vector<1x8x16x16xf32>
    %20 = vector.shape_cast %19 : vector<1x8x16x16xf32> to vector<8x16x16xf32>
    %c0_14 = arith.constant 0 : index
    %c0_15 = arith.constant 0 : index
    %c0_16 = arith.constant 0 : index
    %c0_17 = arith.constant 0 : index
    %21 = vector.load %arg2[%c0_14, %c0_15, %c0_16, %c0_17] : memref<1x8x16x16xf32, #tpu.memory_space<vmem>>, vector<1x8x16x16xf32>
    %22 = vector.shape_cast %21 : vector<1x8x16x16xf32> to vector<8x16x16xf32>
    %c0_18 = arith.constant 0 : index
    %c0_19 = arith.constant 0 : index
    %c0_20 = arith.constant 0 : index
    %c0_21 = arith.constant 0 : index
    %23 = vector.load %arg3[%c0_18, %c0_19, %c0_20, %c0_21] : memref<1x8x16x16xf32, #tpu.memory_space<vmem>>, vector<1x8x16x16xf32>
    %24 = vector.shape_cast %23 : vector<1x8x16x16xf32> to vector<8x16x16xf32>
    %cst_22 = arith.constant dense<0.000000e+00> : vector<8x16xf32>
    %25 = vector.multi_reduction <add>, %20, %cst_22 [2] : vector<8x16x16xf32> to vector<8x16xf32>
    %c15_i32 = arith.constant 15 : i32
    %26 = vector.broadcast %c15_i32 : i32 to vector<8x16x16xi32>
    %27 = arith.cmpi slt, %0, %26 : vector<8x16x16xi32>
    %cst_23 = arith.constant 0.000000e+00 : f32
    %28 = vector.broadcast %cst_23 : f32 to vector<8x16x16xf32>
    %29 = arith.select %27, %20, %28 : vector<8x16x16xi1>, vector<8x16x16xf32>
    %cst_24 = arith.constant dense<0.000000e+00> : vector<8x16xf32>
    %30 = vector.multi_reduction <add>, %29, %cst_24 [2] : vector<8x16x16xf32> to vector<8x16xf32>
    %c0_i32 = arith.constant 0 : i32
    %31 = vector.broadcast %c0_i32 : i32 to vector<8x16x16xi32>
    %32 = arith.cmpi sgt, %0, %31 : vector<8x16x16xi32>
    %cst_25 = arith.constant 0.000000e+00 : f32
    %33 = vector.broadcast %cst_25 : f32 to vector<8x16x16xf32>
    %34 = arith.select %32, %20, %33 : vector<8x16x16xi1>, vector<8x16x16xf32>
    %cst_26 = arith.constant dense<0.000000e+00> : vector<8x16xf32>
    %35 = vector.multi_reduction <add>, %34, %cst_26 [2] : vector<8x16x16xf32> to vector<8x16xf32>
    %c0_27 = arith.constant 0 : index
    %c0_28 = arith.constant 0 : index
    %c0_29 = arith.constant 0 : index
    %36 = vector.load %arg4[%c0_27, %c0_28, %c0_29] : memref<4x8x9xf32, #tpu.memory_space<vmem>>, vector<1x8x9xf32>
    %37 = vector.shape_cast %36 : vector<1x8x9xf32> to vector<8x9xf32>
    %38 = vector.extract_strided_slice %37 {offsets = [0, 0], sizes = [8, 1], strides = [1, 1]} : vector<8x9xf32> to vector<8x1xf32>
    %39 = vector.broadcast %38 : vector<8x1xf32> to vector<8x16xf32>
    %40 = arith.mulf %30, %39 : vector<8x16xf32>
    %41 = vector.extract_strided_slice %37 {offsets = [0, 1], sizes = [8, 1], strides = [1, 1]} : vector<8x9xf32> to vector<8x1xf32>
    %42 = vector.broadcast %41 : vector<8x1xf32> to vector<8x16xf32>
    %43 = arith.mulf %25, %42 : vector<8x16xf32>
    %44 = arith.addf %40, %43 : vector<8x16xf32>
    %45 = vector.extract_strided_slice %37 {offsets = [0, 2], sizes = [8, 1], strides = [1, 1]} : vector<8x9xf32> to vector<8x1xf32>
    %46 = vector.broadcast %45 : vector<8x1xf32> to vector<8x16xf32>
    %47 = arith.mulf %35, %46 : vector<8x16xf32>
    %48 = arith.addf %44, %47 : vector<8x16xf32>
    %49 = vector.extract_strided_slice %37 {offsets = [0, 3], sizes = [8, 1], strides = [1, 1]} : vector<8x9xf32> to vector<8x1xf32>
    %50 = vector.broadcast %49 : vector<8x1xf32> to vector<8x16xf32>
    %51 = arith.mulf %30, %50 : vector<8x16xf32>
    %52 = vector.extract_strided_slice %37 {offsets = [0, 4], sizes = [8, 1], strides = [1, 1]} : vector<8x9xf32> to vector<8x1xf32>
    %53 = vector.broadcast %52 : vector<8x1xf32> to vector<8x16xf32>
    %54 = arith.mulf %25, %53 : vector<8x16xf32>
    %55 = arith.addf %51, %54 : vector<8x16xf32>
    %56 = vector.extract_strided_slice %37 {offsets = [0, 5], sizes = [8, 1], strides = [1, 1]} : vector<8x9xf32> to vector<8x1xf32>
    %57 = vector.broadcast %56 : vector<8x1xf32> to vector<8x16xf32>
    %58 = arith.mulf %35, %57 : vector<8x16xf32>
    %59 = arith.addf %55, %58 : vector<8x16xf32>
    %60 = vector.extract_strided_slice %37 {offsets = [0, 6], sizes = [8, 1], strides = [1, 1]} : vector<8x9xf32> to vector<8x1xf32>
    %61 = vector.broadcast %60 : vector<8x1xf32> to vector<8x16xf32>
    %62 = arith.mulf %30, %61 : vector<8x16xf32>
    %63 = vector.extract_strided_slice %37 {offsets = [0, 7], sizes = [8, 1], strides = [1, 1]} : vector<8x9xf32> to vector<8x1xf32>
    %64 = vector.broadcast %63 : vector<8x1xf32> to vector<8x16xf32>
    %65 = arith.mulf %25, %64 : vector<8x16xf32>
    %66 = arith.addf %62, %65 : vector<8x16xf32>
    %67 = vector.extract_strided_slice %37 {offsets = [0, 8], sizes = [8, 1], strides = [1, 1]} : vector<8x9xf32> to vector<8x1xf32>
    %68 = vector.broadcast %67 : vector<8x1xf32> to vector<8x16xf32>
    %69 = arith.mulf %35, %68 : vector<8x16xf32>
    %70 = arith.addf %66, %69 : vector<8x16xf32>
    %cst_30 = arith.constant dense<0.000000e+00> : vector<8x16xf32>
    %71 = tpu.matmul %48, %8, %cst_30 {dimension_numbers = #tpu.dot_dimension_numbers<[1], [0], [0], [1], [0, 0, 1, 1], [], []>} : vector<8x16xf32>, vector<16x16xf32>, vector<8x16xf32> -> vector<8x16xf32>
    %72 = arith.addf %59, %71 : vector<8x16xf32>
    %cst_31 = arith.constant dense<0.000000e+00> : vector<8x16xf32>
    %73 = tpu.matmul %70, %13, %cst_31 {dimension_numbers = #tpu.dot_dimension_numbers<[1], [0], [0], [1], [0, 0, 1, 1], [], []>} : vector<8x16xf32>, vector<16x16xf32>, vector<8x16xf32> -> vector<8x16xf32>
    %74 = arith.addf %72, %73 : vector<8x16xf32>
    %cst_32 = arith.constant 6.250000e-02 : f32
    %75 = vector.broadcast %cst_32 : f32 to vector<8x16xf32>
    %76 = arith.mulf %74, %75 : vector<8x16xf32>
    %c0_33 = arith.constant 0 : index
    %c0_34 = arith.constant 0 : index
    %c0_35 = arith.constant 0 : index
    %77 = vector.load %arg6[%c0_33, %c0_34, %c0_35] : memref<5x8x1xf32, #tpu.memory_space<vmem>>, vector<1x8x1xf32>
    %78 = vector.shape_cast %77 : vector<1x8x1xf32> to vector<8x1xf32>
    %79 = vector.broadcast %78 : vector<8x1xf32> to vector<8x16xf32>
    %80 = arith.addf %76, %79 : vector<8x16xf32>
    %cst_36 = arith.constant dense<0.000000e+00> : vector<8x16xf32>
    %81 = vector.multi_reduction <add>, %22, %cst_36 [2] : vector<8x16x16xf32> to vector<8x16xf32>
    %c15_i32_37 = arith.constant 15 : i32
    %82 = vector.broadcast %c15_i32_37 : i32 to vector<8x16x16xi32>
    %83 = arith.cmpi slt, %0, %82 : vector<8x16x16xi32>
    %cst_38 = arith.constant 0.000000e+00 : f32
    %84 = vector.broadcast %cst_38 : f32 to vector<8x16x16xf32>
    %85 = arith.select %83, %22, %84 : vector<8x16x16xi1>, vector<8x16x16xf32>
    %cst_39 = arith.constant dense<0.000000e+00> : vector<8x16xf32>
    %86 = vector.multi_reduction <add>, %85, %cst_39 [2] : vector<8x16x16xf32> to vector<8x16xf32>
    %c0_i32_40 = arith.constant 0 : i32
    %87 = vector.broadcast %c0_i32_40 : i32 to vector<8x16x16xi32>
    %88 = arith.cmpi sgt, %0, %87 : vector<8x16x16xi32>
    %cst_41 = arith.constant 0.000000e+00 : f32
    %89 = vector.broadcast %cst_41 : f32 to vector<8x16x16xf32>
    %90 = arith.select %88, %22, %89 : vector<8x16x16xi1>, vector<8x16x16xf32>
    %cst_42 = arith.constant dense<0.000000e+00> : vector<8x16xf32>
    %91 = vector.multi_reduction <add>, %90, %cst_42 [2] : vector<8x16x16xf32> to vector<8x16xf32>
    %c1 = arith.constant 1 : index
    %c0_43 = arith.constant 0 : index
    %c0_44 = arith.constant 0 : index
    %92 = vector.load %arg4[%c1, %c0_43, %c0_44] : memref<4x8x9xf32, #tpu.memory_space<vmem>>, vector<1x8x9xf32>
    %93 = vector.shape_cast %92 : vector<1x8x9xf32> to vector<8x9xf32>
    %94 = vector.extract_strided_slice %93 {offsets = [0, 0], sizes = [8, 1], strides = [1, 1]} : vector<8x9xf32> to vector<8x1xf32>
    %95 = vector.broadcast %94 : vector<8x1xf32> to vector<8x16xf32>
    %96 = arith.mulf %86, %95 : vector<8x16xf32>
    %97 = vector.extract_strided_slice %93 {offsets = [0, 1], sizes = [8, 1], strides = [1, 1]} : vector<8x9xf32> to vector<8x1xf32>
    %98 = vector.broadcast %97 : vector<8x1xf32> to vector<8x16xf32>
    %99 = arith.mulf %81, %98 : vector<8x16xf32>
    %100 = arith.addf %96, %99 : vector<8x16xf32>
    %101 = vector.extract_strided_slice %93 {offsets = [0, 2], sizes = [8, 1], strides = [1, 1]} : vector<8x9xf32> to vector<8x1xf32>
    %102 = vector.broadcast %101 : vector<8x1xf32> to vector<8x16xf32>
    %103 = arith.mulf %91, %102 : vector<8x16xf32>
    %104 = arith.addf %100, %103 : vector<8x16xf32>
    %105 = vector.extract_strided_slice %93 {offsets = [0, 3], sizes = [8, 1], strides = [1, 1]} : vector<8x9xf32> to vector<8x1xf32>
    %106 = vector.broadcast %105 : vector<8x1xf32> to vector<8x16xf32>
    %107 = arith.mulf %86, %106 : vector<8x16xf32>
    %108 = vector.extract_strided_slice %93 {offsets = [0, 4], sizes = [8, 1], strides = [1, 1]} : vector<8x9xf32> to vector<8x1xf32>
    %109 = vector.broadcast %108 : vector<8x1xf32> to vector<8x16xf32>
    %110 = arith.mulf %81, %109 : vector<8x16xf32>
    %111 = arith.addf %107, %110 : vector<8x16xf32>
    %112 = vector.extract_strided_slice %93 {offsets = [0, 5], sizes = [8, 1], strides = [1, 1]} : vector<8x9xf32> to vector<8x1xf32>
    %113 = vector.broadcast %112 : vector<8x1xf32> to vector<8x16xf32>
    %114 = arith.mulf %91, %113 : vector<8x16xf32>
    %115 = arith.addf %111, %114 : vector<8x16xf32>
    %116 = vector.extract_strided_slice %93 {offsets = [0, 6], sizes = [8, 1], strides = [1, 1]} : vector<8x9xf32> to vector<8x1xf32>
    %117 = vector.broadcast %116 : vector<8x1xf32> to vector<8x16xf32>
    %118 = arith.mulf %86, %117 : vector<8x16xf32>
    %119 = vector.extract_strided_slice %93 {offsets = [0, 7], sizes = [8, 1], strides = [1, 1]} : vector<8x9xf32> to vector<8x1xf32>
    %120 = vector.broadcast %119 : vector<8x1xf32> to vector<8x16xf32>
    %121 = arith.mulf %81, %120 : vector<8x16xf32>
    %122 = arith.addf %118, %121 : vector<8x16xf32>
    %123 = vector.extract_strided_slice %93 {offsets = [0, 8], sizes = [8, 1], strides = [1, 1]} : vector<8x9xf32> to vector<8x1xf32>
    %124 = vector.broadcast %123 : vector<8x1xf32> to vector<8x16xf32>
    %125 = arith.mulf %91, %124 : vector<8x16xf32>
    %126 = arith.addf %122, %125 : vector<8x16xf32>
    %cst_45 = arith.constant dense<0.000000e+00> : vector<8x16xf32>
    %127 = tpu.matmul %104, %8, %cst_45 {dimension_numbers = #tpu.dot_dimension_numbers<[1], [0], [0], [1], [0, 0, 1, 1], [], []>} : vector<8x16xf32>, vector<16x16xf32>, vector<8x16xf32> -> vector<8x16xf32>
    %128 = arith.addf %115, %127 : vector<8x16xf32>
    %cst_46 = arith.constant dense<0.000000e+00> : vector<8x16xf32>
    %129 = tpu.matmul %126, %13, %cst_46 {dimension_numbers = #tpu.dot_dimension_numbers<[1], [0], [0], [1], [0, 0, 1, 1], [], []>} : vector<8x16xf32>, vector<16x16xf32>, vector<8x16xf32> -> vector<8x16xf32>
    %130 = arith.addf %128, %129 : vector<8x16xf32>
    %cst_47 = arith.constant 6.250000e-02 : f32
    %131 = vector.broadcast %cst_47 : f32 to vector<8x16xf32>
    %132 = arith.mulf %130, %131 : vector<8x16xf32>
    %c1_48 = arith.constant 1 : index
    %c0_49 = arith.constant 0 : index
    %c0_50 = arith.constant 0 : index
    %133 = vector.load %arg6[%c1_48, %c0_49, %c0_50] : memref<5x8x1xf32, #tpu.memory_space<vmem>>, vector<1x8x1xf32>
    %134 = vector.shape_cast %133 : vector<1x8x1xf32> to vector<8x1xf32>
    %135 = vector.broadcast %134 : vector<8x1xf32> to vector<8x16xf32>
    %136 = arith.addf %132, %135 : vector<8x16xf32>
    %cst_51 = arith.constant dense<0.000000e+00> : vector<8x16xf32>
    %137 = vector.multi_reduction <add>, %20, %cst_51 [1] : vector<8x16x16xf32> to vector<8x16xf32>
    %c15_i32_52 = arith.constant 15 : i32
    %138 = vector.broadcast %c15_i32_52 : i32 to vector<8x16x16xi32>
    %139 = arith.cmpi slt, %1, %138 : vector<8x16x16xi32>
    %cst_53 = arith.constant 0.000000e+00 : f32
    %140 = vector.broadcast %cst_53 : f32 to vector<8x16x16xf32>
    %141 = arith.select %139, %20, %140 : vector<8x16x16xi1>, vector<8x16x16xf32>
    %cst_54 = arith.constant dense<0.000000e+00> : vector<8x16xf32>
    %142 = vector.multi_reduction <add>, %141, %cst_54 [1] : vector<8x16x16xf32> to vector<8x16xf32>
    %c0_i32_55 = arith.constant 0 : i32
    %143 = vector.broadcast %c0_i32_55 : i32 to vector<8x16x16xi32>
    %144 = arith.cmpi sgt, %1, %143 : vector<8x16x16xi32>
    %cst_56 = arith.constant 0.000000e+00 : f32
    %145 = vector.broadcast %cst_56 : f32 to vector<8x16x16xf32>
    %146 = arith.select %144, %20, %145 : vector<8x16x16xi1>, vector<8x16x16xf32>
    %cst_57 = arith.constant dense<0.000000e+00> : vector<8x16xf32>
    %147 = vector.multi_reduction <add>, %146, %cst_57 [1] : vector<8x16x16xf32> to vector<8x16xf32>
    %c2 = arith.constant 2 : index
    %c0_58 = arith.constant 0 : index
    %c0_59 = arith.constant 0 : index
    %148 = vector.load %arg4[%c2, %c0_58, %c0_59] : memref<4x8x9xf32, #tpu.memory_space<vmem>>, vector<1x8x9xf32>
    %149 = vector.shape_cast %148 : vector<1x8x9xf32> to vector<8x9xf32>
    %150 = vector.extract_strided_slice %149 {offsets = [0, 0], sizes = [8, 1], strides = [1, 1]} : vector<8x9xf32> to vector<8x1xf32>
    %151 = vector.broadcast %150 : vector<8x1xf32> to vector<8x16xf32>
    %152 = arith.mulf %142, %151 : vector<8x16xf32>
    %153 = vector.extract_strided_slice %149 {offsets = [0, 3], sizes = [8, 1], strides = [1, 1]} : vector<8x9xf32> to vector<8x1xf32>
    %154 = vector.broadcast %153 : vector<8x1xf32> to vector<8x16xf32>
    %155 = arith.mulf %137, %154 : vector<8x16xf32>
    %156 = arith.addf %152, %155 : vector<8x16xf32>
    %157 = vector.extract_strided_slice %149 {offsets = [0, 6], sizes = [8, 1], strides = [1, 1]} : vector<8x9xf32> to vector<8x1xf32>
    %158 = vector.broadcast %157 : vector<8x1xf32> to vector<8x16xf32>
    %159 = arith.mulf %147, %158 : vector<8x16xf32>
    %160 = arith.addf %156, %159 : vector<8x16xf32>
    %161 = vector.extract_strided_slice %149 {offsets = [0, 1], sizes = [8, 1], strides = [1, 1]} : vector<8x9xf32> to vector<8x1xf32>
    %162 = vector.broadcast %161 : vector<8x1xf32> to vector<8x16xf32>
    %163 = arith.mulf %142, %162 : vector<8x16xf32>
    %164 = vector.extract_strided_slice %149 {offsets = [0, 4], sizes = [8, 1], strides = [1, 1]} : vector<8x9xf32> to vector<8x1xf32>
    %165 = vector.broadcast %164 : vector<8x1xf32> to vector<8x16xf32>
    %166 = arith.mulf %137, %165 : vector<8x16xf32>
    %167 = arith.addf %163, %166 : vector<8x16xf32>
    %168 = vector.extract_strided_slice %149 {offsets = [0, 7], sizes = [8, 1], strides = [1, 1]} : vector<8x9xf32> to vector<8x1xf32>
    %169 = vector.broadcast %168 : vector<8x1xf32> to vector<8x16xf32>
    %170 = arith.mulf %147, %169 : vector<8x16xf32>
    %171 = arith.addf %167, %170 : vector<8x16xf32>
    %172 = vector.extract_strided_slice %149 {offsets = [0, 2], sizes = [8, 1], strides = [1, 1]} : vector<8x9xf32> to vector<8x1xf32>
    %173 = vector.broadcast %172 : vector<8x1xf32> to vector<8x16xf32>
    %174 = arith.mulf %142, %173 : vector<8x16xf32>
    %175 = vector.extract_strided_slice %149 {offsets = [0, 5], sizes = [8, 1], strides = [1, 1]} : vector<8x9xf32> to vector<8x1xf32>
    %176 = vector.broadcast %175 : vector<8x1xf32> to vector<8x16xf32>
    %177 = arith.mulf %137, %176 : vector<8x16xf32>
    %178 = arith.addf %174, %177 : vector<8x16xf32>
    %179 = vector.extract_strided_slice %149 {offsets = [0, 8], sizes = [8, 1], strides = [1, 1]} : vector<8x9xf32> to vector<8x1xf32>
    %180 = vector.broadcast %179 : vector<8x1xf32> to vector<8x16xf32>
    %181 = arith.mulf %147, %180 : vector<8x16xf32>
    %182 = arith.addf %178, %181 : vector<8x16xf32>
    %cst_60 = arith.constant dense<0.000000e+00> : vector<8x16xf32>
    %183 = tpu.matmul %160, %8, %cst_60 {dimension_numbers = #tpu.dot_dimension_numbers<[1], [0], [0], [1], [0, 0, 1, 1], [], []>} : vector<8x16xf32>, vector<16x16xf32>, vector<8x16xf32> -> vector<8x16xf32>
    %184 = arith.addf %171, %183 : vector<8x16xf32>
    %cst_61 = arith.constant dense<0.000000e+00> : vector<8x16xf32>
    %185 = tpu.matmul %182, %13, %cst_61 {dimension_numbers = #tpu.dot_dimension_numbers<[1], [0], [0], [1], [0, 0, 1, 1], [], []>} : vector<8x16xf32>, vector<16x16xf32>, vector<8x16xf32> -> vector<8x16xf32>
    %186 = arith.addf %184, %185 : vector<8x16xf32>
    %cst_62 = arith.constant 6.250000e-02 : f32
    %187 = vector.broadcast %cst_62 : f32 to vector<8x16xf32>
    %188 = arith.mulf %186, %187 : vector<8x16xf32>
    %c2_63 = arith.constant 2 : index
    %c0_64 = arith.constant 0 : index
    %c0_65 = arith.constant 0 : index
    %189 = vector.load %arg6[%c2_63, %c0_64, %c0_65] : memref<5x8x1xf32, #tpu.memory_space<vmem>>, vector<1x8x1xf32>
    %190 = vector.shape_cast %189 : vector<1x8x1xf32> to vector<8x1xf32>
    %191 = vector.broadcast %190 : vector<8x1xf32> to vector<8x16xf32>
    %192 = arith.addf %188, %191 : vector<8x16xf32>
    %cst_66 = arith.constant dense<0.000000e+00> : vector<8x16xf32>
    %193 = vector.multi_reduction <add>, %22, %cst_66 [1] : vector<8x16x16xf32> to vector<8x16xf32>
    %c15_i32_67 = arith.constant 15 : i32
    %194 = vector.broadcast %c15_i32_67 : i32 to vector<8x16x16xi32>
    %195 = arith.cmpi slt, %1, %194 : vector<8x16x16xi32>
    %cst_68 = arith.constant 0.000000e+00 : f32
    %196 = vector.broadcast %cst_68 : f32 to vector<8x16x16xf32>
    %197 = arith.select %195, %22, %196 : vector<8x16x16xi1>, vector<8x16x16xf32>
    %cst_69 = arith.constant dense<0.000000e+00> : vector<8x16xf32>
    %198 = vector.multi_reduction <add>, %197, %cst_69 [1] : vector<8x16x16xf32> to vector<8x16xf32>
    %c0_i32_70 = arith.constant 0 : i32
    %199 = vector.broadcast %c0_i32_70 : i32 to vector<8x16x16xi32>
    %200 = arith.cmpi sgt, %1, %199 : vector<8x16x16xi32>
    %cst_71 = arith.constant 0.000000e+00 : f32
    %201 = vector.broadcast %cst_71 : f32 to vector<8x16x16xf32>
    %202 = arith.select %200, %22, %201 : vector<8x16x16xi1>, vector<8x16x16xf32>
    %cst_72 = arith.constant dense<0.000000e+00> : vector<8x16xf32>
    %203 = vector.multi_reduction <add>, %202, %cst_72 [1] : vector<8x16x16xf32> to vector<8x16xf32>
    %c3 = arith.constant 3 : index
    %c0_73 = arith.constant 0 : index
    %c0_74 = arith.constant 0 : index
    %204 = vector.load %arg4[%c3, %c0_73, %c0_74] : memref<4x8x9xf32, #tpu.memory_space<vmem>>, vector<1x8x9xf32>
    %205 = vector.shape_cast %204 : vector<1x8x9xf32> to vector<8x9xf32>
    %206 = vector.extract_strided_slice %205 {offsets = [0, 0], sizes = [8, 1], strides = [1, 1]} : vector<8x9xf32> to vector<8x1xf32>
    %207 = vector.broadcast %206 : vector<8x1xf32> to vector<8x16xf32>
    %208 = arith.mulf %198, %207 : vector<8x16xf32>
    %209 = vector.extract_strided_slice %205 {offsets = [0, 3], sizes = [8, 1], strides = [1, 1]} : vector<8x9xf32> to vector<8x1xf32>
    %210 = vector.broadcast %209 : vector<8x1xf32> to vector<8x16xf32>
    %211 = arith.mulf %193, %210 : vector<8x16xf32>
    %212 = arith.addf %208, %211 : vector<8x16xf32>
    %213 = vector.extract_strided_slice %205 {offsets = [0, 6], sizes = [8, 1], strides = [1, 1]} : vector<8x9xf32> to vector<8x1xf32>
    %214 = vector.broadcast %213 : vector<8x1xf32> to vector<8x16xf32>
    %215 = arith.mulf %203, %214 : vector<8x16xf32>
    %216 = arith.addf %212, %215 : vector<8x16xf32>
    %217 = vector.extract_strided_slice %205 {offsets = [0, 1], sizes = [8, 1], strides = [1, 1]} : vector<8x9xf32> to vector<8x1xf32>
    %218 = vector.broadcast %217 : vector<8x1xf32> to vector<8x16xf32>
    %219 = arith.mulf %198, %218 : vector<8x16xf32>
    %220 = vector.extract_strided_slice %205 {offsets = [0, 4], sizes = [8, 1], strides = [1, 1]} : vector<8x9xf32> to vector<8x1xf32>
    %221 = vector.broadcast %220 : vector<8x1xf32> to vector<8x16xf32>
    %222 = arith.mulf %193, %221 : vector<8x16xf32>
    %223 = arith.addf %219, %222 : vector<8x16xf32>
    %224 = vector.extract_strided_slice %205 {offsets = [0, 7], sizes = [8, 1], strides = [1, 1]} : vector<8x9xf32> to vector<8x1xf32>
    %225 = vector.broadcast %224 : vector<8x1xf32> to vector<8x16xf32>
    %226 = arith.mulf %203, %225 : vector<8x16xf32>
    %227 = arith.addf %223, %226 : vector<8x16xf32>
    %228 = vector.extract_strided_slice %205 {offsets = [0, 2], sizes = [8, 1], strides = [1, 1]} : vector<8x9xf32> to vector<8x1xf32>
    %229 = vector.broadcast %228 : vector<8x1xf32> to vector<8x16xf32>
    %230 = arith.mulf %198, %229 : vector<8x16xf32>
    %231 = vector.extract_strided_slice %205 {offsets = [0, 5], sizes = [8, 1], strides = [1, 1]} : vector<8x9xf32> to vector<8x1xf32>
    %232 = vector.broadcast %231 : vector<8x1xf32> to vector<8x16xf32>
    %233 = arith.mulf %193, %232 : vector<8x16xf32>
    %234 = arith.addf %230, %233 : vector<8x16xf32>
    %235 = vector.extract_strided_slice %205 {offsets = [0, 8], sizes = [8, 1], strides = [1, 1]} : vector<8x9xf32> to vector<8x1xf32>
    %236 = vector.broadcast %235 : vector<8x1xf32> to vector<8x16xf32>
    %237 = arith.mulf %203, %236 : vector<8x16xf32>
    %238 = arith.addf %234, %237 : vector<8x16xf32>
    %cst_75 = arith.constant dense<0.000000e+00> : vector<8x16xf32>
    %239 = tpu.matmul %216, %8, %cst_75 {dimension_numbers = #tpu.dot_dimension_numbers<[1], [0], [0], [1], [0, 0, 1, 1], [], []>} : vector<8x16xf32>, vector<16x16xf32>, vector<8x16xf32> -> vector<8x16xf32>
    %240 = arith.addf %227, %239 : vector<8x16xf32>
    %cst_76 = arith.constant dense<0.000000e+00> : vector<8x16xf32>
    %241 = tpu.matmul %238, %13, %cst_76 {dimension_numbers = #tpu.dot_dimension_numbers<[1], [0], [0], [1], [0, 0, 1, 1], [], []>} : vector<8x16xf32>, vector<16x16xf32>, vector<8x16xf32> -> vector<8x16xf32>
    %242 = arith.addf %240, %241 : vector<8x16xf32>
    %cst_77 = arith.constant 6.250000e-02 : f32
    %243 = vector.broadcast %cst_77 : f32 to vector<8x16xf32>
    %244 = arith.mulf %242, %243 : vector<8x16xf32>
    %c3_78 = arith.constant 3 : index
    %c0_79 = arith.constant 0 : index
    %c0_80 = arith.constant 0 : index
    %245 = vector.load %arg6[%c3_78, %c0_79, %c0_80] : memref<5x8x1xf32, #tpu.memory_space<vmem>>, vector<1x8x1xf32>
    %246 = vector.shape_cast %245 : vector<1x8x1xf32> to vector<8x1xf32>
    %247 = vector.broadcast %246 : vector<8x1xf32> to vector<8x16xf32>
    %248 = arith.addf %244, %247 : vector<8x16xf32>
    %c0_81 = arith.constant 0 : index
    %c1_82 = arith.constant 1 : index
    %c1_83 = arith.constant 1 : index
    %249 = vector.load %arg12[%c0_81, %c1_82, %c1_83] : memref<8x18x18xf32, #tpu.memory_space<vmem>>, vector<8x16x16xf32>
    tpu.vector_store %arg12[%c0_81, %c1_82, %c1_83], %24 {strides = array<i32>} : memref<8x18x18xf32, #tpu.memory_space<vmem>>, vector<8x16x16xf32>,
    %c0_84 = arith.constant 0 : index
    %c0_85 = arith.constant 0 : index
    %c0_86 = arith.constant 0 : index
    %250 = vector.load %arg12[%c0_84, %c0_85, %c0_86] : memref<8x18x18xf32, #tpu.memory_space<vmem>>, vector<8x18x18xf32>
    %251 = vector.extract_strided_slice %250 {offsets = [0, 0, 0], sizes = [8, 16, 16], strides = [1, 1, 1]} : vector<8x18x18xf32> to vector<8x16x16xf32>
    %252 = vector.extract_strided_slice %18 {offsets = [0, 0, 0], sizes = [8, 1, 1], strides = [1, 1, 1]} : vector<8x1x9xf32> to vector<8x1x1xf32>
    %253 = vector.broadcast %252 : vector<8x1x1xf32> to vector<8x16x16xf32>
    %254 = arith.mulf %251, %253 : vector<8x16x16xf32>
    %255 = vector.extract_strided_slice %250 {offsets = [0, 0, 1], sizes = [8, 16, 16], strides = [1, 1, 1]} : vector<8x18x18xf32> to vector<8x16x16xf32>
    %256 = vector.extract_strided_slice %18 {offsets = [0, 0, 1], sizes = [8, 1, 1], strides = [1, 1, 1]} : vector<8x1x9xf32> to vector<8x1x1xf32>
    %257 = vector.broadcast %256 : vector<8x1x1xf32> to vector<8x16x16xf32>
    %258 = arith.mulf %255, %257 : vector<8x16x16xf32>
    %259 = arith.addf %254, %258 : vector<8x16x16xf32>
    %260 = vector.extract_strided_slice %250 {offsets = [0, 0, 2], sizes = [8, 16, 16], strides = [1, 1, 1]} : vector<8x18x18xf32> to vector<8x16x16xf32>
    %261 = vector.extract_strided_slice %18 {offsets = [0, 0, 2], sizes = [8, 1, 1], strides = [1, 1, 1]} : vector<8x1x9xf32> to vector<8x1x1xf32>
    %262 = vector.broadcast %261 : vector<8x1x1xf32> to vector<8x16x16xf32>
    %263 = arith.mulf %260, %262 : vector<8x16x16xf32>
    %264 = arith.addf %259, %263 : vector<8x16x16xf32>
    %265 = vector.extract_strided_slice %250 {offsets = [0, 1, 0], sizes = [8, 16, 16], strides = [1, 1, 1]} : vector<8x18x18xf32> to vector<8x16x16xf32>
    %266 = vector.extract_strided_slice %18 {offsets = [0, 0, 3], sizes = [8, 1, 1], strides = [1, 1, 1]} : vector<8x1x9xf32> to vector<8x1x1xf32>
    %267 = vector.broadcast %266 : vector<8x1x1xf32> to vector<8x16x16xf32>
    %268 = arith.mulf %265, %267 : vector<8x16x16xf32>
    %269 = arith.addf %264, %268 : vector<8x16x16xf32>
    %270 = vector.extract_strided_slice %250 {offsets = [0, 1, 1], sizes = [8, 16, 16], strides = [1, 1, 1]} : vector<8x18x18xf32> to vector<8x16x16xf32>
    %271 = vector.extract_strided_slice %18 {offsets = [0, 0, 4], sizes = [8, 1, 1], strides = [1, 1, 1]} : vector<8x1x9xf32> to vector<8x1x1xf32>
    %272 = vector.broadcast %271 : vector<8x1x1xf32> to vector<8x16x16xf32>
    %273 = arith.mulf %270, %272 : vector<8x16x16xf32>
    %274 = arith.addf %269, %273 : vector<8x16x16xf32>
    %275 = vector.extract_strided_slice %250 {offsets = [0, 1, 2], sizes = [8, 16, 16], strides = [1, 1, 1]} : vector<8x18x18xf32> to vector<8x16x16xf32>
    %276 = vector.extract_strided_slice %18 {offsets = [0, 0, 5], sizes = [8, 1, 1], strides = [1, 1, 1]} : vector<8x1x9xf32> to vector<8x1x1xf32>
    %277 = vector.broadcast %276 : vector<8x1x1xf32> to vector<8x16x16xf32>
    %278 = arith.mulf %275, %277 : vector<8x16x16xf32>
    %279 = arith.addf %274, %278 : vector<8x16x16xf32>
    %280 = vector.extract_strided_slice %250 {offsets = [0, 2, 0], sizes = [8, 16, 16], strides = [1, 1, 1]} : vector<8x18x18xf32> to vector<8x16x16xf32>
    %281 = vector.extract_strided_slice %18 {offsets = [0, 0, 6], sizes = [8, 1, 1], strides = [1, 1, 1]} : vector<8x1x9xf32> to vector<8x1x1xf32>
    %282 = vector.broadcast %281 : vector<8x1x1xf32> to vector<8x16x16xf32>
    %283 = arith.mulf %280, %282 : vector<8x16x16xf32>
    %284 = arith.addf %279, %283 : vector<8x16x16xf32>
    %285 = vector.extract_strided_slice %250 {offsets = [0, 2, 1], sizes = [8, 16, 16], strides = [1, 1, 1]} : vector<8x18x18xf32> to vector<8x16x16xf32>
    %286 = vector.extract_strided_slice %18 {offsets = [0, 0, 7], sizes = [8, 1, 1], strides = [1, 1, 1]} : vector<8x1x9xf32> to vector<8x1x1xf32>
    %287 = vector.broadcast %286 : vector<8x1x1xf32> to vector<8x16x16xf32>
    %288 = arith.mulf %285, %287 : vector<8x16x16xf32>
    %289 = arith.addf %284, %288 : vector<8x16x16xf32>
    %290 = vector.extract_strided_slice %250 {offsets = [0, 2, 2], sizes = [8, 16, 16], strides = [1, 1, 1]} : vector<8x18x18xf32> to vector<8x16x16xf32>
    %291 = vector.extract_strided_slice %18 {offsets = [0, 0, 8], sizes = [8, 1, 1], strides = [1, 1, 1]} : vector<8x1x9xf32> to vector<8x1x1xf32>
    %292 = vector.broadcast %291 : vector<8x1x1xf32> to vector<8x16x16xf32>
    %293 = arith.mulf %290, %292 : vector<8x16x16xf32>
    %294 = arith.addf %289, %293 : vector<8x16x16xf32>
    %295 = vector.shape_cast %294 : vector<8x16x16xf32> to vector<8x256xf32>
    %c4 = arith.constant 4 : index
    %c0_87 = arith.constant 0 : index
    %c0_88 = arith.constant 0 : index
    %296 = vector.load %arg6[%c4, %c0_87, %c0_88] : memref<5x8x1xf32, #tpu.memory_space<vmem>>, vector<1x8x1xf32>
    %297 = vector.shape_cast %296 : vector<1x8x1xf32> to vector<8x1xf32>
    %298 = vector.broadcast %297 : vector<8x1xf32> to vector<8x256xf32>
    %299 = arith.addf %295, %298 : vector<8x256xf32>
    %c0_89 = arith.constant 0 : index
    %c0_90 = arith.constant 0 : index
    %c0_91 = arith.constant 0 : index
    %300 = vector.load %arg7[%c0_89, %c0_90, %c0_91] : memref<5x16x8xf32, #tpu.memory_space<vmem>>, vector<1x16x8xf32>
    %301 = vector.shape_cast %300 : vector<1x16x8xf32> to vector<16x8xf32>
    %cst_92 = arith.constant dense<0.000000e+00> : vector<16x16xf32>
    %302 = tpu.matmul %301, %80, %cst_92 {dimension_numbers = #tpu.dot_dimension_numbers<[1], [0], [0], [1], [0, 0, 1, 1], [], []>} : vector<16x8xf32>, vector<8x16xf32>, vector<16x16xf32> -> vector<16x16xf32>
    %c0_93 = arith.constant 0 : index
    %c0_94 = arith.constant 0 : index
    %c0_95 = arith.constant 0 : index
    %303 = vector.load %arg8[%c0_93, %c0_94, %c0_95] : memref<5x16x1xf32, #tpu.memory_space<vmem>>, vector<1x16x1xf32>
    %304 = vector.shape_cast %303 : vector<1x16x1xf32> to vector<16x1xf32>
    %305 = vector.broadcast %304 : vector<16x1xf32> to vector<16x16xf32>
    %306 = arith.addf %302, %305 : vector<16x16xf32>
    %307 = arith.mulf %306, %306 : vector<16x16xf32>
    %cst_96 = arith.constant dense<0.000000e+00> : vector<16xf32>
    %308 = vector.multi_reduction <add>, %307, %cst_96 [1] : vector<16x16xf32> to vector<16xf32>
    %309 = vector.shape_cast %308 : vector<16xf32> to vector<16x1xf32>
    %cst_97 = arith.constant 1.000000e-24 : f32
    %310 = vector.broadcast %cst_97 : f32 to vector<16x1xf32>
    %311 = arith.maximumf %309, %310 : vector<16x1xf32>
    %312 = math.rsqrt %311 : vector<16x1xf32>
    %313 = vector.broadcast %312 : vector<16x1xf32> to vector<16x16xf32>
    %314 = arith.mulf %306, %313 : vector<16x16xf32>
    %c1_98 = arith.constant 1 : index
    %c0_99 = arith.constant 0 : index
    %c0_100 = arith.constant 0 : index
    %315 = vector.load %arg7[%c1_98, %c0_99, %c0_100] : memref<5x16x8xf32, #tpu.memory_space<vmem>>, vector<1x16x8xf32>
    %316 = vector.shape_cast %315 : vector<1x16x8xf32> to vector<16x8xf32>
    %cst_101 = arith.constant dense<0.000000e+00> : vector<16x16xf32>
    %317 = tpu.matmul %316, %136, %cst_101 {dimension_numbers = #tpu.dot_dimension_numbers<[1], [0], [0], [1], [0, 0, 1, 1], [], []>} : vector<16x8xf32>, vector<8x16xf32>, vector<16x16xf32> -> vector<16x16xf32>
    %c1_102 = arith.constant 1 : index
    %c0_103 = arith.constant 0 : index
    %c0_104 = arith.constant 0 : index
    %318 = vector.load %arg8[%c1_102, %c0_103, %c0_104] : memref<5x16x1xf32, #tpu.memory_space<vmem>>, vector<1x16x1xf32>
    %319 = vector.shape_cast %318 : vector<1x16x1xf32> to vector<16x1xf32>
    %320 = vector.broadcast %319 : vector<16x1xf32> to vector<16x16xf32>
    %321 = arith.addf %317, %320 : vector<16x16xf32>
    %322 = arith.mulf %321, %321 : vector<16x16xf32>
    %cst_105 = arith.constant dense<0.000000e+00> : vector<16xf32>
    %323 = vector.multi_reduction <add>, %322, %cst_105 [1] : vector<16x16xf32> to vector<16xf32>
    %324 = vector.shape_cast %323 : vector<16xf32> to vector<16x1xf32>
    %cst_106 = arith.constant 1.000000e-24 : f32
    %325 = vector.broadcast %cst_106 : f32 to vector<16x1xf32>
    %326 = arith.maximumf %324, %325 : vector<16x1xf32>
    %327 = math.rsqrt %326 : vector<16x1xf32>
    %328 = vector.broadcast %327 : vector<16x1xf32> to vector<16x16xf32>
    %329 = arith.mulf %321, %328 : vector<16x16xf32>
    %c2_107 = arith.constant 2 : index
    %c0_108 = arith.constant 0 : index
    %c0_109 = arith.constant 0 : index
    %330 = vector.load %arg7[%c2_107, %c0_108, %c0_109] : memref<5x16x8xf32, #tpu.memory_space<vmem>>, vector<1x16x8xf32>
    %331 = vector.shape_cast %330 : vector<1x16x8xf32> to vector<16x8xf32>
    %cst_110 = arith.constant dense<0.000000e+00> : vector<16x16xf32>
    %332 = tpu.matmul %331, %192, %cst_110 {dimension_numbers = #tpu.dot_dimension_numbers<[1], [0], [0], [1], [0, 0, 1, 1], [], []>} : vector<16x8xf32>, vector<8x16xf32>, vector<16x16xf32> -> vector<16x16xf32>
    %c2_111 = arith.constant 2 : index
    %c0_112 = arith.constant 0 : index
    %c0_113 = arith.constant 0 : index
    %333 = vector.load %arg8[%c2_111, %c0_112, %c0_113] : memref<5x16x1xf32, #tpu.memory_space<vmem>>, vector<1x16x1xf32>
    %334 = vector.shape_cast %333 : vector<1x16x1xf32> to vector<16x1xf32>
    %335 = vector.broadcast %334 : vector<16x1xf32> to vector<16x16xf32>
    %336 = arith.addf %332, %335 : vector<16x16xf32>
    %337 = arith.mulf %336, %336 : vector<16x16xf32>
    %cst_114 = arith.constant dense<0.000000e+00> : vector<16xf32>
    %338 = vector.multi_reduction <add>, %337, %cst_114 [1] : vector<16x16xf32> to vector<16xf32>
    %339 = vector.shape_cast %338 : vector<16xf32> to vector<16x1xf32>
    %cst_115 = arith.constant 1.000000e-24 : f32
    %340 = vector.broadcast %cst_115 : f32 to vector<16x1xf32>
    %341 = arith.maximumf %339, %340 : vector<16x1xf32>
    %342 = math.rsqrt %341 : vector<16x1xf32>
    %343 = vector.broadcast %342 : vector<16x1xf32> to vector<16x16xf32>
    %344 = arith.mulf %336, %343 : vector<16x16xf32>
    %c3_116 = arith.constant 3 : index
    %c0_117 = arith.constant 0 : index
    %c0_118 = arith.constant 0 : index
    %345 = vector.load %arg7[%c3_116, %c0_117, %c0_118] : memref<5x16x8xf32, #tpu.memory_space<vmem>>, vector<1x16x8xf32>
    %346 = vector.shape_cast %345 : vector<1x16x8xf32> to vector<16x8xf32>
    %cst_119 = arith.constant dense<0.000000e+00> : vector<16x16xf32>
    %347 = tpu.matmul %346, %248, %cst_119 {dimension_numbers = #tpu.dot_dimension_numbers<[1], [0], [0], [1], [0, 0, 1, 1], [], []>} : vector<16x8xf32>, vector<8x16xf32>, vector<16x16xf32> -> vector<16x16xf32>
    %c3_120 = arith.constant 3 : index
    %c0_121 = arith.constant 0 : index
    %c0_122 = arith.constant 0 : index
    %348 = vector.load %arg8[%c3_120, %c0_121, %c0_122] : memref<5x16x1xf32, #tpu.memory_space<vmem>>, vector<1x16x1xf32>
    %349 = vector.shape_cast %348 : vector<1x16x1xf32> to vector<16x1xf32>
    %350 = vector.broadcast %349 : vector<16x1xf32> to vector<16x16xf32>
    %351 = arith.addf %347, %350 : vector<16x16xf32>
    %352 = arith.mulf %351, %351 : vector<16x16xf32>
    %cst_123 = arith.constant dense<0.000000e+00> : vector<16xf32>
    %353 = vector.multi_reduction <add>, %352, %cst_123 [1] : vector<16x16xf32> to vector<16xf32>
    %354 = vector.shape_cast %353 : vector<16xf32> to vector<16x1xf32>
    %cst_124 = arith.constant 1.000000e-24 : f32
    %355 = vector.broadcast %cst_124 : f32 to vector<16x1xf32>
    %356 = arith.maximumf %354, %355 : vector<16x1xf32>
    %357 = math.rsqrt %356 : vector<16x1xf32>
    %358 = vector.broadcast %357 : vector<16x1xf32> to vector<16x16xf32>
    %359 = arith.mulf %351, %358 : vector<16x16xf32>
    %c4_125 = arith.constant 4 : index
    %c0_126 = arith.constant 0 : index
    %c0_127 = arith.constant 0 : index
    %360 = vector.load %arg7[%c4_125, %c0_126, %c0_127] : memref<5x16x8xf32, #tpu.memory_space<vmem>>, vector<1x16x8xf32>
    %361 = vector.shape_cast %360 : vector<1x16x8xf32> to vector<16x8xf32>
    %cst_128 = arith.constant dense<0.000000e+00> : vector<16x256xf32>
    %362 = tpu.matmul %361, %299, %cst_128 {dimension_numbers = #tpu.dot_dimension_numbers<[1], [0], [0], [1], [0, 0, 1, 1], [], []>} : vector<16x8xf32>, vector<8x256xf32>, vector<16x256xf32> -> vector<16x256xf32>
    %c4_129 = arith.constant 4 : index
    %c0_130 = arith.constant 0 : index
    %c0_131 = arith.constant 0 : index
    %363 = vector.load %arg8[%c4_129, %c0_130, %c0_131] : memref<5x16x1xf32, #tpu.memory_space<vmem>>, vector<1x16x1xf32>
    %364 = vector.shape_cast %363 : vector<1x16x1xf32> to vector<16x1xf32>
    %365 = vector.broadcast %364 : vector<16x1xf32> to vector<16x256xf32>
    %366 = arith.addf %362, %365 : vector<16x256xf32>
    %367 = vector.extract_strided_slice %314 {offsets = [0, 0], sizes = [8, 16], strides = [1, 1]} : vector<16x16xf32> to vector<8x16xf32>
    %368 = vector.extract_strided_slice %329 {offsets = [0, 0], sizes = [8, 16], strides = [1, 1]} : vector<16x16xf32> to vector<8x16xf32>
    %cst_132 = arith.constant dense<0.000000e+00> : vector<8x8xf32>
    %369 = tpu.matmul %367, %368, %cst_132 {dimension_numbers = #tpu.dot_dimension_numbers<[1], [1], [0], [0], [0, 0, 1, 0], [], []>} : vector<8x16xf32>, vector<8x16xf32>, vector<8x8xf32> -> vector<8x8xf32>
    %cst_133 = arith.constant dense<0xFF800000> : vector<8xf32>
    %370 = vector.multi_reduction <maximumf>, %369, %cst_133 [1] : vector<8x8xf32> to vector<8xf32>
    %371 = vector.shape_cast %370 : vector<8xf32> to vector<8x1xf32>
    %372 = vector.broadcast %371 : vector<8x1xf32> to vector<8x8xf32>
    %373 = arith.subf %369, %372 : vector<8x8xf32>
    %374 = math.exp %373 : vector<8x8xf32>
    %cst_134 = arith.constant dense<0.000000e+00> : vector<8xf32>
    %375 = vector.multi_reduction <add>, %374, %cst_134 [1] : vector<8x8xf32> to vector<8xf32>
    %376 = vector.shape_cast %375 : vector<8xf32> to vector<8x1xf32>
    %377 = tpu.reciprocal %376 {approx = true} : vector<8x1xf32> -> vector<8x1xf32>
    %378 = vector.broadcast %377 : vector<8x1xf32> to vector<8x8xf32>
    %379 = arith.mulf %374, %378 : vector<8x8xf32>
    %380 = vector.extract_strided_slice %344 {offsets = [0, 0], sizes = [8, 16], strides = [1, 1]} : vector<16x16xf32> to vector<8x16xf32>
    %381 = vector.extract_strided_slice %359 {offsets = [0, 0], sizes = [8, 16], strides = [1, 1]} : vector<16x16xf32> to vector<8x16xf32>
    %cst_135 = arith.constant dense<0.000000e+00> : vector<8x8xf32>
    %382 = tpu.matmul %380, %381, %cst_135 {dimension_numbers = #tpu.dot_dimension_numbers<[1], [1], [0], [0], [0, 0, 1, 0], [], []>} : vector<8x16xf32>, vector<8x16xf32>, vector<8x8xf32> -> vector<8x8xf32>
    %cst_136 = arith.constant dense<0xFF800000> : vector<8xf32>
    %383 = vector.multi_reduction <maximumf>, %382, %cst_136 [1] : vector<8x8xf32> to vector<8xf32>
    %384 = vector.shape_cast %383 : vector<8xf32> to vector<8x1xf32>
    %385 = vector.broadcast %384 : vector<8x1xf32> to vector<8x8xf32>
    %386 = arith.subf %382, %385 : vector<8x8xf32>
    %387 = math.exp %386 : vector<8x8xf32>
    %cst_137 = arith.constant dense<0.000000e+00> : vector<8xf32>
    %388 = vector.multi_reduction <add>, %387, %cst_137 [1] : vector<8x8xf32> to vector<8xf32>
    %389 = vector.shape_cast %388 : vector<8xf32> to vector<8x1xf32>
    %390 = tpu.reciprocal %389 {approx = true} : vector<8x1xf32> -> vector<8x1xf32>
    %391 = vector.broadcast %390 : vector<8x1xf32> to vector<8x8xf32>
    %392 = arith.mulf %387, %391 : vector<8x8xf32>
    %393 = vector.extract_strided_slice %366 {offsets = [0, 0], sizes = [8, 256], strides = [1, 1]} : vector<16x256xf32> to vector<8x256xf32>
    %cst_138 = arith.constant dense<0.000000e+00> : vector<8x256xf32>
    %394 = tpu.matmul %379, %393, %cst_138 {dimension_numbers = #tpu.dot_dimension_numbers<[1], [0], [0], [1], [0, 0, 1, 1], [], []>} : vector<8x8xf32>, vector<8x256xf32>, vector<8x256xf32> -> vector<8x256xf32>
    %cst_139 = arith.constant dense<0.000000e+00> : vector<8x256xf32>
    %395 = tpu.matmul %392, %394, %cst_139 {dimension_numbers = #tpu.dot_dimension_numbers<[0], [0], [1], [1], [0, 1, 1, 1], [], []>} : vector<8x8xf32>, vector<8x256xf32>, vector<8x256xf32> -> vector<8x256xf32>
    %396 = vector.extract_strided_slice %314 {offsets = [8, 0], sizes = [8, 16], strides = [1, 1]} : vector<16x16xf32> to vector<8x16xf32>
    %397 = vector.extract_strided_slice %329 {offsets = [8, 0], sizes = [8, 16], strides = [1, 1]} : vector<16x16xf32> to vector<8x16xf32>
    %cst_140 = arith.constant dense<0.000000e+00> : vector<8x8xf32>
    %398 = tpu.matmul %396, %397, %cst_140 {dimension_numbers = #tpu.dot_dimension_numbers<[1], [1], [0], [0], [0, 0, 1, 0], [], []>} : vector<8x16xf32>, vector<8x16xf32>, vector<8x8xf32> -> vector<8x8xf32>
    %cst_141 = arith.constant dense<0xFF800000> : vector<8xf32>
    %399 = vector.multi_reduction <maximumf>, %398, %cst_141 [1] : vector<8x8xf32> to vector<8xf32>
    %400 = vector.shape_cast %399 : vector<8xf32> to vector<8x1xf32>
    %401 = vector.broadcast %400 : vector<8x1xf32> to vector<8x8xf32>
    %402 = arith.subf %398, %401 : vector<8x8xf32>
    %403 = math.exp %402 : vector<8x8xf32>
    %cst_142 = arith.constant dense<0.000000e+00> : vector<8xf32>
    %404 = vector.multi_reduction <add>, %403, %cst_142 [1] : vector<8x8xf32> to vector<8xf32>
    %405 = vector.shape_cast %404 : vector<8xf32> to vector<8x1xf32>
    %406 = tpu.reciprocal %405 {approx = true} : vector<8x1xf32> -> vector<8x1xf32>
    %407 = vector.broadcast %406 : vector<8x1xf32> to vector<8x8xf32>
    %408 = arith.mulf %403, %407 : vector<8x8xf32>
    %409 = vector.extract_strided_slice %344 {offsets = [8, 0], sizes = [8, 16], strides = [1, 1]} : vector<16x16xf32> to vector<8x16xf32>
    %410 = vector.extract_strided_slice %359 {offsets = [8, 0], sizes = [8, 16], strides = [1, 1]} : vector<16x16xf32> to vector<8x16xf32>
    %cst_143 = arith.constant dense<0.000000e+00> : vector<8x8xf32>
    %411 = tpu.matmul %409, %410, %cst_143 {dimension_numbers = #tpu.dot_dimension_numbers<[1], [1], [0], [0], [0, 0, 1, 0], [], []>} : vector<8x16xf32>, vector<8x16xf32>, vector<8x8xf32> -> vector<8x8xf32>
    %cst_144 = arith.constant dense<0xFF800000> : vector<8xf32>
    %412 = vector.multi_reduction <maximumf>, %411, %cst_144 [1] : vector<8x8xf32> to vector<8xf32>
    %413 = vector.shape_cast %412 : vector<8xf32> to vector<8x1xf32>
    %414 = vector.broadcast %413 : vector<8x1xf32> to vector<8x8xf32>
    %415 = arith.subf %411, %414 : vector<8x8xf32>
    %416 = math.exp %415 : vector<8x8xf32>
    %cst_145 = arith.constant dense<0.000000e+00> : vector<8xf32>
    %417 = vector.multi_reduction <add>, %416, %cst_145 [1] : vector<8x8xf32> to vector<8xf32>
    %418 = vector.shape_cast %417 : vector<8xf32> to vector<8x1xf32>
    %419 = tpu.reciprocal %418 {approx = true} : vector<8x1xf32> -> vector<8x1xf32>
    %420 = vector.broadcast %419 : vector<8x1xf32> to vector<8x8xf32>
    %421 = arith.mulf %416, %420 : vector<8x8xf32>
    %422 = vector.extract_strided_slice %366 {offsets = [8, 0], sizes = [8, 256], strides = [1, 1]} : vector<16x256xf32> to vector<8x256xf32>
    %cst_146 = arith.constant dense<0.000000e+00> : vector<8x256xf32>
    %423 = tpu.matmul %408, %422, %cst_146 {dimension_numbers = #tpu.dot_dimension_numbers<[1], [0], [0], [1], [0, 0, 1, 1], [], []>} : vector<8x8xf32>, vector<8x256xf32>, vector<8x256xf32> -> vector<8x256xf32>
    %cst_147 = arith.constant dense<0.000000e+00> : vector<8x256xf32>
    %424 = tpu.matmul %421, %423, %cst_147 {dimension_numbers = #tpu.dot_dimension_numbers<[0], [0], [1], [1], [0, 1, 1, 1], [], []>} : vector<8x8xf32>, vector<8x256xf32>, vector<8x256xf32> -> vector<8x256xf32>
    %425 = tpu.concatenate %395, %424 in 0 : vector<8x256xf32>, vector<8x256xf32> -> vector<16x256xf32>
    %cst_148 = arith.constant dense<0.000000e+00> : vector<8x256xf32>
    %426 = tpu.matmul %16, %425, %cst_148 {dimension_numbers = #tpu.dot_dimension_numbers<[1], [0], [0], [1], [0, 0, 1, 1], [], []>} : vector<8x16xf32>, vector<16x256xf32>, vector<8x256xf32> -> vector<8x256xf32>
    %427 = vector.broadcast %17 : vector<8x1xf32> to vector<8x256xf32>
    %428 = arith.addf %426, %427 : vector<8x256xf32>
    %c0_149 = arith.constant 0 : index
    %c0_150 = arith.constant 0 : index
    %c0_151 = arith.constant 0 : index
    %429 = vector.load %arg11[%c0_149, %c0_150, %c0_151] : memref<1x8x256xf32, #tpu.memory_space<vmem>>, vector<1x8x256xf32>
    %430 = vector.shape_cast %429 : vector<1x8x256xf32> to vector<8x256xf32>
    %431 = vector.shape_cast %428 : vector<8x256xf32> to vector<1x8x256xf32>
    tpu.vector_store %arg11[%c0_149, %c0_150, %c0_151], %431 {strides = array<i32>} : memref<1x8x256xf32, #tpu.memory_space<vmem>>, vector<1x8x256xf32>,
    return
  }
  func.func @transform_0(%arg0: i32) -> (i32, i32, i32, i32) {
    %c0_i32 = arith.constant 0 : i32
    %c0_i32_0 = arith.constant 0 : i32
    %c0_i32_1 = arith.constant 0 : i32
    %c0_i32_2 = arith.constant 0 : i32
    return %arg0, %c0_i32, %c0_i32_0, %c0_i32_1 : i32, i32, i32, i32
  }
  func.func @transform_1(%arg0: i32) -> (i32, i32, i32, i32) {
    %c0_i32 = arith.constant 0 : i32
    %c0_i32_0 = arith.constant 0 : i32
    %c0_i32_1 = arith.constant 0 : i32
    %c0_i32_2 = arith.constant 0 : i32
    return %arg0, %c0_i32, %c0_i32_0, %c0_i32_1 : i32, i32, i32, i32
  }
  func.func @transform_2(%arg0: i32) -> (i32, i32, i32, i32) {
    %c0_i32 = arith.constant 0 : i32
    %c0_i32_0 = arith.constant 0 : i32
    %c0_i32_1 = arith.constant 0 : i32
    %c0_i32_2 = arith.constant 0 : i32
    return %arg0, %c0_i32, %c0_i32_0, %c0_i32_1 : i32, i32, i32, i32
  }
  func.func @transform_3(%arg0: i32) -> (i32, i32, i32) {
    %c0_i32 = arith.constant 0 : i32
    %c0_i32_0 = arith.constant 0 : i32
    %c0_i32_1 = arith.constant 0 : i32
    %c0_i32_2 = arith.constant 0 : i32
    return %c0_i32, %c0_i32_0, %c0_i32_1 : i32, i32, i32
  }
  func.func @transform_4(%arg0: i32) -> (i32, i32, i32) {
    %c0_i32 = arith.constant 0 : i32
    %c0_i32_0 = arith.constant 0 : i32
    %c0_i32_1 = arith.constant 0 : i32
    %c0_i32_2 = arith.constant 0 : i32
    return %c0_i32, %c0_i32_0, %c0_i32_1 : i32, i32, i32
  }
  func.func @transform_5(%arg0: i32) -> (i32, i32, i32) {
    %c0_i32 = arith.constant 0 : i32
    %c0_i32_0 = arith.constant 0 : i32
    %c0_i32_1 = arith.constant 0 : i32
    %c0_i32_2 = arith.constant 0 : i32
    return %c0_i32, %c0_i32_0, %c0_i32_1 : i32, i32, i32
  }
  func.func @transform_6(%arg0: i32) -> (i32, i32, i32) {
    %c0_i32 = arith.constant 0 : i32
    %c0_i32_0 = arith.constant 0 : i32
    %c0_i32_1 = arith.constant 0 : i32
    %c0_i32_2 = arith.constant 0 : i32
    return %c0_i32, %c0_i32_0, %c0_i32_1 : i32, i32, i32
  }
  func.func @transform_7(%arg0: i32) -> (i32, i32, i32) {
    %c0_i32 = arith.constant 0 : i32
    %c0_i32_0 = arith.constant 0 : i32
    %c0_i32_1 = arith.constant 0 : i32
    %c0_i32_2 = arith.constant 0 : i32
    return %c0_i32, %c0_i32_0, %c0_i32_1 : i32, i32, i32
  }
  func.func @transform_8(%arg0: i32) -> (i32, i32) {
    %c0_i32 = arith.constant 0 : i32
    %c0_i32_0 = arith.constant 0 : i32
    %c0_i32_1 = arith.constant 0 : i32
    return %c0_i32, %c0_i32_0 : i32, i32
  }
  func.func @transform_9(%arg0: i32) -> (i32, i32) {
    %c0_i32 = arith.constant 0 : i32
    %c0_i32_0 = arith.constant 0 : i32
    %c0_i32_1 = arith.constant 0 : i32
    return %c0_i32, %c0_i32_0 : i32, i32
  }
  func.func @transform_10(%arg0: i32) -> (i32, i32, i32) {
    %c0_i32 = arith.constant 0 : i32
    %c0_i32_0 = arith.constant 0 : i32
    %c0_i32_1 = arith.constant 0 : i32
    return %arg0, %c0_i32, %c0_i32_0 : i32, i32, i32
  }
}

</mosaic_0001>

<llo_original>
// kernel: dual_axis_forward.1
$region0: #{dual_axis_forward.1}
  #allocation0 [shape = 'u32[]', space=smem, size = 0x4, offset = 0x4, fixed_abs, tag = 'smem constant byte address 0x4 - core index']
  #allocation1 [shape = 'u32[144,128]{1,0:T(1,128)}', space=vmem, size = 0x12000, scoped, tag = 'internal scratch']
  #allocation2 [shape = 'f32[8,18,18]{2,1,0:T(8,128)}', space=vmem, size = 0x18000, scoped, tag = 'scratch operand']
  %s0 = inlined_call_operand.vmem [shape: f32[2,8,16,16], index: 0, kind: input, shape index: {}]
  %s1 = inlined_call_operand.hbm [shape: f32[2,8,16,16], index: 1, kind: input, shape index: {}]
  %s2 = inlined_call_operand.hbm [shape: f32[2,8,16,16], index: 2, kind: input, shape index: {}]
  %s3 = inlined_call_operand.hbm [shape: f32[4,8,9], index: 3, kind: input, shape index: {}]
  %s4 = inlined_call_operand.vmem [shape: f32[8,1,9], index: 4, kind: input, shape index: {}]
  %s5 = inlined_call_operand.vmem [shape: f32[5,8,1], index: 5, kind: input, shape index: {}]
  %s6 = inlined_call_operand.vmem [shape: f32[5,16,8], index: 6, kind: input, shape index: {}]
  %s7 = inlined_call_operand.vmem [shape: f32[5,16,1], index: 7, kind: input, shape index: {}]
  %s8 = inlined_call_operand.vmem [shape: f32[8,16], index: 8, kind: input, shape index: {}]
  %s9 = inlined_call_operand.vmem [shape: f32[8,1], index: 9, kind: input, shape index: {}]
  %s10 = inlined_call_operand.vmem [shape: f32[2,8,256], index: 10, kind: output, shape index: {}]
  %s11 = sld [smem:[#allocation0]]
  $region85: #{dual_axis_forward.1} parent=0
    _
  %s13 = ssub.s32 1, %s11
  %s14 = scalar_select 0, %s13, %s11
  $region1: #{dual_axis_forward.1} parent=0
    #allocation3 [shape = 'u8[131072]{0}', space=vmem, size = 0x20000, scoped, tag = 'input window, operand 1']
    #allocation4 [shape = 's32[2]{0}', space=sflag, size = 0x8, scoped, tag = 'scoped memory for dual_axis_forward.1']
    #allocation5 [shape = 'u8[131072]{0}', space=vmem, size = 0x20000, scoped, tag = 'input window, operand 2']
    #allocation6 [shape = 's32[2]{0}', space=sflag, size = 0x8, scoped, tag = 'scoped memory for dual_axis_forward.1']
    #allocation7 [shape = 'u8[16384]{0}', space=vmem, size = 0x4000, scoped, tag = 'input window, operand 3, single buffered']
    %15 = vsyncpa [#allocation4], 0
    %s16 = scalar_lea.sflag [#allocation4], 1
    %17 = vsyncpa %s16, 0
    %18 = vsyncpa [#allocation6], 0
    %s19 = scalar_lea.sflag [#allocation6], 1
    %20 = vsyncpa %s19, 0
    loop: start=0, step=1, limit=4
    $region2: #{dual_axis_forward.1} parent=1 // loop_pre_header
      _
    $region3: #{dual_axis_forward.1} parent=1 // loop_header
      %s22 = sphi 0, %s26
      %p23 = scmp.ge.s32.totalorder %s22, 4
      %s32 = sphi 0, %s34
      %s35 = sphi 0, %s32
      %s36 = sphi 0, %s35
      %s52 = sphi 0, %s36
      %s58 = sphi 0, %s60
      %s61 = sphi 0, %s58
      %s62 = sphi 0, %s61
      %s78 = sphi 0, %s62
      %s84 = sphi 0, %s86
      %s87 = sphi 0, %s84
      %s88 = sphi 0, %s87
      %s104 = sphi 0, %s88
      %s108 = sphi 0, %s108
      %s110 = sphi 0, %s108
      %s111 = sphi 0, %s110
      %s125 = sphi 0, %s111
      %s129 = sphi 0, %s129
      %s131 = sphi 0, %s129
      %s132 = sphi 0, %s131
      %s146 = sphi 0, %s132
      %s150 = sphi 0, %s150
      %s152 = sphi 0, %s150
      %s153 = sphi 0, %s152
      %s167 = sphi 0, %s153
      %s171 = sphi 0, %s171
      %s173 = sphi 0, %s171
      %s174 = sphi 0, %s173
      %s188 = sphi 0, %s174
      %s192 = sphi 0, %s192
      %s194 = sphi 0, %s192
      %s195 = sphi 0, %s194
      %s209 = sphi 0, %s195
      %s213 = sphi 0, %s213
      %s215 = sphi 0, %s213
      %s216 = sphi 0, %s215
      %s230 = sphi 0, %s216
      %s234 = sphi 0, %s234
      %s236 = sphi 0, %s234
      %s237 = sphi 0, %s236
      %s251 = sphi 0, %s237
      %s257 = sphi 0, %s259
      %s260 = sphi 0, %s257
      %s261 = sphi 0, %s260
      %s277 = sphi 0, %s261
    $region4: #{dual_axis_forward.1} parent=1 // loop_header_branch
      %25 = sbr.rel (%p23) target = $region8
    $region5: #{dual_axis_forward.1} parent=1 // loop_body
      %s27 = ssub.s32 %s22, 1
      %s28 = ssub.s32 %s22, 2
      %s29 = sadd.s32 %s22, 1
      %s30 = ssub.s32 %s22, %s29
      %p31 = scmp.eq.s32.totalorder %s30, 0
      %s33 = sadd.s32 %s32, 1
      %s34 = scalar_select %p31, %s32, %s33
      %p37 = pneg %p31
      %p38 = scmp.eq.s32.totalorder %s22, 1
      %p39 = por %p37, %p38
      %p40 = scmp.ne.s32.totalorder %s32, %s35
      %p41 = scmp.eq.s32.totalorder %s22, 0
      %p42 = por %p40, %p41
      %p43 = scmp.ne.s32.totalorder %s32, %s35
      %p44 = scmp.eq.s32.totalorder %s27, 1
      %p45 = por %p43, %p44
      %p46 = scmp.ne.s32.totalorder %s35, %s36
      %p47 = scmp.eq.s32.totalorder %s27, 0
      %p48 = por %p46, %p47
      %p49 = scmp.ne.s32.totalorder %s35, %s36
      %p50 = scmp.eq.s32.totalorder %s28, 1
      %p51 = por %p49, %p50
      %p53 = scmp.ne.s32.totalorder %s36, %s52
      %p54 = scmp.eq.s32.totalorder %s28, 0
      %p55 = por %p53, %p54
      %s56 = ssub.s32 %s22, %s29
      %p57 = scmp.eq.s32.totalorder %s56, 0
      %s59 = sadd.s32 %s58, 1
      %s60 = scalar_select %p57, %s58, %s59
      %p63 = pneg %p57
      %p64 = scmp.eq.s32.totalorder %s22, 1
      %p65 = por %p63, %p64
      %p66 = scmp.ne.s32.totalorder %s58, %s61
      %p67 = scmp.eq.s32.totalorder %s22, 0
      %p68 = por %p66, %p67
      %p69 = scmp.ne.s32.totalorder %s58, %s61
      %p70 = scmp.eq.s32.totalorder %s27, 1
      %p71 = por %p69, %p70
      %p72 = scmp.ne.s32.totalorder %s61, %s62
      %p73 = scmp.eq.s32.totalorder %s27, 0
      %p74 = por %p72, %p73
      %p75 = scmp.ne.s32.totalorder %s61, %s62
      %p76 = scmp.eq.s32.totalorder %s28, 1
      %p77 = por %p75, %p76
      %p79 = scmp.ne.s32.totalorder %s62, %s78
      %p80 = scmp.eq.s32.totalorder %s28, 0
      %p81 = por %p79, %p80
      %s82 = ssub.s32 %s22, %s29
      %p83 = scmp.eq.s32.totalorder %s82, 0
      %s85 = sadd.s32 %s84, 1
      %s86 = scalar_select %p83, %s84, %s85
      %p89 = pneg %p83
      %p90 = scmp.eq.s32.totalorder %s22, 1
      %p91 = por %p89, %p90
      %p92 = scmp.ne.s32.totalorder %s84, %s87
      %p93 = scmp.eq.s32.totalorder %s22, 0
      %p94 = por %p92, %p93
      %p95 = scmp.ne.s32.totalorder %s84, %s87
      %p96 = scmp.eq.s32.totalorder %s27, 1
      %p97 = por %p95, %p96
      %p98 = scmp.ne.s32.totalorder %s87, %s88
      %p99 = scmp.eq.s32.totalorder %s27, 0
      %p100 = por %p98, %p99
      %p101 = scmp.ne.s32.totalorder %s87, %s88
      %p102 = scmp.eq.s32.totalorder %s28, 1
      %p103 = por %p101, %p102
      %p105 = scmp.ne.s32.totalorder %s88, %s104
      %p106 = scmp.eq.s32.totalorder %s28, 0
      %p107 = por %p105, %p106
      %s109 = sadd.s32 %s108, 1
      %p112 = scmp.eq.s32.totalorder %s22, 1
      %p113 = scmp.ne.s32.totalorder %s108, %s110
      %p114 = scmp.eq.s32.totalorder %s22, 0
      %p115 = por %p113, %p114
      %p116 = scmp.ne.s32.totalorder %s108, %s110
      %p117 = scmp.eq.s32.totalorder %s27, 1
      %p118 = por %p116, %p117
      %p119 = scmp.ne.s32.totalorder %s110, %s111
      %p120 = scmp.eq.s32.totalorder %s27, 0
      %p121 = por %p119, %p120
      %p122 = scmp.ne.s32.totalorder %s110, %s111
      %p123 = scmp.eq.s32.totalorder %s28, 1
      %p124 = por %p122, %p123
      %p126 = scmp.ne.s32.totalorder %s111, %s125
      %p127 = scmp.eq.s32.totalorder %s28, 0
      %p128 = por %p126, %p127
      %s130 = sadd.s32 %s129, 1
      %p133 = scmp.eq.s32.totalorder %s22, 1
      %p134 = scmp.ne.s32.totalorder %s129, %s131
      %p135 = scmp.eq.s32.totalorder %s22, 0
      %p136 = por %p134, %p135
      %p137 = scmp.ne.s32.totalorder %s129, %s131
      %p138 = scmp.eq.s32.totalorder %s27, 1
      %p139 = por %p137, %p138
      %p140 = scmp.ne.s32.totalorder %s131, %s132
      %p141 = scmp.eq.s32.totalorder %s27, 0
      %p142 = por %p140, %p141
      %p143 = scmp.ne.s32.totalorder %s131, %s132
      %p144 = scmp.eq.s32.totalorder %s28, 1
      %p145 = por %p143, %p144
      %p147 = scmp.ne.s32.totalorder %s132, %s146
      %p148 = scmp.eq.s32.totalorder %s28, 0
      %p149 = por %p147, %p148
      %s151 = sadd.s32 %s150, 1
      %p154 = scmp.eq.s32.totalorder %s22, 1
      %p155 = scmp.ne.s32.totalorder %s150, %s152
      %p156 = scmp.eq.s32.totalorder %s22, 0
      %p157 = por %p155, %p156
      %p158 = scmp.ne.s32.totalorder %s150, %s152
      %p159 = scmp.eq.s32.totalorder %s27, 1
      %p160 = por %p158, %p159
      %p161 = scmp.ne.s32.totalorder %s152, %s153
      %p162 = scmp.eq.s32.totalorder %s27, 0
      %p163 = por %p161, %p162
      %p164 = scmp.ne.s32.totalorder %s152, %s153
      %p165 = scmp.eq.s32.totalorder %s28, 1
      %p166 = por %p164, %p165
      %p168 = scmp.ne.s32.totalorder %s153, %s167
      %p169 = scmp.eq.s32.totalorder %s28, 0
      %p170 = por %p168, %p169
      %s172 = sadd.s32 %s171, 1
      %p175 = scmp.eq.s32.totalorder %s22, 1
      %p176 = scmp.ne.s32.totalorder %s171, %s173
      %p177 = scmp.eq.s32.totalorder %s22, 0
      %p178 = por %p176, %p177
      %p179 = scmp.ne.s32.totalorder %s171, %s173
      %p180 = scmp.eq.s32.totalorder %s27, 1
      %p181 = por %p179, %p180
      %p182 = scmp.ne.s32.totalorder %s173, %s174
      %p183 = scmp.eq.s32.totalorder %s27, 0
      %p184 = por %p182, %p183
      %p185 = scmp.ne.s32.totalorder %s173, %s174
      %p186 = scmp.eq.s32.totalorder %s28, 1
      %p187 = por %p185, %p186
      %p189 = scmp.ne.s32.totalorder %s174, %s188
      %p190 = scmp.eq.s32.totalorder %s28, 0
      %p191 = por %p189, %p190
      %s193 = sadd.s32 %s192, 1
      %p196 = scmp.eq.s32.totalorder %s22, 1
      %p197 = scmp.ne.s32.totalorder %s192, %s194
      %p198 = scmp.eq.s32.totalorder %s22, 0
      %p199 = por %p197, %p198
      %p200 = scmp.ne.s32.totalorder %s192, %s194
      %p201 = scmp.eq.s32.totalorder %s27, 1
      %p202 = por %p200, %p201
      %p203 = scmp.ne.s32.totalorder %s194, %s195
      %p204 = scmp.eq.s32.totalorder %s27, 0
      %p205 = por %p203, %p204
      %p206 = scmp.ne.s32.totalorder %s194, %s195
      %p207 = scmp.eq.s32.totalorder %s28, 1
      %p208 = por %p206, %p207
      %p210 = scmp.ne.s32.totalorder %s195, %s209
      %p211 = scmp.eq.s32.totalorder %s28, 0
      %p212 = por %p210, %p211
      %s214 = sadd.s32 %s213, 1
      %p217 = scmp.eq.s32.totalorder %s22, 1
      %p218 = scmp.ne.s32.totalorder %s213, %s215
      %p219 = scmp.eq.s32.totalorder %s22, 0
      %p220 = por %p218, %p219
      %p221 = scmp.ne.s32.totalorder %s213, %s215
      %p222 = scmp.eq.s32.totalorder %s27, 1
      %p223 = por %p221, %p222
      %p224 = scmp.ne.s32.totalorder %s215, %s216
      %p225 = scmp.eq.s32.totalorder %s27, 0
      %p226 = por %p224, %p225
      %p227 = scmp.ne.s32.totalorder %s215, %s216
      %p228 = scmp.eq.s32.totalorder %s28, 1
      %p229 = por %p227, %p228
      %p231 = scmp.ne.s32.totalorder %s216, %s230
      %p232 = scmp.eq.s32.totalorder %s28, 0
      %p233 = por %p231, %p232
      %s235 = sadd.s32 %s234, 1
      %p238 = scmp.eq.s32.totalorder %s22, 1
      %p239 = scmp.ne.s32.totalorder %s234, %s236
      %p240 = scmp.eq.s32.totalorder %s22, 0
      %p241 = por %p239, %p240
      %p242 = scmp.ne.s32.totalorder %s234, %s236
      %p243 = scmp.eq.s32.totalorder %s27, 1
      %p244 = por %p242, %p243
      %p245 = scmp.ne.s32.totalorder %s236, %s237
      %p246 = scmp.eq.s32.totalorder %s27, 0
      %p247 = por %p245, %p246
      %p248 = scmp.ne.s32.totalorder %s236, %s237
      %p249 = scmp.eq.s32.totalorder %s28, 1
      %p250 = por %p248, %p249
      %p252 = scmp.ne.s32.totalorder %s237, %s251
      %p253 = scmp.eq.s32.totalorder %s28, 0
      %p254 = por %p252, %p253
      %s255 = ssub.s32 %s22, %s29
      %p256 = scmp.eq.s32.totalorder %s255, 0
      %s258 = sadd.s32 %s257, 1
      %s259 = scalar_select %p256, %s257, %s258
      %p262 = pneg %p256
      %p263 = scmp.eq.s32.totalorder %s22, 1
      %p264 = por %p262, %p263
      %p265 = scmp.ne.s32.totalorder %s257, %s260
      %p266 = scmp.eq.s32.totalorder %s22, 0
      %p267 = por %p265, %p266
      %p268 = scmp.ne.s32.totalorder %s257, %s260
      %p269 = scmp.eq.s32.totalorder %s27, 1
      %p270 = por %p268, %p269
      %p271 = scmp.ne.s32.totalorder %s260, %s261
      %p272 = scmp.eq.s32.totalorder %s27, 0
      %p273 = por %p271, %p272
      %p274 = scmp.ne.s32.totalorder %s260, %s261
      %p275 = scmp.eq.s32.totalorder %s28, 1
      %p276 = por %p274, %p275
      %p278 = scmp.ne.s32.totalorder %s261, %s277
      %p279 = scmp.eq.s32.totalorder %s28, 0
      %p280 = por %p278, %p279
      %p281 = scmp.le.s32.totalorder 1, %s22
      %p282 = scmp.lt.s32.totalorder %s22, 3
      %p283 = pnand %p281, %p282
      %p284 = pneg %p283
      // Predicated region
      $region9: #{dual_axis_forward.1} parent=5 // pred_check
        _
      $region10: #{dual_axis_forward.1} parent=5 // pred_check_branch
        %286 = sbr.rel (%p283) target = $region12
      $region11: #{dual_axis_forward.1} parent=5 // pred_region
        %s287 = ssub.s32 %s22, 1
        // Predicated region
        $region13: #{dual_axis_forward.1} parent=11 // pred_check
          %p288 = pneg %p121
        $region14: #{dual_axis_forward.1} parent=11 // pred_check_branch
          %290 = sbr.rel (%p288) target = $region16
        $region15: #{dual_axis_forward.1} parent=11 // pred_region
          %s292 = ssub.s32 512, 512
          %293 = vsyncadd [#allocation6], %s292
          %s294 = sshll.u32 [#allocation7], 4
          %s295 = int_to_ptr.vmem [resolvable:$true] %s294
          %300 = dma.hbm_to_vmem [thread:$0]  %s3, 512, %s295, [#allocation6], 128, 128, 8
        $region16: #{dual_axis_forward.1} parent=11 // pred_fallthru
          _
        // Predicated region
        $region17: #{dual_axis_forward.1} parent=11 // pred_check
          %p301 = pneg %p142
        $region18: #{dual_axis_forward.1} parent=11 // pred_check_branch
          %303 = sbr.rel (%p301) target = $region20
        $region19: #{dual_axis_forward.1} parent=11 // pred_region
          _
        $region20: #{dual_axis_forward.1} parent=11 // pred_fallthru
          _
        // Predicated region
        $region21: #{dual_axis_forward.1} parent=11 // pred_check
          %p304 = pneg %p163
        $region22: #{dual_axis_forward.1} parent=11 // pred_check_branch
          %306 = sbr.rel (%p304) target = $region24
        $region23: #{dual_axis_forward.1} parent=11 // pred_region
          _
        $region24: #{dual_axis_forward.1} parent=11 // pred_fallthru
          _
        // Predicated region
        $region25: #{dual_axis_forward.1} parent=11 // pred_check
          %p307 = pneg %p184
        $region26: #{dual_axis_forward.1} parent=11 // pred_check_branch
          %309 = sbr.rel (%p307) target = $region28
        $region27: #{dual_axis_forward.1} parent=11 // pred_region
          _
        $region28: #{dual_axis_forward.1} parent=11 // pred_fallthru
          _
        // Predicated region
        $region29: #{dual_axis_forward.1} parent=11 // pred_check
          %p310 = pneg %p205
        $region30: #{dual_axis_forward.1} parent=11 // pred_check_branch
          %312 = sbr.rel (%p310) target = $region32
        $region31: #{dual_axis_forward.1} parent=11 // pred_region
          _
        $region32: #{dual_axis_forward.1} parent=11 // pred_fallthru
          _
        // Predicated region
        $region33: #{dual_axis_forward.1} parent=11 // pred_check
          %p313 = pneg %p226
        $region34: #{dual_axis_forward.1} parent=11 // pred_check_branch
          %315 = sbr.rel (%p313) target = $region36
        $region35: #{dual_axis_forward.1} parent=11 // pred_region
          _
        $region36: #{dual_axis_forward.1} parent=11 // pred_fallthru
          _
        // Predicated region
        $region37: #{dual_axis_forward.1} parent=11 // pred_check
          %p316 = pneg %p247
        $region38: #{dual_axis_forward.1} parent=11 // pred_check_branch
          %318 = sbr.rel (%p316) target = $region40
        $region39: #{dual_axis_forward.1} parent=11 // pred_region
          _
        $region40: #{dual_axis_forward.1} parent=11 // pred_fallthru
          _
      $region12: #{dual_axis_forward.1} parent=5 // pred_fallthru
        _
      %p319 = scmp.lt.s32.totalorder %s22, 2
      // Predicated region
      $region41: #{dual_axis_forward.1} parent=5 // pred_check
        %p320 = pneg %p319
      $region42: #{dual_axis_forward.1} parent=5 // pred_check_branch
        %322 = sbr.rel (%p320) target = $region44
      $region43: #{dual_axis_forward.1} parent=5 // pred_region
        // Predicated region
        $region45: #{dual_axis_forward.1} parent=43 // pred_check
          %p323 = pneg %p42
        $region46: #{dual_axis_forward.1} parent=43 // pred_check_branch
          %325 = sbr.rel (%p323) target = $region48
        $region47: #{dual_axis_forward.1} parent=43 // pred_region
          %p326 = scmp.lt.s32.totalorder %s22, 1
          %s327 = scalar_select %p326, %s22, 1
          %s328 = smul.addr %s327, 16
          %s329 = smul.addr %s328, 8
          %s330 = scalar_lea.vmem %s0, %s329
        $region48: #{dual_axis_forward.1} parent=43 // pred_fallthru
          _
        // Predicated region
        $region49: #{dual_axis_forward.1} parent=43 // pred_check
          %p331 = pneg %p68
        $region50: #{dual_axis_forward.1} parent=43 // pred_check_branch
          %333 = sbr.rel (%p331) target = $region52
        $region51: #{dual_axis_forward.1} parent=43 // pred_region
          %s334 = sand.u32 %s58, 1
          %s335 = scalar_lea.sflag [#allocation4], %s334
          %s336 = sand.u32 %s58, 1
          %s337 = smul.addr %s336, 128
          %s338 = scalar_lea.vmem [#allocation3], %s337
          %s340 = ssub.s32 2048, 2048
          %341 = vsyncadd %s335, %s340
          %s342 = smul.addr %s22, 16
          %s343 = smul.addr %s342, 128
          %s344 = scalar_lea.hbm %s1, %s343
          %s345 = sshll.u32 %s338, 4
          %s346 = int_to_ptr.vmem [resolvable:$true] %s345
          %351 = dma.hbm_to_vmem [thread:$0]  %s344, 2048, %s346, %s335, 128, 128, 8
        $region52: #{dual_axis_forward.1} parent=43 // pred_fallthru
          _
        // Predicated region
        $region53: #{dual_axis_forward.1} parent=43 // pred_check
          %p352 = pneg %p94
        $region54: #{dual_axis_forward.1} parent=43 // pred_check_branch
          %354 = sbr.rel (%p352) target = $region56
        $region55: #{dual_axis_forward.1} parent=43 // pred_region
          %s355 = sand.u32 %s22, 1
          %s356 = scalar_lea.sflag [#allocation6], %s355
          %s357 = sand.u32 %s84, 1
          %s358 = smul.addr %s357, 128
          %s359 = scalar_lea.vmem [#allocation5], %s358
          %s361 = ssub.s32 2048, 2048
          %362 = vsyncadd %s356, %s361
          %s363 = smul.addr %s22, 16
          %s364 = smul.addr %s363, 128
          %s365 = scalar_lea.hbm %s2, %s364
          %s366 = sshll.u32 %s359, 4
          %s367 = int_to_ptr.vmem [resolvable:$true] %s366
          %372 = dma.hbm_to_vmem [thread:$0]  %s365, 2048, %s367, %s356, 128, 128, 8
        $region56: #{dual_axis_forward.1} parent=43 // pred_fallthru
          _
      $region44: #{dual_axis_forward.1} parent=5 // pred_fallthru
        _
      %p373 = scmp.le.s32.totalorder 1, %s22
      %p374 = scmp.lt.s32.totalorder %s22, 3
      %p375 = pnand %p373, %p374
      %p376 = pneg %p375
      // Predicated region
      $region57: #{dual_axis_forward.1} parent=5 // pred_check
        _
      $region58: #{dual_axis_forward.1} parent=5 // pred_check_branch
        %378 = sbr.rel (%p375) target = $region60
      $region59: #{dual_axis_forward.1} parent=5 // pred_region
        %s379 = ssub.s32 %s22, 1
        %s380 = sand.u32 %s61, 1
        %s381 = scalar_lea.sflag [#allocation4], %s380
        %s382 = sand.u32 %s61, 1
        %s383 = smul.addr %s382, 128
        %s384 = scalar_lea.vmem [#allocation3], %s383
        // Predicated region
        $region61: #{dual_axis_forward.1} parent=59 // pred_check
          %p385 = pneg %p74
        $region62: #{dual_axis_forward.1} parent=59 // pred_check_branch
          %387 = sbr.rel (%p385) target = $region64
        $region63: #{dual_axis_forward.1} parent=59 // pred_region
          %388 = dma.done %s381, 2048
        $region64: #{dual_axis_forward.1} parent=59 // pred_fallthru
          _
        %s389 = sand.u32 %s27, 1
        %s390 = scalar_lea.sflag [#allocation6], %s389
        %s391 = sand.u32 %s87, 1
        %s392 = smul.addr %s391, 128
        %s393 = scalar_lea.vmem [#allocation5], %s392
        // Predicated region
        $region65: #{dual_axis_forward.1} parent=59 // pred_check
          %p394 = pneg %p100
        $region66: #{dual_axis_forward.1} parent=59 // pred_check_branch
          %396 = sbr.rel (%p394) target = $region68
        $region67: #{dual_axis_forward.1} parent=59 // pred_region
          %397 = dma.done %s390, 2048
        $region68: #{dual_axis_forward.1} parent=59 // pred_fallthru
          _
        // Predicated region
        $region69: #{dual_axis_forward.1} parent=59 // pred_check
          %p398 = pneg %p121
        $region70: #{dual_axis_forward.1} parent=59 // pred_check_branch
          %400 = sbr.rel (%p398) target = $region72
        $region71: #{dual_axis_forward.1} parent=59 // pred_region
          %401 = dma.done [#allocation6], 512
        $region72: #{dual_axis_forward.1} parent=59 // pred_fallthru
          _
        %p402 = scmp.lt.s32.totalorder %s27, 1
        %s403 = scalar_select %p402, %s27, 1
        %s404 = smul.addr %s403, 16
        %s405 = smul.addr %s404, 8
        %s406 = scalar_lea.vmem %s0, %s405
        %p407 = pneg %p48
        %p408 = pneg %p45
        %s409 = sand.u32 %s61, 1
        %s410 = scalar_lea.sflag [#allocation4], %s409
        %s411 = sand.u32 %s61, 1
        %s412 = smul.addr %s411, 128
        %s413 = scalar_lea.vmem [#allocation3], %s412
        %p414 = pneg %p74
        %p415 = pneg %p71
        %s416 = sand.u32 %s27, 1
        %s417 = scalar_lea.sflag [#allocation6], %s416
        %s418 = sand.u32 %s87, 1
        %s419 = smul.addr %s418, 128
        %s420 = scalar_lea.vmem [#allocation5], %s419
        %p421 = pneg %p100
        %p422 = pneg %p97
        %p423 = pneg %p121
        %p424 = pneg %p118
        %p425 = pneg %p142
        %p426 = pneg %p139
        %p427 = pneg %p163
        %p428 = pneg %p160
        %p429 = pneg %p184
        %p430 = pneg %p181
        %p431 = pneg %p205
        %p432 = pneg %p202
        %p433 = pneg %p226
        %p434 = pneg %p223
        %p435 = pneg %p247
        %p436 = pneg %p244
        %p437 = pneg %p273
        %p438 = pneg %p270
        %p439 = scmp.lt.s32.totalorder %s27, 1
        %s440 = scalar_select %p439, %s27, 1
        %s441 = smul.addr %s440, 2
        %s442 = smul.addr %s441, 8
        %s443 = scalar_lea.vmem %s10, %s442
        %p444 = scmp.lt.s32.totalorder %s27, 1
        %s445 = scalar_select %p444, %s27, 1
        %s446 = smul.addr %s445, 16
        %s447 = smul.addr %s446, 8
        %s448 = scalar_lea.vmem %s0, %s447
        %p449 = scmp.lt.s32.totalorder %s27, 1
        %s450 = scalar_select %p449, %s27, 1
        %s451 = smul.addr %s450, 2
        %s452 = smul.addr %s451, 8
        %s453 = scalar_lea.vmem %s10, %s452
        %v454 = vlaneseq
        %v455 = vand.u32 %v454, 127
        %v456 = vlaneseq
        %v457 = vshrl.u32 %v456, 7
        %v458 = vadd.s32 %v457, 8
        %v459 = vadd.s32 %v457, 1
        %v460 = vadd.s32 %v458, 1
        %vm461 = vcmp.eq.s32.totalorder %v455, %v459
        %vm462 = vcmp.eq.s32.totalorder %v455, %v460
        %v463 = vsel %vm461, 1, 0
        %v464 = vsel %vm462, 1, 0
        %v465 = vcvt.s32.f32 %v463
        %v466 = vcvt.s32.f32 %v464
        %v467 = vsub.s32 %v457, 1
        %v468 = vsub.s32 %v458, 1
        %vm469 = vcmp.eq.s32.totalorder %v455, %v467
        %vm470 = vcmp.eq.s32.totalorder %v455, %v468
        %v471 = vsel %vm469, 1, 0
        %v472 = vsel %vm470, 1, 0
        %v473 = vcvt.s32.f32 %v471
        %v474 = vcvt.s32.f32 %v472
        %vm475 = vcmask 146432
        %476 = vst.msk [vmem:[#allocation2] sm:$0xff] %vm475, 0.0
        %477 = vst.msk [vmem:[#allocation2 + $0x8] sm:$0xff] %vm475, 0.0
        %vm478 = vcmask 140288
        %479 = vst.msk [vmem:[#allocation2 + $0x10] sm:$0x3] %vm478, 0.0
        %480 = vst.msk [vmem:[#allocation2 + $0x18] sm:$0xff] %vm475, 0.0
        %481 = vst.msk [vmem:[#allocation2 + $0x20] sm:$0xff] %vm475, 0.0
        %482 = vst.msk [vmem:[#allocation2 + $0x28] sm:$0x3] %vm478, 0.0
        %483 = vst.msk [vmem:[#allocation2 + $0x30] sm:$0xff] %vm475, 0.0
        %484 = vst.msk [vmem:[#allocation2 + $0x38] sm:$0xff] %vm475, 0.0
        %485 = vst.msk [vmem:[#allocation2 + $0x40] sm:$0x3] %vm478, 0.0
        %486 = vst.msk [vmem:[#allocation2 + $0x48] sm:$0xff] %vm475, 0.0
        %487 = vst.msk [vmem:[#allocation2 + $0x50] sm:$0xff] %vm475, 0.0
        %488 = vst.msk [vmem:[#allocation2 + $0x58] sm:$0x3] %vm478, 0.0
        %489 = vst.msk [vmem:[#allocation2 + $0x60] sm:$0xff] %vm475, 0.0
        %490 = vst.msk [vmem:[#allocation2 + $0x68] sm:$0xff] %vm475, 0.0
        %491 = vst.msk [vmem:[#allocation2 + $0x70] sm:$0x3] %vm478, 0.0
        %492 = vst.msk [vmem:[#allocation2 + $0x78] sm:$0xff] %vm475, 0.0
        %493 = vst.msk [vmem:[#allocation2 + $0x80] sm:$0xff] %vm475, 0.0
        %494 = vst.msk [vmem:[#allocation2 + $0x88] sm:$0x3] %vm478, 0.0
        %495 = vst.msk [vmem:[#allocation2 + $0x90] sm:$0xff] %vm475, 0.0
        %496 = vst.msk [vmem:[#allocation2 + $0x98] sm:$0xff] %vm475, 0.0
        %497 = vst.msk [vmem:[#allocation2 + $0xa0] sm:$0x3] %vm478, 0.0
        %498 = vst.msk [vmem:[#allocation2 + $0xa8] sm:$0xff] %vm475, 0.0
        %499 = vst.msk [vmem:[#allocation2 + $0xb0] sm:$0xff] %vm475, 0.0
        %500 = vst.msk [vmem:[#allocation2 + $0xb8] sm:$0x3] %vm478, 0.0
        %v501 = vld [vmem:[%s8] sm:$0xff]
        %v502 = vld [vmem:[%s9] sm:$0xff]
        %v503 = vld [vmem:[%s4] sm:$0x1]
        %v504 = vld [vmem:[%s4 + $0x1] sm:$0x1]
        %v505 = vld [vmem:[%s4 + $0x2] sm:$0x1]
        %v506 = vld [vmem:[%s4 + $0x3] sm:$0x1]
        %v507 = vld [vmem:[%s4 + $0x4] sm:$0x1]
        %v508 = vld [vmem:[%s4 + $0x5] sm:$0x1]
        %v509 = vld [vmem:[%s4 + $0x6] sm:$0x1]
        %v510 = vld [vmem:[%s4 + $0x7] sm:$0x1]
        %v511 = vld [vmem:[%s448] sm:$0xff]
        %v512 = vld [vmem:[%s448 + $0x8] sm:$0xff]
        %v513 = vld [vmem:[%s448 + $0x10] sm:$0xff]
        %v514 = vld [vmem:[%s448 + $0x18] sm:$0xff]
        %v515 = vld [vmem:[%s448 + $0x20] sm:$0xff]
        %v516 = vld [vmem:[%s448 + $0x28] sm:$0xff]
        %v517 = vld [vmem:[%s448 + $0x30] sm:$0xff]
        %v518 = vld [vmem:[%s448 + $0x38] sm:$0xff]
        %v519 = vld [vmem:[%s448 + $0x40] sm:$0xff]
        %v520 = vld [vmem:[%s448 + $0x48] sm:$0xff]
        %v521 = vld [vmem:[%s448 + $0x50] sm:$0xff]
        %v522 = vld [vmem:[%s448 + $0x58] sm:$0xff]
        %v523 = vld [vmem:[%s448 + $0x60] sm:$0xff]
        %v524 = vld [vmem:[%s448 + $0x68] sm:$0xff]
        %v525 = vld [vmem:[%s448 + $0x70] sm:$0xff]
        %v526 = vld [vmem:[%s448 + $0x78] sm:$0xff]
        %v527 = vld [vmem:[%s384] sm:$0xff]
        %v528 = vld [vmem:[%s384 + $0x8] sm:$0xff]
        %v529 = vld [vmem:[%s384 + $0x10] sm:$0xff]
        %v530 = vld [vmem:[%s384 + $0x18] sm:$0xff]
        %v531 = vld [vmem:[%s384 + $0x20] sm:$0xff]
        %v532 = vld [vmem:[%s384 + $0x28] sm:$0xff]
        %v533 = vld [vmem:[%s384 + $0x30] sm:$0xff]
        %v534 = vld [vmem:[%s384 + $0x38] sm:$0xff]
        %v535 = vld [vmem:[%s384 + $0x40] sm:$0xff]
        %v536 = vld [vmem:[%s384 + $0x48] sm:$0xff]
        %v537 = vld [vmem:[%s384 + $0x50] sm:$0xff]
        %v538 = vld [vmem:[%s384 + $0x58] sm:$0xff]
        %v539 = vld [vmem:[%s384 + $0x60] sm:$0xff]
        %v540 = vld [vmem:[%s384 + $0x68] sm:$0xff]
        %v541 = vld [vmem:[%s384 + $0x70] sm:$0xff]
        %v542 = vld [vmem:[%s384 + $0x78] sm:$0xff]
        %v543 = vld [vmem:[%s393] sm:$0xff]
        %v544 = vld [vmem:[%s393 + $0x8] sm:$0xff]
        %v545 = vld [vmem:[%s393 + $0x10] sm:$0xff]
        %v546 = vld [vmem:[%s393 + $0x18] sm:$0xff]
        %v547 = vld [vmem:[%s393 + $0x20] sm:$0xff]
        %v548 = vld [vmem:[%s393 + $0x28] sm:$0xff]
        %v549 = vld [vmem:[%s393 + $0x30] sm:$0xff]
        %v550 = vld [vmem:[%s393 + $0x38] sm:$0xff]
        %v551 = vld [vmem:[%s393 + $0x40] sm:$0xff]
        %v552 = vld [vmem:[%s393 + $0x48] sm:$0xff]
        %v553 = vld [vmem:[%s393 + $0x50] sm:$0xff]
        %v554 = vld [vmem:[%s393 + $0x58] sm:$0xff]
        %v555 = vld [vmem:[%s393 + $0x60] sm:$0xff]
        %v556 = vld [vmem:[%s393 + $0x68] sm:$0xff]
        %v557 = vld [vmem:[%s393 + $0x70] sm:$0xff]
        %v558 = vld [vmem:[%s393 + $0x78] sm:$0xff]
        %vm559 = vcmask 130048
        %v560 = vsel %vm559, %v511, 0.0
        %561 = vadd.xlane.f32.xlu0 %v560
        %v562 = vpop.xlane.xlu0 %561
        %v563 = vsel %vm559, %v512, 0.0
        %564 = vadd.xlane.f32.xlu0 %v563
        %v565 = vpop.xlane.xlu0 %564
        %v566 = vsel %vm559, %v513, 0.0
        %567 = vadd.xlane.f32.xlu0 %v566
        %v568 = vpop.xlane.xlu0 %567
        %v569 = vsel %vm559, %v514, 0.0
        %570 = vadd.xlane.f32.xlu0 %v569
        %v571 = vpop.xlane.xlu0 %570
        %v572 = vsel %vm559, %v515, 0.0
        %573 = vadd.xlane.f32.xlu0 %v572
        %v574 = vpop.xlane.xlu0 %573
        %v575 = vsel %vm559, %v516, 0.0
        %576 = vadd.xlane.f32.xlu0 %v575
        %v577 = vpop.xlane.xlu0 %576
        %v578 = vsel %vm559, %v517, 0.0
        %579 = vadd.xlane.f32.xlu0 %v578
        %v580 = vpop.xlane.xlu0 %579
        %v581 = vsel %vm559, %v518, 0.0
        %582 = vadd.xlane.f32.xlu0 %v581
        %v583 = vpop.xlane.xlu0 %582
        %v584 = vsel %vm559, %v519, 0.0
        %585 = vadd.xlane.f32.xlu0 %v584
        %v586 = vpop.xlane.xlu0 %585
        %v587 = vsel %vm559, %v520, 0.0
        %588 = vadd.xlane.f32.xlu0 %v587
        %v589 = vpop.xlane.xlu0 %588
        %v590 = vsel %vm559, %v521, 0.0
        %591 = vadd.xlane.f32.xlu0 %v590
        %v592 = vpop.xlane.xlu0 %591
        %v593 = vsel %vm559, %v522, 0.0
        %594 = vadd.xlane.f32.xlu0 %v593
        %v595 = vpop.xlane.xlu0 %594
        %v596 = vsel %vm559, %v523, 0.0
        %597 = vadd.xlane.f32.xlu0 %v596
        %v598 = vpop.xlane.xlu0 %597
        %v599 = vsel %vm559, %v524, 0.0
        %600 = vadd.xlane.f32.xlu0 %v599
        %v601 = vpop.xlane.xlu0 %600
        %v602 = vsel %vm559, %v525, 0.0
        %603 = vadd.xlane.f32.xlu0 %v602
        %v604 = vpop.xlane.xlu0 %603
        %v605 = vsel %vm559, %v526, 0.0
        %606 = vadd.xlane.f32.xlu0 %v605
        %v607 = vpop.xlane.xlu0 %606
        %vm608 = vcmp.lt.s32.totalorder %v455, 15
        %v609 = vsel %vm608, %v511, 0.0
        %v610 = vsel %vm608, %v512, 0.0
        %v611 = vsel %vm608, %v513, 0.0
        %v612 = vsel %vm608, %v514, 0.0
        %v613 = vsel %vm608, %v515, 0.0
        %v614 = vsel %vm608, %v516, 0.0
        %v615 = vsel %vm608, %v517, 0.0
        %v616 = vsel %vm608, %v518, 0.0
        %v617 = vsel %vm608, %v519, 0.0
        %v618 = vsel %vm608, %v520, 0.0
        %v619 = vsel %vm608, %v521, 0.0
        %v620 = vsel %vm608, %v522, 0.0
        %v621 = vsel %vm608, %v523, 0.0
        %v622 = vsel %vm608, %v524, 0.0
        %v623 = vsel %vm608, %v525, 0.0
        %v624 = vsel %vm608, %v526, 0.0
        %v625 = vsel %vm559, %v609, 0.0
        %626 = vadd.xlane.f32.xlu0 %v625
        %v627 = vpop.xlane.xlu0 %626
        %v628 = vsel %vm559, %v610, 0.0
        %629 = vadd.xlane.f32.xlu0 %v628
        %v630 = vpop.xlane.xlu0 %629
        %v631 = vsel %vm559, %v611, 0.0
        %632 = vadd.xlane.f32.xlu0 %v631
        %v633 = vpop.xlane.xlu0 %632
        %v634 = vsel %vm559, %v612, 0.0
        %635 = vadd.xlane.f32.xlu0 %v634
        %v636 = vpop.xlane.xlu0 %635
        %v637 = vsel %vm559, %v613, 0.0
        %638 = vadd.xlane.f32.xlu0 %v637
        %v639 = vpop.xlane.xlu0 %638
        %v640 = vsel %vm559, %v614, 0.0
        %641 = vadd.xlane.f32.xlu0 %v640
        %v642 = vpop.xlane.xlu0 %641
        %v643 = vsel %vm559, %v615, 0.0
        %644 = vadd.xlane.f32.xlu0 %v643
        %v645 = vpop.xlane.xlu0 %644
        %v646 = vsel %vm559, %v616, 0.0
        %647 = vadd.xlane.f32.xlu0 %v646
        %v648 = vpop.xlane.xlu0 %647
        %v649 = vsel %vm559, %v617, 0.0
        %650 = vadd.xlane.f32.xlu0 %v649
        %v651 = vpop.xlane.xlu0 %650
        %v652 = vsel %vm559, %v618, 0.0
        %653 = vadd.xlane.f32.xlu0 %v652
        %v654 = vpop.xlane.xlu0 %653
        %v655 = vsel %vm559, %v619, 0.0
        %656 = vadd.xlane.f32.xlu0 %v655
        %v657 = vpop.xlane.xlu0 %656
        %v658 = vsel %vm559, %v620, 0.0
        %659 = vadd.xlane.f32.xlu0 %v658
        %v660 = vpop.xlane.xlu0 %659
        %v661 = vsel %vm559, %v621, 0.0
        %662 = vadd.xlane.f32.xlu0 %v661
        %v663 = vpop.xlane.xlu0 %662
        %v664 = vsel %vm559, %v622, 0.0
        %665 = vadd.xlane.f32.xlu0 %v664
        %v666 = vpop.xlane.xlu0 %665
        %v667 = vsel %vm559, %v623, 0.0
        %668 = vadd.xlane.f32.xlu0 %v667
        %v669 = vpop.xlane.xlu0 %668
        %v670 = vsel %vm559, %v624, 0.0
        %671 = vadd.xlane.f32.xlu0 %v670
        %v672 = vpop.xlane.xlu0 %671
        %vm673 = vcmp.gt.s32.totalorder %v455, 0
        %v674 = vsel %vm673, %v511, 0.0
        %v675 = vsel %vm673, %v512, 0.0
        %v676 = vsel %vm673, %v513, 0.0
        %v677 = vsel %vm673, %v514, 0.0
        %v678 = vsel %vm673, %v515, 0.0
        %v679 = vsel %vm673, %v516, 0.0
        %v680 = vsel %vm673, %v517, 0.0
        %v681 = vsel %vm673, %v518, 0.0
        %v682 = vsel %vm673, %v519, 0.0
        %v683 = vsel %vm673, %v520, 0.0
        %v684 = vsel %vm673, %v521, 0.0
        %v685 = vsel %vm673, %v522, 0.0
        %v686 = vsel %vm673, %v523, 0.0
        %v687 = vsel %vm673, %v524, 0.0
        %v688 = vsel %vm673, %v525, 0.0
        %v689 = vsel %vm673, %v526, 0.0
        %v690 = vsel %vm559, %v674, 0.0
        %691 = vadd.xlane.f32.xlu0 %v690
        %v692 = vpop.xlane.xlu0 %691
        %v693 = vsel %vm559, %v675, 0.0
        %694 = vadd.xlane.f32.xlu0 %v693
        %v695 = vpop.xlane.xlu0 %694
        %v696 = vsel %vm559, %v676, 0.0
        %697 = vadd.xlane.f32.xlu0 %v696
        %v698 = vpop.xlane.xlu0 %697
        %v699 = vsel %vm559, %v677, 0.0
        %700 = vadd.xlane.f32.xlu0 %v699
        %v701 = vpop.xlane.xlu0 %700
        %v702 = vsel %vm559, %v678, 0.0
        %703 = vadd.xlane.f32.xlu0 %v702
        %v704 = vpop.xlane.xlu0 %703
        %v705 = vsel %vm559, %v679, 0.0
        %706 = vadd.xlane.f32.xlu0 %v705
        %v707 = vpop.xlane.xlu0 %706
        %v708 = vsel %vm559, %v680, 0.0
        %709 = vadd.xlane.f32.xlu0 %v708
        %v710 = vpop.xlane.xlu0 %709
        %v711 = vsel %vm559, %v681, 0.0
        %712 = vadd.xlane.f32.xlu0 %v711
        %v713 = vpop.xlane.xlu0 %712
        %v714 = vsel %vm559, %v682, 0.0
        %715 = vadd.xlane.f32.xlu0 %v714
        %v716 = vpop.xlane.xlu0 %715
        %v717 = vsel %vm559, %v683, 0.0
        %718 = vadd.xlane.f32.xlu0 %v717
        %v719 = vpop.xlane.xlu0 %718
        %v720 = vsel %vm559, %v684, 0.0
        %721 = vadd.xlane.f32.xlu0 %v720
        %v722 = vpop.xlane.xlu0 %721
        %v723 = vsel %vm559, %v685, 0.0
        %724 = vadd.xlane.f32.xlu0 %v723
        %v725 = vpop.xlane.xlu0 %724
        %v726 = vsel %vm559, %v686, 0.0
        %727 = vadd.xlane.f32.xlu0 %v726
        %v728 = vpop.xlane.xlu0 %727
        %v729 = vsel %vm559, %v687, 0.0
        %730 = vadd.xlane.f32.xlu0 %v729
        %v731 = vpop.xlane.xlu0 %730
        %v732 = vsel %vm559, %v688, 0.0
        %733 = vadd.xlane.f32.xlu0 %v732
        %v734 = vpop.xlane.xlu0 %733
        %v735 = vsel %vm559, %v689, 0.0
        %736 = vadd.xlane.f32.xlu0 %v735
        %v737 = vpop.xlane.xlu0 %736
        %v738 = vld [vmem:[#allocation7] sm:$0xff]
        %740 = vset.pattern.permute.xlu0 0
        %741 = vperm.xlu0 %740, %v738
        %v742 = vpop.permute.xlu0 %741
        %v743 = vlaneseq
        %v744 = vshrl.u32 %v743, 7
        %v745 = vsub.s32 0, %v744
        %v746 = vrot.slane %v742, %v745
        %v747 = vlaneseq
        %v748 = vshrl.u32 %v747, 7
        %v749 = vsub.s32 1, %v748
        %v750 = vrot.slane %v742, %v749
        %v751 = vlaneseq
        %v752 = vshrl.u32 %v751, 7
        %v753 = vsub.s32 2, %v752
        %v754 = vrot.slane %v742, %v753
        %v755 = vlaneseq
        %v756 = vshrl.u32 %v755, 7
        %v757 = vsub.s32 3, %v756
        %v758 = vrot.slane %v742, %v757
        %v759 = vlaneseq
        %v760 = vshrl.u32 %v759, 7
        %v761 = vsub.s32 4, %v760
        %v762 = vrot.slane %v742, %v761
        %v763 = vlaneseq
        %v764 = vshrl.u32 %v763, 7
        %v765 = vsub.s32 5, %v764
        %v766 = vrot.slane %v742, %v765
        %v767 = vlaneseq
        %v768 = vshrl.u32 %v767, 7
        %v769 = vsub.s32 6, %v768
        %v770 = vrot.slane %v742, %v769
        %v771 = vlaneseq
        %v772 = vshrl.u32 %v771, 7
        %v773 = vsub.s32 7, %v772
        %v774 = vrot.slane %v742, %v773
        %v783 = vmul.f32 %v627, %v746
        %v784 = vmul.f32 %v630, %v746
        %v785 = vmul.f32 %v633, %v750
        %v786 = vmul.f32 %v636, %v750
        %v787 = vmul.f32 %v639, %v754
        %v788 = vmul.f32 %v642, %v754
        %v789 = vmul.f32 %v645, %v758
        %v790 = vmul.f32 %v648, %v758
        %v791 = vmul.f32 %v651, %v762
        %v792 = vmul.f32 %v654, %v762
        %v793 = vmul.f32 %v657, %v766
        %v794 = vmul.f32 %v660, %v766
        %v795 = vmul.f32 %v663, %v770
        %v796 = vmul.f32 %v666, %v770
        %v797 = vmul.f32 %v669, %v774
        %v798 = vmul.f32 %v672, %v774
        %799 = vset.pattern.permute.xlu0 1
        %800 = vperm.xlu0 %799, %v738
        %v801 = vpop.permute.xlu0 %800
        %v802 = vlaneseq
        %v803 = vshrl.u32 %v802, 7
        %v804 = vsub.s32 0, %v803
        %v805 = vrot.slane %v801, %v804
        %v806 = vlaneseq
        %v807 = vshrl.u32 %v806, 7
        %v808 = vsub.s32 1, %v807
        %v809 = vrot.slane %v801, %v808
        %v810 = vlaneseq
        %v811 = vshrl.u32 %v810, 7
        %v812 = vsub.s32 2, %v811
        %v813 = vrot.slane %v801, %v812
        %v814 = vlaneseq
        %v815 = vshrl.u32 %v814, 7
        %v816 = vsub.s32 3, %v815
        %v817 = vrot.slane %v801, %v816
        %v818 = vlaneseq
        %v819 = vshrl.u32 %v818, 7
        %v820 = vsub.s32 4, %v819
        %v821 = vrot.slane %v801, %v820
        %v822 = vlaneseq
        %v823 = vshrl.u32 %v822, 7
        %v824 = vsub.s32 5, %v823
        %v825 = vrot.slane %v801, %v824
        %v826 = vlaneseq
        %v827 = vshrl.u32 %v826, 7
        %v828 = vsub.s32 6, %v827
        %v829 = vrot.slane %v801, %v828
        %v830 = vlaneseq
        %v831 = vshrl.u32 %v830, 7
        %v832 = vsub.s32 7, %v831
        %v833 = vrot.slane %v801, %v832
        %v842 = vmul.f32 %v562, %v805
        %v843 = vmul.f32 %v565, %v805
        %v844 = vmul.f32 %v568, %v809
        %v845 = vmul.f32 %v571, %v809
        %v846 = vmul.f32 %v574, %v813
        %v847 = vmul.f32 %v577, %v813
        %v848 = vmul.f32 %v580, %v817
        %v849 = vmul.f32 %v583, %v817
        %v850 = vmul.f32 %v586, %v821
        %v851 = vmul.f32 %v589, %v821
        %v852 = vmul.f32 %v592, %v825
        %v853 = vmul.f32 %v595, %v825
        %v854 = vmul.f32 %v598, %v829
        %v855 = vmul.f32 %v601, %v829
        %v856 = vmul.f32 %v604, %v833
        %v857 = vmul.f32 %v607, %v833
        %v858 = vadd.f32 %v783, %v842
        %v859 = vadd.f32 %v784, %v843
        %v860 = vadd.f32 %v785, %v844
        %v861 = vadd.f32 %v786, %v845
        %v862 = vadd.f32 %v787, %v846
        %v863 = vadd.f32 %v788, %v847
        %v864 = vadd.f32 %v789, %v848
        %v865 = vadd.f32 %v790, %v849
        %v866 = vadd.f32 %v791, %v850
        %v867 = vadd.f32 %v792, %v851
        %v868 = vadd.f32 %v793, %v852
        %v869 = vadd.f32 %v794, %v853
        %v870 = vadd.f32 %v795, %v854
        %v871 = vadd.f32 %v796, %v855
        %v872 = vadd.f32 %v797, %v856
        %v873 = vadd.f32 %v798, %v857
        %874 = vset.pattern.permute.xlu0 2
        %875 = vperm.xlu0 %874, %v738
        %v876 = vpop.permute.xlu0 %875
        %v877 = vlaneseq
        %v878 = vshrl.u32 %v877, 7
        %v879 = vsub.s32 0, %v878
        %v880 = vrot.slane %v876, %v879
        %v881 = vlaneseq
        %v882 = vshrl.u32 %v881, 7
        %v883 = vsub.s32 1, %v882
        %v884 = vrot.slane %v876, %v883
        %v885 = vlaneseq
        %v886 = vshrl.u32 %v885, 7
        %v887 = vsub.s32 2, %v886
        %v888 = vrot.slane %v876, %v887
        %v889 = vlaneseq
        %v890 = vshrl.u32 %v889, 7
        %v891 = vsub.s32 3, %v890
        %v892 = vrot.slane %v876, %v891
        %v893 = vlaneseq
        %v894 = vshrl.u32 %v893, 7
        %v895 = vsub.s32 4, %v894
        %v896 = vrot.slane %v876, %v895
        %v897 = vlaneseq
        %v898 = vshrl.u32 %v897, 7
        %v899 = vsub.s32 5, %v898
        %v900 = vrot.slane %v876, %v899
        %v901 = vlaneseq
        %v902 = vshrl.u32 %v901, 7
        %v903 = vsub.s32 6, %v902
        %v904 = vrot.slane %v876, %v903
        %v905 = vlaneseq
        %v906 = vshrl.u32 %v905, 7
        %v907 = vsub.s32 7, %v906
        %v908 = vrot.slane %v876, %v907
        %v917 = vmul.f32 %v692, %v880
        %v918 = vmul.f32 %v695, %v880
        %v919 = vmul.f32 %v698, %v884
        %v920 = vmul.f32 %v701, %v884
        %v921 = vmul.f32 %v704, %v888
        %v922 = vmul.f32 %v707, %v888
        %v923 = vmul.f32 %v710, %v892
        %v924 = vmul.f32 %v713, %v892
        %v925 = vmul.f32 %v716, %v896
        %v926 = vmul.f32 %v719, %v896
        %v927 = vmul.f32 %v722, %v900
        %v928 = vmul.f32 %v725, %v900
        %v929 = vmul.f32 %v728, %v904
        %v930 = vmul.f32 %v731, %v904
        %v931 = vmul.f32 %v734, %v908
        %v932 = vmul.f32 %v737, %v908
        %v933 = vadd.f32 %v858, %v917
        %v934 = vadd.f32 %v859, %v918
        %v935 = vadd.f32 %v860, %v919
        %v936 = vadd.f32 %v861, %v920
        %v937 = vadd.f32 %v862, %v921
        %v938 = vadd.f32 %v863, %v922
        %v939 = vadd.f32 %v864, %v923
        %v940 = vadd.f32 %v865, %v924
        %v941 = vadd.f32 %v866, %v925
        %v942 = vadd.f32 %v867, %v926
        %v943 = vadd.f32 %v868, %v927
        %v944 = vadd.f32 %v869, %v928
        %v945 = vadd.f32 %v870, %v929
        %v946 = vadd.f32 %v871, %v930
        %v947 = vadd.f32 %v872, %v931
        %v948 = vadd.f32 %v873, %v932
        %949 = vset.pattern.permute.xlu0 3
        %950 = vperm.xlu0 %949, %v738
        %v951 = vpop.permute.xlu0 %950
        %v952 = vlaneseq
        %v953 = vshrl.u32 %v952, 7
        %v954 = vsub.s32 0, %v953
        %v955 = vrot.slane %v951, %v954
        %v956 = vlaneseq
        %v957 = vshrl.u32 %v956, 7
        %v958 = vsub.s32 1, %v957
        %v959 = vrot.slane %v951, %v958
        %v960 = vlaneseq
        %v961 = vshrl.u32 %v960, 7
        %v962 = vsub.s32 2, %v961
        %v963 = vrot.slane %v951, %v962
        %v964 = vlaneseq
        %v965 = vshrl.u32 %v964, 7
        %v966 = vsub.s32 3, %v965
        %v967 = vrot.slane %v951, %v966
        %v968 = vlaneseq
        %v969 = vshrl.u32 %v968, 7
        %v970 = vsub.s32 4, %v969
        %v971 = vrot.slane %v951, %v970
        %v972 = vlaneseq
        %v973 = vshrl.u32 %v972, 7
        %v974 = vsub.s32 5, %v973
        %v975 = vrot.slane %v951, %v974
        %v976 = vlaneseq
        %v977 = vshrl.u32 %v976, 7
        %v978 = vsub.s32 6, %v977
        %v979 = vrot.slane %v951, %v978
        %v980 = vlaneseq
        %v981 = vshrl.u32 %v980, 7
        %v982 = vsub.s32 7, %v981
        %v983 = vrot.slane %v951, %v982
        %v992 = vmul.f32 %v627, %v955
        %v993 = vmul.f32 %v630, %v955
        %v994 = vmul.f32 %v633, %v959
        %v995 = vmul.f32 %v636, %v959
        %v996 = vmul.f32 %v639, %v963
        %v997 = vmul.f32 %v642, %v963
        %v998 = vmul.f32 %v645, %v967
        %v999 = vmul.f32 %v648, %v967
        %v1000 = vmul.f32 %v651, %v971
        %v1001 = vmul.f32 %v654, %v971
        %v1002 = vmul.f32 %v657, %v975
        %v1003 = vmul.f32 %v660, %v975
        %v1004 = vmul.f32 %v663, %v979
        %v1005 = vmul.f32 %v666, %v979
        %v1006 = vmul.f32 %v669, %v983
        %v1007 = vmul.f32 %v672, %v983
        %1008 = vset.pattern.permute.xlu0 4
        %1009 = vperm.xlu0 %1008, %v738
        %v1010 = vpop.permute.xlu0 %1009
        %v1011 = vlaneseq
        %v1012 = vshrl.u32 %v1011, 7
        %v1013 = vsub.s32 0, %v1012
        %v1014 = vrot.slane %v1010, %v1013
        %v1015 = vlaneseq
        %v1016 = vshrl.u32 %v1015, 7
        %v1017 = vsub.s32 1, %v1016
        %v1018 = vrot.slane %v1010, %v1017
        %v1019 = vlaneseq
        %v1020 = vshrl.u32 %v1019, 7
        %v1021 = vsub.s32 2, %v1020
        %v1022 = vrot.slane %v1010, %v1021
        %v1023 = vlaneseq
        %v1024 = vshrl.u32 %v1023, 7
        %v1025 = vsub.s32 3, %v1024
        %v1026 = vrot.slane %v1010, %v1025
        %v1027 = vlaneseq
        %v1028 = vshrl.u32 %v1027, 7
        %v1029 = vsub.s32 4, %v1028
        %v1030 = vrot.slane %v1010, %v1029
        %v1031 = vlaneseq
        %v1032 = vshrl.u32 %v1031, 7
        %v1033 = vsub.s32 5, %v1032
        %v1034 = vrot.slane %v1010, %v1033
        %v1035 = vlaneseq
        %v1036 = vshrl.u32 %v1035, 7
        %v1037 = vsub.s32 6, %v1036
        %v1038 = vrot.slane %v1010, %v1037
        %v1039 = vlaneseq
        %v1040 = vshrl.u32 %v1039, 7
        %v1041 = vsub.s32 7, %v1040
        %v1042 = vrot.slane %v1010, %v1041
        %v1051 = vmul.f32 %v562, %v1014
        %v1052 = vmul.f32 %v565, %v1014
        %v1053 = vmul.f32 %v568, %v1018
        %v1054 = vmul.f32 %v571, %v1018
        %v1055 = vmul.f32 %v574, %v1022
        %v1056 = vmul.f32 %v577, %v1022
        %v1057 = vmul.f32 %v580, %v1026
        %v1058 = vmul.f32 %v583, %v1026
        %v1059 = vmul.f32 %v586, %v1030
        %v1060 = vmul.f32 %v589, %v1030
        %v1061 = vmul.f32 %v592, %v1034
        %v1062 = vmul.f32 %v595, %v1034
        %v1063 = vmul.f32 %v598, %v1038
        %v1064 = vmul.f32 %v601, %v1038
        %v1065 = vmul.f32 %v604, %v1042
        %v1066 = vmul.f32 %v607, %v1042
        %v1067 = vadd.f32 %v992, %v1051
        %v1068 = vadd.f32 %v993, %v1052
        %v1069 = vadd.f32 %v994, %v1053
        %v1070 = vadd.f32 %v995, %v1054
        %v1071 = vadd.f32 %v996, %v1055
        %v1072 = vadd.f32 %v997, %v1056
        %v1073 = vadd.f32 %v998, %v1057
        %v1074 = vadd.f32 %v999, %v1058
        %v1075 = vadd.f32 %v1000, %v1059
        %v1076 = vadd.f32 %v1001, %v1060
        %v1077 = vadd.f32 %v1002, %v1061
        %v1078 = vadd.f32 %v1003, %v1062
        %v1079 = vadd.f32 %v1004, %v1063
        %v1080 = vadd.f32 %v1005, %v1064
        %v1081 = vadd.f32 %v1006, %v1065
        %v1082 = vadd.f32 %v1007, %v1066
        %1083 = vset.pattern.permute.xlu0 5
        %1084 = vperm.xlu0 %1083, %v738
        %v1085 = vpop.permute.xlu0 %1084
        %v1086 = vlaneseq
        %v1087 = vshrl.u32 %v1086, 7
        %v1088 = vsub.s32 0, %v1087
        %v1089 = vrot.slane %v1085, %v1088
        %v1090 = vlaneseq
        %v1091 = vshrl.u32 %v1090, 7
        %v1092 = vsub.s32 1, %v1091
        %v1093 = vrot.slane %v1085, %v1092
        %v1094 = vlaneseq
        %v1095 = vshrl.u32 %v1094, 7
        %v1096 = vsub.s32 2, %v1095
        %v1097 = vrot.slane %v1085, %v1096
        %v1098 = vlaneseq
        %v1099 = vshrl.u32 %v1098, 7
        %v1100 = vsub.s32 3, %v1099
        %v1101 = vrot.slane %v1085, %v1100
        %v1102 = vlaneseq
        %v1103 = vshrl.u32 %v1102, 7
        %v1104 = vsub.s32 4, %v1103
        %v1105 = vrot.slane %v1085, %v1104
        %v1106 = vlaneseq
        %v1107 = vshrl.u32 %v1106, 7
        %v1108 = vsub.s32 5, %v1107
        %v1109 = vrot.slane %v1085, %v1108
        %v1110 = vlaneseq
        %v1111 = vshrl.u32 %v1110, 7
        %v1112 = vsub.s32 6, %v1111
        %v1113 = vrot.slane %v1085, %v1112
        %v1114 = vlaneseq
        %v1115 = vshrl.u32 %v1114, 7
        %v1116 = vsub.s32 7, %v1115
        %v1117 = vrot.slane %v1085, %v1116
        %v1126 = vmul.f32 %v692, %v1089
        %v1127 = vmul.f32 %v695, %v1089
        %v1128 = vmul.f32 %v698, %v1093
        %v1129 = vmul.f32 %v701, %v1093
        %v1130 = vmul.f32 %v704, %v1097
        %v1131 = vmul.f32 %v707, %v1097
        %v1132 = vmul.f32 %v710, %v1101
        %v1133 = vmul.f32 %v713, %v1101
        %v1134 = vmul.f32 %v716, %v1105
        %v1135 = vmul.f32 %v719, %v1105
        %v1136 = vmul.f32 %v722, %v1109
        %v1137 = vmul.f32 %v725, %v1109
        %v1138 = vmul.f32 %v728, %v1113
        %v1139 = vmul.f32 %v731, %v1113
        %v1140 = vmul.f32 %v734, %v1117
        %v1141 = vmul.f32 %v737, %v1117
        %v1142 = vadd.f32 %v1067, %v1126
        %v1143 = vadd.f32 %v1068, %v1127
        %v1144 = vadd.f32 %v1069, %v1128
        %v1145 = vadd.f32 %v1070, %v1129
        %v1146 = vadd.f32 %v1071, %v1130
        %v1147 = vadd.f32 %v1072, %v1131
        %v1148 = vadd.f32 %v1073, %v1132
        %v1149 = vadd.f32 %v1074, %v1133
        %v1150 = vadd.f32 %v1075, %v1134
        %v1151 = vadd.f32 %v1076, %v1135
        %v1152 = vadd.f32 %v1077, %v1136
        %v1153 = vadd.f32 %v1078, %v1137
        %v1154 = vadd.f32 %v1079, %v1138
        %v1155 = vadd.f32 %v1080, %v1139
        %v1156 = vadd.f32 %v1081, %v1140
        %v1157 = vadd.f32 %v1082, %v1141
        %1158 = vset.pattern.permute.xlu0 6
        %1159 = vperm.xlu0 %1158, %v738
        %v1160 = vpop.permute.xlu0 %1159
        %v1161 = vlaneseq
        %v1162 = vshrl.u32 %v1161, 7
        %v1163 = vsub.s32 0, %v1162
        %v1164 = vrot.slane %v1160, %v1163
        %v1165 = vlaneseq
        %v1166 = vshrl.u32 %v1165, 7
        %v1167 = vsub.s32 1, %v1166
        %v1168 = vrot.slane %v1160, %v1167
        %v1169 = vlaneseq
        %v1170 = vshrl.u32 %v1169, 7
        %v1171 = vsub.s32 2, %v1170
        %v1172 = vrot.slane %v1160, %v1171
        %v1173 = vlaneseq
        %v1174 = vshrl.u32 %v1173, 7
        %v1175 = vsub.s32 3, %v1174
        %v1176 = vrot.slane %v1160, %v1175
        %v1177 = vlaneseq
        %v1178 = vshrl.u32 %v1177, 7
        %v1179 = vsub.s32 4, %v1178
        %v1180 = vrot.slane %v1160, %v1179
        %v1181 = vlaneseq
        %v1182 = vshrl.u32 %v1181, 7
        %v1183 = vsub.s32 5, %v1182
        %v1184 = vrot.slane %v1160, %v1183
        %v1185 = vlaneseq
        %v1186 = vshrl.u32 %v1185, 7
        %v1187 = vsub.s32 6, %v1186
        %v1188 = vrot.slane %v1160, %v1187
        %v1189 = vlaneseq
        %v1190 = vshrl.u32 %v1189, 7
        %v1191 = vsub.s32 7, %v1190
        %v1192 = vrot.slane %v1160, %v1191
        %v1201 = vmul.f32 %v627, %v1164
        %v1202 = vmul.f32 %v630, %v1164
        %v1203 = vmul.f32 %v633, %v1168
        %v1204 = vmul.f32 %v636, %v1168
        %v1205 = vmul.f32 %v639, %v1172
        %v1206 = vmul.f32 %v642, %v1172
        %v1207 = vmul.f32 %v645, %v1176
        %v1208 = vmul.f32 %v648, %v1176
        %v1209 = vmul.f32 %v651, %v1180
        %v1210 = vmul.f32 %v654, %v1180
        %v1211 = vmul.f32 %v657, %v1184
        %v1212 = vmul.f32 %v660, %v1184
        %v1213 = vmul.f32 %v663, %v1188
        %v1214 = vmul.f32 %v666, %v1188
        %v1215 = vmul.f32 %v669, %v1192
        %v1216 = vmul.f32 %v672, %v1192
        %1217 = vset.pattern.permute.xlu0 7
        %1218 = vperm.xlu0 %1217, %v738
        %v1219 = vpop.permute.xlu0 %1218
        %v1220 = vlaneseq
        %v1221 = vshrl.u32 %v1220, 7
        %v1222 = vsub.s32 0, %v1221
        %v1223 = vrot.slane %v1219, %v1222
        %v1224 = vlaneseq
        %v1225 = vshrl.u32 %v1224, 7
        %v1226 = vsub.s32 1, %v1225
        %v1227 = vrot.slane %v1219, %v1226
        %v1228 = vlaneseq
        %v1229 = vshrl.u32 %v1228, 7
        %v1230 = vsub.s32 2, %v1229
        %v1231 = vrot.slane %v1219, %v1230
        %v1232 = vlaneseq
        %v1233 = vshrl.u32 %v1232, 7
        %v1234 = vsub.s32 3, %v1233
        %v1235 = vrot.slane %v1219, %v1234
        %v1236 = vlaneseq
        %v1237 = vshrl.u32 %v1236, 7
        %v1238 = vsub.s32 4, %v1237
        %v1239 = vrot.slane %v1219, %v1238
        %v1240 = vlaneseq
        %v1241 = vshrl.u32 %v1240, 7
        %v1242 = vsub.s32 5, %v1241
        %v1243 = vrot.slane %v1219, %v1242
        %v1244 = vlaneseq
        %v1245 = vshrl.u32 %v1244, 7
        %v1246 = vsub.s32 6, %v1245
        %v1247 = vrot.slane %v1219, %v1246
        %v1248 = vlaneseq
        %v1249 = vshrl.u32 %v1248, 7
        %v1250 = vsub.s32 7, %v1249
        %v1251 = vrot.slane %v1219, %v1250
        %v1260 = vmul.f32 %v562, %v1223
        %v1261 = vmul.f32 %v565, %v1223
        %v1262 = vmul.f32 %v568, %v1227
        %v1263 = vmul.f32 %v571, %v1227
        %v1264 = vmul.f32 %v574, %v1231
        %v1265 = vmul.f32 %v577, %v1231
        %v1266 = vmul.f32 %v580, %v1235
        %v1267 = vmul.f32 %v583, %v1235
        %v1268 = vmul.f32 %v586, %v1239
        %v1269 = vmul.f32 %v589, %v1239
        %v1270 = vmul.f32 %v592, %v1243
        %v1271 = vmul.f32 %v595, %v1243
        %v1272 = vmul.f32 %v598, %v1247
        %v1273 = vmul.f32 %v601, %v1247
        %v1274 = vmul.f32 %v604, %v1251
        %v1275 = vmul.f32 %v607, %v1251
        %v1276 = vadd.f32 %v1201, %v1260
        %v1277 = vadd.f32 %v1202, %v1261
        %v1278 = vadd.f32 %v1203, %v1262
        %v1279 = vadd.f32 %v1204, %v1263
        %v1280 = vadd.f32 %v1205, %v1264
        %v1281 = vadd.f32 %v1206, %v1265
        %v1282 = vadd.f32 %v1207, %v1266
        %v1283 = vadd.f32 %v1208, %v1267
        %v1284 = vadd.f32 %v1209, %v1268
        %v1285 = vadd.f32 %v1210, %v1269
        %v1286 = vadd.f32 %v1211, %v1270
        %v1287 = vadd.f32 %v1212, %v1271
        %v1288 = vadd.f32 %v1213, %v1272
        %v1289 = vadd.f32 %v1214, %v1273
        %v1290 = vadd.f32 %v1215, %v1274
        %v1291 = vadd.f32 %v1216, %v1275
        %1292 = vset.pattern.permute.xlu0 8
        %1293 = vperm.xlu0 %1292, %v738
        %v1294 = vpop.permute.xlu0 %1293
        %v1295 = vlaneseq
        %v1296 = vshrl.u32 %v1295, 7
        %v1297 = vsub.s32 0, %v1296
        %v1298 = vrot.slane %v1294, %v1297
        %v1299 = vlaneseq
        %v1300 = vshrl.u32 %v1299, 7
        %v1301 = vsub.s32 1, %v1300
        %v1302 = vrot.slane %v1294, %v1301
        %v1303 = vlaneseq
        %v1304 = vshrl.u32 %v1303, 7
        %v1305 = vsub.s32 2, %v1304
        %v1306 = vrot.slane %v1294, %v1305
        %v1307 = vlaneseq
        %v1308 = vshrl.u32 %v1307, 7
        %v1309 = vsub.s32 3, %v1308
        %v1310 = vrot.slane %v1294, %v1309
        %v1311 = vlaneseq
        %v1312 = vshrl.u32 %v1311, 7
        %v1313 = vsub.s32 4, %v1312
        %v1314 = vrot.slane %v1294, %v1313
        %v1315 = vlaneseq
        %v1316 = vshrl.u32 %v1315, 7
        %v1317 = vsub.s32 5, %v1316
        %v1318 = vrot.slane %v1294, %v1317
        %v1319 = vlaneseq
        %v1320 = vshrl.u32 %v1319, 7
        %v1321 = vsub.s32 6, %v1320
        %v1322 = vrot.slane %v1294, %v1321
        %v1323 = vlaneseq
        %v1324 = vshrl.u32 %v1323, 7
        %v1325 = vsub.s32 7, %v1324
        %v1326 = vrot.slane %v1294, %v1325
        %v1335 = vmul.f32 %v692, %v1298
        %v1336 = vmul.f32 %v695, %v1298
        %v1337 = vmul.f32 %v698, %v1302
        %v1338 = vmul.f32 %v701, %v1302
        %v1339 = vmul.f32 %v704, %v1306
        %v1340 = vmul.f32 %v707, %v1306
        %v1341 = vmul.f32 %v710, %v1310
        %v1342 = vmul.f32 %v713, %v1310
        %v1343 = vmul.f32 %v716, %v1314
        %v1344 = vmul.f32 %v719, %v1314
        %v1345 = vmul.f32 %v722, %v1318
        %v1346 = vmul.f32 %v725, %v1318
        %v1347 = vmul.f32 %v728, %v1322
        %v1348 = vmul.f32 %v731, %v1322
        %v1349 = vmul.f32 %v734, %v1326
        %v1350 = vmul.f32 %v737, %v1326
        %v1351 = vadd.f32 %v1276, %v1335
        %v1352 = vadd.f32 %v1277, %v1336
        %v1353 = vadd.f32 %v1278, %v1337
        %v1354 = vadd.f32 %v1279, %v1338
        %v1355 = vadd.f32 %v1280, %v1339
        %v1356 = vadd.f32 %v1281, %v1340
        %v1357 = vadd.f32 %v1282, %v1341
        %v1358 = vadd.f32 %v1283, %v1342
        %v1359 = vadd.f32 %v1284, %v1343
        %v1360 = vadd.f32 %v1285, %v1344
        %v1361 = vadd.f32 %v1286, %v1345
        %v1362 = vadd.f32 %v1287, %v1346
        %v1363 = vadd.f32 %v1288, %v1347
        %v1364 = vadd.f32 %v1289, %v1348
        %v1365 = vadd.f32 %v1290, %v1349
        %v1366 = vadd.f32 %v1291, %v1350
        %1383 = vset.pattern.permute.xlu0 0
        %1384 = vperm.xlu0 %1383, %v933
        %v1385 = vpop.permute.xlu0 %1384
        %1386 = vset.pattern.permute.xlu0 0
        %1387 = vperm.xlu0 %1386, %v934
        %v1388 = vpop.permute.xlu0 %1387
        %1389 = vset.pattern.permute.xlu0 0
        %1390 = vperm.xlu0 %1389, %v935
        %v1391 = vpop.permute.xlu0 %1390
        %1392 = vset.pattern.permute.xlu0 0
        %1393 = vperm.xlu0 %1392, %v936
        %v1394 = vpop.permute.xlu0 %1393
        %1395 = vset.pattern.permute.xlu0 0
        %1396 = vperm.xlu0 %1395, %v937
        %v1397 = vpop.permute.xlu0 %1396
        %1398 = vset.pattern.permute.xlu0 0
        %1399 = vperm.xlu0 %1398, %v938
        %v1400 = vpop.permute.xlu0 %1399
        %1401 = vset.pattern.permute.xlu0 0
        %1402 = vperm.xlu0 %1401, %v939
        %v1403 = vpop.permute.xlu0 %1402
        %1404 = vset.pattern.permute.xlu0 0
        %1405 = vperm.xlu0 %1404, %v940
        %v1406 = vpop.permute.xlu0 %1405
        %1407 = vset.pattern.permute.xlu0 0
        %1408 = vperm.xlu0 %1407, %v941
        %v1409 = vpop.permute.xlu0 %1408
        %1410 = vset.pattern.permute.xlu0 0
        %1411 = vperm.xlu0 %1410, %v942
        %v1412 = vpop.permute.xlu0 %1411
        %1413 = vset.pattern.permute.xlu0 0
        %1414 = vperm.xlu0 %1413, %v943
        %v1415 = vpop.permute.xlu0 %1414
        %1416 = vset.pattern.permute.xlu0 0
        %1417 = vperm.xlu0 %1416, %v944
        %v1418 = vpop.permute.xlu0 %1417
        %1419 = vset.pattern.permute.xlu0 0
        %1420 = vperm.xlu0 %1419, %v945
        %v1421 = vpop.permute.xlu0 %1420
        %1422 = vset.pattern.permute.xlu0 0
        %1423 = vperm.xlu0 %1422, %v946
        %v1424 = vpop.permute.xlu0 %1423
        %1425 = vset.pattern.permute.xlu0 0
        %1426 = vperm.xlu0 %1425, %v947
        %v1427 = vpop.permute.xlu0 %1426
        %1428 = vset.pattern.permute.xlu0 0
        %1429 = vperm.xlu0 %1428, %v948
        %v1430 = vpop.permute.xlu0 %1429
        %v1431 = vlaneseq
        %v1432 = vshrl.u32 %v1431, 7
        %v1433 = vsub.s32 %v455, %v1432
        %v1434 = vrot.slane %v1385, %v1433
        %v1435 = vadd.s32 %v455, 4294967288
        %v1436 = vlaneseq
        %v1437 = vshrl.u32 %v1436, 7
        %v1438 = vsub.s32 %v1435, %v1437
        %v1439 = vrot.slane %v1388, %v1438
        %vm1440 = vcmask 130112
        %v1441 = vsel %vm1440, %v1439, %v1434
        %v1442 = vlaneseq
        %v1443 = vshrl.u32 %v1442, 7
        %v1444 = vsub.s32 %v455, %v1443
        %v1445 = vrot.slane %v1391, %v1444
        %v1446 = vlaneseq
        %v1447 = vshrl.u32 %v1446, 7
        %v1448 = vsub.s32 %v1435, %v1447
        %v1449 = vrot.slane %v1394, %v1448
        %v1450 = vsel %vm1440, %v1449, %v1445
        %v1451 = vlaneseq
        %v1452 = vshrl.u32 %v1451, 7
        %v1453 = vsub.s32 %v455, %v1452
        %v1454 = vrot.slane %v1397, %v1453
        %v1455 = vlaneseq
        %v1456 = vshrl.u32 %v1455, 7
        %v1457 = vsub.s32 %v1435, %v1456
        %v1458 = vrot.slane %v1400, %v1457
        %v1459 = vsel %vm1440, %v1458, %v1454
        %v1460 = vlaneseq
        %v1461 = vshrl.u32 %v1460, 7
        %v1462 = vsub.s32 %v455, %v1461
        %v1463 = vrot.slane %v1403, %v1462
        %v1464 = vlaneseq
        %v1465 = vshrl.u32 %v1464, 7
        %v1466 = vsub.s32 %v1435, %v1465
        %v1467 = vrot.slane %v1406, %v1466
        %v1468 = vsel %vm1440, %v1467, %v1463
        %v1469 = vlaneseq
        %v1470 = vshrl.u32 %v1469, 7
        %v1471 = vsub.s32 %v455, %v1470
        %v1472 = vrot.slane %v1409, %v1471
        %v1473 = vlaneseq
        %v1474 = vshrl.u32 %v1473, 7
        %v1475 = vsub.s32 %v1435, %v1474
        %v1476 = vrot.slane %v1412, %v1475
        %v1477 = vsel %vm1440, %v1476, %v1472
        %v1478 = vlaneseq
        %v1479 = vshrl.u32 %v1478, 7
        %v1480 = vsub.s32 %v455, %v1479
        %v1481 = vrot.slane %v1415, %v1480
        %v1482 = vlaneseq
        %v1483 = vshrl.u32 %v1482, 7
        %v1484 = vsub.s32 %v1435, %v1483
        %v1485 = vrot.slane %v1418, %v1484
        %v1486 = vsel %vm1440, %v1485, %v1481
        %v1487 = vlaneseq
        %v1488 = vshrl.u32 %v1487, 7
        %v1489 = vsub.s32 %v455, %v1488
        %v1490 = vrot.slane %v1421, %v1489
        %v1491 = vlaneseq
        %v1492 = vshrl.u32 %v1491, 7
        %v1493 = vsub.s32 %v1435, %v1492
        %v1494 = vrot.slane %v1424, %v1493
        %v1495 = vsel %vm1440, %v1494, %v1490
        %v1496 = vlaneseq
        %v1497 = vshrl.u32 %v1496, 7
        %v1498 = vsub.s32 %v455, %v1497
        %v1499 = vrot.slane %v1427, %v1498
        %v1500 = vlaneseq
        %v1501 = vshrl.u32 %v1500, 7
        %v1502 = vsub.s32 %v1435, %v1501
        %v1503 = vrot.slane %v1430, %v1502
        %v1504 = vsel %vm1440, %v1503, %v1499
        %vm1505 = vcmask 1041409
        %v1506 = vsel %vm1505, %v1450, %v1441
        %vm1507 = vcmask 1042434
        %v1508 = vsel %vm1507, %v1459, %v1506
        %vm1509 = vcmask 1043459
        %v1510 = vsel %vm1509, %v1468, %v1508
        %vm1511 = vcmask 1044484
        %v1512 = vsel %vm1511, %v1477, %v1510
        %vm1513 = vcmask 1045509
        %v1514 = vsel %vm1513, %v1486, %v1512
        %vm1515 = vcmask 1046534
        %v1516 = vsel %vm1515, %v1495, %v1514
        %vm1517 = vcmask 1047559
        %v1518 = vsel %vm1517, %v1504, %v1516
        %v1519 = vsel %vm559, %v1518, 0
        %1521 = vmatprep.subr.mxu0 0.0
        %1522 = vmatpush1.msra.mxu0 %v465
        %1523 = vmatprep.subr.mxu0 0.0
        %1524 = vmatpush1.msra.mxu0 %v466
        %1525 = vmatprep.subr.mxu0 0.0
        %1526 = vmatpush1.msra.mxu0 0.0
        %1527 = vmatprep.subr.mxu0 0.0
        %1528 = vmatpush1.msra.mxu0 0.0
        %1529 = vmatprep.subr.mxu0 0.0
        %1530 = vmatpush1.msra.mxu0 0.0
        %1531 = vmatprep.subr.mxu0 0.0
        %1532 = vmatpush1.msra.mxu0 0.0
        %1533 = vmatprep.subr.mxu0 0.0
        %1534 = vmatpush1.msra.mxu0 0.0
        %1535 = vmatprep.subr.mxu0 0.0
        %1536 = vmatpush1.msra.mxu0 0.0
        %1537 = vmatprep.subr.mxu0 0.0
        %1538 = vmatpush1.msra.mxu0 0.0
        %1539 = vmatprep.subr.mxu0 0.0
        %1540 = vmatpush1.msra.mxu0 0.0
        %1541 = vmatprep.subr.mxu0 0.0
        %1542 = vmatpush1.msra.mxu0 0.0
        %1543 = vmatprep.subr.mxu0 0.0
        %1544 = vmatpush1.msra.mxu0 0.0
        %1545 = vmatprep.subr.mxu0 0.0
        %1546 = vmatpush1.msra.mxu0 0.0
        %1547 = vmatprep.subr.mxu0 0.0
        %1548 = vmatpush1.msra.mxu0 0.0
        %1549 = vmatprep.subr.mxu0 0.0
        %1550 = vmatpush1.msra.mxu0 0.0
        %1551 = vmatprep.subr.mxu0 0.0
        %1552 = vmatpush1.msra.mxu0 0.0
        %1553 = vmatprep.subr.mxu0 0.0
        %1554 = vmatpush1.msra.mxu0 0.0
        %1555 = vmatprep.subr.mxu0 0.0
        %1556 = vmatpush1.msra.mxu0 0.0
        %1557 = vmatprep.subr.mxu0 0.0
        %1558 = vmatpush1.msra.mxu0 0.0
        %1559 = vmatprep.subr.mxu0 0.0
        %1560 = vmatpush1.msra.mxu0 0.0
        %1561 = vmatprep.subr.mxu0 0.0
        %1562 = vmatpush1.msra.mxu0 0.0
        %1563 = vmatprep.subr.mxu0 0.0
        %1564 = vmatpush1.msra.mxu0 0.0
        %1565 = vmatprep.subr.mxu0 0.0
        %1566 = vmatpush1.msra.mxu0 0.0
        %1567 = vmatprep.subr.mxu0 0.0
        %1568 = vmatpush1.msra.mxu0 0.0
        %1569 = vmatprep.subr.mxu0 0.0
        %1570 = vmatpush1.msra.mxu0 0.0
        %1571 = vmatprep.subr.mxu0 0.0
        %1572 = vmatpush1.msra.mxu0 0.0
        %1573 = vmatprep.subr.mxu0 0.0
        %1574 = vmatpush1.msra.mxu0 0.0
        %1575 = vmatprep.subr.mxu0 0.0
        %1576 = vmatpush1.msra.mxu0 0.0
        %1577 = vmatprep.subr.mxu0 0.0
        %1578 = vmatpush1.msra.mxu0 0.0
        %1579 = vmatprep.subr.mxu0 0.0
        %1580 = vmatpush1.msra.mxu0 0.0
        %1581 = vmatprep.subr.mxu0 0.0
        %1582 = vmatpush1.msra.mxu0 0.0
        %1583 = vmatprep.subr.mxu0 0.0
        %1584 = vmatpush1.msra.mxu0 0.0
        %1585 = vmatprep.mubr.f32.mxu0 0.0
        %1586 = vmatmul.mubr.f32.gmra.mrb[0].mxu0 %v1519
        %v1587 = vpop.f32.mrb[0].mxu0
        %v1588 = vadd.f32 0.0, %v1587
        %v1589 = vpop.f32.mrb[0].mxu0
        %1590 = vdwg.mxu0
        %v1592 = vlaneseq
        %v1593 = vshrl.u32 %v1592, 7
        %v1594 = vsub.s32 0, %v1593
        %v1595 = vrot.slane %v1588, %v1594
        %1597 = vbcast.lane.b32.xlu0 %v1595, 256
        %v1598 = vpop.permute.xlu0 %1597
        %s1600 = sor.u32 256, 8
        %1601 = vbcast.lane.b32.xlu0 %v1595, %s1600
        %v1602 = vpop.permute.xlu0 %1601
        %v1603 = vlaneseq
        %v1604 = vshrl.u32 %v1603, 7
        %v1605 = vsub.s32 1, %v1604
        %v1606 = vrot.slane %v1588, %v1605
        %1608 = vbcast.lane.b32.xlu0 %v1606, 256
        %v1609 = vpop.permute.xlu0 %1608
        %s1611 = sor.u32 256, 8
        %1612 = vbcast.lane.b32.xlu0 %v1606, %s1611
        %v1613 = vpop.permute.xlu0 %1612
        %v1614 = vlaneseq
        %v1615 = vshrl.u32 %v1614, 7
        %v1616 = vsub.s32 2, %v1615
        %v1617 = vrot.slane %v1588, %v1616
        %1619 = vbcast.lane.b32.xlu0 %v1617, 256
        %v1620 = vpop.permute.xlu0 %1619
        %s1622 = sor.u32 256, 8
        %1623 = vbcast.lane.b32.xlu0 %v1617, %s1622
        %v1624 = vpop.permute.xlu0 %1623
        %v1625 = vlaneseq
        %v1626 = vshrl.u32 %v1625, 7
        %v1627 = vsub.s32 3, %v1626
        %v1628 = vrot.slane %v1588, %v1627
        %1630 = vbcast.lane.b32.xlu0 %v1628, 256
        %v1631 = vpop.permute.xlu0 %1630
        %s1633 = sor.u32 256, 8
        %1634 = vbcast.lane.b32.xlu0 %v1628, %s1633
        %v1635 = vpop.permute.xlu0 %1634
        %v1636 = vlaneseq
        %v1637 = vshrl.u32 %v1636, 7
        %v1638 = vsub.s32 4, %v1637
        %v1639 = vrot.slane %v1588, %v1638
        %1641 = vbcast.lane.b32.xlu0 %v1639, 256
        %v1642 = vpop.permute.xlu0 %1641
        %s1644 = sor.u32 256, 8
        %1645 = vbcast.lane.b32.xlu0 %v1639, %s1644
        %v1646 = vpop.permute.xlu0 %1645
        %v1647 = vlaneseq
        %v1648 = vshrl.u32 %v1647, 7
        %v1649 = vsub.s32 5, %v1648
        %v1650 = vrot.slane %v1588, %v1649
        %1652 = vbcast.lane.b32.xlu0 %v1650, 256
        %v1653 = vpop.permute.xlu0 %1652
        %s1655 = sor.u32 256, 8
        %1656 = vbcast.lane.b32.xlu0 %v1650, %s1655
        %v1657 = vpop.permute.xlu0 %1656
        %v1658 = vlaneseq
        %v1659 = vshrl.u32 %v1658, 7
        %v1660 = vsub.s32 6, %v1659
        %v1661 = vrot.slane %v1588, %v1660
        %1663 = vbcast.lane.b32.xlu0 %v1661, 256
        %v1664 = vpop.permute.xlu0 %1663
        %s1666 = sor.u32 256, 8
        %1667 = vbcast.lane.b32.xlu0 %v1661, %s1666
        %v1668 = vpop.permute.xlu0 %1667
        %v1669 = vlaneseq
        %v1670 = vshrl.u32 %v1669, 7
        %v1671 = vsub.s32 7, %v1670
        %v1672 = vrot.slane %v1588, %v1671
        %1674 = vbcast.lane.b32.xlu0 %v1672, 256
        %v1675 = vpop.permute.xlu0 %1674
        %s1677 = sor.u32 256, 8
        %1678 = vbcast.lane.b32.xlu0 %v1672, %s1677
        %v1679 = vpop.permute.xlu0 %1678
        %v1696 = vadd.f32 %v1142, %v1598
        %v1697 = vadd.f32 %v1143, %v1602
        %v1698 = vadd.f32 %v1144, %v1609
        %v1699 = vadd.f32 %v1145, %v1613
        %v1700 = vadd.f32 %v1146, %v1620
        %v1701 = vadd.f32 %v1147, %v1624
        %v1702 = vadd.f32 %v1148, %v1631
        %v1703 = vadd.f32 %v1149, %v1635
        %v1704 = vadd.f32 %v1150, %v1642
        %v1705 = vadd.f32 %v1151, %v1646
        %v1706 = vadd.f32 %v1152, %v1653
        %v1707 = vadd.f32 %v1153, %v1657
        %v1708 = vadd.f32 %v1154, %v1664
        %v1709 = vadd.f32 %v1155, %v1668
        %v1710 = vadd.f32 %v1156, %v1675
        %v1711 = vadd.f32 %v1157, %v1679
        %1728 = vset.pattern.permute.xlu0 0
        %1729 = vperm.xlu0 %1728, %v1351
        %v1730 = vpop.permute.xlu0 %1729
        %1731 = vset.pattern.permute.xlu0 0
        %1732 = vperm.xlu0 %1731, %v1352
        %v1733 = vpop.permute.xlu0 %1732
        %1734 = vset.pattern.permute.xlu0 0
        %1735 = vperm.xlu0 %1734, %v1353
        %v1736 = vpop.permute.xlu0 %1735
        %1737 = vset.pattern.permute.xlu0 0
        %1738 = vperm.xlu0 %1737, %v1354
        %v1739 = vpop.permute.xlu0 %1738
        %1740 = vset.pattern.permute.xlu0 0
        %1741 = vperm.xlu0 %1740, %v1355
        %v1742 = vpop.permute.xlu0 %1741
        %1743 = vset.pattern.permute.xlu0 0
        %1744 = vperm.xlu0 %1743, %v1356
        %v1745 = vpop.permute.xlu0 %1744
        %1746 = vset.pattern.permute.xlu0 0
        %1747 = vperm.xlu0 %1746, %v1357
        %v1748 = vpop.permute.xlu0 %1747
        %1749 = vset.pattern.permute.xlu0 0
        %1750 = vperm.xlu0 %1749, %v1358
        %v1751 = vpop.permute.xlu0 %1750
        %1752 = vset.pattern.permute.xlu0 0
        %1753 = vperm.xlu0 %1752, %v1359
        %v1754 = vpop.permute.xlu0 %1753
        %1755 = vset.pattern.permute.xlu0 0
        %1756 = vperm.xlu0 %1755, %v1360
        %v1757 = vpop.permute.xlu0 %1756
        %1758 = vset.pattern.permute.xlu0 0
        %1759 = vperm.xlu0 %1758, %v1361
        %v1760 = vpop.permute.xlu0 %1759
        %1761 = vset.pattern.permute.xlu0 0
        %1762 = vperm.xlu0 %1761, %v1362
        %v1763 = vpop.permute.xlu0 %1762
        %1764 = vset.pattern.permute.xlu0 0
        %1765 = vperm.xlu0 %1764, %v1363
        %v1766 = vpop.permute.xlu0 %1765
        %1767 = vset.pattern.permute.xlu0 0
        %1768 = vperm.xlu0 %1767, %v1364
        %v1769 = vpop.permute.xlu0 %1768
        %1770 = vset.pattern.permute.xlu0 0
        %1771 = vperm.xlu0 %1770, %v1365
        %v1772 = vpop.permute.xlu0 %1771
        %1773 = vset.pattern.permute.xlu0 0
        %1774 = vperm.xlu0 %1773, %v1366
        %v1775 = vpop.permute.xlu0 %1774
        %v1776 = vlaneseq
        %v1777 = vshrl.u32 %v1776, 7
        %v1778 = vsub.s32 %v455, %v1777
        %v1779 = vrot.slane %v1730, %v1778
        %v1780 = vlaneseq
        %v1781 = vshrl.u32 %v1780, 7
        %v1782 = vsub.s32 %v1435, %v1781
        %v1783 = vrot.slane %v1733, %v1782
        %v1784 = vsel %vm1440, %v1783, %v1779
        %v1785 = vlaneseq
        %v1786 = vshrl.u32 %v1785, 7
        %v1787 = vsub.s32 %v455, %v1786
        %v1788 = vrot.slane %v1736, %v1787
        %v1789 = vlaneseq
        %v1790 = vshrl.u32 %v1789, 7
        %v1791 = vsub.s32 %v1435, %v1790
        %v1792 = vrot.slane %v1739, %v1791
        %v1793 = vsel %vm1440, %v1792, %v1788
        %v1794 = vlaneseq
        %v1795 = vshrl.u32 %v1794, 7
        %v1796 = vsub.s32 %v455, %v1795
        %v1797 = vrot.slane %v1742, %v1796
        %v1798 = vlaneseq
        %v1799 = vshrl.u32 %v1798, 7
        %v1800 = vsub.s32 %v1435, %v1799
        %v1801 = vrot.slane %v1745, %v1800
        %v1802 = vsel %vm1440, %v1801, %v1797
        %v1803 = vlaneseq
        %v1804 = vshrl.u32 %v1803, 7
        %v1805 = vsub.s32 %v455, %v1804
        %v1806 = vrot.slane %v1748, %v1805
        %v1807 = vlaneseq
        %v1808 = vshrl.u32 %v1807, 7
        %v1809 = vsub.s32 %v1435, %v1808
        %v1810 = vrot.slane %v1751, %v1809
        %v1811 = vsel %vm1440, %v1810, %v1806
        %v1812 = vlaneseq
        %v1813 = vshrl.u32 %v1812, 7
        %v1814 = vsub.s32 %v455, %v1813
        %v1815 = vrot.slane %v1754, %v1814
        %v1816 = vlaneseq
        %v1817 = vshrl.u32 %v1816, 7
        %v1818 = vsub.s32 %v1435, %v1817
        %v1819 = vrot.slane %v1757, %v1818
        %v1820 = vsel %vm1440, %v1819, %v1815
        %v1821 = vlaneseq
        %v1822 = vshrl.u32 %v1821, 7
        %v1823 = vsub.s32 %v455, %v1822
        %v1824 = vrot.slane %v1760, %v1823
        %v1825 = vlaneseq
        %v1826 = vshrl.u32 %v1825, 7
        %v1827 = vsub.s32 %v1435, %v1826
        %v1828 = vrot.slane %v1763, %v1827
        %v1829 = vsel %vm1440, %v1828, %v1824
        %v1830 = vlaneseq
        %v1831 = vshrl.u32 %v1830, 7
        %v1832 = vsub.s32 %v455, %v1831
        %v1833 = vrot.slane %v1766, %v1832
        %v1834 = vlaneseq
        %v1835 = vshrl.u32 %v1834, 7
        %v1836 = vsub.s32 %v1435, %v1835
        %v1837 = vrot.slane %v1769, %v1836
        %v1838 = vsel %vm1440, %v1837, %v1833
        %v1839 = vlaneseq
        %v1840 = vshrl.u32 %v1839, 7
        %v1841 = vsub.s32 %v455, %v1840
        %v1842 = vrot.slane %v1772, %v1841
        %v1843 = vlaneseq
        %v1844 = vshrl.u32 %v1843, 7
        %v1845 = vsub.s32 %v1435, %v1844
        %v1846 = vrot.slane %v1775, %v1845
        %v1847 = vsel %vm1440, %v1846, %v1842
        %v1848 = vsel %vm1505, %v1793, %v1784
        %v1849 = vsel %vm1507, %v1802, %v1848
        %v1850 = vsel %vm1509, %v1811, %v1849
        %v1851 = vsel %vm1511, %v1820, %v1850
        %v1852 = vsel %vm1513, %v1829, %v1851
        %v1853 = vsel %vm1515, %v1838, %v1852
        %v1854 = vsel %vm1517, %v1847, %v1853
        %v1855 = vsel %vm559, %v1854, 0
        %1857 = vmatprep.subr.mxu0 0.0
        %1858 = vmatpush1.msra.mxu0 %v473
        %1859 = vmatprep.subr.mxu0 0.0
        %1860 = vmatpush1.msra.mxu0 %v474
        %1861 = vmatprep.subr.mxu0 0.0
        %1862 = vmatpush1.msra.mxu0 0.0
        %1863 = vmatprep.subr.mxu0 0.0
        %1864 = vmatpush1.msra.mxu0 0.0
        %1865 = vmatprep.subr.mxu0 0.0
        %1866 = vmatpush1.msra.mxu0 0.0
        %1867 = vmatprep.subr.mxu0 0.0
        %1868 = vmatpush1.msra.mxu0 0.0
        %1869 = vmatprep.subr.mxu0 0.0
        %1870 = vmatpush1.msra.mxu0 0.0
        %1871 = vmatprep.subr.mxu0 0.0
        %1872 = vmatpush1.msra.mxu0 0.0
        %1873 = vmatprep.subr.mxu0 0.0
        %1874 = vmatpush1.msra.mxu0 0.0
        %1875 = vmatprep.subr.mxu0 0.0
        %1876 = vmatpush1.msra.mxu0 0.0
        %1877 = vmatprep.subr.mxu0 0.0
        %1878 = vmatpush1.msra.mxu0 0.0
        %1879 = vmatprep.subr.mxu0 0.0
        %1880 = vmatpush1.msra.mxu0 0.0
        %1881 = vmatprep.subr.mxu0 0.0
        %1882 = vmatpush1.msra.mxu0 0.0
        %1883 = vmatprep.subr.mxu0 0.0
        %1884 = vmatpush1.msra.mxu0 0.0
        %1885 = vmatprep.subr.mxu0 0.0
        %1886 = vmatpush1.msra.mxu0 0.0
        %1887 = vmatprep.subr.mxu0 0.0
        %1888 = vmatpush1.msra.mxu0 0.0
        %1889 = vmatprep.subr.mxu0 0.0
        %1890 = vmatpush1.msra.mxu0 0.0
        %1891 = vmatprep.subr.mxu0 0.0
        %1892 = vmatpush1.msra.mxu0 0.0
        %1893 = vmatprep.subr.mxu0 0.0
        %1894 = vmatpush1.msra.mxu0 0.0
        %1895 = vmatprep.subr.mxu0 0.0
        %1896 = vmatpush1.msra.mxu0 0.0
        %1897 = vmatprep.subr.mxu0 0.0
        %1898 = vmatpush1.msra.mxu0 0.0
        %1899 = vmatprep.subr.mxu0 0.0
        %1900 = vmatpush1.msra.mxu0 0.0
        %1901 = vmatprep.subr.mxu0 0.0
        %1902 = vmatpush1.msra.mxu0 0.0
        %1903 = vmatprep.subr.mxu0 0.0
        %1904 = vmatpush1.msra.mxu0 0.0
        %1905 = vmatprep.subr.mxu0 0.0
        %1906 = vmatpush1.msra.mxu0 0.0
        %1907 = vmatprep.subr.mxu0 0.0
        %1908 = vmatpush1.msra.mxu0 0.0
        %1909 = vmatprep.subr.mxu0 0.0
        %1910 = vmatpush1.msra.mxu0 0.0
        %1911 = vmatprep.subr.mxu0 0.0
        %1912 = vmatpush1.msra.mxu0 0.0
        %1913 = vmatprep.subr.mxu0 0.0
        %1914 = vmatpush1.msra.mxu0 0.0
        %1915 = vmatprep.subr.mxu0 0.0
        %1916 = vmatpush1.msra.mxu0 0.0
        %1917 = vmatprep.subr.mxu0 0.0
        %1918 = vmatpush1.msra.mxu0 0.0
        %1919 = vmatprep.subr.mxu0 0.0
        %1920 = vmatpush1.msra.mxu0 0.0
        %1921 = vmatprep.mubr.f32.mxu0 0.0
        %1922 = vmatmul.mubr.f32.gmra.mrb[0].mxu0 %v1855
        %v1923 = vpop.f32.mrb[0].mxu0
        %v1924 = vadd.f32 0.0, %v1923
        %v1925 = vpop.f32.mrb[0].mxu0
        %1926 = vdwg.mxu0
        %v1928 = vlaneseq
        %v1929 = vshrl.u32 %v1928, 7
        %v1930 = vsub.s32 0, %v1929
        %v1931 = vrot.slane %v1924, %v1930
        %1933 = vbcast.lane.b32.xlu0 %v1931, 256
        %v1934 = vpop.permute.xlu0 %1933
        %s1936 = sor.u32 256, 8
        %1937 = vbcast.lane.b32.xlu0 %v1931, %s1936
        %v1938 = vpop.permute.xlu0 %1937
        %v1939 = vlaneseq
        %v1940 = vshrl.u32 %v1939, 7
        %v1941 = vsub.s32 1, %v1940
        %v1942 = vrot.slane %v1924, %v1941
        %1944 = vbcast.lane.b32.xlu0 %v1942, 256
        %v1945 = vpop.permute.xlu0 %1944
        %s1947 = sor.u32 256, 8
        %1948 = vbcast.lane.b32.xlu0 %v1942, %s1947
        %v1949 = vpop.permute.xlu0 %1948
        %v1950 = vlaneseq
        %v1951 = vshrl.u32 %v1950, 7
        %v1952 = vsub.s32 2, %v1951
        %v1953 = vrot.slane %v1924, %v1952
        %1955 = vbcast.lane.b32.xlu0 %v1953, 256
        %v1956 = vpop.permute.xlu0 %1955
        %s1958 = sor.u32 256, 8
        %1959 = vbcast.lane.b32.xlu0 %v1953, %s1958
        %v1960 = vpop.permute.xlu0 %1959
        %v1961 = vlaneseq
        %v1962 = vshrl.u32 %v1961, 7
        %v1963 = vsub.s32 3, %v1962
        %v1964 = vrot.slane %v1924, %v1963
        %1966 = vbcast.lane.b32.xlu0 %v1964, 256
        %v1967 = vpop.permute.xlu0 %1966
        %s1969 = sor.u32 256, 8
        %1970 = vbcast.lane.b32.xlu0 %v1964, %s1969
        %v1971 = vpop.permute.xlu0 %1970
        %v1972 = vlaneseq
        %v1973 = vshrl.u32 %v1972, 7
        %v1974 = vsub.s32 4, %v1973
        %v1975 = vrot.slane %v1924, %v1974
        %1977 = vbcast.lane.b32.xlu0 %v1975, 256
        %v1978 = vpop.permute.xlu0 %1977
        %s1980 = sor.u32 256, 8
        %1981 = vbcast.lane.b32.xlu0 %v1975, %s1980
        %v1982 = vpop.permute.xlu0 %1981
        %v1983 = vlaneseq
        %v1984 = vshrl.u32 %v1983, 7
        %v1985 = vsub.s32 5, %v1984
        %v1986 = vrot.slane %v1924, %v1985
        %1988 = vbcast.lane.b32.xlu0 %v1986, 256
        %v1989 = vpop.permute.xlu0 %1988
        %s1991 = sor.u32 256, 8
        %1992 = vbcast.lane.b32.xlu0 %v1986, %s1991
        %v1993 = vpop.permute.xlu0 %1992
        %v1994 = vlaneseq
        %v1995 = vshrl.u32 %v1994, 7
        %v1996 = vsub.s32 6, %v1995
        %v1997 = vrot.slane %v1924, %v1996
        %1999 = vbcast.lane.b32.xlu0 %v1997, 256
        %v2000 = vpop.permute.xlu0 %1999
        %s2002 = sor.u32 256, 8
        %2003 = vbcast.lane.b32.xlu0 %v1997, %s2002
        %v2004 = vpop.permute.xlu0 %2003
        %v2005 = vlaneseq
        %v2006 = vshrl.u32 %v2005, 7
        %v2007 = vsub.s32 7, %v2006
        %v2008 = vrot.slane %v1924, %v2007
        %2010 = vbcast.lane.b32.xlu0 %v2008, 256
        %v2011 = vpop.permute.xlu0 %2010
        %s2013 = sor.u32 256, 8
        %2014 = vbcast.lane.b32.xlu0 %v2008, %s2013
        %v2015 = vpop.permute.xlu0 %2014
        %v2032 = vadd.f32 %v1696, %v1934
        %v2033 = vadd.f32 %v1697, %v1938
        %v2034 = vadd.f32 %v1698, %v1945
        %v2035 = vadd.f32 %v1699, %v1949
        %v2036 = vadd.f32 %v1700, %v1956
        %v2037 = vadd.f32 %v1701, %v1960
        %v2038 = vadd.f32 %v1702, %v1967
        %v2039 = vadd.f32 %v1703, %v1971
        %v2040 = vadd.f32 %v1704, %v1978
        %v2041 = vadd.f32 %v1705, %v1982
        %v2042 = vadd.f32 %v1706, %v1989
        %v2043 = vadd.f32 %v1707, %v1993
        %v2044 = vadd.f32 %v1708, %v2000
        %v2045 = vadd.f32 %v1709, %v2004
        %v2046 = vadd.f32 %v1710, %v2011
        %v2047 = vadd.f32 %v1711, %v2015
        %v2048 = vmul.f32 %v2032, 0.0625
        %v2049 = vmul.f32 %v2033, 0.0625
        %v2050 = vmul.f32 %v2034, 0.0625
        %v2051 = vmul.f32 %v2035, 0.0625
        %v2052 = vmul.f32 %v2036, 0.0625
        %v2053 = vmul.f32 %v2037, 0.0625
        %v2054 = vmul.f32 %v2038, 0.0625
        %v2055 = vmul.f32 %v2039, 0.0625
        %v2056 = vmul.f32 %v2040, 0.0625
        %v2057 = vmul.f32 %v2041, 0.0625
        %v2058 = vmul.f32 %v2042, 0.0625
        %v2059 = vmul.f32 %v2043, 0.0625
        %v2060 = vmul.f32 %v2044, 0.0625
        %v2061 = vmul.f32 %v2045, 0.0625
        %v2062 = vmul.f32 %v2046, 0.0625
        %v2063 = vmul.f32 %v2047, 0.0625
        %v2064 = vld [vmem:[%s5] sm:$0xff]
        %2066 = vset.pattern.permute.xlu0 0
        %2067 = vperm.xlu0 %2066, %v2064
        %v2068 = vpop.permute.xlu0 %2067
        %v2069 = vlaneseq
        %v2070 = vshrl.u32 %v2069, 7
        %v2071 = vsub.s32 0, %v2070
        %v2072 = vrot.slane %v2068, %v2071
        %v2073 = vlaneseq
        %v2074 = vshrl.u32 %v2073, 7
        %v2075 = vsub.s32 1, %v2074
        %v2076 = vrot.slane %v2068, %v2075
        %v2077 = vlaneseq
        %v2078 = vshrl.u32 %v2077, 7
        %v2079 = vsub.s32 2, %v2078
        %v2080 = vrot.slane %v2068, %v2079
        %v2081 = vlaneseq
        %v2082 = vshrl.u32 %v2081, 7
        %v2083 = vsub.s32 3, %v2082
        %v2084 = vrot.slane %v2068, %v2083
        %v2085 = vlaneseq
        %v2086 = vshrl.u32 %v2085, 7
        %v2087 = vsub.s32 4, %v2086
        %v2088 = vrot.slane %v2068, %v2087
        %v2089 = vlaneseq
        %v2090 = vshrl.u32 %v2089, 7
        %v2091 = vsub.s32 5, %v2090
        %v2092 = vrot.slane %v2068, %v2091
        %v2093 = vlaneseq
        %v2094 = vshrl.u32 %v2093, 7
        %v2095 = vsub.s32 6, %v2094
        %v2096 = vrot.slane %v2068, %v2095
        %v2097 = vlaneseq
        %v2098 = vshrl.u32 %v2097, 7
        %v2099 = vsub.s32 7, %v2098
        %v2100 = vrot.slane %v2068, %v2099
        %v2109 = vadd.f32 %v2048, %v2072
        %v2110 = vadd.f32 %v2049, %v2072
        %v2111 = vadd.f32 %v2050, %v2076
        %v2112 = vadd.f32 %v2051, %v2076
        %v2113 = vadd.f32 %v2052, %v2080
        %v2114 = vadd.f32 %v2053, %v2080
        %v2115 = vadd.f32 %v2054, %v2084
        %v2116 = vadd.f32 %v2055, %v2084
        %v2117 = vadd.f32 %v2056, %v2088
        %v2118 = vadd.f32 %v2057, %v2088
        %v2119 = vadd.f32 %v2058, %v2092
        %v2120 = vadd.f32 %v2059, %v2092
        %v2121 = vadd.f32 %v2060, %v2096
        %v2122 = vadd.f32 %v2061, %v2096
        %v2123 = vadd.f32 %v2062, %v2100
        %v2124 = vadd.f32 %v2063, %v2100
        %v2125 = vsel %vm559, %v527, 0.0
        %2126 = vadd.xlane.f32.xlu0 %v2125
        %v2127 = vpop.xlane.xlu0 %2126
        %v2128 = vsel %vm559, %v528, 0.0
        %2129 = vadd.xlane.f32.xlu0 %v2128
        %v2130 = vpop.xlane.xlu0 %2129
        %v2131 = vsel %vm559, %v529, 0.0
        %2132 = vadd.xlane.f32.xlu0 %v2131
        %v2133 = vpop.xlane.xlu0 %2132
        %v2134 = vsel %vm559, %v530, 0.0
        %2135 = vadd.xlane.f32.xlu0 %v2134
        %v2136 = vpop.xlane.xlu0 %2135
        %v2137 = vsel %vm559, %v531, 0.0
        %2138 = vadd.xlane.f32.xlu0 %v2137
        %v2139 = vpop.xlane.xlu0 %2138
        %v2140 = vsel %vm559, %v532, 0.0
        %2141 = vadd.xlane.f32.xlu0 %v2140
        %v2142 = vpop.xlane.xlu0 %2141
        %v2143 = vsel %vm559, %v533, 0.0
        %2144 = vadd.xlane.f32.xlu0 %v2143
        %v2145 = vpop.xlane.xlu0 %2144
        %v2146 = vsel %vm559, %v534, 0.0
        %2147 = vadd.xlane.f32.xlu0 %v2146
        %v2148 = vpop.xlane.xlu0 %2147
        %v2149 = vsel %vm559, %v535, 0.0
        %2150 = vadd.xlane.f32.xlu0 %v2149
        %v2151 = vpop.xlane.xlu0 %2150
        %v2152 = vsel %vm559, %v536, 0.0
        %2153 = vadd.xlane.f32.xlu0 %v2152
        %v2154 = vpop.xlane.xlu0 %2153
        %v2155 = vsel %vm559, %v537, 0.0
        %2156 = vadd.xlane.f32.xlu0 %v2155
        %v2157 = vpop.xlane.xlu0 %2156
        %v2158 = vsel %vm559, %v538, 0.0
        %2159 = vadd.xlane.f32.xlu0 %v2158
        %v2160 = vpop.xlane.xlu0 %2159
        %v2161 = vsel %vm559, %v539, 0.0
        %2162 = vadd.xlane.f32.xlu0 %v2161
        %v2163 = vpop.xlane.xlu0 %2162
        %v2164 = vsel %vm559, %v540, 0.0
        %2165 = vadd.xlane.f32.xlu0 %v2164
        %v2166 = vpop.xlane.xlu0 %2165
        %v2167 = vsel %vm559, %v541, 0.0
        %2168 = vadd.xlane.f32.xlu0 %v2167
        %v2169 = vpop.xlane.xlu0 %2168
        %v2170 = vsel %vm559, %v542, 0.0
        %2171 = vadd.xlane.f32.xlu0 %v2170
        %v2172 = vpop.xlane.xlu0 %2171
        %v2173 = vsel %vm608, %v527, 0.0
        %v2174 = vsel %vm608, %v528, 0.0
        %v2175 = vsel %vm608, %v529, 0.0
        %v2176 = vsel %vm608, %v530, 0.0
        %v2177 = vsel %vm608, %v531, 0.0
        %v2178 = vsel %vm608, %v532, 0.0
        %v2179 = vsel %vm608, %v533, 0.0
        %v2180 = vsel %vm608, %v534, 0.0
        %v2181 = vsel %vm608, %v535, 0.0
        %v2182 = vsel %vm608, %v536, 0.0
        %v2183 = vsel %vm608, %v537, 0.0
        %v2184 = vsel %vm608, %v538, 0.0
        %v2185 = vsel %vm608, %v539, 0.0
        %v2186 = vsel %vm608, %v540, 0.0
        %v2187 = vsel %vm608, %v541, 0.0
        %v2188 = vsel %vm608, %v542, 0.0
        %v2189 = vsel %vm559, %v2173, 0.0
        %2190 = vadd.xlane.f32.xlu0 %v2189
        %v2191 = vpop.xlane.xlu0 %2190
        %v2192 = vsel %vm559, %v2174, 0.0
        %2193 = vadd.xlane.f32.xlu0 %v2192
        %v2194 = vpop.xlane.xlu0 %2193
        %v2195 = vsel %vm559, %v2175, 0.0
        %2196 = vadd.xlane.f32.xlu0 %v2195
        %v2197 = vpop.xlane.xlu0 %2196
        %v2198 = vsel %vm559, %v2176, 0.0
        %2199 = vadd.xlane.f32.xlu0 %v2198
        %v2200 = vpop.xlane.xlu0 %2199
        %v2201 = vsel %vm559, %v2177, 0.0
        %2202 = vadd.xlane.f32.xlu0 %v2201
        %v2203 = vpop.xlane.xlu0 %2202
        %v2204 = vsel %vm559, %v2178, 0.0
        %2205 = vadd.xlane.f32.xlu0 %v2204
        %v2206 = vpop.xlane.xlu0 %2205
        %v2207 = vsel %vm559, %v2179, 0.0
        %2208 = vadd.xlane.f32.xlu0 %v2207
        %v2209 = vpop.xlane.xlu0 %2208
        %v2210 = vsel %vm559, %v2180, 0.0
        %2211 = vadd.xlane.f32.xlu0 %v2210
        %v2212 = vpop.xlane.xlu0 %2211
        %v2213 = vsel %vm559, %v2181, 0.0
        %2214 = vadd.xlane.f32.xlu0 %v2213
        %v2215 = vpop.xlane.xlu0 %2214
        %v2216 = vsel %vm559, %v2182, 0.0
        %2217 = vadd.xlane.f32.xlu0 %v2216
        %v2218 = vpop.xlane.xlu0 %2217
        %v2219 = vsel %vm559, %v2183, 0.0
        %2220 = vadd.xlane.f32.xlu0 %v2219
        %v2221 = vpop.xlane.xlu0 %2220
        %v2222 = vsel %vm559, %v2184, 0.0
        %2223 = vadd.xlane.f32.xlu0 %v2222
        %v2224 = vpop.xlane.xlu0 %2223
        %v2225 = vsel %vm559, %v2185, 0.0
        %2226 = vadd.xlane.f32.xlu0 %v2225
        %v2227 = vpop.xlane.xlu0 %2226
        %v2228 = vsel %vm559, %v2186, 0.0
        %2229 = vadd.xlane.f32.xlu0 %v2228
        %v2230 = vpop.xlane.xlu0 %2229
        %v2231 = vsel %vm559, %v2187, 0.0
        %2232 = vadd.xlane.f32.xlu0 %v2231
        %v2233 = vpop.xlane.xlu0 %2232
        %v2234 = vsel %vm559, %v2188, 0.0
        %2235 = vadd.xlane.f32.xlu0 %v2234
        %v2236 = vpop.xlane.xlu0 %2235
        %v2237 = vsel %vm673, %v527, 0.0
        %v2238 = vsel %vm673, %v528, 0.0
        %v2239 = vsel %vm673, %v529, 0.0
        %v2240 = vsel %vm673, %v530, 0.0
        %v2241 = vsel %vm673, %v531, 0.0
        %v2242 = vsel %vm673, %v532, 0.0
        %v2243 = vsel %vm673, %v533, 0.0
        %v2244 = vsel %vm673, %v534, 0.0
        %v2245 = vsel %vm673, %v535, 0.0
        %v2246 = vsel %vm673, %v536, 0.0
        %v2247 = vsel %vm673, %v537, 0.0
        %v2248 = vsel %vm673, %v538, 0.0
        %v2249 = vsel %vm673, %v539, 0.0
        %v2250 = vsel %vm673, %v540, 0.0
        %v2251 = vsel %vm673, %v541, 0.0
        %v2252 = vsel %vm673, %v542, 0.0
        %v2253 = vsel %vm559, %v2237, 0.0
        %2254 = vadd.xlane.f32.xlu0 %v2253
        %v2255 = vpop.xlane.xlu0 %2254
        %v2256 = vsel %vm559, %v2238, 0.0
        %2257 = vadd.xlane.f32.xlu0 %v2256
        %v2258 = vpop.xlane.xlu0 %2257
        %v2259 = vsel %vm559, %v2239, 0.0
        %2260 = vadd.xlane.f32.xlu0 %v2259
        %v2261 = vpop.xlane.xlu0 %2260
        %v2262 = vsel %vm559, %v2240, 0.0
        %2263 = vadd.xlane.f32.xlu0 %v2262
        %v2264 = vpop.xlane.xlu0 %2263
        %v2265 = vsel %vm559, %v2241, 0.0
        %2266 = vadd.xlane.f32.xlu0 %v2265
        %v2267 = vpop.xlane.xlu0 %2266
        %v2268 = vsel %vm559, %v2242, 0.0
        %2269 = vadd.xlane.f32.xlu0 %v2268
        %v2270 = vpop.xlane.xlu0 %2269
        %v2271 = vsel %vm559, %v2243, 0.0
        %2272 = vadd.xlane.f32.xlu0 %v2271
        %v2273 = vpop.xlane.xlu0 %2272
        %v2274 = vsel %vm559, %v2244, 0.0
        %2275 = vadd.xlane.f32.xlu0 %v2274
        %v2276 = vpop.xlane.xlu0 %2275
        %v2277 = vsel %vm559, %v2245, 0.0
        %2278 = vadd.xlane.f32.xlu0 %v2277
        %v2279 = vpop.xlane.xlu0 %2278
        %v2280 = vsel %vm559, %v2246, 0.0
        %2281 = vadd.xlane.f32.xlu0 %v2280
        %v2282 = vpop.xlane.xlu0 %2281
        %v2283 = vsel %vm559, %v2247, 0.0
        %2284 = vadd.xlane.f32.xlu0 %v2283
        %v2285 = vpop.xlane.xlu0 %2284
        %v2286 = vsel %vm559, %v2248, 0.0
        %2287 = vadd.xlane.f32.xlu0 %v2286
        %v2288 = vpop.xlane.xlu0 %2287
        %v2289 = vsel %vm559, %v2249, 0.0
        %2290 = vadd.xlane.f32.xlu0 %v2289
        %v2291 = vpop.xlane.xlu0 %2290
        %v2292 = vsel %vm559, %v2250, 0.0
        %2293 = vadd.xlane.f32.xlu0 %v2292
        %v2294 = vpop.xlane.xlu0 %2293
        %v2295 = vsel %vm559, %v2251, 0.0
        %2296 = vadd.xlane.f32.xlu0 %v2295
        %v2297 = vpop.xlane.xlu0 %2296
        %v2298 = vsel %vm559, %v2252, 0.0
        %2299 = vadd.xlane.f32.xlu0 %v2298
        %v2300 = vpop.xlane.xlu0 %2299
        %s2301 = scalar_lea.vmem [#allocation7], 8
        %v2302 = vld [vmem:[%s2301] sm:$0xff]
        %2304 = vset.pattern.permute.xlu0 0
        %2305 = vperm.xlu0 %2304, %v2302
        %v2306 = vpop.permute.xlu0 %2305
        %v2307 = vlaneseq
        %v2308 = vshrl.u32 %v2307, 7
        %v2309 = vsub.s32 0, %v2308
        %v2310 = vrot.slane %v2306, %v2309
        %v2311 = vlaneseq
        %v2312 = vshrl.u32 %v2311, 7
        %v2313 = vsub.s32 1, %v2312
        %v2314 = vrot.slane %v2306, %v2313
        %v2315 = vlaneseq
        %v2316 = vshrl.u32 %v2315, 7
        %v2317 = vsub.s32 2, %v2316
        %v2318 = vrot.slane %v2306, %v2317
        %v2319 = vlaneseq
        %v2320 = vshrl.u32 %v2319, 7
        %v2321 = vsub.s32 3, %v2320
        %v2322 = vrot.slane %v2306, %v2321
        %v2323 = vlaneseq
        %v2324 = vshrl.u32 %v2323, 7
        %v2325 = vsub.s32 4, %v2324
        %v2326 = vrot.slane %v2306, %v2325
        %v2327 = vlaneseq
        %v2328 = vshrl.u32 %v2327, 7
        %v2329 = vsub.s32 5, %v2328
        %v2330 = vrot.slane %v2306, %v2329
        %v2331 = vlaneseq
        %v2332 = vshrl.u32 %v2331, 7
        %v2333 = vsub.s32 6, %v2332
        %v2334 = vrot.slane %v2306, %v2333
        %v2335 = vlaneseq
        %v2336 = vshrl.u32 %v2335, 7
        %v2337 = vsub.s32 7, %v2336
        %v2338 = vrot.slane %v2306, %v2337
        %v2347 = vmul.f32 %v2191, %v2310
        %v2348 = vmul.f32 %v2194, %v2310
        %v2349 = vmul.f32 %v2197, %v2314
        %v2350 = vmul.f32 %v2200, %v2314
        %v2351 = vmul.f32 %v2203, %v2318
        %v2352 = vmul.f32 %v2206, %v2318
        %v2353 = vmul.f32 %v2209, %v2322
        %v2354 = vmul.f32 %v2212, %v2322
        %v2355 = vmul.f32 %v2215, %v2326
        %v2356 = vmul.f32 %v2218, %v2326
        %v2357 = vmul.f32 %v2221, %v2330
        %v2358 = vmul.f32 %v2224, %v2330
        %v2359 = vmul.f32 %v2227, %v2334
        %v2360 = vmul.f32 %v2230, %v2334
        %v2361 = vmul.f32 %v2233, %v2338
        %v2362 = vmul.f32 %v2236, %v2338
        %2363 = vset.pattern.permute.xlu0 1
        %2364 = vperm.xlu0 %2363, %v2302
        %v2365 = vpop.permute.xlu0 %2364
        %v2366 = vlaneseq
        %v2367 = vshrl.u32 %v2366, 7
        %v2368 = vsub.s32 0, %v2367
        %v2369 = vrot.slane %v2365, %v2368
        %v2370 = vlaneseq
        %v2371 = vshrl.u32 %v2370, 7
        %v2372 = vsub.s32 1, %v2371
        %v2373 = vrot.slane %v2365, %v2372
        %v2374 = vlaneseq
        %v2375 = vshrl.u32 %v2374, 7
        %v2376 = vsub.s32 2, %v2375
        %v2377 = vrot.slane %v2365, %v2376
        %v2378 = vlaneseq
        %v2379 = vshrl.u32 %v2378, 7
        %v2380 = vsub.s32 3, %v2379
        %v2381 = vrot.slane %v2365, %v2380
        %v2382 = vlaneseq
        %v2383 = vshrl.u32 %v2382, 7
        %v2384 = vsub.s32 4, %v2383
        %v2385 = vrot.slane %v2365, %v2384
        %v2386 = vlaneseq
        %v2387 = vshrl.u32 %v2386, 7
        %v2388 = vsub.s32 5, %v2387
        %v2389 = vrot.slane %v2365, %v2388
        %v2390 = vlaneseq
        %v2391 = vshrl.u32 %v2390, 7
        %v2392 = vsub.s32 6, %v2391
        %v2393 = vrot.slane %v2365, %v2392
        %v2394 = vlaneseq
        %v2395 = vshrl.u32 %v2394, 7
        %v2396 = vsub.s32 7, %v2395
        %v2397 = vrot.slane %v2365, %v2396
        %v2406 = vmul.f32 %v2127, %v2369
        %v2407 = vmul.f32 %v2130, %v2369
        %v2408 = vmul.f32 %v2133, %v2373
        %v2409 = vmul.f32 %v2136, %v2373
        %v2410 = vmul.f32 %v2139, %v2377
        %v2411 = vmul.f32 %v2142, %v2377
        %v2412 = vmul.f32 %v2145, %v2381
        %v2413 = vmul.f32 %v2148, %v2381
        %v2414 = vmul.f32 %v2151, %v2385
        %v2415 = vmul.f32 %v2154, %v2385
        %v2416 = vmul.f32 %v2157, %v2389
        %v2417 = vmul.f32 %v2160, %v2389
        %v2418 = vmul.f32 %v2163, %v2393
        %v2419 = vmul.f32 %v2166, %v2393
        %v2420 = vmul.f32 %v2169, %v2397
        %v2421 = vmul.f32 %v2172, %v2397
        %v2422 = vadd.f32 %v2347, %v2406
        %v2423 = vadd.f32 %v2348, %v2407
        %v2424 = vadd.f32 %v2349, %v2408
        %v2425 = vadd.f32 %v2350, %v2409
        %v2426 = vadd.f32 %v2351, %v2410
        %v2427 = vadd.f32 %v2352, %v2411
        %v2428 = vadd.f32 %v2353, %v2412
        %v2429 = vadd.f32 %v2354, %v2413
        %v2430 = vadd.f32 %v2355, %v2414
        %v2431 = vadd.f32 %v2356, %v2415
        %v2432 = vadd.f32 %v2357, %v2416
        %v2433 = vadd.f32 %v2358, %v2417
        %v2434 = vadd.f32 %v2359, %v2418
        %v2435 = vadd.f32 %v2360, %v2419
        %v2436 = vadd.f32 %v2361, %v2420
        %v2437 = vadd.f32 %v2362, %v2421
        %2438 = vset.pattern.permute.xlu0 2
        %2439 = vperm.xlu0 %2438, %v2302
        %v2440 = vpop.permute.xlu0 %2439
        %v2441 = vlaneseq
        %v2442 = vshrl.u32 %v2441, 7
        %v2443 = vsub.s32 0, %v2442
        %v2444 = vrot.slane %v2440, %v2443
        %v2445 = vlaneseq
        %v2446 = vshrl.u32 %v2445, 7
        %v2447 = vsub.s32 1, %v2446
        %v2448 = vrot.slane %v2440, %v2447
        %v2449 = vlaneseq
        %v2450 = vshrl.u32 %v2449, 7
        %v2451 = vsub.s32 2, %v2450
        %v2452 = vrot.slane %v2440, %v2451
        %v2453 = vlaneseq
        %v2454 = vshrl.u32 %v2453, 7
        %v2455 = vsub.s32 3, %v2454
        %v2456 = vrot.slane %v2440, %v2455
        %v2457 = vlaneseq
        %v2458 = vshrl.u32 %v2457, 7
        %v2459 = vsub.s32 4, %v2458
        %v2460 = vrot.slane %v2440, %v2459
        %v2461 = vlaneseq
        %v2462 = vshrl.u32 %v2461, 7
        %v2463 = vsub.s32 5, %v2462
        %v2464 = vrot.slane %v2440, %v2463
        %v2465 = vlaneseq
        %v2466 = vshrl.u32 %v2465, 7
        %v2467 = vsub.s32 6, %v2466
        %v2468 = vrot.slane %v2440, %v2467
        %v2469 = vlaneseq
        %v2470 = vshrl.u32 %v2469, 7
        %v2471 = vsub.s32 7, %v2470
        %v2472 = vrot.slane %v2440, %v2471
        %v2481 = vmul.f32 %v2255, %v2444
        %v2482 = vmul.f32 %v2258, %v2444
        %v2483 = vmul.f32 %v2261, %v2448
        %v2484 = vmul.f32 %v2264, %v2448
        %v2485 = vmul.f32 %v2267, %v2452
        %v2486 = vmul.f32 %v2270, %v2452
        %v2487 = vmul.f32 %v2273, %v2456
        %v2488 = vmul.f32 %v2276, %v2456
        %v2489 = vmul.f32 %v2279, %v2460
        %v2490 = vmul.f32 %v2282, %v2460
        %v2491 = vmul.f32 %v2285, %v2464
        %v2492 = vmul.f32 %v2288, %v2464
        %v2493 = vmul.f32 %v2291, %v2468
        %v2494 = vmul.f32 %v2294, %v2468
        %v2495 = vmul.f32 %v2297, %v2472
        %v2496 = vmul.f32 %v2300, %v2472
        %v2497 = vadd.f32 %v2422, %v2481
        %v2498 = vadd.f32 %v2423, %v2482
        %v2499 = vadd.f32 %v2424, %v2483
        %v2500 = vadd.f32 %v2425, %v2484
        %v2501 = vadd.f32 %v2426, %v2485
        %v2502 = vadd.f32 %v2427, %v2486
        %v2503 = vadd.f32 %v2428, %v2487
        %v2504 = vadd.f32 %v2429, %v2488
        %v2505 = vadd.f32 %v2430, %v2489
        %v2506 = vadd.f32 %v2431, %v2490
        %v2507 = vadd.f32 %v2432, %v2491
        %v2508 = vadd.f32 %v2433, %v2492
        %v2509 = vadd.f32 %v2434, %v2493
        %v2510 = vadd.f32 %v2435, %v2494
        %v2511 = vadd.f32 %v2436, %v2495
        %v2512 = vadd.f32 %v2437, %v2496
        %2513 = vset.pattern.permute.xlu0 3
        %2514 = vperm.xlu0 %2513, %v2302
        %v2515 = vpop.permute.xlu0 %2514
        %v2516 = vlaneseq
        %v2517 = vshrl.u32 %v2516, 7
        %v2518 = vsub.s32 0, %v2517
        %v2519 = vrot.slane %v2515, %v2518
        %v2520 = vlaneseq
        %v2521 = vshrl.u32 %v2520, 7
        %v2522 = vsub.s32 1, %v2521
        %v2523 = vrot.slane %v2515, %v2522
        %v2524 = vlaneseq
        %v2525 = vshrl.u32 %v2524, 7
        %v2526 = vsub.s32 2, %v2525
        %v2527 = vrot.slane %v2515, %v2526
        %v2528 = vlaneseq
        %v2529 = vshrl.u32 %v2528, 7
        %v2530 = vsub.s32 3, %v2529
        %v2531 = vrot.slane %v2515, %v2530
        %v2532 = vlaneseq
        %v2533 = vshrl.u32 %v2532, 7
        %v2534 = vsub.s32 4, %v2533
        %v2535 = vrot.slane %v2515, %v2534
        %v2536 = vlaneseq
        %v2537 = vshrl.u32 %v2536, 7
        %v2538 = vsub.s32 5, %v2537
        %v2539 = vrot.slane %v2515, %v2538
        %v2540 = vlaneseq
        %v2541 = vshrl.u32 %v2540, 7
        %v2542 = vsub.s32 6, %v2541
        %v2543 = vrot.slane %v2515, %v2542
        %v2544 = vlaneseq
        %v2545 = vshrl.u32 %v2544, 7
        %v2546 = vsub.s32 7, %v2545
        %v2547 = vrot.slane %v2515, %v2546
        %v2556 = vmul.f32 %v2191, %v2519
        %v2557 = vmul.f32 %v2194, %v2519
        %v2558 = vmul.f32 %v2197, %v2523
        %v2559 = vmul.f32 %v2200, %v2523
        %v2560 = vmul.f32 %v2203, %v2527
        %v2561 = vmul.f32 %v2206, %v2527
        %v2562 = vmul.f32 %v2209, %v2531
        %v2563 = vmul.f32 %v2212, %v2531
        %v2564 = vmul.f32 %v2215, %v2535
        %v2565 = vmul.f32 %v2218, %v2535
        %v2566 = vmul.f32 %v2221, %v2539
        %v2567 = vmul.f32 %v2224, %v2539
        %v2568 = vmul.f32 %v2227, %v2543
        %v2569 = vmul.f32 %v2230, %v2543
        %v2570 = vmul.f32 %v2233, %v2547
        %v2571 = vmul.f32 %v2236, %v2547
        %2572 = vset.pattern.permute.xlu0 4
        %2573 = vperm.xlu0 %2572, %v2302
        %v2574 = vpop.permute.xlu0 %2573
        %v2575 = vlaneseq
        %v2576 = vshrl.u32 %v2575, 7
        %v2577 = vsub.s32 0, %v2576
        %v2578 = vrot.slane %v2574, %v2577
        %v2579 = vlaneseq
        %v2580 = vshrl.u32 %v2579, 7
        %v2581 = vsub.s32 1, %v2580
        %v2582 = vrot.slane %v2574, %v2581
        %v2583 = vlaneseq
        %v2584 = vshrl.u32 %v2583, 7
        %v2585 = vsub.s32 2, %v2584
        %v2586 = vrot.slane %v2574, %v2585
        %v2587 = vlaneseq
        %v2588 = vshrl.u32 %v2587, 7
        %v2589 = vsub.s32 3, %v2588
        %v2590 = vrot.slane %v2574, %v2589
        %v2591 = vlaneseq
        %v2592 = vshrl.u32 %v2591, 7
        %v2593 = vsub.s32 4, %v2592
        %v2594 = vrot.slane %v2574, %v2593
        %v2595 = vlaneseq
        %v2596 = vshrl.u32 %v2595, 7
        %v2597 = vsub.s32 5, %v2596
        %v2598 = vrot.slane %v2574, %v2597
        %v2599 = vlaneseq
        %v2600 = vshrl.u32 %v2599, 7
        %v2601 = vsub.s32 6, %v2600
        %v2602 = vrot.slane %v2574, %v2601
        %v2603 = vlaneseq
        %v2604 = vshrl.u32 %v2603, 7
        %v2605 = vsub.s32 7, %v2604
        %v2606 = vrot.slane %v2574, %v2605
        %v2615 = vmul.f32 %v2127, %v2578
        %v2616 = vmul.f32 %v2130, %v2578
        %v2617 = vmul.f32 %v2133, %v2582
        %v2618 = vmul.f32 %v2136, %v2582
        %v2619 = vmul.f32 %v2139, %v2586
        %v2620 = vmul.f32 %v2142, %v2586
        %v2621 = vmul.f32 %v2145, %v2590
        %v2622 = vmul.f32 %v2148, %v2590
        %v2623 = vmul.f32 %v2151, %v2594
        %v2624 = vmul.f32 %v2154, %v2594
        %v2625 = vmul.f32 %v2157, %v2598
        %v2626 = vmul.f32 %v2160, %v2598
        %v2627 = vmul.f32 %v2163, %v2602
        %v2628 = vmul.f32 %v2166, %v2602
        %v2629 = vmul.f32 %v2169, %v2606
        %v2630 = vmul.f32 %v2172, %v2606
        %v2631 = vadd.f32 %v2556, %v2615
        %v2632 = vadd.f32 %v2557, %v2616
        %v2633 = vadd.f32 %v2558, %v2617
        %v2634 = vadd.f32 %v2559, %v2618
        %v2635 = vadd.f32 %v2560, %v2619
        %v2636 = vadd.f32 %v2561, %v2620
        %v2637 = vadd.f32 %v2562, %v2621
        %v2638 = vadd.f32 %v2563, %v2622
        %v2639 = vadd.f32 %v2564, %v2623
        %v2640 = vadd.f32 %v2565, %v2624
        %v2641 = vadd.f32 %v2566, %v2625
        %v2642 = vadd.f32 %v2567, %v2626
        %v2643 = vadd.f32 %v2568, %v2627
        %v2644 = vadd.f32 %v2569, %v2628
        %v2645 = vadd.f32 %v2570, %v2629
        %v2646 = vadd.f32 %v2571, %v2630
        %2647 = vset.pattern.permute.xlu0 5
        %2648 = vperm.xlu0 %2647, %v2302
        %v2649 = vpop.permute.xlu0 %2648
        %v2650 = vlaneseq
        %v2651 = vshrl.u32 %v2650, 7
        %v2652 = vsub.s32 0, %v2651
        %v2653 = vrot.slane %v2649, %v2652
        %v2654 = vlaneseq
        %v2655 = vshrl.u32 %v2654, 7
        %v2656 = vsub.s32 1, %v2655
        %v2657 = vrot.slane %v2649, %v2656
        %v2658 = vlaneseq
        %v2659 = vshrl.u32 %v2658, 7
        %v2660 = vsub.s32 2, %v2659
        %v2661 = vrot.slane %v2649, %v2660
        %v2662 = vlaneseq
        %v2663 = vshrl.u32 %v2662, 7
        %v2664 = vsub.s32 3, %v2663
        %v2665 = vrot.slane %v2649, %v2664
        %v2666 = vlaneseq
        %v2667 = vshrl.u32 %v2666, 7
        %v2668 = vsub.s32 4, %v2667
        %v2669 = vrot.slane %v2649, %v2668
        %v2670 = vlaneseq
        %v2671 = vshrl.u32 %v2670, 7
        %v2672 = vsub.s32 5, %v2671
        %v2673 = vrot.slane %v2649, %v2672
        %v2674 = vlaneseq
        %v2675 = vshrl.u32 %v2674, 7
        %v2676 = vsub.s32 6, %v2675
        %v2677 = vrot.slane %v2649, %v2676
        %v2678 = vlaneseq
        %v2679 = vshrl.u32 %v2678, 7
        %v2680 = vsub.s32 7, %v2679
        %v2681 = vrot.slane %v2649, %v2680
        %v2690 = vmul.f32 %v2255, %v2653
        %v2691 = vmul.f32 %v2258, %v2653
        %v2692 = vmul.f32 %v2261, %v2657
        %v2693 = vmul.f32 %v2264, %v2657
        %v2694 = vmul.f32 %v2267, %v2661
        %v2695 = vmul.f32 %v2270, %v2661
        %v2696 = vmul.f32 %v2273, %v2665
        %v2697 = vmul.f32 %v2276, %v2665
        %v2698 = vmul.f32 %v2279, %v2669
        %v2699 = vmul.f32 %v2282, %v2669
        %v2700 = vmul.f32 %v2285, %v2673
        %v2701 = vmul.f32 %v2288, %v2673
        %v2702 = vmul.f32 %v2291, %v2677
        %v2703 = vmul.f32 %v2294, %v2677
        %v2704 = vmul.f32 %v2297, %v2681
        %v2705 = vmul.f32 %v2300, %v2681
        %v2706 = vadd.f32 %v2631, %v2690
        %v2707 = vadd.f32 %v2632, %v2691
        %v2708 = vadd.f32 %v2633, %v2692
        %v2709 = vadd.f32 %v2634, %v2693
        %v2710 = vadd.f32 %v2635, %v2694
        %v2711 = vadd.f32 %v2636, %v2695
        %v2712 = vadd.f32 %v2637, %v2696
        %v2713 = vadd.f32 %v2638, %v2697
        %v2714 = vadd.f32 %v2639, %v2698
        %v2715 = vadd.f32 %v2640, %v2699
        %v2716 = vadd.f32 %v2641, %v2700
        %v2717 = vadd.f32 %v2642, %v2701
        %v2718 = vadd.f32 %v2643, %v2702
        %v2719 = vadd.f32 %v2644, %v2703
        %v2720 = vadd.f32 %v2645, %v2704
        %v2721 = vadd.f32 %v2646, %v2705
        %2722 = vset.pattern.permute.xlu0 6
        %2723 = vperm.xlu0 %2722, %v2302
        %v2724 = vpop.permute.xlu0 %2723
        %v2725 = vlaneseq
        %v2726 = vshrl.u32 %v2725, 7
        %v2727 = vsub.s32 0, %v2726
        %v2728 = vrot.slane %v2724, %v2727
        %v2729 = vlaneseq
        %v2730 = vshrl.u32 %v2729, 7
        %v2731 = vsub.s32 1, %v2730
        %v2732 = vrot.slane %v2724, %v2731
        %v2733 = vlaneseq
        %v2734 = vshrl.u32 %v2733, 7
        %v2735 = vsub.s32 2, %v2734
        %v2736 = vrot.slane %v2724, %v2735
        %v2737 = vlaneseq
        %v2738 = vshrl.u32 %v2737, 7
        %v2739 = vsub.s32 3, %v2738
        %v2740 = vrot.slane %v2724, %v2739
        %v2741 = vlaneseq
        %v2742 = vshrl.u32 %v2741, 7
        %v2743 = vsub.s32 4, %v2742
        %v2744 = vrot.slane %v2724, %v2743
        %v2745 = vlaneseq
        %v2746 = vshrl.u32 %v2745, 7
        %v2747 = vsub.s32 5, %v2746
        %v2748 = vrot.slane %v2724, %v2747
        %v2749 = vlaneseq
        %v2750 = vshrl.u32 %v2749, 7
        %v2751 = vsub.s32 6, %v2750
        %v2752 = vrot.slane %v2724, %v2751
        %v2753 = vlaneseq
        %v2754 = vshrl.u32 %v2753, 7
        %v2755 = vsub.s32 7, %v2754
        %v2756 = vrot.slane %v2724, %v2755
        %v2765 = vmul.f32 %v2191, %v2728
        %v2766 = vmul.f32 %v2194, %v2728
        %v2767 = vmul.f32 %v2197, %v2732
        %v2768 = vmul.f32 %v2200, %v2732
        %v2769 = vmul.f32 %v2203, %v2736
        %v2770 = vmul.f32 %v2206, %v2736
        %v2771 = vmul.f32 %v2209, %v2740
        %v2772 = vmul.f32 %v2212, %v2740
        %v2773 = vmul.f32 %v2215, %v2744
        %v2774 = vmul.f32 %v2218, %v2744
        %v2775 = vmul.f32 %v2221, %v2748
        %v2776 = vmul.f32 %v2224, %v2748
        %v2777 = vmul.f32 %v2227, %v2752
        %v2778 = vmul.f32 %v2230, %v2752
        %v2779 = vmul.f32 %v2233, %v2756
        %v2780 = vmul.f32 %v2236, %v2756
        %2781 = vset.pattern.permute.xlu0 7
        %2782 = vperm.xlu0 %2781, %v2302
        %v2783 = vpop.permute.xlu0 %2782
        %v2784 = vlaneseq
        %v2785 = vshrl.u32 %v2784, 7
        %v2786 = vsub.s32 0, %v2785
        %v2787 = vrot.slane %v2783, %v2786
        %v2788 = vlaneseq
        %v2789 = vshrl.u32 %v2788, 7
        %v2790 = vsub.s32 1, %v2789
        %v2791 = vrot.slane %v2783, %v2790
        %v2792 = vlaneseq
        %v2793 = vshrl.u32 %v2792, 7
        %v2794 = vsub.s32 2, %v2793
        %v2795 = vrot.slane %v2783, %v2794
        %v2796 = vlaneseq
        %v2797 = vshrl.u32 %v2796, 7
        %v2798 = vsub.s32 3, %v2797
        %v2799 = vrot.slane %v2783, %v2798
        %v2800 = vlaneseq
        %v2801 = vshrl.u32 %v2800, 7
        %v2802 = vsub.s32 4, %v2801
        %v2803 = vrot.slane %v2783, %v2802
        %v2804 = vlaneseq
        %v2805 = vshrl.u32 %v2804, 7
        %v2806 = vsub.s32 5, %v2805
        %v2807 = vrot.slane %v2783, %v2806
        %v2808 = vlaneseq
        %v2809 = vshrl.u32 %v2808, 7
        %v2810 = vsub.s32 6, %v2809
        %v2811 = vrot.slane %v2783, %v2810
        %v2812 = vlaneseq
        %v2813 = vshrl.u32 %v2812, 7
        %v2814 = vsub.s32 7, %v2813
        %v2815 = vrot.slane %v2783, %v2814
        %v2824 = vmul.f32 %v2127, %v2787
        %v2825 = vmul.f32 %v2130, %v2787
        %v2826 = vmul.f32 %v2133, %v2791
        %v2827 = vmul.f32 %v2136, %v2791
        %v2828 = vmul.f32 %v2139, %v2795
        %v2829 = vmul.f32 %v2142, %v2795
        %v2830 = vmul.f32 %v2145, %v2799
        %v2831 = vmul.f32 %v2148, %v2799
        %v2832 = vmul.f32 %v2151, %v2803
        %v2833 = vmul.f32 %v2154, %v2803
        %v2834 = vmul.f32 %v2157, %v2807
        %v2835 = vmul.f32 %v2160, %v2807
        %v2836 = vmul.f32 %v2163, %v2811
        %v2837 = vmul.f32 %v2166, %v2811
        %v2838 = vmul.f32 %v2169, %v2815
        %v2839 = vmul.f32 %v2172, %v2815
        %v2840 = vadd.f32 %v2765, %v2824
        %v2841 = vadd.f32 %v2766, %v2825
        %v2842 = vadd.f32 %v2767, %v2826
        %v2843 = vadd.f32 %v2768, %v2827
        %v2844 = vadd.f32 %v2769, %v2828
        %v2845 = vadd.f32 %v2770, %v2829
        %v2846 = vadd.f32 %v2771, %v2830
        %v2847 = vadd.f32 %v2772, %v2831
        %v2848 = vadd.f32 %v2773, %v2832
        %v2849 = vadd.f32 %v2774, %v2833
        %v2850 = vadd.f32 %v2775, %v2834
        %v2851 = vadd.f32 %v2776, %v2835
        %v2852 = vadd.f32 %v2777, %v2836
        %v2853 = vadd.f32 %v2778, %v2837
        %v2854 = vadd.f32 %v2779, %v2838
        %v2855 = vadd.f32 %v2780, %v2839
        %2856 = vset.pattern.permute.xlu0 8
        %2857 = vperm.xlu0 %2856, %v2302
        %v2858 = vpop.permute.xlu0 %2857
        %v2859 = vlaneseq
        %v2860 = vshrl.u32 %v2859, 7
        %v2861 = vsub.s32 0, %v2860
        %v2862 = vrot.slane %v2858, %v2861
        %v2863 = vlaneseq
        %v2864 = vshrl.u32 %v2863, 7
        %v2865 = vsub.s32 1, %v2864
        %v2866 = vrot.slane %v2858, %v2865
        %v2867 = vlaneseq
        %v2868 = vshrl.u32 %v2867, 7
        %v2869 = vsub.s32 2, %v2868
        %v2870 = vrot.slane %v2858, %v2869
        %v2871 = vlaneseq
        %v2872 = vshrl.u32 %v2871, 7
        %v2873 = vsub.s32 3, %v2872
        %v2874 = vrot.slane %v2858, %v2873
        %v2875 = vlaneseq
        %v2876 = vshrl.u32 %v2875, 7
        %v2877 = vsub.s32 4, %v2876
        %v2878 = vrot.slane %v2858, %v2877
        %v2879 = vlaneseq
        %v2880 = vshrl.u32 %v2879, 7
        %v2881 = vsub.s32 5, %v2880
        %v2882 = vrot.slane %v2858, %v2881
        %v2883 = vlaneseq
        %v2884 = vshrl.u32 %v2883, 7
        %v2885 = vsub.s32 6, %v2884
        %v2886 = vrot.slane %v2858, %v2885
        %v2887 = vlaneseq
        %v2888 = vshrl.u32 %v2887, 7
        %v2889 = vsub.s32 7, %v2888
        %v2890 = vrot.slane %v2858, %v2889
        %v2899 = vmul.f32 %v2255, %v2862
        %v2900 = vmul.f32 %v2258, %v2862
        %v2901 = vmul.f32 %v2261, %v2866
        %v2902 = vmul.f32 %v2264, %v2866
        %v2903 = vmul.f32 %v2267, %v2870
        %v2904 = vmul.f32 %v2270, %v2870
        %v2905 = vmul.f32 %v2273, %v2874
        %v2906 = vmul.f32 %v2276, %v2874
        %v2907 = vmul.f32 %v2279, %v2878
        %v2908 = vmul.f32 %v2282, %v2878
        %v2909 = vmul.f32 %v2285, %v2882
        %v2910 = vmul.f32 %v2288, %v2882
        %v2911 = vmul.f32 %v2291, %v2886
        %v2912 = vmul.f32 %v2294, %v2886
        %v2913 = vmul.f32 %v2297, %v2890
        %v2914 = vmul.f32 %v2300, %v2890
        %v2915 = vadd.f32 %v2840, %v2899
        %v2916 = vadd.f32 %v2841, %v2900
        %v2917 = vadd.f32 %v2842, %v2901
        %v2918 = vadd.f32 %v2843, %v2902
        %v2919 = vadd.f32 %v2844, %v2903
        %v2920 = vadd.f32 %v2845, %v2904
        %v2921 = vadd.f32 %v2846, %v2905
        %v2922 = vadd.f32 %v2847, %v2906
        %v2923 = vadd.f32 %v2848, %v2907
        %v2924 = vadd.f32 %v2849, %v2908
        %v2925 = vadd.f32 %v2850, %v2909
        %v2926 = vadd.f32 %v2851, %v2910
        %v2927 = vadd.f32 %v2852, %v2911
        %v2928 = vadd.f32 %v2853, %v2912
        %v2929 = vadd.f32 %v2854, %v2913
        %v2930 = vadd.f32 %v2855, %v2914
        %2947 = vset.pattern.permute.xlu0 0
        %2948 = vperm.xlu0 %2947, %v2497
        %v2949 = vpop.permute.xlu0 %2948
        %2950 = vset.pattern.permute.xlu0 0
        %2951 = vperm.xlu0 %2950, %v2498
        %v2952 = vpop.permute.xlu0 %2951
        %2953 = vset.pattern.permute.xlu0 0
        %2954 = vperm.xlu0 %2953, %v2499
        %v2955 = vpop.permute.xlu0 %2954
        %2956 = vset.pattern.permute.xlu0 0
        %2957 = vperm.xlu0 %2956, %v2500
        %v2958 = vpop.permute.xlu0 %2957
        %2959 = vset.pattern.permute.xlu0 0
        %2960 = vperm.xlu0 %2959, %v2501
        %v2961 = vpop.permute.xlu0 %2960
        %2962 = vset.pattern.permute.xlu0 0
        %2963 = vperm.xlu0 %2962, %v2502
        %v2964 = vpop.permute.xlu0 %2963
        %2965 = vset.pattern.permute.xlu0 0
        %2966 = vperm.xlu0 %2965, %v2503
        %v2967 = vpop.permute.xlu0 %2966
        %2968 = vset.pattern.permute.xlu0 0
        %2969 = vperm.xlu0 %2968, %v2504
        %v2970 = vpop.permute.xlu0 %2969
        %2971 = vset.pattern.permute.xlu0 0
        %2972 = vperm.xlu0 %2971, %v2505
        %v2973 = vpop.permute.xlu0 %2972
        %2974 = vset.pattern.permute.xlu0 0
        %2975 = vperm.xlu0 %2974, %v2506
        %v2976 = vpop.permute.xlu0 %2975
        %2977 = vset.pattern.permute.xlu0 0
        %2978 = vperm.xlu0 %2977, %v2507
        %v2979 = vpop.permute.xlu0 %2978
        %2980 = vset.pattern.permute.xlu0 0
        %2981 = vperm.xlu0 %2980, %v2508
        %v2982 = vpop.permute.xlu0 %2981
        %2983 = vset.pattern.permute.xlu0 0
        %2984 = vperm.xlu0 %2983, %v2509
        %v2985 = vpop.permute.xlu0 %2984
        %2986 = vset.pattern.permute.xlu0 0
        %2987 = vperm.xlu0 %2986, %v2510
        %v2988 = vpop.permute.xlu0 %2987
        %2989 = vset.pattern.permute.xlu0 0
        %2990 = vperm.xlu0 %2989, %v2511
        %v2991 = vpop.permute.xlu0 %2990
        %2992 = vset.pattern.permute.xlu0 0
        %2993 = vperm.xlu0 %2992, %v2512
        %v2994 = vpop.permute.xlu0 %2993
        %v2995 = vlaneseq
        %v2996 = vshrl.u32 %v2995, 7
        %v2997 = vsub.s32 %v455, %v2996
        %v2998 = vrot.slane %v2949, %v2997
        %v2999 = vlaneseq
        %v3000 = vshrl.u32 %v2999, 7
        %v3001 = vsub.s32 %v1435, %v3000
        %v3002 = vrot.slane %v2952, %v3001
        %v3003 = vsel %vm1440, %v3002, %v2998
        %v3004 = vlaneseq
        %v3005 = vshrl.u32 %v3004, 7
        %v3006 = vsub.s32 %v455, %v3005
        %v3007 = vrot.slane %v2955, %v3006
        %v3008 = vlaneseq
        %v3009 = vshrl.u32 %v3008, 7
        %v3010 = vsub.s32 %v1435, %v3009
        %v3011 = vrot.slane %v2958, %v3010
        %v3012 = vsel %vm1440, %v3011, %v3007
        %v3013 = vlaneseq
        %v3014 = vshrl.u32 %v3013, 7
        %v3015 = vsub.s32 %v455, %v3014
        %v3016 = vrot.slane %v2961, %v3015
        %v3017 = vlaneseq
        %v3018 = vshrl.u32 %v3017, 7
        %v3019 = vsub.s32 %v1435, %v3018
        %v3020 = vrot.slane %v2964, %v3019
        %v3021 = vsel %vm1440, %v3020, %v3016
        %v3022 = vlaneseq
        %v3023 = vshrl.u32 %v3022, 7
        %v3024 = vsub.s32 %v455, %v3023
        %v3025 = vrot.slane %v2967, %v3024
        %v3026 = vlaneseq
        %v3027 = vshrl.u32 %v3026, 7
        %v3028 = vsub.s32 %v1435, %v3027
        %v3029 = vrot.slane %v2970, %v3028
        %v3030 = vsel %vm1440, %v3029, %v3025
        %v3031 = vlaneseq
        %v3032 = vshrl.u32 %v3031, 7
        %v3033 = vsub.s32 %v455, %v3032
        %v3034 = vrot.slane %v2973, %v3033
        %v3035 = vlaneseq
        %v3036 = vshrl.u32 %v3035, 7
        %v3037 = vsub.s32 %v1435, %v3036
        %v3038 = vrot.slane %v2976, %v3037
        %v3039 = vsel %vm1440, %v3038, %v3034
        %v3040 = vlaneseq
        %v3041 = vshrl.u32 %v3040, 7
        %v3042 = vsub.s32 %v455, %v3041
        %v3043 = vrot.slane %v2979, %v3042
        %v3044 = vlaneseq
        %v3045 = vshrl.u32 %v3044, 7
        %v3046 = vsub.s32 %v1435, %v3045
        %v3047 = vrot.slane %v2982, %v3046
        %v3048 = vsel %vm1440, %v3047, %v3043
        %v3049 = vlaneseq
        %v3050 = vshrl.u32 %v3049, 7
        %v3051 = vsub.s32 %v455, %v3050
        %v3052 = vrot.slane %v2985, %v3051
        %v3053 = vlaneseq
        %v3054 = vshrl.u32 %v3053, 7
        %v3055 = vsub.s32 %v1435, %v3054
        %v3056 = vrot.slane %v2988, %v3055
        %v3057 = vsel %vm1440, %v3056, %v3052
        %v3058 = vlaneseq
        %v3059 = vshrl.u32 %v3058, 7
        %v3060 = vsub.s32 %v455, %v3059
        %v3061 = vrot.slane %v2991, %v3060
        %v3062 = vlaneseq
        %v3063 = vshrl.u32 %v3062, 7
        %v3064 = vsub.s32 %v1435, %v3063
        %v3065 = vrot.slane %v2994, %v3064
        %v3066 = vsel %vm1440, %v3065, %v3061
        %v3067 = vsel %vm1505, %v3012, %v3003
        %v3068 = vsel %vm1507, %v3021, %v3067
        %v3069 = vsel %vm1509, %v3030, %v3068
        %v3070 = vsel %vm1511, %v3039, %v3069
        %v3071 = vsel %vm1513, %v3048, %v3070
        %v3072 = vsel %vm1515, %v3057, %v3071
        %v3073 = vsel %vm1517, %v3066, %v3072
        %v3074 = vsel %vm559, %v3073, 0
        %3076 = vmatprep.subr.mxu0 0.0
        %3077 = vmatpush1.msra.mxu0 %v465
        %3078 = vmatprep.subr.mxu0 0.0
        %3079 = vmatpush1.msra.mxu0 %v466
        %3080 = vmatprep.subr.mxu0 0.0
        %3081 = vmatpush1.msra.mxu0 0.0
        %3082 = vmatprep.subr.mxu0 0.0
        %3083 = vmatpush1.msra.mxu0 0.0
        %3084 = vmatprep.subr.mxu0 0.0
        %3085 = vmatpush1.msra.mxu0 0.0
        %3086 = vmatprep.subr.mxu0 0.0
        %3087 = vmatpush1.msra.mxu0 0.0
        %3088 = vmatprep.subr.mxu0 0.0
        %3089 = vmatpush1.msra.mxu0 0.0
        %3090 = vmatprep.subr.mxu0 0.0
        %3091 = vmatpush1.msra.mxu0 0.0
        %3092 = vmatprep.subr.mxu0 0.0
        %3093 = vmatpush1.msra.mxu0 0.0
        %3094 = vmatprep.subr.mxu0 0.0
        %3095 = vmatpush1.msra.mxu0 0.0
        %3096 = vmatprep.subr.mxu0 0.0
        %3097 = vmatpush1.msra.mxu0 0.0
        %3098 = vmatprep.subr.mxu0 0.0
        %3099 = vmatpush1.msra.mxu0 0.0
        %3100 = vmatprep.subr.mxu0 0.0
        %3101 = vmatpush1.msra.mxu0 0.0
        %3102 = vmatprep.subr.mxu0 0.0
        %3103 = vmatpush1.msra.mxu0 0.0
        %3104 = vmatprep.subr.mxu0 0.0
        %3105 = vmatpush1.msra.mxu0 0.0
        %3106 = vmatprep.subr.mxu0 0.0
        %3107 = vmatpush1.msra.mxu0 0.0
        %3108 = vmatprep.subr.mxu0 0.0
        %3109 = vmatpush1.msra.mxu0 0.0
        %3110 = vmatprep.subr.mxu0 0.0
        %3111 = vmatpush1.msra.mxu0 0.0
        %3112 = vmatprep.subr.mxu0 0.0
        %3113 = vmatpush1.msra.mxu0 0.0
        %3114 = vmatprep.subr.mxu0 0.0
        %3115 = vmatpush1.msra.mxu0 0.0
        %3116 = vmatprep.subr.mxu0 0.0
        %3117 = vmatpush1.msra.mxu0 0.0
        %3118 = vmatprep.subr.mxu0 0.0
        %3119 = vmatpush1.msra.mxu0 0.0
        %3120 = vmatprep.subr.mxu0 0.0
        %3121 = vmatpush1.msra.mxu0 0.0
        %3122 = vmatprep.subr.mxu0 0.0
        %3123 = vmatpush1.msra.mxu0 0.0
        %3124 = vmatprep.subr.mxu0 0.0
        %3125 = vmatpush1.msra.mxu0 0.0
        %3126 = vmatprep.subr.mxu0 0.0
        %3127 = vmatpush1.msra.mxu0 0.0
        %3128 = vmatprep.subr.mxu0 0.0
        %3129 = vmatpush1.msra.mxu0 0.0
        %3130 = vmatprep.subr.mxu0 0.0
        %3131 = vmatpush1.msra.mxu0 0.0
        %3132 = vmatprep.subr.mxu0 0.0
        %3133 = vmatpush1.msra.mxu0 0.0
        %3134 = vmatprep.subr.mxu0 0.0
        %3135 = vmatpush1.msra.mxu0 0.0
        %3136 = vmatprep.subr.mxu0 0.0
        %3137 = vmatpush1.msra.mxu0 0.0
        %3138 = vmatprep.subr.mxu0 0.0
        %3139 = vmatpush1.msra.mxu0 0.0
        %3140 = vmatprep.mubr.f32.mxu0 0.0
        %3141 = vmatmul.mubr.f32.gmra.mrb[0].mxu0 %v3074
        %v3142 = vpop.f32.mrb[0].mxu0
        %v3143 = vadd.f32 0.0, %v3142
        %v3144 = vpop.f32.mrb[0].mxu0
        %3145 = vdwg.mxu0
        %v3147 = vlaneseq
        %v3148 = vshrl.u32 %v3147, 7
        %v3149 = vsub.s32 0, %v3148
        %v3150 = vrot.slane %v3143, %v3149
        %3152 = vbcast.lane.b32.xlu0 %v3150, 256
        %v3153 = vpop.permute.xlu0 %3152
        %s3155 = sor.u32 256, 8
        %3156 = vbcast.lane.b32.xlu0 %v3150, %s3155
        %v3157 = vpop.permute.xlu0 %3156
        %v3158 = vlaneseq
        %v3159 = vshrl.u32 %v3158, 7
        %v3160 = vsub.s32 1, %v3159
        %v3161 = vrot.slane %v3143, %v3160
        %3163 = vbcast.lane.b32.xlu0 %v3161, 256
        %v3164 = vpop.permute.xlu0 %3163
        %s3166 = sor.u32 256, 8
        %3167 = vbcast.lane.b32.xlu0 %v3161, %s3166
        %v3168 = vpop.permute.xlu0 %3167
        %v3169 = vlaneseq
        %v3170 = vshrl.u32 %v3169, 7
        %v3171 = vsub.s32 2, %v3170
        %v3172 = vrot.slane %v3143, %v3171
        %3174 = vbcast.lane.b32.xlu0 %v3172, 256
        %v3175 = vpop.permute.xlu0 %3174
        %s3177 = sor.u32 256, 8
        %3178 = vbcast.lane.b32.xlu0 %v3172, %s3177
        %v3179 = vpop.permute.xlu0 %3178
        %v3180 = vlaneseq
        %v3181 = vshrl.u32 %v3180, 7
        %v3182 = vsub.s32 3, %v3181
        %v3183 = vrot.slane %v3143, %v3182
        %3185 = vbcast.lane.b32.xlu0 %v3183, 256
        %v3186 = vpop.permute.xlu0 %3185
        %s3188 = sor.u32 256, 8
        %3189 = vbcast.lane.b32.xlu0 %v3183, %s3188
        %v3190 = vpop.permute.xlu0 %3189
        %v3191 = vlaneseq
        %v3192 = vshrl.u32 %v3191, 7
        %v3193 = vsub.s32 4, %v3192
        %v3194 = vrot.slane %v3143, %v3193
        %3196 = vbcast.lane.b32.xlu0 %v3194, 256
        %v3197 = vpop.permute.xlu0 %3196
        %s3199 = sor.u32 256, 8
        %3200 = vbcast.lane.b32.xlu0 %v3194, %s3199
        %v3201 = vpop.permute.xlu0 %3200
        %v3202 = vlaneseq
        %v3203 = vshrl.u32 %v3202, 7
        %v3204 = vsub.s32 5, %v3203
        %v3205 = vrot.slane %v3143, %v3204
        %3207 = vbcast.lane.b32.xlu0 %v3205, 256
        %v3208 = vpop.permute.xlu0 %3207
        %s3210 = sor.u32 256, 8
        %3211 = vbcast.lane.b32.xlu0 %v3205, %s3210
        %v3212 = vpop.permute.xlu0 %3211
        %v3213 = vlaneseq
        %v3214 = vshrl.u32 %v3213, 7
        %v3215 = vsub.s32 6, %v3214
        %v3216 = vrot.slane %v3143, %v3215
        %3218 = vbcast.lane.b32.xlu0 %v3216, 256
        %v3219 = vpop.permute.xlu0 %3218
        %s3221 = sor.u32 256, 8
        %3222 = vbcast.lane.b32.xlu0 %v3216, %s3221
        %v3223 = vpop.permute.xlu0 %3222
        %v3224 = vlaneseq
        %v3225 = vshrl.u32 %v3224, 7
        %v3226 = vsub.s32 7, %v3225
        %v3227 = vrot.slane %v3143, %v3226
        %3229 = vbcast.lane.b32.xlu0 %v3227, 256
        %v3230 = vpop.permute.xlu0 %3229
        %s3232 = sor.u32 256, 8
        %3233 = vbcast.lane.b32.xlu0 %v3227, %s3232
        %v3234 = vpop.permute.xlu0 %3233
        %v3251 = vadd.f32 %v2706, %v3153
        %v3252 = vadd.f32 %v2707, %v3157
        %v3253 = vadd.f32 %v2708, %v3164
        %v3254 = vadd.f32 %v2709, %v3168
        %v3255 = vadd.f32 %v2710, %v3175
        %v3256 = vadd.f32 %v2711, %v3179
        %v3257 = vadd.f32 %v2712, %v3186
        %v3258 = vadd.f32 %v2713, %v3190
        %v3259 = vadd.f32 %v2714, %v3197
        %v3260 = vadd.f32 %v2715, %v3201
        %v3261 = vadd.f32 %v2716, %v3208
        %v3262 = vadd.f32 %v2717, %v3212
        %v3263 = vadd.f32 %v2718, %v3219
        %v3264 = vadd.f32 %v2719, %v3223
        %v3265 = vadd.f32 %v2720, %v3230
        %v3266 = vadd.f32 %v2721, %v3234
        %3283 = vset.pattern.permute.xlu0 0
        %3284 = vperm.xlu0 %3283, %v2915
        %v3285 = vpop.permute.xlu0 %3284
        %3286 = vset.pattern.permute.xlu0 0
        %3287 = vperm.xlu0 %3286, %v2916
        %v3288 = vpop.permute.xlu0 %3287
        %3289 = vset.pattern.permute.xlu0 0
        %3290 = vperm.xlu0 %3289, %v2917
        %v3291 = vpop.permute.xlu0 %3290
        %3292 = vset.pattern.permute.xlu0 0
        %3293 = vperm.xlu0 %3292, %v2918
        %v3294 = vpop.permute.xlu0 %3293
        %3295 = vset.pattern.permute.xlu0 0
        %3296 = vperm.xlu0 %3295, %v2919
        %v3297 = vpop.permute.xlu0 %3296
        %3298 = vset.pattern.permute.xlu0 0
        %3299 = vperm.xlu0 %3298, %v2920
        %v3300 = vpop.permute.xlu0 %3299
        %3301 = vset.pattern.permute.xlu0 0
        %3302 = vperm.xlu0 %3301, %v2921
        %v3303 = vpop.permute.xlu0 %3302
        %3304 = vset.pattern.permute.xlu0 0
        %3305 = vperm.xlu0 %3304, %v2922
        %v3306 = vpop.permute.xlu0 %3305
        %3307 = vset.pattern.permute.xlu0 0
        %3308 = vperm.xlu0 %3307, %v2923
        %v3309 = vpop.permute.xlu0 %3308
        %3310 = vset.pattern.permute.xlu0 0
        %3311 = vperm.xlu0 %3310, %v2924
        %v3312 = vpop.permute.xlu0 %3311
        %3313 = vset.pattern.permute.xlu0 0
        %3314 = vperm.xlu0 %3313, %v2925
        %v3315 = vpop.permute.xlu0 %3314
        %3316 = vset.pattern.permute.xlu0 0
        %3317 = vperm.xlu0 %3316, %v2926
        %v3318 = vpop.permute.xlu0 %3317
        %3319 = vset.pattern.permute.xlu0 0
        %3320 = vperm.xlu0 %3319, %v2927
        %v3321 = vpop.permute.xlu0 %3320
        %3322 = vset.pattern.permute.xlu0 0
        %3323 = vperm.xlu0 %3322, %v2928
        %v3324 = vpop.permute.xlu0 %3323
        %3325 = vset.pattern.permute.xlu0 0
        %3326 = vperm.xlu0 %3325, %v2929
        %v3327 = vpop.permute.xlu0 %3326
        %3328 = vset.pattern.permute.xlu0 0
        %3329 = vperm.xlu0 %3328, %v2930
        %v3330 = vpop.permute.xlu0 %3329
        %v3331 = vlaneseq
        %v3332 = vshrl.u32 %v3331, 7
        %v3333 = vsub.s32 %v455, %v3332
        %v3334 = vrot.slane %v3285, %v3333
        %v3335 = vlaneseq
        %v3336 = vshrl.u32 %v3335, 7
        %v3337 = vsub.s32 %v1435, %v3336
        %v3338 = vrot.slane %v3288, %v3337
        %v3339 = vsel %vm1440, %v3338, %v3334
        %v3340 = vlaneseq
        %v3341 = vshrl.u32 %v3340, 7
        %v3342 = vsub.s32 %v455, %v3341
        %v3343 = vrot.slane %v3291, %v3342
        %v3344 = vlaneseq
        %v3345 = vshrl.u32 %v3344, 7
        %v3346 = vsub.s32 %v1435, %v3345
        %v3347 = vrot.slane %v3294, %v3346
        %v3348 = vsel %vm1440, %v3347, %v3343
        %v3349 = vlaneseq
        %v3350 = vshrl.u32 %v3349, 7
        %v3351 = vsub.s32 %v455, %v3350
        %v3352 = vrot.slane %v3297, %v3351
        %v3353 = vlaneseq
        %v3354 = vshrl.u32 %v3353, 7
        %v3355 = vsub.s32 %v1435, %v3354
        %v3356 = vrot.slane %v3300, %v3355
        %v3357 = vsel %vm1440, %v3356, %v3352
        %v3358 = vlaneseq
        %v3359 = vshrl.u32 %v3358, 7
        %v3360 = vsub.s32 %v455, %v3359
        %v3361 = vrot.slane %v3303, %v3360
        %v3362 = vlaneseq
        %v3363 = vshrl.u32 %v3362, 7
        %v3364 = vsub.s32 %v1435, %v3363
        %v3365 = vrot.slane %v3306, %v3364
        %v3366 = vsel %vm1440, %v3365, %v3361
        %v3367 = vlaneseq
        %v3368 = vshrl.u32 %v3367, 7
        %v3369 = vsub.s32 %v455, %v3368
        %v3370 = vrot.slane %v3309, %v3369
        %v3371 = vlaneseq
        %v3372 = vshrl.u32 %v3371, 7
        %v3373 = vsub.s32 %v1435, %v3372
        %v3374 = vrot.slane %v3312, %v3373
        %v3375 = vsel %vm1440, %v3374, %v3370
        %v3376 = vlaneseq
        %v3377 = vshrl.u32 %v3376, 7
        %v3378 = vsub.s32 %v455, %v3377
        %v3379 = vrot.slane %v3315, %v3378
        %v3380 = vlaneseq
        %v3381 = vshrl.u32 %v3380, 7
        %v3382 = vsub.s32 %v1435, %v3381
        %v3383 = vrot.slane %v3318, %v3382
        %v3384 = vsel %vm1440, %v3383, %v3379
        %v3385 = vlaneseq
        %v3386 = vshrl.u32 %v3385, 7
        %v3387 = vsub.s32 %v455, %v3386
        %v3388 = vrot.slane %v3321, %v3387
        %v3389 = vlaneseq
        %v3390 = vshrl.u32 %v3389, 7
        %v3391 = vsub.s32 %v1435, %v3390
        %v3392 = vrot.slane %v3324, %v3391
        %v3393 = vsel %vm1440, %v3392, %v3388
        %v3394 = vlaneseq
        %v3395 = vshrl.u32 %v3394, 7
        %v3396 = vsub.s32 %v455, %v3395
        %v3397 = vrot.slane %v3327, %v3396
        %v3398 = vlaneseq
        %v3399 = vshrl.u32 %v3398, 7
        %v3400 = vsub.s32 %v1435, %v3399
        %v3401 = vrot.slane %v3330, %v3400
        %v3402 = vsel %vm1440, %v3401, %v3397
        %v3403 = vsel %vm1505, %v3348, %v3339
        %v3404 = vsel %vm1507, %v3357, %v3403
        %v3405 = vsel %vm1509, %v3366, %v3404
        %v3406 = vsel %vm1511, %v3375, %v3405
        %v3407 = vsel %vm1513, %v3384, %v3406
        %v3408 = vsel %vm1515, %v3393, %v3407
        %v3409 = vsel %vm1517, %v3402, %v3408
        %v3410 = vsel %vm559, %v3409, 0
        %3412 = vmatprep.subr.mxu0 0.0
        %3413 = vmatpush1.msra.mxu0 %v473
        %3414 = vmatprep.subr.mxu0 0.0
        %3415 = vmatpush1.msra.mxu0 %v474
        %3416 = vmatprep.subr.mxu0 0.0
        %3417 = vmatpush1.msra.mxu0 0.0
        %3418 = vmatprep.subr.mxu0 0.0
        %3419 = vmatpush1.msra.mxu0 0.0
        %3420 = vmatprep.subr.mxu0 0.0
        %3421 = vmatpush1.msra.mxu0 0.0
        %3422 = vmatprep.subr.mxu0 0.0
        %3423 = vmatpush1.msra.mxu0 0.0
        %3424 = vmatprep.subr.mxu0 0.0
        %3425 = vmatpush1.msra.mxu0 0.0
        %3426 = vmatprep.subr.mxu0 0.0
        %3427 = vmatpush1.msra.mxu0 0.0
        %3428 = vmatprep.subr.mxu0 0.0
        %3429 = vmatpush1.msra.mxu0 0.0
        %3430 = vmatprep.subr.mxu0 0.0
        %3431 = vmatpush1.msra.mxu0 0.0
        %3432 = vmatprep.subr.mxu0 0.0
        %3433 = vmatpush1.msra.mxu0 0.0
        %3434 = vmatprep.subr.mxu0 0.0
        %3435 = vmatpush1.msra.mxu0 0.0
        %3436 = vmatprep.subr.mxu0 0.0
        %3437 = vmatpush1.msra.mxu0 0.0
        %3438 = vmatprep.subr.mxu0 0.0
        %3439 = vmatpush1.msra.mxu0 0.0
        %3440 = vmatprep.subr.mxu0 0.0
        %3441 = vmatpush1.msra.mxu0 0.0
        %3442 = vmatprep.subr.mxu0 0.0
        %3443 = vmatpush1.msra.mxu0 0.0
        %3444 = vmatprep.subr.mxu0 0.0
        %3445 = vmatpush1.msra.mxu0 0.0
        %3446 = vmatprep.subr.mxu0 0.0
        %3447 = vmatpush1.msra.mxu0 0.0
        %3448 = vmatprep.subr.mxu0 0.0
        %3449 = vmatpush1.msra.mxu0 0.0
        %3450 = vmatprep.subr.mxu0 0.0
        %3451 = vmatpush1.msra.mxu0 0.0
        %3452 = vmatprep.subr.mxu0 0.0
        %3453 = vmatpush1.msra.mxu0 0.0
        %3454 = vmatprep.subr.mxu0 0.0
        %3455 = vmatpush1.msra.mxu0 0.0
        %3456 = vmatprep.subr.mxu0 0.0
        %3457 = vmatpush1.msra.mxu0 0.0
        %3458 = vmatprep.subr.mxu0 0.0
        %3459 = vmatpush1.msra.mxu0 0.0
        %3460 = vmatprep.subr.mxu0 0.0
        %3461 = vmatpush1.msra.mxu0 0.0
        %3462 = vmatprep.subr.mxu0 0.0
        %3463 = vmatpush1.msra.mxu0 0.0
        %3464 = vmatprep.subr.mxu0 0.0
        %3465 = vmatpush1.msra.mxu0 0.0
        %3466 = vmatprep.subr.mxu0 0.0
        %3467 = vmatpush1.msra.mxu0 0.0
        %3468 = vmatprep.subr.mxu0 0.0
        %3469 = vmatpush1.msra.mxu0 0.0
        %3470 = vmatprep.subr.mxu0 0.0
        %3471 = vmatpush1.msra.mxu0 0.0
        %3472 = vmatprep.subr.mxu0 0.0
        %3473 = vmatpush1.msra.mxu0 0.0
        %3474 = vmatprep.subr.mxu0 0.0
        %3475 = vmatpush1.msra.mxu0 0.0
        %3476 = vmatprep.mubr.f32.mxu0 0.0
        %3477 = vmatmul.mubr.f32.gmra.mrb[0].mxu0 %v3410
        %v3478 = vpop.f32.mrb[0].mxu0
        %v3479 = vadd.f32 0.0, %v3478
        %v3480 = vpop.f32.mrb[0].mxu0
        %3481 = vdwg.mxu0
        %v3483 = vlaneseq
        %v3484 = vshrl.u32 %v3483, 7
        %v3485 = vsub.s32 0, %v3484
        %v3486 = vrot.slane %v3479, %v3485
        %3488 = vbcast.lane.b32.xlu0 %v3486, 256
        %v3489 = vpop.permute.xlu0 %3488
        %s3491 = sor.u32 256, 8
        %3492 = vbcast.lane.b32.xlu0 %v3486, %s3491
        %v3493 = vpop.permute.xlu0 %3492
        %v3494 = vlaneseq
        %v3495 = vshrl.u32 %v3494, 7
        %v3496 = vsub.s32 1, %v3495
        %v3497 = vrot.slane %v3479, %v3496
        %3499 = vbcast.lane.b32.xlu0 %v3497, 256
        %v3500 = vpop.permute.xlu0 %3499
        %s3502 = sor.u32 256, 8
        %3503 = vbcast.lane.b32.xlu0 %v3497, %s3502
        %v3504 = vpop.permute.xlu0 %3503
        %v3505 = vlaneseq
        %v3506 = vshrl.u32 %v3505, 7
        %v3507 = vsub.s32 2, %v3506
        %v3508 = vrot.slane %v3479, %v3507
        %3510 = vbcast.lane.b32.xlu0 %v3508, 256
        %v3511 = vpop.permute.xlu0 %3510
        %s3513 = sor.u32 256, 8
        %3514 = vbcast.lane.b32.xlu0 %v3508, %s3513
        %v3515 = vpop.permute.xlu0 %3514
        %v3516 = vlaneseq
        %v3517 = vshrl.u32 %v3516, 7
        %v3518 = vsub.s32 3, %v3517
        %v3519 = vrot.slane %v3479, %v3518
        %3521 = vbcast.lane.b32.xlu0 %v3519, 256
        %v3522 = vpop.permute.xlu0 %3521
        %s3524 = sor.u32 256, 8
        %3525 = vbcast.lane.b32.xlu0 %v3519, %s3524
        %v3526 = vpop.permute.xlu0 %3525
        %v3527 = vlaneseq
        %v3528 = vshrl.u32 %v3527, 7
        %v3529 = vsub.s32 4, %v3528
        %v3530 = vrot.slane %v3479, %v3529
        %3532 = vbcast.lane.b32.xlu0 %v3530, 256
        %v3533 = vpop.permute.xlu0 %3532
        %s3535 = sor.u32 256, 8
        %3536 = vbcast.lane.b32.xlu0 %v3530, %s3535
        %v3537 = vpop.permute.xlu0 %3536
        %v3538 = vlaneseq
        %v3539 = vshrl.u32 %v3538, 7
        %v3540 = vsub.s32 5, %v3539
        %v3541 = vrot.slane %v3479, %v3540
        %3543 = vbcast.lane.b32.xlu0 %v3541, 256
        %v3544 = vpop.permute.xlu0 %3543
        %s3546 = sor.u32 256, 8
        %3547 = vbcast.lane.b32.xlu0 %v3541, %s3546
        %v3548 = vpop.permute.xlu0 %3547
        %v3549 = vlaneseq
        %v3550 = vshrl.u32 %v3549, 7
        %v3551 = vsub.s32 6, %v3550
        %v3552 = vrot.slane %v3479, %v3551
        %3554 = vbcast.lane.b32.xlu0 %v3552, 256
        %v3555 = vpop.permute.xlu0 %3554
        %s3557 = sor.u32 256, 8
        %3558 = vbcast.lane.b32.xlu0 %v3552, %s3557
        %v3559 = vpop.permute.xlu0 %3558
        %v3560 = vlaneseq
        %v3561 = vshrl.u32 %v3560, 7
        %v3562 = vsub.s32 7, %v3561
        %v3563 = vrot.slane %v3479, %v3562
        %3565 = vbcast.lane.b32.xlu0 %v3563, 256
        %v3566 = vpop.permute.xlu0 %3565
        %s3568 = sor.u32 256, 8
        %3569 = vbcast.lane.b32.xlu0 %v3563, %s3568
        %v3570 = vpop.permute.xlu0 %3569
        %v3587 = vadd.f32 %v3251, %v3489
        %v3588 = vadd.f32 %v3252, %v3493
        %v3589 = vadd.f32 %v3253, %v3500
        %v3590 = vadd.f32 %v3254, %v3504
        %v3591 = vadd.f32 %v3255, %v3511
        %v3592 = vadd.f32 %v3256, %v3515
        %v3593 = vadd.f32 %v3257, %v3522
        %v3594 = vadd.f32 %v3258, %v3526
        %v3595 = vadd.f32 %v3259, %v3533
        %v3596 = vadd.f32 %v3260, %v3537
        %v3597 = vadd.f32 %v3261, %v3544
        %v3598 = vadd.f32 %v3262, %v3548
        %v3599 = vadd.f32 %v3263, %v3555
        %v3600 = vadd.f32 %v3264, %v3559
        %v3601 = vadd.f32 %v3265, %v3566
        %v3602 = vadd.f32 %v3266, %v3570
        %v3603 = vmul.f32 %v3587, 0.0625
        %v3604 = vmul.f32 %v3588, 0.0625
        %v3605 = vmul.f32 %v3589, 0.0625
        %v3606 = vmul.f32 %v3590, 0.0625
        %v3607 = vmul.f32 %v3591, 0.0625
        %v3608 = vmul.f32 %v3592, 0.0625
        %v3609 = vmul.f32 %v3593, 0.0625
        %v3610 = vmul.f32 %v3594, 0.0625
        %v3611 = vmul.f32 %v3595, 0.0625
        %v3612 = vmul.f32 %v3596, 0.0625
        %v3613 = vmul.f32 %v3597, 0.0625
        %v3614 = vmul.f32 %v3598, 0.0625
        %v3615 = vmul.f32 %v3599, 0.0625
        %v3616 = vmul.f32 %v3600, 0.0625
        %v3617 = vmul.f32 %v3601, 0.0625
        %v3618 = vmul.f32 %v3602, 0.0625
        %s3619 = scalar_lea.vmem %s5, 8
        %v3620 = vld [vmem:[%s3619] sm:$0xff]
        %3622 = vset.pattern.permute.xlu0 0
        %3623 = vperm.xlu0 %3622, %v3620
        %v3624 = vpop.permute.xlu0 %3623
        %v3625 = vlaneseq
        %v3626 = vshrl.u32 %v3625, 7
        %v3627 = vsub.s32 0, %v3626
        %v3628 = vrot.slane %v3624, %v3627
        %v3629 = vlaneseq
        %v3630 = vshrl.u32 %v3629, 7
        %v3631 = vsub.s32 1, %v3630
        %v3632 = vrot.slane %v3624, %v3631
        %v3633 = vlaneseq
        %v3634 = vshrl.u32 %v3633, 7
        %v3635 = vsub.s32 2, %v3634
        %v3636 = vrot.slane %v3624, %v3635
        %v3637 = vlaneseq
        %v3638 = vshrl.u32 %v3637, 7
        %v3639 = vsub.s32 3, %v3638
        %v3640 = vrot.slane %v3624, %v3639
        %v3641 = vlaneseq
        %v3642 = vshrl.u32 %v3641, 7
        %v3643 = vsub.s32 4, %v3642
        %v3644 = vrot.slane %v3624, %v3643
        %v3645 = vlaneseq
        %v3646 = vshrl.u32 %v3645, 7
        %v3647 = vsub.s32 5, %v3646
        %v3648 = vrot.slane %v3624, %v3647
        %v3649 = vlaneseq
        %v3650 = vshrl.u32 %v3649, 7
        %v3651 = vsub.s32 6, %v3650
        %v3652 = vrot.slane %v3624, %v3651
        %v3653 = vlaneseq
        %v3654 = vshrl.u32 %v3653, 7
        %v3655 = vsub.s32 7, %v3654
        %v3656 = vrot.slane %v3624, %v3655
        %v3665 = vadd.f32 %v3603, %v3628
        %v3666 = vadd.f32 %v3604, %v3628
        %v3667 = vadd.f32 %v3605, %v3632
        %v3668 = vadd.f32 %v3606, %v3632
        %v3669 = vadd.f32 %v3607, %v3636
        %v3670 = vadd.f32 %v3608, %v3636
        %v3671 = vadd.f32 %v3609, %v3640
        %v3672 = vadd.f32 %v3610, %v3640
        %v3673 = vadd.f32 %v3611, %v3644
        %v3674 = vadd.f32 %v3612, %v3644
        %v3675 = vadd.f32 %v3613, %v3648
        %v3676 = vadd.f32 %v3614, %v3648
        %v3677 = vadd.f32 %v3615, %v3652
        %v3678 = vadd.f32 %v3616, %v3652
        %v3679 = vadd.f32 %v3617, %v3656
        %v3680 = vadd.f32 %v3618, %v3656
        %v3681 = vadd.f32 %v560, %v563
        %v3682 = vrot.slane %v3681, 4
        %v3683 = vadd.f32 %v3681, %v3682
        %v3684 = vrot.slane %v3683, 2
        %v3685 = vadd.f32 %v3683, %v3684
        %v3686 = vrot.slane %v3685, 1
        %v3687 = vadd.f32 %v3685, %v3686
        %v3688 = vadd.f32 %v566, %v569
        %v3689 = vrot.slane %v3688, 4
        %v3690 = vadd.f32 %v3688, %v3689
        %v3691 = vrot.slane %v3690, 2
        %v3692 = vadd.f32 %v3690, %v3691
        %v3693 = vrot.slane %v3692, 1
        %v3694 = vadd.f32 %v3692, %v3693
        %v3695 = vadd.f32 %v572, %v575
        %v3696 = vrot.slane %v3695, 4
        %v3697 = vadd.f32 %v3695, %v3696
        %v3698 = vrot.slane %v3697, 2
        %v3699 = vadd.f32 %v3697, %v3698
        %v3700 = vrot.slane %v3699, 1
        %v3701 = vadd.f32 %v3699, %v3700
        %v3702 = vadd.f32 %v578, %v581
        %v3703 = vrot.slane %v3702, 4
        %v3704 = vadd.f32 %v3702, %v3703
        %v3705 = vrot.slane %v3704, 2
        %v3706 = vadd.f32 %v3704, %v3705
        %v3707 = vrot.slane %v3706, 1
        %v3708 = vadd.f32 %v3706, %v3707
        %v3709 = vadd.f32 %v584, %v587
        %v3710 = vrot.slane %v3709, 4
        %v3711 = vadd.f32 %v3709, %v3710
        %v3712 = vrot.slane %v3711, 2
        %v3713 = vadd.f32 %v3711, %v3712
        %v3714 = vrot.slane %v3713, 1
        %v3715 = vadd.f32 %v3713, %v3714
        %v3716 = vadd.f32 %v590, %v593
        %v3717 = vrot.slane %v3716, 4
        %v3718 = vadd.f32 %v3716, %v3717
        %v3719 = vrot.slane %v3718, 2
        %v3720 = vadd.f32 %v3718, %v3719
        %v3721 = vrot.slane %v3720, 1
        %v3722 = vadd.f32 %v3720, %v3721
        %v3723 = vadd.f32 %v596, %v599
        %v3724 = vrot.slane %v3723, 4
        %v3725 = vadd.f32 %v3723, %v3724
        %v3726 = vrot.slane %v3725, 2
        %v3727 = vadd.f32 %v3725, %v3726
        %v3728 = vrot.slane %v3727, 1
        %v3729 = vadd.f32 %v3727, %v3728
        %v3730 = vadd.f32 %v602, %v605
        %v3731 = vrot.slane %v3730, 4
        %v3732 = vadd.f32 %v3730, %v3731
        %v3733 = vrot.slane %v3732, 2
        %v3734 = vadd.f32 %v3732, %v3733
        %v3735 = vrot.slane %v3734, 1
        %v3736 = vadd.f32 %v3734, %v3735
        %vm3737 = vcmp.lt.s32.totalorder %v457, 15
        %vm3738 = vcmp.lt.s32.totalorder %v458, 15
        %v3739 = vsel %vm3737, %v511, 0.0
        %v3740 = vsel %vm3738, %v512, 0.0
        %v3741 = vsel %vm3737, %v513, 0.0
        %v3742 = vsel %vm3738, %v514, 0.0
        %v3743 = vsel %vm3737, %v515, 0.0
        %v3744 = vsel %vm3738, %v516, 0.0
        %v3745 = vsel %vm3737, %v517, 0.0
        %v3746 = vsel %vm3738, %v518, 0.0
        %v3747 = vsel %vm3737, %v519, 0.0
        %v3748 = vsel %vm3738, %v520, 0.0
        %v3749 = vsel %vm3737, %v521, 0.0
        %v3750 = vsel %vm3738, %v522, 0.0
        %v3751 = vsel %vm3737, %v523, 0.0
        %v3752 = vsel %vm3738, %v524, 0.0
        %v3753 = vsel %vm3737, %v525, 0.0
        %v3754 = vsel %vm3738, %v526, 0.0
        %v3755 = vsel %vm559, %v3739, 0.0
        %v3756 = vsel %vm559, %v3740, 0.0
        %v3757 = vadd.f32 %v3755, %v3756
        %v3758 = vrot.slane %v3757, 4
        %v3759 = vadd.f32 %v3757, %v3758
        %v3760 = vrot.slane %v3759, 2
        %v3761 = vadd.f32 %v3759, %v3760
        %v3762 = vrot.slane %v3761, 1
        %v3763 = vadd.f32 %v3761, %v3762
        %v3764 = vsel %vm559, %v3741, 0.0
        %v3765 = vsel %vm559, %v3742, 0.0
        %v3766 = vadd.f32 %v3764, %v3765
        %v3767 = vrot.slane %v3766, 4
        %v3768 = vadd.f32 %v3766, %v3767
        %v3769 = vrot.slane %v3768, 2
        %v3770 = vadd.f32 %v3768, %v3769
        %v3771 = vrot.slane %v3770, 1
        %v3772 = vadd.f32 %v3770, %v3771
        %v3773 = vsel %vm559, %v3743, 0.0
        %v3774 = vsel %vm559, %v3744, 0.0
        %v3775 = vadd.f32 %v3773, %v3774
        %v3776 = vrot.slane %v3775, 4
        %v3777 = vadd.f32 %v3775, %v3776
        %v3778 = vrot.slane %v3777, 2
        %v3779 = vadd.f32 %v3777, %v3778
        %v3780 = vrot.slane %v3779, 1
        %v3781 = vadd.f32 %v3779, %v3780
        %v3782 = vsel %vm559, %v3745, 0.0
        %v3783 = vsel %vm559, %v3746, 0.0
        %v3784 = vadd.f32 %v3782, %v3783
        %v3785 = vrot.slane %v3784, 4
        %v3786 = vadd.f32 %v3784, %v3785
        %v3787 = vrot.slane %v3786, 2
        %v3788 = vadd.f32 %v3786, %v3787
        %v3789 = vrot.slane %v3788, 1
        %v3790 = vadd.f32 %v3788, %v3789
        %v3791 = vsel %vm559, %v3747, 0.0
        %v3792 = vsel %vm559, %v3748, 0.0
        %v3793 = vadd.f32 %v3791, %v3792
        %v3794 = vrot.slane %v3793, 4
        %v3795 = vadd.f32 %v3793, %v3794
        %v3796 = vrot.slane %v3795, 2
        %v3797 = vadd.f32 %v3795, %v3796
        %v3798 = vrot.slane %v3797, 1
        %v3799 = vadd.f32 %v3797, %v3798
        %v3800 = vsel %vm559, %v3749, 0.0
        %v3801 = vsel %vm559, %v3750, 0.0
        %v3802 = vadd.f32 %v3800, %v3801
        %v3803 = vrot.slane %v3802, 4
        %v3804 = vadd.f32 %v3802, %v3803
        %v3805 = vrot.slane %v3804, 2
        %v3806 = vadd.f32 %v3804, %v3805
        %v3807 = vrot.slane %v3806, 1
        %v3808 = vadd.f32 %v3806, %v3807
        %v3809 = vsel %vm559, %v3751, 0.0
        %v3810 = vsel %vm559, %v3752, 0.0
        %v3811 = vadd.f32 %v3809, %v3810
        %v3812 = vrot.slane %v3811, 4
        %v3813 = vadd.f32 %v3811, %v3812
        %v3814 = vrot.slane %v3813, 2
        %v3815 = vadd.f32 %v3813, %v3814
        %v3816 = vrot.slane %v3815, 1
        %v3817 = vadd.f32 %v3815, %v3816
        %v3818 = vsel %vm559, %v3753, 0.0
        %v3819 = vsel %vm559, %v3754, 0.0
        %v3820 = vadd.f32 %v3818, %v3819
        %v3821 = vrot.slane %v3820, 4
        %v3822 = vadd.f32 %v3820, %v3821
        %v3823 = vrot.slane %v3822, 2
        %v3824 = vadd.f32 %v3822, %v3823
        %v3825 = vrot.slane %v3824, 1
        %v3826 = vadd.f32 %v3824, %v3825
        %vm3827 = vcmp.gt.s32.totalorder %v457, 0
        %vm3828 = vcmp.gt.s32.totalorder %v458, 0
        %v3829 = vsel %vm3827, %v511, 0.0
        %v3830 = vsel %vm3828, %v512, 0.0
        %v3831 = vsel %vm3827, %v513, 0.0
        %v3832 = vsel %vm3828, %v514, 0.0
        %v3833 = vsel %vm3827, %v515, 0.0
        %v3834 = vsel %vm3828, %v516, 0.0
        %v3835 = vsel %vm3827, %v517, 0.0
        %v3836 = vsel %vm3828, %v518, 0.0
        %v3837 = vsel %vm3827, %v519, 0.0
        %v3838 = vsel %vm3828, %v520, 0.0
        %v3839 = vsel %vm3827, %v521, 0.0
        %v3840 = vsel %vm3828, %v522, 0.0
        %v3841 = vsel %vm3827, %v523, 0.0
        %v3842 = vsel %vm3828, %v524, 0.0
        %v3843 = vsel %vm3827, %v525, 0.0
        %v3844 = vsel %vm3828, %v526, 0.0
        %v3845 = vsel %vm559, %v3829, 0.0
        %v3846 = vsel %vm559, %v3830, 0.0
        %v3847 = vadd.f32 %v3845, %v3846
        %v3848 = vrot.slane %v3847, 4
        %v3849 = vadd.f32 %v3847, %v3848
        %v3850 = vrot.slane %v3849, 2
        %v3851 = vadd.f32 %v3849, %v3850
        %v3852 = vrot.slane %v3851, 1
        %v3853 = vadd.f32 %v3851, %v3852
        %v3854 = vsel %vm559, %v3831, 0.0
        %v3855 = vsel %vm559, %v3832, 0.0
        %v3856 = vadd.f32 %v3854, %v3855
        %v3857 = vrot.slane %v3856, 4
        %v3858 = vadd.f32 %v3856, %v3857
        %v3859 = vrot.slane %v3858, 2
        %v3860 = vadd.f32 %v3858, %v3859
        %v3861 = vrot.slane %v3860, 1
        %v3862 = vadd.f32 %v3860, %v3861
        %v3863 = vsel %vm559, %v3833, 0.0
        %v3864 = vsel %vm559, %v3834, 0.0
        %v3865 = vadd.f32 %v3863, %v3864
        %v3866 = vrot.slane %v3865, 4
        %v3867 = vadd.f32 %v3865, %v3866
        %v3868 = vrot.slane %v3867, 2
        %v3869 = vadd.f32 %v3867, %v3868
        %v3870 = vrot.slane %v3869, 1
        %v3871 = vadd.f32 %v3869, %v3870
        %v3872 = vsel %vm559, %v3835, 0.0
        %v3873 = vsel %vm559, %v3836, 0.0
        %v3874 = vadd.f32 %v3872, %v3873
        %v3875 = vrot.slane %v3874, 4
        %v3876 = vadd.f32 %v3874, %v3875
        %v3877 = vrot.slane %v3876, 2
        %v3878 = vadd.f32 %v3876, %v3877
        %v3879 = vrot.slane %v3878, 1
        %v3880 = vadd.f32 %v3878, %v3879
        %v3881 = vsel %vm559, %v3837, 0.0
        %v3882 = vsel %vm559, %v3838, 0.0
        %v3883 = vadd.f32 %v3881, %v3882
        %v3884 = vrot.slane %v3883, 4
        %v3885 = vadd.f32 %v3883, %v3884
        %v3886 = vrot.slane %v3885, 2
        %v3887 = vadd.f32 %v3885, %v3886
        %v3888 = vrot.slane %v3887, 1
        %v3889 = vadd.f32 %v3887, %v3888
        %v3890 = vsel %vm559, %v3839, 0.0
        %v3891 = vsel %vm559, %v3840, 0.0
        %v3892 = vadd.f32 %v3890, %v3891
        %v3893 = vrot.slane %v3892, 4
        %v3894 = vadd.f32 %v3892, %v3893
        %v3895 = vrot.slane %v3894, 2
        %v3896 = vadd.f32 %v3894, %v3895
        %v3897 = vrot.slane %v3896, 1
        %v3898 = vadd.f32 %v3896, %v3897
        %v3899 = vsel %vm559, %v3841, 0.0
        %v3900 = vsel %vm559, %v3842, 0.0
        %v3901 = vadd.f32 %v3899, %v3900
        %v3902 = vrot.slane %v3901, 4
        %v3903 = vadd.f32 %v3901, %v3902
        %v3904 = vrot.slane %v3903, 2
        %v3905 = vadd.f32 %v3903, %v3904
        %v3906 = vrot.slane %v3905, 1
        %v3907 = vadd.f32 %v3905, %v3906
        %v3908 = vsel %vm559, %v3843, 0.0
        %v3909 = vsel %vm559, %v3844, 0.0
        %v3910 = vadd.f32 %v3908, %v3909
        %v3911 = vrot.slane %v3910, 4
        %v3912 = vadd.f32 %v3910, %v3911
        %v3913 = vrot.slane %v3912, 2
        %v3914 = vadd.f32 %v3912, %v3913
        %v3915 = vrot.slane %v3914, 1
        %v3916 = vadd.f32 %v3914, %v3915
        %s3917 = scalar_lea.vmem [#allocation7], 16
        %v3918 = vld [vmem:[%s3917] sm:$0xff]
        %3920 = vset.pattern.permute.xlu0 0
        %3921 = vperm.xlu0 %3920, %v3918
        %v3922 = vpop.permute.xlu0 %3921
        %v3923 = vrot.slane %v3922, 1
        %v3924 = vrot.slane %v3922, 2
        %v3925 = vrot.slane %v3922, 3
        %v3926 = vrot.slane %v3922, 4
        %v3927 = vrot.slane %v3922, 5
        %v3928 = vrot.slane %v3922, 6
        %v3929 = vrot.slane %v3922, 7
        %v3938 = vmul.f32 %v3763, %v3922
        %v3939 = vmul.f32 %v3772, %v3923
        %v3940 = vmul.f32 %v3781, %v3924
        %v3941 = vmul.f32 %v3790, %v3925
        %v3942 = vmul.f32 %v3799, %v3926
        %v3943 = vmul.f32 %v3808, %v3927
        %v3944 = vmul.f32 %v3817, %v3928
        %v3945 = vmul.f32 %v3826, %v3929
        %3946 = vset.pattern.permute.xlu0 3
        %3947 = vperm.xlu0 %3946, %v3918
        %v3948 = vpop.permute.xlu0 %3947
        %v3949 = vrot.slane %v3948, 1
        %v3950 = vrot.slane %v3948, 2
        %v3951 = vrot.slane %v3948, 3
        %v3952 = vrot.slane %v3948, 4
        %v3953 = vrot.slane %v3948, 5
        %v3954 = vrot.slane %v3948, 6
        %v3955 = vrot.slane %v3948, 7
        %v3964 = vmul.f32 %v3687, %v3948
        %v3965 = vmul.f32 %v3694, %v3949
        %v3966 = vmul.f32 %v3701, %v3950
        %v3967 = vmul.f32 %v3708, %v3951
        %v3968 = vmul.f32 %v3715, %v3952
        %v3969 = vmul.f32 %v3722, %v3953
        %v3970 = vmul.f32 %v3729, %v3954
        %v3971 = vmul.f32 %v3736, %v3955
        %v3972 = vadd.f32 %v3938, %v3964
        %v3973 = vadd.f32 %v3939, %v3965
        %v3974 = vadd.f32 %v3940, %v3966
        %v3975 = vadd.f32 %v3941, %v3967
        %v3976 = vadd.f32 %v3942, %v3968
        %v3977 = vadd.f32 %v3943, %v3969
        %v3978 = vadd.f32 %v3944, %v3970
        %v3979 = vadd.f32 %v3945, %v3971
        %3980 = vset.pattern.permute.xlu0 6
        %3981 = vperm.xlu0 %3980, %v3918
        %v3982 = vpop.permute.xlu0 %3981
        %v3983 = vrot.slane %v3982, 1
        %v3984 = vrot.slane %v3982, 2
        %v3985 = vrot.slane %v3982, 3
        %v3986 = vrot.slane %v3982, 4
        %v3987 = vrot.slane %v3982, 5
        %v3988 = vrot.slane %v3982, 6
        %v3989 = vrot.slane %v3982, 7
        %v3998 = vmul.f32 %v3853, %v3982
        %v3999 = vmul.f32 %v3862, %v3983
        %v4000 = vmul.f32 %v3871, %v3984
        %v4001 = vmul.f32 %v3880, %v3985
        %v4002 = vmul.f32 %v3889, %v3986
        %v4003 = vmul.f32 %v3898, %v3987
        %v4004 = vmul.f32 %v3907, %v3988
        %v4005 = vmul.f32 %v3916, %v3989
        %v4006 = vadd.f32 %v3972, %v3998
        %v4007 = vadd.f32 %v3973, %v3999
        %v4008 = vadd.f32 %v3974, %v4000
        %v4009 = vadd.f32 %v3975, %v4001
        %v4010 = vadd.f32 %v3976, %v4002
        %v4011 = vadd.f32 %v3977, %v4003
        %v4012 = vadd.f32 %v3978, %v4004
        %v4013 = vadd.f32 %v3979, %v4005
        %4014 = vset.pattern.permute.xlu0 1
        %4015 = vperm.xlu0 %4014, %v3918
        %v4016 = vpop.permute.xlu0 %4015
        %v4017 = vrot.slane %v4016, 1
        %v4018 = vrot.slane %v4016, 2
        %v4019 = vrot.slane %v4016, 3
        %v4020 = vrot.slane %v4016, 4
        %v4021 = vrot.slane %v4016, 5
        %v4022 = vrot.slane %v4016, 6
        %v4023 = vrot.slane %v4016, 7
        %v4032 = vmul.f32 %v3763, %v4016
        %v4033 = vmul.f32 %v3772, %v4017
        %v4034 = vmul.f32 %v3781, %v4018
        %v4035 = vmul.f32 %v3790, %v4019
        %v4036 = vmul.f32 %v3799, %v4020
        %v4037 = vmul.f32 %v3808, %v4021
        %v4038 = vmul.f32 %v3817, %v4022
        %v4039 = vmul.f32 %v3826, %v4023
        %4040 = vset.pattern.permute.xlu0 4
        %4041 = vperm.xlu0 %4040, %v3918
        %v4042 = vpop.permute.xlu0 %4041
        %v4043 = vrot.slane %v4042, 1
        %v4044 = vrot.slane %v4042, 2
        %v4045 = vrot.slane %v4042, 3
        %v4046 = vrot.slane %v4042, 4
        %v4047 = vrot.slane %v4042, 5
        %v4048 = vrot.slane %v4042, 6
        %v4049 = vrot.slane %v4042, 7
        %v4058 = vmul.f32 %v3687, %v4042
        %v4059 = vmul.f32 %v3694, %v4043
        %v4060 = vmul.f32 %v3701, %v4044
        %v4061 = vmul.f32 %v3708, %v4045
        %v4062 = vmul.f32 %v3715, %v4046
        %v4063 = vmul.f32 %v3722, %v4047
        %v4064 = vmul.f32 %v3729, %v4048
        %v4065 = vmul.f32 %v3736, %v4049
        %v4066 = vadd.f32 %v4032, %v4058
        %v4067 = vadd.f32 %v4033, %v4059
        %v4068 = vadd.f32 %v4034, %v4060
        %v4069 = vadd.f32 %v4035, %v4061
        %v4070 = vadd.f32 %v4036, %v4062
        %v4071 = vadd.f32 %v4037, %v4063
        %v4072 = vadd.f32 %v4038, %v4064
        %v4073 = vadd.f32 %v4039, %v4065
        %4074 = vset.pattern.permute.xlu0 7
        %4075 = vperm.xlu0 %4074, %v3918
        %v4076 = vpop.permute.xlu0 %4075
        %v4077 = vrot.slane %v4076, 1
        %v4078 = vrot.slane %v4076, 2
        %v4079 = vrot.slane %v4076, 3
        %v4080 = vrot.slane %v4076, 4
        %v4081 = vrot.slane %v4076, 5
        %v4082 = vrot.slane %v4076, 6
        %v4083 = vrot.slane %v4076, 7
        %v4092 = vmul.f32 %v3853, %v4076
        %v4093 = vmul.f32 %v3862, %v4077
        %v4094 = vmul.f32 %v3871, %v4078
        %v4095 = vmul.f32 %v3880, %v4079
        %v4096 = vmul.f32 %v3889, %v4080
        %v4097 = vmul.f32 %v3898, %v4081
        %v4098 = vmul.f32 %v3907, %v4082
        %v4099 = vmul.f32 %v3916, %v4083
        %v4100 = vadd.f32 %v4066, %v4092
        %v4101 = vadd.f32 %v4067, %v4093
        %v4102 = vadd.f32 %v4068, %v4094
        %v4103 = vadd.f32 %v4069, %v4095
        %v4104 = vadd.f32 %v4070, %v4096
        %v4105 = vadd.f32 %v4071, %v4097
        %v4106 = vadd.f32 %v4072, %v4098
        %v4107 = vadd.f32 %v4073, %v4099
        %4108 = vset.pattern.permute.xlu0 2
        %4109 = vperm.xlu0 %4108, %v3918
        %v4110 = vpop.permute.xlu0 %4109
        %v4111 = vrot.slane %v4110, 1
        %v4112 = vrot.slane %v4110, 2
        %v4113 = vrot.slane %v4110, 3
        %v4114 = vrot.slane %v4110, 4
        %v4115 = vrot.slane %v4110, 5
        %v4116 = vrot.slane %v4110, 6
        %v4117 = vrot.slane %v4110, 7
        %v4126 = vmul.f32 %v3763, %v4110
        %v4127 = vmul.f32 %v3772, %v4111
        %v4128 = vmul.f32 %v3781, %v4112
        %v4129 = vmul.f32 %v3790, %v4113
        %v4130 = vmul.f32 %v3799, %v4114
        %v4131 = vmul.f32 %v3808, %v4115
        %v4132 = vmul.f32 %v3817, %v4116
        %v4133 = vmul.f32 %v3826, %v4117
        %4134 = vset.pattern.permute.xlu0 5
        %4135 = vperm.xlu0 %4134, %v3918
        %v4136 = vpop.permute.xlu0 %4135
        %v4137 = vrot.slane %v4136, 1
        %v4138 = vrot.slane %v4136, 2
        %v4139 = vrot.slane %v4136, 3
        %v4140 = vrot.slane %v4136, 4
        %v4141 = vrot.slane %v4136, 5
        %v4142 = vrot.slane %v4136, 6
        %v4143 = vrot.slane %v4136, 7
        %v4152 = vmul.f32 %v3687, %v4136
        %v4153 = vmul.f32 %v3694, %v4137
        %v4154 = vmul.f32 %v3701, %v4138
        %v4155 = vmul.f32 %v3708, %v4139
        %v4156 = vmul.f32 %v3715, %v4140
        %v4157 = vmul.f32 %v3722, %v4141
        %v4158 = vmul.f32 %v3729, %v4142
        %v4159 = vmul.f32 %v3736, %v4143
        %v4160 = vadd.f32 %v4126, %v4152
        %v4161 = vadd.f32 %v4127, %v4153
        %v4162 = vadd.f32 %v4128, %v4154
        %v4163 = vadd.f32 %v4129, %v4155
        %v4164 = vadd.f32 %v4130, %v4156
        %v4165 = vadd.f32 %v4131, %v4157
        %v4166 = vadd.f32 %v4132, %v4158
        %v4167 = vadd.f32 %v4133, %v4159
        %4168 = vset.pattern.permute.xlu0 8
        %4169 = vperm.xlu0 %4168, %v3918
        %v4170 = vpop.permute.xlu0 %4169
        %v4171 = vrot.slane %v4170, 1
        %v4172 = vrot.slane %v4170, 2
        %v4173 = vrot.slane %v4170, 3
        %v4174 = vrot.slane %v4170, 4
        %v4175 = vrot.slane %v4170, 5
        %v4176 = vrot.slane %v4170, 6
        %v4177 = vrot.slane %v4170, 7
        %v4186 = vmul.f32 %v3853, %v4170
        %v4187 = vmul.f32 %v3862, %v4171
        %v4188 = vmul.f32 %v3871, %v4172
        %v4189 = vmul.f32 %v3880, %v4173
        %v4190 = vmul.f32 %v3889, %v4174
        %v4191 = vmul.f32 %v3898, %v4175
        %v4192 = vmul.f32 %v3907, %v4176
        %v4193 = vmul.f32 %v3916, %v4177
        %v4194 = vadd.f32 %v4160, %v4186
        %v4195 = vadd.f32 %v4161, %v4187
        %v4196 = vadd.f32 %v4162, %v4188
        %v4197 = vadd.f32 %v4163, %v4189
        %v4198 = vadd.f32 %v4164, %v4190
        %v4199 = vadd.f32 %v4165, %v4191
        %v4200 = vadd.f32 %v4166, %v4192
        %v4201 = vadd.f32 %v4167, %v4193
        %v4210 = vrot.slane %v4007, 7
        %v4211 = vsel %vm1505, %v4210, %v4006
        %v4212 = vrot.slane %v4008, 6
        %v4213 = vsel %vm1507, %v4212, %v4211
        %v4214 = vrot.slane %v4009, 5
        %v4215 = vsel %vm1509, %v4214, %v4213
        %v4216 = vrot.slane %v4010, 4
        %v4217 = vsel %vm1511, %v4216, %v4215
        %v4218 = vrot.slane %v4011, 3
        %v4219 = vsel %vm1513, %v4218, %v4217
        %v4220 = vrot.slane %v4012, 2
        %v4221 = vsel %vm1515, %v4220, %v4219
        %v4222 = vrot.slane %v4013, 1
        %v4223 = vsel %vm1517, %v4222, %v4221
        %v4224 = vsel %vm559, %v4223, 0
        %4226 = vmatprep.subr.mxu0 0.0
        %4227 = vmatpush1.msra.mxu0 %v465
        %4228 = vmatprep.subr.mxu0 0.0
        %4229 = vmatpush1.msra.mxu0 %v466
        %4230 = vmatprep.subr.mxu0 0.0
        %4231 = vmatpush1.msra.mxu0 0.0
        %4232 = vmatprep.subr.mxu0 0.0
        %4233 = vmatpush1.msra.mxu0 0.0
        %4234 = vmatprep.subr.mxu0 0.0
        %4235 = vmatpush1.msra.mxu0 0.0
        %4236 = vmatprep.subr.mxu0 0.0
        %4237 = vmatpush1.msra.mxu0 0.0
        %4238 = vmatprep.subr.mxu0 0.0
        %4239 = vmatpush1.msra.mxu0 0.0
        %4240 = vmatprep.subr.mxu0 0.0
        %4241 = vmatpush1.msra.mxu0 0.0
        %4242 = vmatprep.subr.mxu0 0.0
        %4243 = vmatpush1.msra.mxu0 0.0
        %4244 = vmatprep.subr.mxu0 0.0
        %4245 = vmatpush1.msra.mxu0 0.0
        %4246 = vmatprep.subr.mxu0 0.0
        %4247 = vmatpush1.msra.mxu0 0.0
        %4248 = vmatprep.subr.mxu0 0.0
        %4249 = vmatpush1.msra.mxu0 0.0
        %4250 = vmatprep.subr.mxu0 0.0
        %4251 = vmatpush1.msra.mxu0 0.0
        %4252 = vmatprep.subr.mxu0 0.0
        %4253 = vmatpush1.msra.mxu0 0.0
        %4254 = vmatprep.subr.mxu0 0.0
        %4255 = vmatpush1.msra.mxu0 0.0
        %4256 = vmatprep.subr.mxu0 0.0
        %4257 = vmatpush1.msra.mxu0 0.0
        %4258 = vmatprep.subr.mxu0 0.0
        %4259 = vmatpush1.msra.mxu0 0.0
        %4260 = vmatprep.subr.mxu0 0.0
        %4261 = vmatpush1.msra.mxu0 0.0
        %4262 = vmatprep.subr.mxu0 0.0
        %4263 = vmatpush1.msra.mxu0 0.0
        %4264 = vmatprep.subr.mxu0 0.0
        %4265 = vmatpush1.msra.mxu0 0.0
        %4266 = vmatprep.subr.mxu0 0.0
        %4267 = vmatpush1.msra.mxu0 0.0
        %4268 = vmatprep.subr.mxu0 0.0
        %4269 = vmatpush1.msra.mxu0 0.0
        %4270 = vmatprep.subr.mxu0 0.0
        %4271 = vmatpush1.msra.mxu0 0.0
        %4272 = vmatprep.subr.mxu0 0.0
        %4273 = vmatpush1.msra.mxu0 0.0
        %4274 = vmatprep.subr.mxu0 0.0
        %4275 = vmatpush1.msra.mxu0 0.0
        %4276 = vmatprep.subr.mxu0 0.0
        %4277 = vmatpush1.msra.mxu0 0.0
        %4278 = vmatprep.subr.mxu0 0.0
        %4279 = vmatpush1.msra.mxu0 0.0
        %4280 = vmatprep.subr.mxu0 0.0
        %4281 = vmatpush1.msra.mxu0 0.0
        %4282 = vmatprep.subr.mxu0 0.0
        %4283 = vmatpush1.msra.mxu0 0.0
        %4284 = vmatprep.subr.mxu0 0.0
        %4285 = vmatpush1.msra.mxu0 0.0
        %4286 = vmatprep.subr.mxu0 0.0
        %4287 = vmatpush1.msra.mxu0 0.0
        %4288 = vmatprep.subr.mxu0 0.0
        %4289 = vmatpush1.msra.mxu0 0.0
        %4290 = vmatprep.mubr.f32.mxu0 0.0
        %4291 = vmatmul.mubr.f32.gmra.mrb[0].mxu0 %v4224
        %v4292 = vpop.f32.mrb[0].mxu0
        %v4293 = vadd.f32 0.0, %v4292
        %v4294 = vpop.f32.mrb[0].mxu0
        %4295 = vdwg.mxu0
        %v4297 = vrot.slane %v4293, 1
        %v4298 = vrot.slane %v4293, 2
        %v4299 = vrot.slane %v4293, 3
        %v4300 = vrot.slane %v4293, 4
        %v4301 = vrot.slane %v4293, 5
        %v4302 = vrot.slane %v4293, 6
        %v4303 = vrot.slane %v4293, 7
        %v4312 = vadd.f32 %v4100, %v4293
        %v4313 = vadd.f32 %v4101, %v4297
        %v4314 = vadd.f32 %v4102, %v4298
        %v4315 = vadd.f32 %v4103, %v4299
        %v4316 = vadd.f32 %v4104, %v4300
        %v4317 = vadd.f32 %v4105, %v4301
        %v4318 = vadd.f32 %v4106, %v4302
        %v4319 = vadd.f32 %v4107, %v4303
        %v4328 = vrot.slane %v4195, 7
        %v4329 = vsel %vm1505, %v4328, %v4194
        %v4330 = vrot.slane %v4196, 6
        %v4331 = vsel %vm1507, %v4330, %v4329
        %v4332 = vrot.slane %v4197, 5
        %v4333 = vsel %vm1509, %v4332, %v4331
        %v4334 = vrot.slane %v4198, 4
        %v4335 = vsel %vm1511, %v4334, %v4333
        %v4336 = vrot.slane %v4199, 3
        %v4337 = vsel %vm1513, %v4336, %v4335
        %v4338 = vrot.slane %v4200, 2
        %v4339 = vsel %vm1515, %v4338, %v4337
        %v4340 = vrot.slane %v4201, 1
        %v4341 = vsel %vm1517, %v4340, %v4339
        %v4342 = vsel %vm559, %v4341, 0
        %4344 = vmatprep.subr.mxu0 0.0
        %4345 = vmatpush1.msra.mxu0 %v473
        %4346 = vmatprep.subr.mxu0 0.0
        %4347 = vmatpush1.msra.mxu0 %v474
        %4348 = vmatprep.subr.mxu0 0.0
        %4349 = vmatpush1.msra.mxu0 0.0
        %4350 = vmatprep.subr.mxu0 0.0
        %4351 = vmatpush1.msra.mxu0 0.0
        %4352 = vmatprep.subr.mxu0 0.0
        %4353 = vmatpush1.msra.mxu0 0.0
        %4354 = vmatprep.subr.mxu0 0.0
        %4355 = vmatpush1.msra.mxu0 0.0
        %4356 = vmatprep.subr.mxu0 0.0
        %4357 = vmatpush1.msra.mxu0 0.0
        %4358 = vmatprep.subr.mxu0 0.0
        %4359 = vmatpush1.msra.mxu0 0.0
        %4360 = vmatprep.subr.mxu0 0.0
        %4361 = vmatpush1.msra.mxu0 0.0
        %4362 = vmatprep.subr.mxu0 0.0
        %4363 = vmatpush1.msra.mxu0 0.0
        %4364 = vmatprep.subr.mxu0 0.0
        %4365 = vmatpush1.msra.mxu0 0.0
        %4366 = vmatprep.subr.mxu0 0.0
        %4367 = vmatpush1.msra.mxu0 0.0
        %4368 = vmatprep.subr.mxu0 0.0
        %4369 = vmatpush1.msra.mxu0 0.0
        %4370 = vmatprep.subr.mxu0 0.0
        %4371 = vmatpush1.msra.mxu0 0.0
        %4372 = vmatprep.subr.mxu0 0.0
        %4373 = vmatpush1.msra.mxu0 0.0
        %4374 = vmatprep.subr.mxu0 0.0
        %4375 = vmatpush1.msra.mxu0 0.0
        %4376 = vmatprep.subr.mxu0 0.0
        %4377 = vmatpush1.msra.mxu0 0.0
        %4378 = vmatprep.subr.mxu0 0.0
        %4379 = vmatpush1.msra.mxu0 0.0
        %4380 = vmatprep.subr.mxu0 0.0
        %4381 = vmatpush1.msra.mxu0 0.0
        %4382 = vmatprep.subr.mxu0 0.0
        %4383 = vmatpush1.msra.mxu0 0.0
        %4384 = vmatprep.subr.mxu0 0.0
        %4385 = vmatpush1.msra.mxu0 0.0
        %4386 = vmatprep.subr.mxu0 0.0
        %4387 = vmatpush1.msra.mxu0 0.0
        %4388 = vmatprep.subr.mxu0 0.0
        %4389 = vmatpush1.msra.mxu0 0.0
        %4390 = vmatprep.subr.mxu0 0.0
        %4391 = vmatpush1.msra.mxu0 0.0
        %4392 = vmatprep.subr.mxu0 0.0
        %4393 = vmatpush1.msra.mxu0 0.0
        %4394 = vmatprep.subr.mxu0 0.0
        %4395 = vmatpush1.msra.mxu0 0.0
        %4396 = vmatprep.subr.mxu0 0.0
        %4397 = vmatpush1.msra.mxu0 0.0
        %4398 = vmatprep.subr.mxu0 0.0
        %4399 = vmatpush1.msra.mxu0 0.0
        %4400 = vmatprep.subr.mxu0 0.0
        %4401 = vmatpush1.msra.mxu0 0.0
        %4402 = vmatprep.subr.mxu0 0.0
        %4403 = vmatpush1.msra.mxu0 0.0
        %4404 = vmatprep.subr.mxu0 0.0
        %4405 = vmatpush1.msra.mxu0 0.0
        %4406 = vmatprep.subr.mxu0 0.0
        %4407 = vmatpush1.msra.mxu0 0.0
        %4408 = vmatprep.mubr.f32.mxu0 0.0
        %4409 = vmatmul.mubr.f32.gmra.mrb[0].mxu0 %v4342
        %v4410 = vpop.f32.mrb[0].mxu0
        %v4411 = vadd.f32 0.0, %v4410
        %v4412 = vpop.f32.mrb[0].mxu0
        %4413 = vdwg.mxu0
        %v4415 = vrot.slane %v4411, 1
        %v4416 = vrot.slane %v4411, 2
        %v4417 = vrot.slane %v4411, 3
        %v4418 = vrot.slane %v4411, 4
        %v4419 = vrot.slane %v4411, 5
        %v4420 = vrot.slane %v4411, 6
        %v4421 = vrot.slane %v4411, 7
        %v4430 = vadd.f32 %v4312, %v4411
        %v4431 = vadd.f32 %v4313, %v4415
        %v4432 = vadd.f32 %v4314, %v4416
        %v4433 = vadd.f32 %v4315, %v4417
        %v4434 = vadd.f32 %v4316, %v4418
        %v4435 = vadd.f32 %v4317, %v4419
        %v4436 = vadd.f32 %v4318, %v4420
        %v4437 = vadd.f32 %v4319, %v4421
        %v4438 = vmul.f32 %v4430, 0.0625
        %v4439 = vmul.f32 %v4431, 0.0625
        %v4440 = vmul.f32 %v4432, 0.0625
        %v4441 = vmul.f32 %v4433, 0.0625
        %v4442 = vmul.f32 %v4434, 0.0625
        %v4443 = vmul.f32 %v4435, 0.0625
        %v4444 = vmul.f32 %v4436, 0.0625
        %v4445 = vmul.f32 %v4437, 0.0625
        %s4446 = scalar_lea.vmem %s5, 16
        %v4447 = vld [vmem:[%s4446] sm:$0xff]
        %4449 = vset.pattern.permute.xlu0 0
        %4450 = vperm.xlu0 %4449, %v4447
        %v4451 = vpop.permute.xlu0 %4450
        %v4452 = vrot.slane %v4451, 1
        %v4453 = vrot.slane %v4451, 2
        %v4454 = vrot.slane %v4451, 3
        %v4455 = vrot.slane %v4451, 4
        %v4456 = vrot.slane %v4451, 5
        %v4457 = vrot.slane %v4451, 6
        %v4458 = vrot.slane %v4451, 7
        %v4467 = vadd.f32 %v4438, %v4451
        %v4468 = vadd.f32 %v4439, %v4452
        %v4469 = vadd.f32 %v4440, %v4453
        %v4470 = vadd.f32 %v4441, %v4454
        %v4471 = vadd.f32 %v4442, %v4455
        %v4472 = vadd.f32 %v4443, %v4456
        %v4473 = vadd.f32 %v4444, %v4457
        %v4474 = vadd.f32 %v4445, %v4458
        %v4475 = vadd.f32 %v2125, %v2128
        %v4476 = vrot.slane %v4475, 4
        %v4477 = vadd.f32 %v4475, %v4476
        %v4478 = vrot.slane %v4477, 2
        %v4479 = vadd.f32 %v4477, %v4478
        %v4480 = vrot.slane %v4479, 1
        %v4481 = vadd.f32 %v4479, %v4480
        %v4482 = vadd.f32 %v2131, %v2134
        %v4483 = vrot.slane %v4482, 4
        %v4484 = vadd.f32 %v4482, %v4483
        %v4485 = vrot.slane %v4484, 2
        %v4486 = vadd.f32 %v4484, %v4485
        %v4487 = vrot.slane %v4486, 1
        %v4488 = vadd.f32 %v4486, %v4487
        %v4489 = vadd.f32 %v2137, %v2140
        %v4490 = vrot.slane %v4489, 4
        %v4491 = vadd.f32 %v4489, %v4490
        %v4492 = vrot.slane %v4491, 2
        %v4493 = vadd.f32 %v4491, %v4492
        %v4494 = vrot.slane %v4493, 1
        %v4495 = vadd.f32 %v4493, %v4494
        %v4496 = vadd.f32 %v2143, %v2146
        %v4497 = vrot.slane %v4496, 4
        %v4498 = vadd.f32 %v4496, %v4497
        %v4499 = vrot.slane %v4498, 2
        %v4500 = vadd.f32 %v4498, %v4499
        %v4501 = vrot.slane %v4500, 1
        %v4502 = vadd.f32 %v4500, %v4501
        %v4503 = vadd.f32 %v2149, %v2152
        %v4504 = vrot.slane %v4503, 4
        %v4505 = vadd.f32 %v4503, %v4504
        %v4506 = vrot.slane %v4505, 2
        %v4507 = vadd.f32 %v4505, %v4506
        %v4508 = vrot.slane %v4507, 1
        %v4509 = vadd.f32 %v4507, %v4508
        %v4510 = vadd.f32 %v2155, %v2158
        %v4511 = vrot.slane %v4510, 4
        %v4512 = vadd.f32 %v4510, %v4511
        %v4513 = vrot.slane %v4512, 2
        %v4514 = vadd.f32 %v4512, %v4513
        %v4515 = vrot.slane %v4514, 1
        %v4516 = vadd.f32 %v4514, %v4515
        %v4517 = vadd.f32 %v2161, %v2164
        %v4518 = vrot.slane %v4517, 4
        %v4519 = vadd.f32 %v4517, %v4518
        %v4520 = vrot.slane %v4519, 2
        %v4521 = vadd.f32 %v4519, %v4520
        %v4522 = vrot.slane %v4521, 1
        %v4523 = vadd.f32 %v4521, %v4522
        %v4524 = vadd.f32 %v2167, %v2170
        %v4525 = vrot.slane %v4524, 4
        %v4526 = vadd.f32 %v4524, %v4525
        %v4527 = vrot.slane %v4526, 2
        %v4528 = vadd.f32 %v4526, %v4527
        %v4529 = vrot.slane %v4528, 1
        %v4530 = vadd.f32 %v4528, %v4529
        %v4531 = vsel %vm3737, %v527, 0.0
        %v4532 = vsel %vm3738, %v528, 0.0
        %v4533 = vsel %vm3737, %v529, 0.0
        %v4534 = vsel %vm3738, %v530, 0.0
        %v4535 = vsel %vm3737, %v531, 0.0
        %v4536 = vsel %vm3738, %v532, 0.0
        %v4537 = vsel %vm3737, %v533, 0.0
        %v4538 = vsel %vm3738, %v534, 0.0
        %v4539 = vsel %vm3737, %v535, 0.0
        %v4540 = vsel %vm3738, %v536, 0.0
        %v4541 = vsel %vm3737, %v537, 0.0
        %v4542 = vsel %vm3738, %v538, 0.0
        %v4543 = vsel %vm3737, %v539, 0.0
        %v4544 = vsel %vm3738, %v540, 0.0
        %v4545 = vsel %vm3737, %v541, 0.0
        %v4546 = vsel %vm3738, %v542, 0.0
        %v4547 = vsel %vm559, %v4531, 0.0
        %v4548 = vsel %vm559, %v4532, 0.0
        %v4549 = vadd.f32 %v4547, %v4548
        %v4550 = vrot.slane %v4549, 4
        %v4551 = vadd.f32 %v4549, %v4550
        %v4552 = vrot.slane %v4551, 2
        %v4553 = vadd.f32 %v4551, %v4552
        %v4554 = vrot.slane %v4553, 1
        %v4555 = vadd.f32 %v4553, %v4554
        %v4556 = vsel %vm559, %v4533, 0.0
        %v4557 = vsel %vm559, %v4534, 0.0
        %v4558 = vadd.f32 %v4556, %v4557
        %v4559 = vrot.slane %v4558, 4
        %v4560 = vadd.f32 %v4558, %v4559
        %v4561 = vrot.slane %v4560, 2
        %v4562 = vadd.f32 %v4560, %v4561
        %v4563 = vrot.slane %v4562, 1
        %v4564 = vadd.f32 %v4562, %v4563
        %v4565 = vsel %vm559, %v4535, 0.0
        %v4566 = vsel %vm559, %v4536, 0.0
        %v4567 = vadd.f32 %v4565, %v4566
        %v4568 = vrot.slane %v4567, 4
        %v4569 = vadd.f32 %v4567, %v4568
        %v4570 = vrot.slane %v4569, 2
        %v4571 = vadd.f32 %v4569, %v4570
        %v4572 = vrot.slane %v4571, 1
        %v4573 = vadd.f32 %v4571, %v4572
        %v4574 = vsel %vm559, %v4537, 0.0
        %v4575 = vsel %vm559, %v4538, 0.0
        %v4576 = vadd.f32 %v4574, %v4575
        %v4577 = vrot.slane %v4576, 4
        %v4578 = vadd.f32 %v4576, %v4577
        %v4579 = vrot.slane %v4578, 2
        %v4580 = vadd.f32 %v4578, %v4579
        %v4581 = vrot.slane %v4580, 1
        %v4582 = vadd.f32 %v4580, %v4581
        %v4583 = vsel %vm559, %v4539, 0.0
        %v4584 = vsel %vm559, %v4540, 0.0
        %v4585 = vadd.f32 %v4583, %v4584
        %v4586 = vrot.slane %v4585, 4
        %v4587 = vadd.f32 %v4585, %v4586
        %v4588 = vrot.slane %v4587, 2
        %v4589 = vadd.f32 %v4587, %v4588
        %v4590 = vrot.slane %v4589, 1
        %v4591 = vadd.f32 %v4589, %v4590
        %v4592 = vsel %vm559, %v4541, 0.0
        %v4593 = vsel %vm559, %v4542, 0.0
        %v4594 = vadd.f32 %v4592, %v4593
        %v4595 = vrot.slane %v4594, 4
        %v4596 = vadd.f32 %v4594, %v4595
        %v4597 = vrot.slane %v4596, 2
        %v4598 = vadd.f32 %v4596, %v4597
        %v4599 = vrot.slane %v4598, 1
        %v4600 = vadd.f32 %v4598, %v4599
        %v4601 = vsel %vm559, %v4543, 0.0
        %v4602 = vsel %vm559, %v4544, 0.0
        %v4603 = vadd.f32 %v4601, %v4602
        %v4604 = vrot.slane %v4603, 4
        %v4605 = vadd.f32 %v4603, %v4604
        %v4606 = vrot.slane %v4605, 2
        %v4607 = vadd.f32 %v4605, %v4606
        %v4608 = vrot.slane %v4607, 1
        %v4609 = vadd.f32 %v4607, %v4608
        %v4610 = vsel %vm559, %v4545, 0.0
        %v4611 = vsel %vm559, %v4546, 0.0
        %v4612 = vadd.f32 %v4610, %v4611
        %v4613 = vrot.slane %v4612, 4
        %v4614 = vadd.f32 %v4612, %v4613
        %v4615 = vrot.slane %v4614, 2
        %v4616 = vadd.f32 %v4614, %v4615
        %v4617 = vrot.slane %v4616, 1
        %v4618 = vadd.f32 %v4616, %v4617
        %v4619 = vsel %vm3827, %v527, 0.0
        %v4620 = vsel %vm3828, %v528, 0.0
        %v4621 = vsel %vm3827, %v529, 0.0
        %v4622 = vsel %vm3828, %v530, 0.0
        %v4623 = vsel %vm3827, %v531, 0.0
        %v4624 = vsel %vm3828, %v532, 0.0
        %v4625 = vsel %vm3827, %v533, 0.0
        %v4626 = vsel %vm3828, %v534, 0.0
        %v4627 = vsel %vm3827, %v535, 0.0
        %v4628 = vsel %vm3828, %v536, 0.0
        %v4629 = vsel %vm3827, %v537, 0.0
        %v4630 = vsel %vm3828, %v538, 0.0
        %v4631 = vsel %vm3827, %v539, 0.0
        %v4632 = vsel %vm3828, %v540, 0.0
        %v4633 = vsel %vm3827, %v541, 0.0
        %v4634 = vsel %vm3828, %v542, 0.0
        %v4635 = vsel %vm559, %v4619, 0.0
        %v4636 = vsel %vm559, %v4620, 0.0
        %v4637 = vadd.f32 %v4635, %v4636
        %v4638 = vrot.slane %v4637, 4
        %v4639 = vadd.f32 %v4637, %v4638
        %v4640 = vrot.slane %v4639, 2
        %v4641 = vadd.f32 %v4639, %v4640
        %v4642 = vrot.slane %v4641, 1
        %v4643 = vadd.f32 %v4641, %v4642
        %v4644 = vsel %vm559, %v4621, 0.0
        %v4645 = vsel %vm559, %v4622, 0.0
        %v4646 = vadd.f32 %v4644, %v4645
        %v4647 = vrot.slane %v4646, 4
        %v4648 = vadd.f32 %v4646, %v4647
        %v4649 = vrot.slane %v4648, 2
        %v4650 = vadd.f32 %v4648, %v4649
        %v4651 = vrot.slane %v4650, 1
        %v4652 = vadd.f32 %v4650, %v4651
        %v4653 = vsel %vm559, %v4623, 0.0
        %v4654 = vsel %vm559, %v4624, 0.0
        %v4655 = vadd.f32 %v4653, %v4654
        %v4656 = vrot.slane %v4655, 4
        %v4657 = vadd.f32 %v4655, %v4656
        %v4658 = vrot.slane %v4657, 2
        %v4659 = vadd.f32 %v4657, %v4658
        %v4660 = vrot.slane %v4659, 1
        %v4661 = vadd.f32 %v4659, %v4660
        %v4662 = vsel %vm559, %v4625, 0.0
        %v4663 = vsel %vm559, %v4626, 0.0
        %v4664 = vadd.f32 %v4662, %v4663
        %v4665 = vrot.slane %v4664, 4
        %v4666 = vadd.f32 %v4664, %v4665
        %v4667 = vrot.slane %v4666, 2
        %v4668 = vadd.f32 %v4666, %v4667
        %v4669 = vrot.slane %v4668, 1
        %v4670 = vadd.f32 %v4668, %v4669
        %v4671 = vsel %vm559, %v4627, 0.0
        %v4672 = vsel %vm559, %v4628, 0.0
        %v4673 = vadd.f32 %v4671, %v4672
        %v4674 = vrot.slane %v4673, 4
        %v4675 = vadd.f32 %v4673, %v4674
        %v4676 = vrot.slane %v4675, 2
        %v4677 = vadd.f32 %v4675, %v4676
        %v4678 = vrot.slane %v4677, 1
        %v4679 = vadd.f32 %v4677, %v4678
        %v4680 = vsel %vm559, %v4629, 0.0
        %v4681 = vsel %vm559, %v4630, 0.0
        %v4682 = vadd.f32 %v4680, %v4681
        %v4683 = vrot.slane %v4682, 4
        %v4684 = vadd.f32 %v4682, %v4683
        %v4685 = vrot.slane %v4684, 2
        %v4686 = vadd.f32 %v4684, %v4685
        %v4687 = vrot.slane %v4686, 1
        %v4688 = vadd.f32 %v4686, %v4687
        %v4689 = vsel %vm559, %v4631, 0.0
        %v4690 = vsel %vm559, %v4632, 0.0
        %v4691 = vadd.f32 %v4689, %v4690
        %v4692 = vrot.slane %v4691, 4
        %v4693 = vadd.f32 %v4691, %v4692
        %v4694 = vrot.slane %v4693, 2
        %v4695 = vadd.f32 %v4693, %v4694
        %v4696 = vrot.slane %v4695, 1
        %v4697 = vadd.f32 %v4695, %v4696
        %v4698 = vsel %vm559, %v4633, 0.0
        %v4699 = vsel %vm559, %v4634, 0.0
        %v4700 = vadd.f32 %v4698, %v4699
        %v4701 = vrot.slane %v4700, 4
        %v4702 = vadd.f32 %v4700, %v4701
        %v4703 = vrot.slane %v4702, 2
        %v4704 = vadd.f32 %v4702, %v4703
        %v4705 = vrot.slane %v4704, 1
        %v4706 = vadd.f32 %v4704, %v4705
        %s4707 = scalar_lea.vmem [#allocation7], 24
        %v4708 = vld [vmem:[%s4707] sm:$0xff]
        %4710 = vset.pattern.permute.xlu0 0
        %4711 = vperm.xlu0 %4710, %v4708
        %v4712 = vpop.permute.xlu0 %4711
        %v4713 = vrot.slane %v4712, 1
        %v4714 = vrot.slane %v4712, 2
        %v4715 = vrot.slane %v4712, 3
        %v4716 = vrot.slane %v4712, 4
        %v4717 = vrot.slane %v4712, 5
        %v4718 = vrot.slane %v4712, 6
        %v4719 = vrot.slane %v4712, 7
        %v4728 = vmul.f32 %v4555, %v4712
        %v4729 = vmul.f32 %v4564, %v4713
        %v4730 = vmul.f32 %v4573, %v4714
        %v4731 = vmul.f32 %v4582, %v4715
        %v4732 = vmul.f32 %v4591, %v4716
        %v4733 = vmul.f32 %v4600, %v4717
        %v4734 = vmul.f32 %v4609, %v4718
        %v4735 = vmul.f32 %v4618, %v4719
        %4736 = vset.pattern.permute.xlu0 3
        %4737 = vperm.xlu0 %4736, %v4708
        %v4738 = vpop.permute.xlu0 %4737
        %v4739 = vrot.slane %v4738, 1
        %v4740 = vrot.slane %v4738, 2
        %v4741 = vrot.slane %v4738, 3
        %v4742 = vrot.slane %v4738, 4
        %v4743 = vrot.slane %v4738, 5
        %v4744 = vrot.slane %v4738, 6
        %v4745 = vrot.slane %v4738, 7
        %v4754 = vmul.f32 %v4481, %v4738
        %v4755 = vmul.f32 %v4488, %v4739
        %v4756 = vmul.f32 %v4495, %v4740
        %v4757 = vmul.f32 %v4502, %v4741
        %v4758 = vmul.f32 %v4509, %v4742
        %v4759 = vmul.f32 %v4516, %v4743
        %v4760 = vmul.f32 %v4523, %v4744
        %v4761 = vmul.f32 %v4530, %v4745
        %v4762 = vadd.f32 %v4728, %v4754
        %v4763 = vadd.f32 %v4729, %v4755
        %v4764 = vadd.f32 %v4730, %v4756
        %v4765 = vadd.f32 %v4731, %v4757
        %v4766 = vadd.f32 %v4732, %v4758
        %v4767 = vadd.f32 %v4733, %v4759
        %v4768 = vadd.f32 %v4734, %v4760
        %v4769 = vadd.f32 %v4735, %v4761
        %4770 = vset.pattern.permute.xlu0 6
        %4771 = vperm.xlu0 %4770, %v4708
        %v4772 = vpop.permute.xlu0 %4771
        %v4773 = vrot.slane %v4772, 1
        %v4774 = vrot.slane %v4772, 2
        %v4775 = vrot.slane %v4772, 3
        %v4776 = vrot.slane %v4772, 4
        %v4777 = vrot.slane %v4772, 5
        %v4778 = vrot.slane %v4772, 6
        %v4779 = vrot.slane %v4772, 7
        %v4788 = vmul.f32 %v4643, %v4772
        %v4789 = vmul.f32 %v4652, %v4773
        %v4790 = vmul.f32 %v4661, %v4774
        %v4791 = vmul.f32 %v4670, %v4775
        %v4792 = vmul.f32 %v4679, %v4776
        %v4793 = vmul.f32 %v4688, %v4777
        %v4794 = vmul.f32 %v4697, %v4778
        %v4795 = vmul.f32 %v4706, %v4779
        %v4796 = vadd.f32 %v4762, %v4788
        %v4797 = vadd.f32 %v4763, %v4789
        %v4798 = vadd.f32 %v4764, %v4790
        %v4799 = vadd.f32 %v4765, %v4791
        %v4800 = vadd.f32 %v4766, %v4792
        %v4801 = vadd.f32 %v4767, %v4793
        %v4802 = vadd.f32 %v4768, %v4794
        %v4803 = vadd.f32 %v4769, %v4795
        %4804 = vset.pattern.permute.xlu0 1
        %4805 = vperm.xlu0 %4804, %v4708
        %v4806 = vpop.permute.xlu0 %4805
        %v4807 = vrot.slane %v4806, 1
        %v4808 = vrot.slane %v4806, 2
        %v4809 = vrot.slane %v4806, 3
        %v4810 = vrot.slane %v4806, 4
        %v4811 = vrot.slane %v4806, 5
        %v4812 = vrot.slane %v4806, 6
        %v4813 = vrot.slane %v4806, 7
        %v4822 = vmul.f32 %v4555, %v4806
        %v4823 = vmul.f32 %v4564, %v4807
        %v4824 = vmul.f32 %v4573, %v4808
        %v4825 = vmul.f32 %v4582, %v4809
        %v4826 = vmul.f32 %v4591, %v4810
        %v4827 = vmul.f32 %v4600, %v4811
        %v4828 = vmul.f32 %v4609, %v4812
        %v4829 = vmul.f32 %v4618, %v4813
        %4830 = vset.pattern.permute.xlu0 4
        %4831 = vperm.xlu0 %4830, %v4708
        %v4832 = vpop.permute.xlu0 %4831
        %v4833 = vrot.slane %v4832, 1
        %v4834 = vrot.slane %v4832, 2
        %v4835 = vrot.slane %v4832, 3
        %v4836 = vrot.slane %v4832, 4
        %v4837 = vrot.slane %v4832, 5
        %v4838 = vrot.slane %v4832, 6
        %v4839 = vrot.slane %v4832, 7
        %v4848 = vmul.f32 %v4481, %v4832
        %v4849 = vmul.f32 %v4488, %v4833
        %v4850 = vmul.f32 %v4495, %v4834
        %v4851 = vmul.f32 %v4502, %v4835
        %v4852 = vmul.f32 %v4509, %v4836
        %v4853 = vmul.f32 %v4516, %v4837
        %v4854 = vmul.f32 %v4523, %v4838
        %v4855 = vmul.f32 %v4530, %v4839
        %v4856 = vadd.f32 %v4822, %v4848
        %v4857 = vadd.f32 %v4823, %v4849
        %v4858 = vadd.f32 %v4824, %v4850
        %v4859 = vadd.f32 %v4825, %v4851
        %v4860 = vadd.f32 %v4826, %v4852
        %v4861 = vadd.f32 %v4827, %v4853
        %v4862 = vadd.f32 %v4828, %v4854
        %v4863 = vadd.f32 %v4829, %v4855
        %4864 = vset.pattern.permute.xlu0 7
        %4865 = vperm.xlu0 %4864, %v4708
        %v4866 = vpop.permute.xlu0 %4865
        %v4867 = vrot.slane %v4866, 1
        %v4868 = vrot.slane %v4866, 2
        %v4869 = vrot.slane %v4866, 3
        %v4870 = vrot.slane %v4866, 4
        %v4871 = vrot.slane %v4866, 5
        %v4872 = vrot.slane %v4866, 6
        %v4873 = vrot.slane %v4866, 7
        %v4882 = vmul.f32 %v4643, %v4866
        %v4883 = vmul.f32 %v4652, %v4867
        %v4884 = vmul.f32 %v4661, %v4868
        %v4885 = vmul.f32 %v4670, %v4869
        %v4886 = vmul.f32 %v4679, %v4870
        %v4887 = vmul.f32 %v4688, %v4871
        %v4888 = vmul.f32 %v4697, %v4872
        %v4889 = vmul.f32 %v4706, %v4873
        %v4890 = vadd.f32 %v4856, %v4882
        %v4891 = vadd.f32 %v4857, %v4883
        %v4892 = vadd.f32 %v4858, %v4884
        %v4893 = vadd.f32 %v4859, %v4885
        %v4894 = vadd.f32 %v4860, %v4886
        %v4895 = vadd.f32 %v4861, %v4887
        %v4896 = vadd.f32 %v4862, %v4888
        %v4897 = vadd.f32 %v4863, %v4889
        %4898 = vset.pattern.permute.xlu0 2
        %4899 = vperm.xlu0 %4898, %v4708
        %v4900 = vpop.permute.xlu0 %4899
        %v4901 = vrot.slane %v4900, 1
        %v4902 = vrot.slane %v4900, 2
        %v4903 = vrot.slane %v4900, 3
        %v4904 = vrot.slane %v4900, 4
        %v4905 = vrot.slane %v4900, 5
        %v4906 = vrot.slane %v4900, 6
        %v4907 = vrot.slane %v4900, 7
        %v4916 = vmul.f32 %v4555, %v4900
        %v4917 = vmul.f32 %v4564, %v4901
        %v4918 = vmul.f32 %v4573, %v4902
        %v4919 = vmul.f32 %v4582, %v4903
        %v4920 = vmul.f32 %v4591, %v4904
        %v4921 = vmul.f32 %v4600, %v4905
        %v4922 = vmul.f32 %v4609, %v4906
        %v4923 = vmul.f32 %v4618, %v4907
        %4924 = vset.pattern.permute.xlu0 5
        %4925 = vperm.xlu0 %4924, %v4708
        %v4926 = vpop.permute.xlu0 %4925
        %v4927 = vrot.slane %v4926, 1
        %v4928 = vrot.slane %v4926, 2
        %v4929 = vrot.slane %v4926, 3
        %v4930 = vrot.slane %v4926, 4
        %v4931 = vrot.slane %v4926, 5
        %v4932 = vrot.slane %v4926, 6
        %v4933 = vrot.slane %v4926, 7
        %v4942 = vmul.f32 %v4481, %v4926
        %v4943 = vmul.f32 %v4488, %v4927
        %v4944 = vmul.f32 %v4495, %v4928
        %v4945 = vmul.f32 %v4502, %v4929
        %v4946 = vmul.f32 %v4509, %v4930
        %v4947 = vmul.f32 %v4516, %v4931
        %v4948 = vmul.f32 %v4523, %v4932
        %v4949 = vmul.f32 %v4530, %v4933
        %v4950 = vadd.f32 %v4916, %v4942
        %v4951 = vadd.f32 %v4917, %v4943
        %v4952 = vadd.f32 %v4918, %v4944
        %v4953 = vadd.f32 %v4919, %v4945
        %v4954 = vadd.f32 %v4920, %v4946
        %v4955 = vadd.f32 %v4921, %v4947
        %v4956 = vadd.f32 %v4922, %v4948
        %v4957 = vadd.f32 %v4923, %v4949
        %4958 = vset.pattern.permute.xlu0 8
        %4959 = vperm.xlu0 %4958, %v4708
        %v4960 = vpop.permute.xlu0 %4959
        %v4961 = vrot.slane %v4960, 1
        %v4962 = vrot.slane %v4960, 2
        %v4963 = vrot.slane %v4960, 3
        %v4964 = vrot.slane %v4960, 4
        %v4965 = vrot.slane %v4960, 5
        %v4966 = vrot.slane %v4960, 6
        %v4967 = vrot.slane %v4960, 7
        %v4976 = vmul.f32 %v4643, %v4960
        %v4977 = vmul.f32 %v4652, %v4961
        %v4978 = vmul.f32 %v4661, %v4962
        %v4979 = vmul.f32 %v4670, %v4963
        %v4980 = vmul.f32 %v4679, %v4964
        %v4981 = vmul.f32 %v4688, %v4965
        %v4982 = vmul.f32 %v4697, %v4966
        %v4983 = vmul.f32 %v4706, %v4967
        %v4984 = vadd.f32 %v4950, %v4976
        %v4985 = vadd.f32 %v4951, %v4977
        %v4986 = vadd.f32 %v4952, %v4978
        %v4987 = vadd.f32 %v4953, %v4979
        %v4988 = vadd.f32 %v4954, %v4980
        %v4989 = vadd.f32 %v4955, %v4981
        %v4990 = vadd.f32 %v4956, %v4982
        %v4991 = vadd.f32 %v4957, %v4983
        %v5000 = vrot.slane %v4797, 7
        %v5001 = vsel %vm1505, %v5000, %v4796
        %v5002 = vrot.slane %v4798, 6
        %v5003 = vsel %vm1507, %v5002, %v5001
        %v5004 = vrot.slane %v4799, 5
        %v5005 = vsel %vm1509, %v5004, %v5003
        %v5006 = vrot.slane %v4800, 4
        %v5007 = vsel %vm1511, %v5006, %v5005
        %v5008 = vrot.slane %v4801, 3
        %v5009 = vsel %vm1513, %v5008, %v5007
        %v5010 = vrot.slane %v4802, 2
        %v5011 = vsel %vm1515, %v5010, %v5009
        %v5012 = vrot.slane %v4803, 1
        %v5013 = vsel %vm1517, %v5012, %v5011
        %v5014 = vsel %vm559, %v5013, 0
        %5016 = vmatprep.subr.mxu0 0.0
        %5017 = vmatpush1.msra.mxu0 %v465
        %5018 = vmatprep.subr.mxu0 0.0
        %5019 = vmatpush1.msra.mxu0 %v466
        %5020 = vmatprep.subr.mxu0 0.0
        %5021 = vmatpush1.msra.mxu0 0.0
        %5022 = vmatprep.subr.mxu0 0.0
        %5023 = vmatpush1.msra.mxu0 0.0
        %5024 = vmatprep.subr.mxu0 0.0
        %5025 = vmatpush1.msra.mxu0 0.0
        %5026 = vmatprep.subr.mxu0 0.0
        %5027 = vmatpush1.msra.mxu0 0.0
        %5028 = vmatprep.subr.mxu0 0.0
        %5029 = vmatpush1.msra.mxu0 0.0
        %5030 = vmatprep.subr.mxu0 0.0
        %5031 = vmatpush1.msra.mxu0 0.0
        %5032 = vmatprep.subr.mxu0 0.0
        %5033 = vmatpush1.msra.mxu0 0.0
        %5034 = vmatprep.subr.mxu0 0.0
        %5035 = vmatpush1.msra.mxu0 0.0
        %5036 = vmatprep.subr.mxu0 0.0
        %5037 = vmatpush1.msra.mxu0 0.0
        %5038 = vmatprep.subr.mxu0 0.0
        %5039 = vmatpush1.msra.mxu0 0.0
        %5040 = vmatprep.subr.mxu0 0.0
        %5041 = vmatpush1.msra.mxu0 0.0
        %5042 = vmatprep.subr.mxu0 0.0
        %5043 = vmatpush1.msra.mxu0 0.0
        %5044 = vmatprep.subr.mxu0 0.0
        %5045 = vmatpush1.msra.mxu0 0.0
        %5046 = vmatprep.subr.mxu0 0.0
        %5047 = vmatpush1.msra.mxu0 0.0
        %5048 = vmatprep.subr.mxu0 0.0
        %5049 = vmatpush1.msra.mxu0 0.0
        %5050 = vmatprep.subr.mxu0 0.0
        %5051 = vmatpush1.msra.mxu0 0.0
        %5052 = vmatprep.subr.mxu0 0.0
        %5053 = vmatpush1.msra.mxu0 0.0
        %5054 = vmatprep.subr.mxu0 0.0
        %5055 = vmatpush1.msra.mxu0 0.0
        %5056 = vmatprep.subr.mxu0 0.0
        %5057 = vmatpush1.msra.mxu0 0.0
        %5058 = vmatprep.subr.mxu0 0.0
        %5059 = vmatpush1.msra.mxu0 0.0
        %5060 = vmatprep.subr.mxu0 0.0
        %5061 = vmatpush1.msra.mxu0 0.0
        %5062 = vmatprep.subr.mxu0 0.0
        %5063 = vmatpush1.msra.mxu0 0.0
        %5064 = vmatprep.subr.mxu0 0.0
        %5065 = vmatpush1.msra.mxu0 0.0
        %5066 = vmatprep.subr.mxu0 0.0
        %5067 = vmatpush1.msra.mxu0 0.0
        %5068 = vmatprep.subr.mxu0 0.0
        %5069 = vmatpush1.msra.mxu0 0.0
        %5070 = vmatprep.subr.mxu0 0.0
        %5071 = vmatpush1.msra.mxu0 0.0
        %5072 = vmatprep.subr.mxu0 0.0
        %5073 = vmatpush1.msra.mxu0 0.0
        %5074 = vmatprep.subr.mxu0 0.0
        %5075 = vmatpush1.msra.mxu0 0.0
        %5076 = vmatprep.subr.mxu0 0.0
        %5077 = vmatpush1.msra.mxu0 0.0
        %5078 = vmatprep.subr.mxu0 0.0
        %5079 = vmatpush1.msra.mxu0 0.0
        %5080 = vmatprep.mubr.f32.mxu0 0.0
        %5081 = vmatmul.mubr.f32.gmra.mrb[0].mxu0 %v5014
        %v5082 = vpop.f32.mrb[0].mxu0
        %v5083 = vadd.f32 0.0, %v5082
        %v5084 = vpop.f32.mrb[0].mxu0
        %5085 = vdwg.mxu0
        %v5087 = vrot.slane %v5083, 1
        %v5088 = vrot.slane %v5083, 2
        %v5089 = vrot.slane %v5083, 3
        %v5090 = vrot.slane %v5083, 4
        %v5091 = vrot.slane %v5083, 5
        %v5092 = vrot.slane %v5083, 6
        %v5093 = vrot.slane %v5083, 7
        %v5102 = vadd.f32 %v4890, %v5083
        %v5103 = vadd.f32 %v4891, %v5087
        %v5104 = vadd.f32 %v4892, %v5088
        %v5105 = vadd.f32 %v4893, %v5089
        %v5106 = vadd.f32 %v4894, %v5090
        %v5107 = vadd.f32 %v4895, %v5091
        %v5108 = vadd.f32 %v4896, %v5092
        %v5109 = vadd.f32 %v4897, %v5093
        %v5118 = vrot.slane %v4985, 7
        %v5119 = vsel %vm1505, %v5118, %v4984
        %v5120 = vrot.slane %v4986, 6
        %v5121 = vsel %vm1507, %v5120, %v5119
        %v5122 = vrot.slane %v4987, 5
        %v5123 = vsel %vm1509, %v5122, %v5121
        %v5124 = vrot.slane %v4988, 4
        %v5125 = vsel %vm1511, %v5124, %v5123
        %v5126 = vrot.slane %v4989, 3
        %v5127 = vsel %vm1513, %v5126, %v5125
        %v5128 = vrot.slane %v4990, 2
        %v5129 = vsel %vm1515, %v5128, %v5127
        %v5130 = vrot.slane %v4991, 1
        %v5131 = vsel %vm1517, %v5130, %v5129
        %v5132 = vsel %vm559, %v5131, 0
        %5134 = vmatprep.subr.mxu0 0.0
        %5135 = vmatpush1.msra.mxu0 %v473
        %5136 = vmatprep.subr.mxu0 0.0
        %5137 = vmatpush1.msra.mxu0 %v474
        %5138 = vmatprep.subr.mxu0 0.0
        %5139 = vmatpush1.msra.mxu0 0.0
        %5140 = vmatprep.subr.mxu0 0.0
        %5141 = vmatpush1.msra.mxu0 0.0
        %5142 = vmatprep.subr.mxu0 0.0
        %5143 = vmatpush1.msra.mxu0 0.0
        %5144 = vmatprep.subr.mxu0 0.0
        %5145 = vmatpush1.msra.mxu0 0.0
        %5146 = vmatprep.subr.mxu0 0.0
        %5147 = vmatpush1.msra.mxu0 0.0
        %5148 = vmatprep.subr.mxu0 0.0
        %5149 = vmatpush1.msra.mxu0 0.0
        %5150 = vmatprep.subr.mxu0 0.0
        %5151 = vmatpush1.msra.mxu0 0.0
        %5152 = vmatprep.subr.mxu0 0.0
        %5153 = vmatpush1.msra.mxu0 0.0
        %5154 = vmatprep.subr.mxu0 0.0
        %5155 = vmatpush1.msra.mxu0 0.0
        %5156 = vmatprep.subr.mxu0 0.0
        %5157 = vmatpush1.msra.mxu0 0.0
        %5158 = vmatprep.subr.mxu0 0.0
        %5159 = vmatpush1.msra.mxu0 0.0
        %5160 = vmatprep.subr.mxu0 0.0
        %5161 = vmatpush1.msra.mxu0 0.0
        %5162 = vmatprep.subr.mxu0 0.0
        %5163 = vmatpush1.msra.mxu0 0.0
        %5164 = vmatprep.subr.mxu0 0.0
        %5165 = vmatpush1.msra.mxu0 0.0
        %5166 = vmatprep.subr.mxu0 0.0
        %5167 = vmatpush1.msra.mxu0 0.0
        %5168 = vmatprep.subr.mxu0 0.0
        %5169 = vmatpush1.msra.mxu0 0.0
        %5170 = vmatprep.subr.mxu0 0.0
        %5171 = vmatpush1.msra.mxu0 0.0
        %5172 = vmatprep.subr.mxu0 0.0
        %5173 = vmatpush1.msra.mxu0 0.0
        %5174 = vmatprep.subr.mxu0 0.0
        %5175 = vmatpush1.msra.mxu0 0.0
        %5176 = vmatprep.subr.mxu0 0.0
        %5177 = vmatpush1.msra.mxu0 0.0
        %5178 = vmatprep.subr.mxu0 0.0
        %5179 = vmatpush1.msra.mxu0 0.0
        %5180 = vmatprep.subr.mxu0 0.0
        %5181 = vmatpush1.msra.mxu0 0.0
        %5182 = vmatprep.subr.mxu0 0.0
        %5183 = vmatpush1.msra.mxu0 0.0
        %5184 = vmatprep.subr.mxu0 0.0
        %5185 = vmatpush1.msra.mxu0 0.0
        %5186 = vmatprep.subr.mxu0 0.0
        %5187 = vmatpush1.msra.mxu0 0.0
        %5188 = vmatprep.subr.mxu0 0.0
        %5189 = vmatpush1.msra.mxu0 0.0
        %5190 = vmatprep.subr.mxu0 0.0
        %5191 = vmatpush1.msra.mxu0 0.0
        %5192 = vmatprep.subr.mxu0 0.0
        %5193 = vmatpush1.msra.mxu0 0.0
        %5194 = vmatprep.subr.mxu0 0.0
        %5195 = vmatpush1.msra.mxu0 0.0
        %5196 = vmatprep.subr.mxu0 0.0
        %5197 = vmatpush1.msra.mxu0 0.0
        %5198 = vmatprep.mubr.f32.mxu0 0.0
        %5199 = vmatmul.mubr.f32.gmra.mrb[0].mxu0 %v5132
        %v5200 = vpop.f32.mrb[0].mxu0
        %v5201 = vadd.f32 0.0, %v5200
        %v5202 = vpop.f32.mrb[0].mxu0
        %5203 = vdwg.mxu0
        %v5205 = vrot.slane %v5201, 1
        %v5206 = vrot.slane %v5201, 2
        %v5207 = vrot.slane %v5201, 3
        %v5208 = vrot.slane %v5201, 4
        %v5209 = vrot.slane %v5201, 5
        %v5210 = vrot.slane %v5201, 6
        %v5211 = vrot.slane %v5201, 7
        %v5220 = vadd.f32 %v5102, %v5201
        %v5221 = vadd.f32 %v5103, %v5205
        %v5222 = vadd.f32 %v5104, %v5206
        %v5223 = vadd.f32 %v5105, %v5207
        %v5224 = vadd.f32 %v5106, %v5208
        %v5225 = vadd.f32 %v5107, %v5209
        %v5226 = vadd.f32 %v5108, %v5210
        %v5227 = vadd.f32 %v5109, %v5211
        %v5228 = vmul.f32 %v5220, 0.0625
        %v5229 = vmul.f32 %v5221, 0.0625
        %v5230 = vmul.f32 %v5222, 0.0625
        %v5231 = vmul.f32 %v5223, 0.0625
        %v5232 = vmul.f32 %v5224, 0.0625
        %v5233 = vmul.f32 %v5225, 0.0625
        %v5234 = vmul.f32 %v5226, 0.0625
        %v5235 = vmul.f32 %v5227, 0.0625
        %s5236 = scalar_lea.vmem %s5, 24
        %v5237 = vld [vmem:[%s5236] sm:$0xff]
        %5239 = vset.pattern.permute.xlu0 0
        %5240 = vperm.xlu0 %5239, %v5237
        %v5241 = vpop.permute.xlu0 %5240
        %v5242 = vrot.slane %v5241, 1
        %v5243 = vrot.slane %v5241, 2
        %v5244 = vrot.slane %v5241, 3
        %v5245 = vrot.slane %v5241, 4
        %v5246 = vrot.slane %v5241, 5
        %v5247 = vrot.slane %v5241, 6
        %v5248 = vrot.slane %v5241, 7
        %v5257 = vadd.f32 %v5228, %v5241
        %v5258 = vadd.f32 %v5229, %v5242
        %v5259 = vadd.f32 %v5230, %v5243
        %v5260 = vadd.f32 %v5231, %v5244
        %v5261 = vadd.f32 %v5232, %v5245
        %v5262 = vadd.f32 %v5233, %v5246
        %v5263 = vadd.f32 %v5234, %v5247
        %v5264 = vadd.f32 %v5235, %v5248
        %5281 = vrot.lane.b32.xlu0 %v543, 1
        %v5282 = vpop.permute.xlu0 %5281
        %5283 = vrot.lane.b32.xlu0 %v544, 1
        %v5284 = vpop.permute.xlu0 %5283
        %5285 = vrot.lane.b32.xlu0 %v545, 1
        %v5286 = vpop.permute.xlu0 %5285
        %5287 = vrot.lane.b32.xlu0 %v546, 1
        %v5288 = vpop.permute.xlu0 %5287
        %5289 = vrot.lane.b32.xlu0 %v547, 1
        %v5290 = vpop.permute.xlu0 %5289
        %5291 = vrot.lane.b32.xlu0 %v548, 1
        %v5292 = vpop.permute.xlu0 %5291
        %5293 = vrot.lane.b32.xlu0 %v549, 1
        %v5294 = vpop.permute.xlu0 %5293
        %5295 = vrot.lane.b32.xlu0 %v550, 1
        %v5296 = vpop.permute.xlu0 %5295
        %5297 = vrot.lane.b32.xlu0 %v551, 1
        %v5298 = vpop.permute.xlu0 %5297
        %5299 = vrot.lane.b32.xlu0 %v552, 1
        %v5300 = vpop.permute.xlu0 %5299
        %5301 = vrot.lane.b32.xlu0 %v553, 1
        %v5302 = vpop.permute.xlu0 %5301
        %5303 = vrot.lane.b32.xlu0 %v554, 1
        %v5304 = vpop.permute.xlu0 %5303
        %5305 = vrot.lane.b32.xlu0 %v555, 1
        %v5306 = vpop.permute.xlu0 %5305
        %5307 = vrot.lane.b32.xlu0 %v556, 1
        %v5308 = vpop.permute.xlu0 %5307
        %5309 = vrot.lane.b32.xlu0 %v557, 1
        %v5310 = vpop.permute.xlu0 %5309
        %5311 = vrot.lane.b32.xlu0 %v558, 1
        %v5312 = vpop.permute.xlu0 %5311
        %vm5329 = vcmask 138248
        %5330 = vst.msk [vmem:[#allocation2 + $0x1] sm:$0xff] %vm5329, %v5282
        %5331 = vst.msk [vmem:[#allocation2 + $0x9] sm:$0xff] %vm5329, %v5284
        %5332 = vst.msk [vmem:[#allocation2 + $0x19] sm:$0xff] %vm5329, %v5286
        %5333 = vst.msk [vmem:[#allocation2 + $0x21] sm:$0xff] %vm5329, %v5288
        %5334 = vst.msk [vmem:[#allocation2 + $0x31] sm:$0xff] %vm5329, %v5290
        %5335 = vst.msk [vmem:[#allocation2 + $0x39] sm:$0xff] %vm5329, %v5292
        %5336 = vst.msk [vmem:[#allocation2 + $0x49] sm:$0xff] %vm5329, %v5294
        %5337 = vst.msk [vmem:[#allocation2 + $0x51] sm:$0xff] %vm5329, %v5296
        %5338 = vst.msk [vmem:[#allocation2 + $0x61] sm:$0xff] %vm5329, %v5298
        %5339 = vst.msk [vmem:[#allocation2 + $0x69] sm:$0xff] %vm5329, %v5300
        %5340 = vst.msk [vmem:[#allocation2 + $0x79] sm:$0xff] %vm5329, %v5302
        %5341 = vst.msk [vmem:[#allocation2 + $0x81] sm:$0xff] %vm5329, %v5304
        %5342 = vst.msk [vmem:[#allocation2 + $0x91] sm:$0xff] %vm5329, %v5306
        %5343 = vst.msk [vmem:[#allocation2 + $0x99] sm:$0xff] %vm5329, %v5308
        %5344 = vst.msk [vmem:[#allocation2 + $0xa9] sm:$0xff] %vm5329, %v5310
        %5345 = vst.msk [vmem:[#allocation2 + $0xb1] sm:$0xff] %vm5329, %v5312
        %v5346 = vld [vmem:[#allocation2] sm:$0xff]
        %v5347 = vld [vmem:[#allocation2 + $0x8] sm:$0xff]
        %v5348 = vld [vmem:[#allocation2 + $0x10] sm:$0x3]
        %v5349 = vld [vmem:[#allocation2 + $0x18] sm:$0xff]
        %v5350 = vld [vmem:[#allocation2 + $0x20] sm:$0xff]
        %v5351 = vld [vmem:[#allocation2 + $0x28] sm:$0x3]
        %v5352 = vld [vmem:[#allocation2 + $0x30] sm:$0xff]
        %v5353 = vld [vmem:[#allocation2 + $0x38] sm:$0xff]
        %v5354 = vld [vmem:[#allocation2 + $0x40] sm:$0x3]
        %v5355 = vld [vmem:[#allocation2 + $0x48] sm:$0xff]
        %v5356 = vld [vmem:[#allocation2 + $0x50] sm:$0xff]
        %v5357 = vld [vmem:[#allocation2 + $0x58] sm:$0x3]
        %v5358 = vld [vmem:[#allocation2 + $0x60] sm:$0xff]
        %v5359 = vld [vmem:[#allocation2 + $0x68] sm:$0xff]
        %v5360 = vld [vmem:[#allocation2 + $0x70] sm:$0x3]
        %v5361 = vld [vmem:[#allocation2 + $0x78] sm:$0xff]
        %v5362 = vld [vmem:[#allocation2 + $0x80] sm:$0xff]
        %v5363 = vld [vmem:[#allocation2 + $0x88] sm:$0x3]
        %v5364 = vld [vmem:[#allocation2 + $0x90] sm:$0xff]
        %v5365 = vld [vmem:[#allocation2 + $0x98] sm:$0xff]
        %v5366 = vld [vmem:[#allocation2 + $0xa0] sm:$0x3]
        %v5367 = vld [vmem:[#allocation2 + $0xa8] sm:$0xff]
        %v5368 = vld [vmem:[#allocation2 + $0xb0] sm:$0xff]
        %v5369 = vld [vmem:[#allocation2 + $0xb8] sm:$0x3]
        %v5378 = vlaneseq
        %v5379 = vshrl.u32 %v5378, 7
        %v5380 = vsub.s32 0, %v5379
        %v5381 = vrot.slane %v503, %v5380
        %v5382 = vlaneseq
        %v5383 = vshrl.u32 %v5382, 7
        %v5384 = vsub.s32 0, %v5383
        %v5385 = vrot.slane %v504, %v5384
        %v5386 = vlaneseq
        %v5387 = vshrl.u32 %v5386, 7
        %v5388 = vsub.s32 0, %v5387
        %v5389 = vrot.slane %v505, %v5388
        %v5390 = vlaneseq
        %v5391 = vshrl.u32 %v5390, 7
        %v5392 = vsub.s32 0, %v5391
        %v5393 = vrot.slane %v506, %v5392
        %v5394 = vlaneseq
        %v5395 = vshrl.u32 %v5394, 7
        %v5396 = vsub.s32 0, %v5395
        %v5397 = vrot.slane %v507, %v5396
        %v5398 = vlaneseq
        %v5399 = vshrl.u32 %v5398, 7
        %v5400 = vsub.s32 0, %v5399
        %v5401 = vrot.slane %v508, %v5400
        %v5402 = vlaneseq
        %v5403 = vshrl.u32 %v5402, 7
        %v5404 = vsub.s32 0, %v5403
        %v5405 = vrot.slane %v509, %v5404
        %v5406 = vlaneseq
        %v5407 = vshrl.u32 %v5406, 7
        %v5408 = vsub.s32 0, %v5407
        %v5409 = vrot.slane %v510, %v5408
        %5410 = vset.pattern.permute.xlu0 0
        %5411 = vperm.xlu0 %5410, %v5381
        %v5412 = vpop.permute.xlu0 %5411
        %5414 = vset.pattern.permute.xlu0 0
        %5415 = vperm.xlu0 %5414, %v5385
        %v5416 = vpop.permute.xlu0 %5415
        %5418 = vset.pattern.permute.xlu0 0
        %5419 = vperm.xlu0 %5418, %v5389
        %v5420 = vpop.permute.xlu0 %5419
        %5422 = vset.pattern.permute.xlu0 0
        %5423 = vperm.xlu0 %5422, %v5393
        %v5424 = vpop.permute.xlu0 %5423
        %5426 = vset.pattern.permute.xlu0 0
        %5427 = vperm.xlu0 %5426, %v5397
        %v5428 = vpop.permute.xlu0 %5427
        %5430 = vset.pattern.permute.xlu0 0
        %5431 = vperm.xlu0 %5430, %v5401
        %v5432 = vpop.permute.xlu0 %5431
        %5434 = vset.pattern.permute.xlu0 0
        %5435 = vperm.xlu0 %5434, %v5405
        %v5436 = vpop.permute.xlu0 %5435
        %5438 = vset.pattern.permute.xlu0 0
        %5439 = vperm.xlu0 %5438, %v5409
        %v5440 = vpop.permute.xlu0 %5439
        %v5442 = vmul.f32 %v5346, %v5412
        %v5443 = vmul.f32 %v5347, %v5412
        %v5444 = vmul.f32 %v5349, %v5416
        %v5445 = vmul.f32 %v5350, %v5416
        %v5446 = vmul.f32 %v5352, %v5420
        %v5447 = vmul.f32 %v5353, %v5420
        %v5448 = vmul.f32 %v5355, %v5424
        %v5449 = vmul.f32 %v5356, %v5424
        %v5450 = vmul.f32 %v5358, %v5428
        %v5451 = vmul.f32 %v5359, %v5428
        %v5452 = vmul.f32 %v5361, %v5432
        %v5453 = vmul.f32 %v5362, %v5432
        %v5454 = vmul.f32 %v5364, %v5436
        %v5455 = vmul.f32 %v5365, %v5436
        %v5456 = vmul.f32 %v5367, %v5440
        %v5457 = vmul.f32 %v5368, %v5440
        %5458 = vset.pattern.permute.xlu0 1
        %5459 = vperm.xlu0 %5458, %v5381
        %v5460 = vpop.permute.xlu0 %5459
        %5462 = vset.pattern.permute.xlu0 1
        %5463 = vperm.xlu0 %5462, %v5385
        %v5464 = vpop.permute.xlu0 %5463
        %5466 = vset.pattern.permute.xlu0 1
        %5467 = vperm.xlu0 %5466, %v5389
        %v5468 = vpop.permute.xlu0 %5467
        %5470 = vset.pattern.permute.xlu0 1
        %5471 = vperm.xlu0 %5470, %v5393
        %v5472 = vpop.permute.xlu0 %5471
        %5474 = vset.pattern.permute.xlu0 1
        %5475 = vperm.xlu0 %5474, %v5397
        %v5476 = vpop.permute.xlu0 %5475
        %5478 = vset.pattern.permute.xlu0 1
        %5479 = vperm.xlu0 %5478, %v5401
        %v5480 = vpop.permute.xlu0 %5479
        %5482 = vset.pattern.permute.xlu0 1
        %5483 = vperm.xlu0 %5482, %v5405
        %v5484 = vpop.permute.xlu0 %5483
        %5486 = vset.pattern.permute.xlu0 1
        %5487 = vperm.xlu0 %5486, %v5409
        %v5488 = vpop.permute.xlu0 %5487
        %v5490 = vmul.f32 %v5346, %v5460
        %v5491 = vmul.f32 %v5347, %v5460
        %v5492 = vmul.f32 %v5349, %v5464
        %v5493 = vmul.f32 %v5350, %v5464
        %v5494 = vmul.f32 %v5352, %v5468
        %v5495 = vmul.f32 %v5353, %v5468
        %v5496 = vmul.f32 %v5355, %v5472
        %v5497 = vmul.f32 %v5356, %v5472
        %v5498 = vmul.f32 %v5358, %v5476
        %v5499 = vmul.f32 %v5359, %v5476
        %v5500 = vmul.f32 %v5361, %v5480
        %v5501 = vmul.f32 %v5362, %v5480
        %v5502 = vmul.f32 %v5364, %v5484
        %v5503 = vmul.f32 %v5365, %v5484
        %v5504 = vmul.f32 %v5367, %v5488
        %v5505 = vmul.f32 %v5368, %v5488
        %5522 = vrot.lane.b32.xlu0 %v5490, 127
        %v5523 = vpop.permute.xlu0 %5522
        %5524 = vrot.lane.b32.xlu0 %v5491, 127
        %v5525 = vpop.permute.xlu0 %5524
        %5526 = vrot.lane.b32.xlu0 %v5492, 127
        %v5527 = vpop.permute.xlu0 %5526
        %5528 = vrot.lane.b32.xlu0 %v5493, 127
        %v5529 = vpop.permute.xlu0 %5528
        %5530 = vrot.lane.b32.xlu0 %v5494, 127
        %v5531 = vpop.permute.xlu0 %5530
        %5532 = vrot.lane.b32.xlu0 %v5495, 127
        %v5533 = vpop.permute.xlu0 %5532
        %5534 = vrot.lane.b32.xlu0 %v5496, 127
        %v5535 = vpop.permute.xlu0 %5534
        %5536 = vrot.lane.b32.xlu0 %v5497, 127
        %v5537 = vpop.permute.xlu0 %5536
        %5538 = vrot.lane.b32.xlu0 %v5498, 127
        %v5539 = vpop.permute.xlu0 %5538
        %5540 = vrot.lane.b32.xlu0 %v5499, 127
        %v5541 = vpop.permute.xlu0 %5540
        %5542 = vrot.lane.b32.xlu0 %v5500, 127
        %v5543 = vpop.permute.xlu0 %5542
        %5544 = vrot.lane.b32.xlu0 %v5501, 127
        %v5545 = vpop.permute.xlu0 %5544
        %5546 = vrot.lane.b32.xlu0 %v5502, 127
        %v5547 = vpop.permute.xlu0 %5546
        %5548 = vrot.lane.b32.xlu0 %v5503, 127
        %v5549 = vpop.permute.xlu0 %5548
        %5550 = vrot.lane.b32.xlu0 %v5504, 127
        %v5551 = vpop.permute.xlu0 %5550
        %5552 = vrot.lane.b32.xlu0 %v5505, 127
        %v5553 = vpop.permute.xlu0 %5552
        %v5570 = vadd.f32 %v5442, %v5523
        %v5571 = vadd.f32 %v5443, %v5525
        %v5572 = vadd.f32 %v5444, %v5527
        %v5573 = vadd.f32 %v5445, %v5529
        %v5574 = vadd.f32 %v5446, %v5531
        %v5575 = vadd.f32 %v5447, %v5533
        %v5576 = vadd.f32 %v5448, %v5535
        %v5577 = vadd.f32 %v5449, %v5537
        %v5578 = vadd.f32 %v5450, %v5539
        %v5579 = vadd.f32 %v5451, %v5541
        %v5580 = vadd.f32 %v5452, %v5543
        %v5581 = vadd.f32 %v5453, %v5545
        %v5582 = vadd.f32 %v5454, %v5547
        %v5583 = vadd.f32 %v5455, %v5549
        %v5584 = vadd.f32 %v5456, %v5551
        %v5585 = vadd.f32 %v5457, %v5553
        %5586 = vset.pattern.permute.xlu0 2
        %5587 = vperm.xlu0 %5586, %v5381
        %v5588 = vpop.permute.xlu0 %5587
        %5590 = vset.pattern.permute.xlu0 2
        %5591 = vperm.xlu0 %5590, %v5385
        %v5592 = vpop.permute.xlu0 %5591
        %5594 = vset.pattern.permute.xlu0 2
        %5595 = vperm.xlu0 %5594, %v5389
        %v5596 = vpop.permute.xlu0 %5595
        %5598 = vset.pattern.permute.xlu0 2
        %5599 = vperm.xlu0 %5598, %v5393
        %v5600 = vpop.permute.xlu0 %5599
        %5602 = vset.pattern.permute.xlu0 2
        %5603 = vperm.xlu0 %5602, %v5397
        %v5604 = vpop.permute.xlu0 %5603
        %5606 = vset.pattern.permute.xlu0 2
        %5607 = vperm.xlu0 %5606, %v5401
        %v5608 = vpop.permute.xlu0 %5607
        %5610 = vset.pattern.permute.xlu0 2
        %5611 = vperm.xlu0 %5610, %v5405
        %v5612 = vpop.permute.xlu0 %5611
        %5614 = vset.pattern.permute.xlu0 2
        %5615 = vperm.xlu0 %5614, %v5409
        %v5616 = vpop.permute.xlu0 %5615
        %v5618 = vmul.f32 %v5346, %v5588
        %v5619 = vmul.f32 %v5347, %v5588
        %v5620 = vmul.f32 %v5349, %v5592
        %v5621 = vmul.f32 %v5350, %v5592
        %v5622 = vmul.f32 %v5352, %v5596
        %v5623 = vmul.f32 %v5353, %v5596
        %v5624 = vmul.f32 %v5355, %v5600
        %v5625 = vmul.f32 %v5356, %v5600
        %v5626 = vmul.f32 %v5358, %v5604
        %v5627 = vmul.f32 %v5359, %v5604
        %v5628 = vmul.f32 %v5361, %v5608
        %v5629 = vmul.f32 %v5362, %v5608
        %v5630 = vmul.f32 %v5364, %v5612
        %v5631 = vmul.f32 %v5365, %v5612
        %v5632 = vmul.f32 %v5367, %v5616
        %v5633 = vmul.f32 %v5368, %v5616
        %5650 = vrot.lane.b32.xlu0 %v5618, 126
        %v5651 = vpop.permute.xlu0 %5650
        %5652 = vrot.lane.b32.xlu0 %v5619, 126
        %v5653 = vpop.permute.xlu0 %5652
        %5654 = vrot.lane.b32.xlu0 %v5620, 126
        %v5655 = vpop.permute.xlu0 %5654
        %5656 = vrot.lane.b32.xlu0 %v5621, 126
        %v5657 = vpop.permute.xlu0 %5656
        %5658 = vrot.lane.b32.xlu0 %v5622, 126
        %v5659 = vpop.permute.xlu0 %5658
        %5660 = vrot.lane.b32.xlu0 %v5623, 126
        %v5661 = vpop.permute.xlu0 %5660
        %5662 = vrot.lane.b32.xlu0 %v5624, 126
        %v5663 = vpop.permute.xlu0 %5662
        %5664 = vrot.lane.b32.xlu0 %v5625, 126
        %v5665 = vpop.permute.xlu0 %5664
        %5666 = vrot.lane.b32.xlu0 %v5626, 126
        %v5667 = vpop.permute.xlu0 %5666
        %5668 = vrot.lane.b32.xlu0 %v5627, 126
        %v5669 = vpop.permute.xlu0 %5668
        %5670 = vrot.lane.b32.xlu0 %v5628, 126
        %v5671 = vpop.permute.xlu0 %5670
        %5672 = vrot.lane.b32.xlu0 %v5629, 126
        %v5673 = vpop.permute.xlu0 %5672
        %5674 = vrot.lane.b32.xlu0 %v5630, 126
        %v5675 = vpop.permute.xlu0 %5674
        %5676 = vrot.lane.b32.xlu0 %v5631, 126
        %v5677 = vpop.permute.xlu0 %5676
        %5678 = vrot.lane.b32.xlu0 %v5632, 126
        %v5679 = vpop.permute.xlu0 %5678
        %5680 = vrot.lane.b32.xlu0 %v5633, 126
        %v5681 = vpop.permute.xlu0 %5680
        %v5698 = vadd.f32 %v5570, %v5651
        %v5699 = vadd.f32 %v5571, %v5653
        %v5700 = vadd.f32 %v5572, %v5655
        %v5701 = vadd.f32 %v5573, %v5657
        %v5702 = vadd.f32 %v5574, %v5659
        %v5703 = vadd.f32 %v5575, %v5661
        %v5704 = vadd.f32 %v5576, %v5663
        %v5705 = vadd.f32 %v5577, %v5665
        %v5706 = vadd.f32 %v5578, %v5667
        %v5707 = vadd.f32 %v5579, %v5669
        %v5708 = vadd.f32 %v5580, %v5671
        %v5709 = vadd.f32 %v5581, %v5673
        %v5710 = vadd.f32 %v5582, %v5675
        %v5711 = vadd.f32 %v5583, %v5677
        %v5712 = vadd.f32 %v5584, %v5679
        %v5713 = vadd.f32 %v5585, %v5681
        %5714 = vset.pattern.permute.xlu0 3
        %5715 = vperm.xlu0 %5714, %v5381
        %v5716 = vpop.permute.xlu0 %5715
        %5718 = vset.pattern.permute.xlu0 3
        %5719 = vperm.xlu0 %5718, %v5385
        %v5720 = vpop.permute.xlu0 %5719
        %5722 = vset.pattern.permute.xlu0 3
        %5723 = vperm.xlu0 %5722, %v5389
        %v5724 = vpop.permute.xlu0 %5723
        %5726 = vset.pattern.permute.xlu0 3
        %5727 = vperm.xlu0 %5726, %v5393
        %v5728 = vpop.permute.xlu0 %5727
        %5730 = vset.pattern.permute.xlu0 3
        %5731 = vperm.xlu0 %5730, %v5397
        %v5732 = vpop.permute.xlu0 %5731
        %5734 = vset.pattern.permute.xlu0 3
        %5735 = vperm.xlu0 %5734, %v5401
        %v5736 = vpop.permute.xlu0 %5735
        %5738 = vset.pattern.permute.xlu0 3
        %5739 = vperm.xlu0 %5738, %v5405
        %v5740 = vpop.permute.xlu0 %5739
        %5742 = vset.pattern.permute.xlu0 3
        %5743 = vperm.xlu0 %5742, %v5409
        %v5744 = vpop.permute.xlu0 %5743
        %v5746 = vmul.f32 %v5346, %v5716
        %v5747 = vmul.f32 %v5347, %v5716
        %v5748 = vmul.f32 %v5348, %v5716
        %v5749 = vmul.f32 %v5349, %v5720
        %v5750 = vmul.f32 %v5350, %v5720
        %v5751 = vmul.f32 %v5351, %v5720
        %v5752 = vmul.f32 %v5352, %v5724
        %v5753 = vmul.f32 %v5353, %v5724
        %v5754 = vmul.f32 %v5354, %v5724
        %v5755 = vmul.f32 %v5355, %v5728
        %v5756 = vmul.f32 %v5356, %v5728
        %v5757 = vmul.f32 %v5357, %v5728
        %v5758 = vmul.f32 %v5358, %v5732
        %v5759 = vmul.f32 %v5359, %v5732
        %v5760 = vmul.f32 %v5360, %v5732
        %v5761 = vmul.f32 %v5361, %v5736
        %v5762 = vmul.f32 %v5362, %v5736
        %v5763 = vmul.f32 %v5363, %v5736
        %v5764 = vmul.f32 %v5364, %v5740
        %v5765 = vmul.f32 %v5365, %v5740
        %v5766 = vmul.f32 %v5366, %v5740
        %v5767 = vmul.f32 %v5367, %v5744
        %v5768 = vmul.f32 %v5368, %v5744
        %v5769 = vmul.f32 %v5369, %v5744
        %vm5794 = vcmask 1046528
        %v5795 = vrot.slane %v5746, 1
        %v5796 = vrot.slane %v5747, 1
        %v5797 = vsel %vm5794, %v5795, %v5796
        %v5798 = vrot.slane %v5748, 1
        %v5799 = vsel %vm5794, %v5796, %v5798
        %v5800 = vrot.slane %v5749, 1
        %v5801 = vrot.slane %v5750, 1
        %v5802 = vsel %vm5794, %v5800, %v5801
        %v5803 = vrot.slane %v5751, 1
        %v5804 = vsel %vm5794, %v5801, %v5803
        %v5805 = vrot.slane %v5752, 1
        %v5806 = vrot.slane %v5753, 1
        %v5807 = vsel %vm5794, %v5805, %v5806
        %v5808 = vrot.slane %v5754, 1
        %v5809 = vsel %vm5794, %v5806, %v5808
        %v5810 = vrot.slane %v5755, 1
        %v5811 = vrot.slane %v5756, 1
        %v5812 = vsel %vm5794, %v5810, %v5811
        %v5813 = vrot.slane %v5757, 1
        %v5814 = vsel %vm5794, %v5811, %v5813
        %v5815 = vrot.slane %v5758, 1
        %v5816 = vrot.slane %v5759, 1
        %v5817 = vsel %vm5794, %v5815, %v5816
        %v5818 = vrot.slane %v5760, 1
        %v5819 = vsel %vm5794, %v5816, %v5818
        %v5820 = vrot.slane %v5761, 1
        %v5821 = vrot.slane %v5762, 1
        %v5822 = vsel %vm5794, %v5820, %v5821
        %v5823 = vrot.slane %v5763, 1
        %v5824 = vsel %vm5794, %v5821, %v5823
        %v5825 = vrot.slane %v5764, 1
        %v5826 = vrot.slane %v5765, 1
        %v5827 = vsel %vm5794, %v5825, %v5826
        %v5828 = vrot.slane %v5766, 1
        %v5829 = vsel %vm5794, %v5826, %v5828
        %v5830 = vrot.slane %v5767, 1
        %v5831 = vrot.slane %v5768, 1
        %v5832 = vsel %vm5794, %v5830, %v5831
        %v5833 = vrot.slane %v5769, 1
        %v5834 = vsel %vm5794, %v5831, %v5833
        %v5851 = vadd.f32 %v5698, %v5797
        %v5852 = vadd.f32 %v5699, %v5799
        %v5853 = vadd.f32 %v5700, %v5802
        %v5854 = vadd.f32 %v5701, %v5804
        %v5855 = vadd.f32 %v5702, %v5807
        %v5856 = vadd.f32 %v5703, %v5809
        %v5857 = vadd.f32 %v5704, %v5812
        %v5858 = vadd.f32 %v5705, %v5814
        %v5859 = vadd.f32 %v5706, %v5817
        %v5860 = vadd.f32 %v5707, %v5819
        %v5861 = vadd.f32 %v5708, %v5822
        %v5862 = vadd.f32 %v5709, %v5824
        %v5863 = vadd.f32 %v5710, %v5827
        %v5864 = vadd.f32 %v5711, %v5829
        %v5865 = vadd.f32 %v5712, %v5832
        %v5866 = vadd.f32 %v5713, %v5834
        %5867 = vset.pattern.permute.xlu0 4
        %5868 = vperm.xlu0 %5867, %v5381
        %v5869 = vpop.permute.xlu0 %5868
        %5871 = vset.pattern.permute.xlu0 4
        %5872 = vperm.xlu0 %5871, %v5385
        %v5873 = vpop.permute.xlu0 %5872
        %5875 = vset.pattern.permute.xlu0 4
        %5876 = vperm.xlu0 %5875, %v5389
        %v5877 = vpop.permute.xlu0 %5876
        %5879 = vset.pattern.permute.xlu0 4
        %5880 = vperm.xlu0 %5879, %v5393
        %v5881 = vpop.permute.xlu0 %5880
        %5883 = vset.pattern.permute.xlu0 4
        %5884 = vperm.xlu0 %5883, %v5397
        %v5885 = vpop.permute.xlu0 %5884
        %5887 = vset.pattern.permute.xlu0 4
        %5888 = vperm.xlu0 %5887, %v5401
        %v5889 = vpop.permute.xlu0 %5888
        %5891 = vset.pattern.permute.xlu0 4
        %5892 = vperm.xlu0 %5891, %v5405
        %v5893 = vpop.permute.xlu0 %5892
        %5895 = vset.pattern.permute.xlu0 4
        %5896 = vperm.xlu0 %5895, %v5409
        %v5897 = vpop.permute.xlu0 %5896
        %v5899 = vmul.f32 %v5346, %v5869
        %v5900 = vmul.f32 %v5347, %v5869
        %v5901 = vmul.f32 %v5348, %v5869
        %v5902 = vmul.f32 %v5349, %v5873
        %v5903 = vmul.f32 %v5350, %v5873
        %v5904 = vmul.f32 %v5351, %v5873
        %v5905 = vmul.f32 %v5352, %v5877
        %v5906 = vmul.f32 %v5353, %v5877
        %v5907 = vmul.f32 %v5354, %v5877
        %v5908 = vmul.f32 %v5355, %v5881
        %v5909 = vmul.f32 %v5356, %v5881
        %v5910 = vmul.f32 %v5357, %v5881
        %v5911 = vmul.f32 %v5358, %v5885
        %v5912 = vmul.f32 %v5359, %v5885
        %v5913 = vmul.f32 %v5360, %v5885
        %v5914 = vmul.f32 %v5361, %v5889
        %v5915 = vmul.f32 %v5362, %v5889
        %v5916 = vmul.f32 %v5363, %v5889
        %v5917 = vmul.f32 %v5364, %v5893
        %v5918 = vmul.f32 %v5365, %v5893
        %v5919 = vmul.f32 %v5366, %v5893
        %v5920 = vmul.f32 %v5367, %v5897
        %v5921 = vmul.f32 %v5368, %v5897
        %v5922 = vmul.f32 %v5369, %v5897
        %v5947 = vrot.slane %v5899, 1
        %v5948 = vrot.slane %v5900, 1
        %v5949 = vsel %vm5794, %v5947, %v5948
        %v5950 = vrot.slane %v5901, 1
        %v5951 = vsel %vm5794, %v5948, %v5950
        %v5952 = vrot.slane %v5902, 1
        %v5953 = vrot.slane %v5903, 1
        %v5954 = vsel %vm5794, %v5952, %v5953
        %v5955 = vrot.slane %v5904, 1
        %v5956 = vsel %vm5794, %v5953, %v5955
        %v5957 = vrot.slane %v5905, 1
        %v5958 = vrot.slane %v5906, 1
        %v5959 = vsel %vm5794, %v5957, %v5958
        %v5960 = vrot.slane %v5907, 1
        %v5961 = vsel %vm5794, %v5958, %v5960
        %v5962 = vrot.slane %v5908, 1
        %v5963 = vrot.slane %v5909, 1
        %v5964 = vsel %vm5794, %v5962, %v5963
        %v5965 = vrot.slane %v5910, 1
        %v5966 = vsel %vm5794, %v5963, %v5965
        %v5967 = vrot.slane %v5911, 1
        %v5968 = vrot.slane %v5912, 1
        %v5969 = vsel %vm5794, %v5967, %v5968
        %v5970 = vrot.slane %v5913, 1
        %v5971 = vsel %vm5794, %v5968, %v5970
        %v5972 = vrot.slane %v5914, 1
        %v5973 = vrot.slane %v5915, 1
        %v5974 = vsel %vm5794, %v5972, %v5973
        %v5975 = vrot.slane %v5916, 1
        %v5976 = vsel %vm5794, %v5973, %v5975
        %v5977 = vrot.slane %v5917, 1
        %v5978 = vrot.slane %v5918, 1
        %v5979 = vsel %vm5794, %v5977, %v5978
        %v5980 = vrot.slane %v5919, 1
        %v5981 = vsel %vm5794, %v5978, %v5980
        %v5982 = vrot.slane %v5920, 1
        %v5983 = vrot.slane %v5921, 1
        %v5984 = vsel %vm5794, %v5982, %v5983
        %v5985 = vrot.slane %v5922, 1
        %v5986 = vsel %vm5794, %v5983, %v5985
        %5987 = vrot.lane.b32.xlu0 %v5949, 127
        %v5988 = vpop.permute.xlu0 %5987
        %5989 = vrot.lane.b32.xlu0 %v5951, 127
        %v5990 = vpop.permute.xlu0 %5989
        %5991 = vrot.lane.b32.xlu0 %v5954, 127
        %v5992 = vpop.permute.xlu0 %5991
        %5993 = vrot.lane.b32.xlu0 %v5956, 127
        %v5994 = vpop.permute.xlu0 %5993
        %5995 = vrot.lane.b32.xlu0 %v5959, 127
        %v5996 = vpop.permute.xlu0 %5995
        %5997 = vrot.lane.b32.xlu0 %v5961, 127
        %v5998 = vpop.permute.xlu0 %5997
        %5999 = vrot.lane.b32.xlu0 %v5964, 127
        %v6000 = vpop.permute.xlu0 %5999
        %6001 = vrot.lane.b32.xlu0 %v5966, 127
        %v6002 = vpop.permute.xlu0 %6001
        %6003 = vrot.lane.b32.xlu0 %v5969, 127
        %v6004 = vpop.permute.xlu0 %6003
        %6005 = vrot.lane.b32.xlu0 %v5971, 127
        %v6006 = vpop.permute.xlu0 %6005
        %6007 = vrot.lane.b32.xlu0 %v5974, 127
        %v6008 = vpop.permute.xlu0 %6007
        %6009 = vrot.lane.b32.xlu0 %v5976, 127
        %v6010 = vpop.permute.xlu0 %6009
        %6011 = vrot.lane.b32.xlu0 %v5979, 127
        %v6012 = vpop.permute.xlu0 %6011
        %6013 = vrot.lane.b32.xlu0 %v5981, 127
        %v6014 = vpop.permute.xlu0 %6013
        %6015 = vrot.lane.b32.xlu0 %v5984, 127
        %v6016 = vpop.permute.xlu0 %6015
        %6017 = vrot.lane.b32.xlu0 %v5986, 127
        %v6018 = vpop.permute.xlu0 %6017
        %v6035 = vadd.f32 %v5851, %v5988
        %v6036 = vadd.f32 %v5852, %v5990
        %v6037 = vadd.f32 %v5853, %v5992
        %v6038 = vadd.f32 %v5854, %v5994
        %v6039 = vadd.f32 %v5855, %v5996
        %v6040 = vadd.f32 %v5856, %v5998
        %v6041 = vadd.f32 %v5857, %v6000
        %v6042 = vadd.f32 %v5858, %v6002
        %v6043 = vadd.f32 %v5859, %v6004
        %v6044 = vadd.f32 %v5860, %v6006
        %v6045 = vadd.f32 %v5861, %v6008
        %v6046 = vadd.f32 %v5862, %v6010
        %v6047 = vadd.f32 %v5863, %v6012
        %v6048 = vadd.f32 %v5864, %v6014
        %v6049 = vadd.f32 %v5865, %v6016
        %v6050 = vadd.f32 %v5866, %v6018
        %6051 = vset.pattern.permute.xlu0 5
        %6052 = vperm.xlu0 %6051, %v5381
        %v6053 = vpop.permute.xlu0 %6052
        %6055 = vset.pattern.permute.xlu0 5
        %6056 = vperm.xlu0 %6055, %v5385
        %v6057 = vpop.permute.xlu0 %6056
        %6059 = vset.pattern.permute.xlu0 5
        %6060 = vperm.xlu0 %6059, %v5389
        %v6061 = vpop.permute.xlu0 %6060
        %6063 = vset.pattern.permute.xlu0 5
        %6064 = vperm.xlu0 %6063, %v5393
        %v6065 = vpop.permute.xlu0 %6064
        %6067 = vset.pattern.permute.xlu0 5
        %6068 = vperm.xlu0 %6067, %v5397
        %v6069 = vpop.permute.xlu0 %6068
        %6071 = vset.pattern.permute.xlu0 5
        %6072 = vperm.xlu0 %6071, %v5401
        %v6073 = vpop.permute.xlu0 %6072
        %6075 = vset.pattern.permute.xlu0 5
        %6076 = vperm.xlu0 %6075, %v5405
        %v6077 = vpop.permute.xlu0 %6076
        %6079 = vset.pattern.permute.xlu0 5
        %6080 = vperm.xlu0 %6079, %v5409
        %v6081 = vpop.permute.xlu0 %6080
        %v6083 = vmul.f32 %v5346, %v6053
        %v6084 = vmul.f32 %v5347, %v6053
        %v6085 = vmul.f32 %v5348, %v6053
        %v6086 = vmul.f32 %v5349, %v6057
        %v6087 = vmul.f32 %v5350, %v6057
        %v6088 = vmul.f32 %v5351, %v6057
        %v6089 = vmul.f32 %v5352, %v6061
        %v6090 = vmul.f32 %v5353, %v6061
        %v6091 = vmul.f32 %v5354, %v6061
        %v6092 = vmul.f32 %v5355, %v6065
        %v6093 = vmul.f32 %v5356, %v6065
        %v6094 = vmul.f32 %v5357, %v6065
        %v6095 = vmul.f32 %v5358, %v6069
        %v6096 = vmul.f32 %v5359, %v6069
        %v6097 = vmul.f32 %v5360, %v6069
        %v6098 = vmul.f32 %v5361, %v6073
        %v6099 = vmul.f32 %v5362, %v6073
        %v6100 = vmul.f32 %v5363, %v6073
        %v6101 = vmul.f32 %v5364, %v6077
        %v6102 = vmul.f32 %v5365, %v6077
        %v6103 = vmul.f32 %v5366, %v6077
        %v6104 = vmul.f32 %v5367, %v6081
        %v6105 = vmul.f32 %v5368, %v6081
        %v6106 = vmul.f32 %v5369, %v6081
        %v6131 = vrot.slane %v6083, 1
        %v6132 = vrot.slane %v6084, 1
        %v6133 = vsel %vm5794, %v6131, %v6132
        %v6134 = vrot.slane %v6085, 1
        %v6135 = vsel %vm5794, %v6132, %v6134
        %v6136 = vrot.slane %v6086, 1
        %v6137 = vrot.slane %v6087, 1
        %v6138 = vsel %vm5794, %v6136, %v6137
        %v6139 = vrot.slane %v6088, 1
        %v6140 = vsel %vm5794, %v6137, %v6139
        %v6141 = vrot.slane %v6089, 1
        %v6142 = vrot.slane %v6090, 1
        %v6143 = vsel %vm5794, %v6141, %v6142
        %v6144 = vrot.slane %v6091, 1
        %v6145 = vsel %vm5794, %v6142, %v6144
        %v6146 = vrot.slane %v6092, 1
        %v6147 = vrot.slane %v6093, 1
        %v6148 = vsel %vm5794, %v6146, %v6147
        %v6149 = vrot.slane %v6094, 1
        %v6150 = vsel %vm5794, %v6147, %v6149
        %v6151 = vrot.slane %v6095, 1
        %v6152 = vrot.slane %v6096, 1
        %v6153 = vsel %vm5794, %v6151, %v6152
        %v6154 = vrot.slane %v6097, 1
        %v6155 = vsel %vm5794, %v6152, %v6154
        %v6156 = vrot.slane %v6098, 1
        %v6157 = vrot.slane %v6099, 1
        %v6158 = vsel %vm5794, %v6156, %v6157
        %v6159 = vrot.slane %v6100, 1
        %v6160 = vsel %vm5794, %v6157, %v6159
        %v6161 = vrot.slane %v6101, 1
        %v6162 = vrot.slane %v6102, 1
        %v6163 = vsel %vm5794, %v6161, %v6162
        %v6164 = vrot.slane %v6103, 1
        %v6165 = vsel %vm5794, %v6162, %v6164
        %v6166 = vrot.slane %v6104, 1
        %v6167 = vrot.slane %v6105, 1
        %v6168 = vsel %vm5794, %v6166, %v6167
        %v6169 = vrot.slane %v6106, 1
        %v6170 = vsel %vm5794, %v6167, %v6169
        %6171 = vrot.lane.b32.xlu0 %v6133, 126
        %v6172 = vpop.permute.xlu0 %6171
        %6173 = vrot.lane.b32.xlu0 %v6135, 126
        %v6174 = vpop.permute.xlu0 %6173
        %6175 = vrot.lane.b32.xlu0 %v6138, 126
        %v6176 = vpop.permute.xlu0 %6175
        %6177 = vrot.lane.b32.xlu0 %v6140, 126
        %v6178 = vpop.permute.xlu0 %6177
        %6179 = vrot.lane.b32.xlu0 %v6143, 126
        %v6180 = vpop.permute.xlu0 %6179
        %6181 = vrot.lane.b32.xlu0 %v6145, 126
        %v6182 = vpop.permute.xlu0 %6181
        %6183 = vrot.lane.b32.xlu0 %v6148, 126
        %v6184 = vpop.permute.xlu0 %6183
        %6185 = vrot.lane.b32.xlu0 %v6150, 126
        %v6186 = vpop.permute.xlu0 %6185
        %6187 = vrot.lane.b32.xlu0 %v6153, 126
        %v6188 = vpop.permute.xlu0 %6187
        %6189 = vrot.lane.b32.xlu0 %v6155, 126
        %v6190 = vpop.permute.xlu0 %6189
        %6191 = vrot.lane.b32.xlu0 %v6158, 126
        %v6192 = vpop.permute.xlu0 %6191
        %6193 = vrot.lane.b32.xlu0 %v6160, 126
        %v6194 = vpop.permute.xlu0 %6193
        %6195 = vrot.lane.b32.xlu0 %v6163, 126
        %v6196 = vpop.permute.xlu0 %6195
        %6197 = vrot.lane.b32.xlu0 %v6165, 126
        %v6198 = vpop.permute.xlu0 %6197
        %6199 = vrot.lane.b32.xlu0 %v6168, 126
        %v6200 = vpop.permute.xlu0 %6199
        %6201 = vrot.lane.b32.xlu0 %v6170, 126
        %v6202 = vpop.permute.xlu0 %6201
        %v6219 = vadd.f32 %v6035, %v6172
        %v6220 = vadd.f32 %v6036, %v6174
        %v6221 = vadd.f32 %v6037, %v6176
        %v6222 = vadd.f32 %v6038, %v6178
        %v6223 = vadd.f32 %v6039, %v6180
        %v6224 = vadd.f32 %v6040, %v6182
        %v6225 = vadd.f32 %v6041, %v6184
        %v6226 = vadd.f32 %v6042, %v6186
        %v6227 = vadd.f32 %v6043, %v6188
        %v6228 = vadd.f32 %v6044, %v6190
        %v6229 = vadd.f32 %v6045, %v6192
        %v6230 = vadd.f32 %v6046, %v6194
        %v6231 = vadd.f32 %v6047, %v6196
        %v6232 = vadd.f32 %v6048, %v6198
        %v6233 = vadd.f32 %v6049, %v6200
        %v6234 = vadd.f32 %v6050, %v6202
        %6235 = vset.pattern.permute.xlu0 6
        %6236 = vperm.xlu0 %6235, %v5381
        %v6237 = vpop.permute.xlu0 %6236
        %6239 = vset.pattern.permute.xlu0 6
        %6240 = vperm.xlu0 %6239, %v5385
        %v6241 = vpop.permute.xlu0 %6240
        %6243 = vset.pattern.permute.xlu0 6
        %6244 = vperm.xlu0 %6243, %v5389
        %v6245 = vpop.permute.xlu0 %6244
        %6247 = vset.pattern.permute.xlu0 6
        %6248 = vperm.xlu0 %6247, %v5393
        %v6249 = vpop.permute.xlu0 %6248
        %6251 = vset.pattern.permute.xlu0 6
        %6252 = vperm.xlu0 %6251, %v5397
        %v6253 = vpop.permute.xlu0 %6252
        %6255 = vset.pattern.permute.xlu0 6
        %6256 = vperm.xlu0 %6255, %v5401
        %v6257 = vpop.permute.xlu0 %6256
        %6259 = vset.pattern.permute.xlu0 6
        %6260 = vperm.xlu0 %6259, %v5405
        %v6261 = vpop.permute.xlu0 %6260
        %6263 = vset.pattern.permute.xlu0 6
        %6264 = vperm.xlu0 %6263, %v5409
        %v6265 = vpop.permute.xlu0 %6264
        %v6267 = vmul.f32 %v5346, %v6237
        %v6268 = vmul.f32 %v5347, %v6237
        %v6269 = vmul.f32 %v5348, %v6237
        %v6270 = vmul.f32 %v5349, %v6241
        %v6271 = vmul.f32 %v5350, %v6241
        %v6272 = vmul.f32 %v5351, %v6241
        %v6273 = vmul.f32 %v5352, %v6245
        %v6274 = vmul.f32 %v5353, %v6245
        %v6275 = vmul.f32 %v5354, %v6245
        %v6276 = vmul.f32 %v5355, %v6249
        %v6277 = vmul.f32 %v5356, %v6249
        %v6278 = vmul.f32 %v5357, %v6249
        %v6279 = vmul.f32 %v5358, %v6253
        %v6280 = vmul.f32 %v5359, %v6253
        %v6281 = vmul.f32 %v5360, %v6253
        %v6282 = vmul.f32 %v5361, %v6257
        %v6283 = vmul.f32 %v5362, %v6257
        %v6284 = vmul.f32 %v5363, %v6257
        %v6285 = vmul.f32 %v5364, %v6261
        %v6286 = vmul.f32 %v5365, %v6261
        %v6287 = vmul.f32 %v5366, %v6261
        %v6288 = vmul.f32 %v5367, %v6265
        %v6289 = vmul.f32 %v5368, %v6265
        %v6290 = vmul.f32 %v5369, %v6265
        %vm6315 = vcmask 1045504
        %v6316 = vrot.slane %v6267, 2
        %v6317 = vrot.slane %v6268, 2
        %v6318 = vsel %vm6315, %v6316, %v6317
        %v6319 = vrot.slane %v6269, 2
        %v6320 = vsel %vm6315, %v6317, %v6319
        %v6321 = vrot.slane %v6270, 2
        %v6322 = vrot.slane %v6271, 2
        %v6323 = vsel %vm6315, %v6321, %v6322
        %v6324 = vrot.slane %v6272, 2
        %v6325 = vsel %vm6315, %v6322, %v6324
        %v6326 = vrot.slane %v6273, 2
        %v6327 = vrot.slane %v6274, 2
        %v6328 = vsel %vm6315, %v6326, %v6327
        %v6329 = vrot.slane %v6275, 2
        %v6330 = vsel %vm6315, %v6327, %v6329
        %v6331 = vrot.slane %v6276, 2
        %v6332 = vrot.slane %v6277, 2
        %v6333 = vsel %vm6315, %v6331, %v6332
        %v6334 = vrot.slane %v6278, 2
        %v6335 = vsel %vm6315, %v6332, %v6334
        %v6336 = vrot.slane %v6279, 2
        %v6337 = vrot.slane %v6280, 2
        %v6338 = vsel %vm6315, %v6336, %v6337
        %v6339 = vrot.slane %v6281, 2
        %v6340 = vsel %vm6315, %v6337, %v6339
        %v6341 = vrot.slane %v6282, 2
        %v6342 = vrot.slane %v6283, 2
        %v6343 = vsel %vm6315, %v6341, %v6342
        %v6344 = vrot.slane %v6284, 2
        %v6345 = vsel %vm6315, %v6342, %v6344
        %v6346 = vrot.slane %v6285, 2
        %v6347 = vrot.slane %v6286, 2
        %v6348 = vsel %vm6315, %v6346, %v6347
        %v6349 = vrot.slane %v6287, 2
        %v6350 = vsel %vm6315, %v6347, %v6349
        %v6351 = vrot.slane %v6288, 2
        %v6352 = vrot.slane %v6289, 2
        %v6353 = vsel %vm6315, %v6351, %v6352
        %v6354 = vrot.slane %v6290, 2
        %v6355 = vsel %vm6315, %v6352, %v6354
        %v6372 = vadd.f32 %v6219, %v6318
        %v6373 = vadd.f32 %v6220, %v6320
        %v6374 = vadd.f32 %v6221, %v6323
        %v6375 = vadd.f32 %v6222, %v6325
        %v6376 = vadd.f32 %v6223, %v6328
        %v6377 = vadd.f32 %v6224, %v6330
        %v6378 = vadd.f32 %v6225, %v6333
        %v6379 = vadd.f32 %v6226, %v6335
        %v6380 = vadd.f32 %v6227, %v6338
        %v6381 = vadd.f32 %v6228, %v6340
        %v6382 = vadd.f32 %v6229, %v6343
        %v6383 = vadd.f32 %v6230, %v6345
        %v6384 = vadd.f32 %v6231, %v6348
        %v6385 = vadd.f32 %v6232, %v6350
        %v6386 = vadd.f32 %v6233, %v6353
        %v6387 = vadd.f32 %v6234, %v6355
        %6388 = vset.pattern.permute.xlu0 7
        %6389 = vperm.xlu0 %6388, %v5381
        %v6390 = vpop.permute.xlu0 %6389
        %6392 = vset.pattern.permute.xlu0 7
        %6393 = vperm.xlu0 %6392, %v5385
        %v6394 = vpop.permute.xlu0 %6393
        %6396 = vset.pattern.permute.xlu0 7
        %6397 = vperm.xlu0 %6396, %v5389
        %v6398 = vpop.permute.xlu0 %6397
        %6400 = vset.pattern.permute.xlu0 7
        %6401 = vperm.xlu0 %6400, %v5393
        %v6402 = vpop.permute.xlu0 %6401
        %6404 = vset.pattern.permute.xlu0 7
        %6405 = vperm.xlu0 %6404, %v5397
        %v6406 = vpop.permute.xlu0 %6405
        %6408 = vset.pattern.permute.xlu0 7
        %6409 = vperm.xlu0 %6408, %v5401
        %v6410 = vpop.permute.xlu0 %6409
        %6412 = vset.pattern.permute.xlu0 7
        %6413 = vperm.xlu0 %6412, %v5405
        %v6414 = vpop.permute.xlu0 %6413
        %6416 = vset.pattern.permute.xlu0 7
        %6417 = vperm.xlu0 %6416, %v5409
        %v6418 = vpop.permute.xlu0 %6417
        %v6420 = vmul.f32 %v5346, %v6390
        %v6421 = vmul.f32 %v5347, %v6390
        %v6422 = vmul.f32 %v5348, %v6390
        %v6423 = vmul.f32 %v5349, %v6394
        %v6424 = vmul.f32 %v5350, %v6394
        %v6425 = vmul.f32 %v5351, %v6394
        %v6426 = vmul.f32 %v5352, %v6398
        %v6427 = vmul.f32 %v5353, %v6398
        %v6428 = vmul.f32 %v5354, %v6398
        %v6429 = vmul.f32 %v5355, %v6402
        %v6430 = vmul.f32 %v5356, %v6402
        %v6431 = vmul.f32 %v5357, %v6402
        %v6432 = vmul.f32 %v5358, %v6406
        %v6433 = vmul.f32 %v5359, %v6406
        %v6434 = vmul.f32 %v5360, %v6406
        %v6435 = vmul.f32 %v5361, %v6410
        %v6436 = vmul.f32 %v5362, %v6410
        %v6437 = vmul.f32 %v5363, %v6410
        %v6438 = vmul.f32 %v5364, %v6414
        %v6439 = vmul.f32 %v5365, %v6414
        %v6440 = vmul.f32 %v5366, %v6414
        %v6441 = vmul.f32 %v5367, %v6418
        %v6442 = vmul.f32 %v5368, %v6418
        %v6443 = vmul.f32 %v5369, %v6418
        %v6468 = vrot.slane %v6420, 2
        %v6469 = vrot.slane %v6421, 2
        %v6470 = vsel %vm6315, %v6468, %v6469
        %v6471 = vrot.slane %v6422, 2
        %v6472 = vsel %vm6315, %v6469, %v6471
        %v6473 = vrot.slane %v6423, 2
        %v6474 = vrot.slane %v6424, 2
        %v6475 = vsel %vm6315, %v6473, %v6474
        %v6476 = vrot.slane %v6425, 2
        %v6477 = vsel %vm6315, %v6474, %v6476
        %v6478 = vrot.slane %v6426, 2
        %v6479 = vrot.slane %v6427, 2
        %v6480 = vsel %vm6315, %v6478, %v6479
        %v6481 = vrot.slane %v6428, 2
        %v6482 = vsel %vm6315, %v6479, %v6481
        %v6483 = vrot.slane %v6429, 2
        %v6484 = vrot.slane %v6430, 2
        %v6485 = vsel %vm6315, %v6483, %v6484
        %v6486 = vrot.slane %v6431, 2
        %v6487 = vsel %vm6315, %v6484, %v6486
        %v6488 = vrot.slane %v6432, 2
        %v6489 = vrot.slane %v6433, 2
        %v6490 = vsel %vm6315, %v6488, %v6489
        %v6491 = vrot.slane %v6434, 2
        %v6492 = vsel %vm6315, %v6489, %v6491
        %v6493 = vrot.slane %v6435, 2
        %v6494 = vrot.slane %v6436, 2
        %v6495 = vsel %vm6315, %v6493, %v6494
        %v6496 = vrot.slane %v6437, 2
        %v6497 = vsel %vm6315, %v6494, %v6496
        %v6498 = vrot.slane %v6438, 2
        %v6499 = vrot.slane %v6439, 2
        %v6500 = vsel %vm6315, %v6498, %v6499
        %v6501 = vrot.slane %v6440, 2
        %v6502 = vsel %vm6315, %v6499, %v6501
        %v6503 = vrot.slane %v6441, 2
        %v6504 = vrot.slane %v6442, 2
        %v6505 = vsel %vm6315, %v6503, %v6504
        %v6506 = vrot.slane %v6443, 2
        %v6507 = vsel %vm6315, %v6504, %v6506
        %6508 = vrot.lane.b32.xlu0 %v6470, 127
        %v6509 = vpop.permute.xlu0 %6508
        %6510 = vrot.lane.b32.xlu0 %v6472, 127
        %v6511 = vpop.permute.xlu0 %6510
        %6512 = vrot.lane.b32.xlu0 %v6475, 127
        %v6513 = vpop.permute.xlu0 %6512
        %6514 = vrot.lane.b32.xlu0 %v6477, 127
        %v6515 = vpop.permute.xlu0 %6514
        %6516 = vrot.lane.b32.xlu0 %v6480, 127
        %v6517 = vpop.permute.xlu0 %6516
        %6518 = vrot.lane.b32.xlu0 %v6482, 127
        %v6519 = vpop.permute.xlu0 %6518
        %6520 = vrot.lane.b32.xlu0 %v6485, 127
        %v6521 = vpop.permute.xlu0 %6520
        %6522 = vrot.lane.b32.xlu0 %v6487, 127
        %v6523 = vpop.permute.xlu0 %6522
        %6524 = vrot.lane.b32.xlu0 %v6490, 127
        %v6525 = vpop.permute.xlu0 %6524
        %6526 = vrot.lane.b32.xlu0 %v6492, 127
        %v6527 = vpop.permute.xlu0 %6526
        %6528 = vrot.lane.b32.xlu0 %v6495, 127
        %v6529 = vpop.permute.xlu0 %6528
        %6530 = vrot.lane.b32.xlu0 %v6497, 127
        %v6531 = vpop.permute.xlu0 %6530
        %6532 = vrot.lane.b32.xlu0 %v6500, 127
        %v6533 = vpop.permute.xlu0 %6532
        %6534 = vrot.lane.b32.xlu0 %v6502, 127
        %v6535 = vpop.permute.xlu0 %6534
        %6536 = vrot.lane.b32.xlu0 %v6505, 127
        %v6537 = vpop.permute.xlu0 %6536
        %6538 = vrot.lane.b32.xlu0 %v6507, 127
        %v6539 = vpop.permute.xlu0 %6538
        %v6556 = vadd.f32 %v6372, %v6509
        %v6557 = vadd.f32 %v6373, %v6511
        %v6558 = vadd.f32 %v6374, %v6513
        %v6559 = vadd.f32 %v6375, %v6515
        %v6560 = vadd.f32 %v6376, %v6517
        %v6561 = vadd.f32 %v6377, %v6519
        %v6562 = vadd.f32 %v6378, %v6521
        %v6563 = vadd.f32 %v6379, %v6523
        %v6564 = vadd.f32 %v6380, %v6525
        %v6565 = vadd.f32 %v6381, %v6527
        %v6566 = vadd.f32 %v6382, %v6529
        %v6567 = vadd.f32 %v6383, %v6531
        %v6568 = vadd.f32 %v6384, %v6533
        %v6569 = vadd.f32 %v6385, %v6535
        %v6570 = vadd.f32 %v6386, %v6537
        %v6571 = vadd.f32 %v6387, %v6539
        %6572 = vset.pattern.permute.xlu0 8
        %6573 = vperm.xlu0 %6572, %v5381
        %v6574 = vpop.permute.xlu0 %6573
        %6576 = vset.pattern.permute.xlu0 8
        %6577 = vperm.xlu0 %6576, %v5385
        %v6578 = vpop.permute.xlu0 %6577
        %6580 = vset.pattern.permute.xlu0 8
        %6581 = vperm.xlu0 %6580, %v5389
        %v6582 = vpop.permute.xlu0 %6581
        %6584 = vset.pattern.permute.xlu0 8
        %6585 = vperm.xlu0 %6584, %v5393
        %v6586 = vpop.permute.xlu0 %6585
        %6588 = vset.pattern.permute.xlu0 8
        %6589 = vperm.xlu0 %6588, %v5397
        %v6590 = vpop.permute.xlu0 %6589
        %6592 = vset.pattern.permute.xlu0 8
        %6593 = vperm.xlu0 %6592, %v5401
        %v6594 = vpop.permute.xlu0 %6593
        %6596 = vset.pattern.permute.xlu0 8
        %6597 = vperm.xlu0 %6596, %v5405
        %v6598 = vpop.permute.xlu0 %6597
        %6600 = vset.pattern.permute.xlu0 8
        %6601 = vperm.xlu0 %6600, %v5409
        %v6602 = vpop.permute.xlu0 %6601
        %v6604 = vmul.f32 %v5346, %v6574
        %v6605 = vmul.f32 %v5347, %v6574
        %v6606 = vmul.f32 %v5348, %v6574
        %v6607 = vmul.f32 %v5349, %v6578
        %v6608 = vmul.f32 %v5350, %v6578
        %v6609 = vmul.f32 %v5351, %v6578
        %v6610 = vmul.f32 %v5352, %v6582
        %v6611 = vmul.f32 %v5353, %v6582
        %v6612 = vmul.f32 %v5354, %v6582
        %v6613 = vmul.f32 %v5355, %v6586
        %v6614 = vmul.f32 %v5356, %v6586
        %v6615 = vmul.f32 %v5357, %v6586
        %v6616 = vmul.f32 %v5358, %v6590
        %v6617 = vmul.f32 %v5359, %v6590
        %v6618 = vmul.f32 %v5360, %v6590
        %v6619 = vmul.f32 %v5361, %v6594
        %v6620 = vmul.f32 %v5362, %v6594
        %v6621 = vmul.f32 %v5363, %v6594
        %v6622 = vmul.f32 %v5364, %v6598
        %v6623 = vmul.f32 %v5365, %v6598
        %v6624 = vmul.f32 %v5366, %v6598
        %v6625 = vmul.f32 %v5367, %v6602
        %v6626 = vmul.f32 %v5368, %v6602
        %v6627 = vmul.f32 %v5369, %v6602
        %v6652 = vrot.slane %v6604, 2
        %v6653 = vrot.slane %v6605, 2
        %v6654 = vsel %vm6315, %v6652, %v6653
        %v6655 = vrot.slane %v6606, 2
        %v6656 = vsel %vm6315, %v6653, %v6655
        %v6657 = vrot.slane %v6607, 2
        %v6658 = vrot.slane %v6608, 2
        %v6659 = vsel %vm6315, %v6657, %v6658
        %v6660 = vrot.slane %v6609, 2
        %v6661 = vsel %vm6315, %v6658, %v6660
        %v6662 = vrot.slane %v6610, 2
        %v6663 = vrot.slane %v6611, 2
        %v6664 = vsel %vm6315, %v6662, %v6663
        %v6665 = vrot.slane %v6612, 2
        %v6666 = vsel %vm6315, %v6663, %v6665
        %v6667 = vrot.slane %v6613, 2
        %v6668 = vrot.slane %v6614, 2
        %v6669 = vsel %vm6315, %v6667, %v6668
        %v6670 = vrot.slane %v6615, 2
        %v6671 = vsel %vm6315, %v6668, %v6670
        %v6672 = vrot.slane %v6616, 2
        %v6673 = vrot.slane %v6617, 2
        %v6674 = vsel %vm6315, %v6672, %v6673
        %v6675 = vrot.slane %v6618, 2
        %v6676 = vsel %vm6315, %v6673, %v6675
        %v6677 = vrot.slane %v6619, 2
        %v6678 = vrot.slane %v6620, 2
        %v6679 = vsel %vm6315, %v6677, %v6678
        %v6680 = vrot.slane %v6621, 2
        %v6681 = vsel %vm6315, %v6678, %v6680
        %v6682 = vrot.slane %v6622, 2
        %v6683 = vrot.slane %v6623, 2
        %v6684 = vsel %vm6315, %v6682, %v6683
        %v6685 = vrot.slane %v6624, 2
        %v6686 = vsel %vm6315, %v6683, %v6685
        %v6687 = vrot.slane %v6625, 2
        %v6688 = vrot.slane %v6626, 2
        %v6689 = vsel %vm6315, %v6687, %v6688
        %v6690 = vrot.slane %v6627, 2
        %v6691 = vsel %vm6315, %v6688, %v6690
        %6692 = vrot.lane.b32.xlu0 %v6654, 126
        %v6693 = vpop.permute.xlu0 %6692
        %6694 = vrot.lane.b32.xlu0 %v6656, 126
        %v6695 = vpop.permute.xlu0 %6694
        %6696 = vrot.lane.b32.xlu0 %v6659, 126
        %v6697 = vpop.permute.xlu0 %6696
        %6698 = vrot.lane.b32.xlu0 %v6661, 126
        %v6699 = vpop.permute.xlu0 %6698
        %6700 = vrot.lane.b32.xlu0 %v6664, 126
        %v6701 = vpop.permute.xlu0 %6700
        %6702 = vrot.lane.b32.xlu0 %v6666, 126
        %v6703 = vpop.permute.xlu0 %6702
        %6704 = vrot.lane.b32.xlu0 %v6669, 126
        %v6705 = vpop.permute.xlu0 %6704
        %6706 = vrot.lane.b32.xlu0 %v6671, 126
        %v6707 = vpop.permute.xlu0 %6706
        %6708 = vrot.lane.b32.xlu0 %v6674, 126
        %v6709 = vpop.permute.xlu0 %6708
        %6710 = vrot.lane.b32.xlu0 %v6676, 126
        %v6711 = vpop.permute.xlu0 %6710
        %6712 = vrot.lane.b32.xlu0 %v6679, 126
        %v6713 = vpop.permute.xlu0 %6712
        %6714 = vrot.lane.b32.xlu0 %v6681, 126
        %v6715 = vpop.permute.xlu0 %6714
        %6716 = vrot.lane.b32.xlu0 %v6684, 126
        %v6717 = vpop.permute.xlu0 %6716
        %6718 = vrot.lane.b32.xlu0 %v6686, 126
        %v6719 = vpop.permute.xlu0 %6718
        %6720 = vrot.lane.b32.xlu0 %v6689, 126
        %v6721 = vpop.permute.xlu0 %6720
        %6722 = vrot.lane.b32.xlu0 %v6691, 126
        %v6723 = vpop.permute.xlu0 %6722
        %v6740 = vadd.f32 %v6556, %v6693
        %v6741 = vadd.f32 %v6557, %v6695
        %v6742 = vadd.f32 %v6558, %v6697
        %v6743 = vadd.f32 %v6559, %v6699
        %v6744 = vadd.f32 %v6560, %v6701
        %v6745 = vadd.f32 %v6561, %v6703
        %v6746 = vadd.f32 %v6562, %v6705
        %v6747 = vadd.f32 %v6563, %v6707
        %v6748 = vadd.f32 %v6564, %v6709
        %v6749 = vadd.f32 %v6565, %v6711
        %v6750 = vadd.f32 %v6566, %v6713
        %v6751 = vadd.f32 %v6567, %v6715
        %v6752 = vadd.f32 %v6568, %v6717
        %v6753 = vadd.f32 %v6569, %v6719
        %v6754 = vadd.f32 %v6570, %v6721
        %v6755 = vadd.f32 %v6571, %v6723
        %v6756 = vcombine.low %v6740, %v6744
        %v6757 = vcombine.high %v6740, %v6744
        %v6759 = vunpack.c.l.s4 1983009808
        %v6760 = vunpack.c.0.s8 %v6759
        %v6761 = vlaneseq
        %v6762 = vshrl.u32 %v6761, 7
        %v6763 = vsub.s32 %v6760, %v6762
        %v6764 = vrot.slane %v6756, %v6763
        %v6766 = vunpack.c.l.s4 1983009808
        %v6767 = vunpack.c.0.s8 %v6766
        %v6768 = vlaneseq
        %v6769 = vshrl.u32 %v6768, 7
        %v6770 = vsub.s32 %v6767, %v6769
        %v6771 = vrot.slane %v6757, %v6770
        %v6772 = vcombine.low %v6742, %v6746
        %v6773 = vcombine.high %v6742, %v6746
        %v6775 = vunpack.c.l.s4 1983009808
        %v6776 = vunpack.c.0.s8 %v6775
        %v6777 = vlaneseq
        %v6778 = vshrl.u32 %v6777, 7
        %v6779 = vsub.s32 %v6776, %v6778
        %v6780 = vrot.slane %v6772, %v6779
        %v6782 = vunpack.c.l.s4 1983009808
        %v6783 = vunpack.c.0.s8 %v6782
        %v6784 = vlaneseq
        %v6785 = vshrl.u32 %v6784, 7
        %v6786 = vsub.s32 %v6783, %v6785
        %v6787 = vrot.slane %v6773, %v6786
        %v6788 = vcombine.low %v6748, %v6752
        %v6789 = vcombine.high %v6748, %v6752
        %v6791 = vunpack.c.l.s4 1983009808
        %v6792 = vunpack.c.0.s8 %v6791
        %v6793 = vlaneseq
        %v6794 = vshrl.u32 %v6793, 7
        %v6795 = vsub.s32 %v6792, %v6794
        %v6796 = vrot.slane %v6788, %v6795
        %v6798 = vunpack.c.l.s4 1983009808
        %v6799 = vunpack.c.0.s8 %v6798
        %v6800 = vlaneseq
        %v6801 = vshrl.u32 %v6800, 7
        %v6802 = vsub.s32 %v6799, %v6801
        %v6803 = vrot.slane %v6789, %v6802
        %v6804 = vcombine.low %v6750, %v6754
        %v6805 = vcombine.high %v6750, %v6754
        %v6807 = vunpack.c.l.s4 1983009808
        %v6808 = vunpack.c.0.s8 %v6807
        %v6809 = vlaneseq
        %v6810 = vshrl.u32 %v6809, 7
        %v6811 = vsub.s32 %v6808, %v6810
        %v6812 = vrot.slane %v6804, %v6811
        %v6814 = vunpack.c.l.s4 1983009808
        %v6815 = vunpack.c.0.s8 %v6814
        %v6816 = vlaneseq
        %v6817 = vshrl.u32 %v6816, 7
        %v6818 = vsub.s32 %v6815, %v6817
        %v6819 = vrot.slane %v6805, %v6818
        %v6820 = vcombine.low %v6764, %v6780
        %v6821 = vcombine.high %v6764, %v6780
        %v6823 = vunpack.c.l.s4 1934713408
        %v6824 = vunpack.c.0.s8 %v6823
        %v6825 = vlaneseq
        %v6826 = vshrl.u32 %v6825, 7
        %v6827 = vsub.s32 %v6824, %v6826
        %v6828 = vrot.slane %v6820, %v6827
        %v6830 = vunpack.c.l.s4 1934713408
        %v6831 = vunpack.c.0.s8 %v6830
        %v6832 = vlaneseq
        %v6833 = vshrl.u32 %v6832, 7
        %v6834 = vsub.s32 %v6831, %v6833
        %v6835 = vrot.slane %v6821, %v6834
        %v6836 = vcombine.low %v6771, %v6787
        %v6837 = vcombine.high %v6771, %v6787
        %v6839 = vunpack.c.l.s4 1934713408
        %v6840 = vunpack.c.0.s8 %v6839
        %v6841 = vlaneseq
        %v6842 = vshrl.u32 %v6841, 7
        %v6843 = vsub.s32 %v6840, %v6842
        %v6844 = vrot.slane %v6836, %v6843
        %v6846 = vunpack.c.l.s4 1934713408
        %v6847 = vunpack.c.0.s8 %v6846
        %v6848 = vlaneseq
        %v6849 = vshrl.u32 %v6848, 7
        %v6850 = vsub.s32 %v6847, %v6849
        %v6851 = vrot.slane %v6837, %v6850
        %v6852 = vcombine.low %v6796, %v6812
        %v6853 = vcombine.high %v6796, %v6812
        %v6855 = vunpack.c.l.s4 1934713408
        %v6856 = vunpack.c.0.s8 %v6855
        %v6857 = vlaneseq
        %v6858 = vshrl.u32 %v6857, 7
        %v6859 = vsub.s32 %v6856, %v6858
        %v6860 = vrot.slane %v6852, %v6859
        %v6862 = vunpack.c.l.s4 1934713408
        %v6863 = vunpack.c.0.s8 %v6862
        %v6864 = vlaneseq
        %v6865 = vshrl.u32 %v6864, 7
        %v6866 = vsub.s32 %v6863, %v6865
        %v6867 = vrot.slane %v6853, %v6866
        %v6868 = vcombine.low %v6803, %v6819
        %v6869 = vcombine.high %v6803, %v6819
        %v6871 = vunpack.c.l.s4 1934713408
        %v6872 = vunpack.c.0.s8 %v6871
        %v6873 = vlaneseq
        %v6874 = vshrl.u32 %v6873, 7
        %v6875 = vsub.s32 %v6872, %v6874
        %v6876 = vrot.slane %v6868, %v6875
        %v6878 = vunpack.c.l.s4 1934713408
        %v6879 = vunpack.c.0.s8 %v6878
        %v6880 = vlaneseq
        %v6881 = vshrl.u32 %v6880, 7
        %v6882 = vsub.s32 %v6879, %v6881
        %v6883 = vrot.slane %v6869, %v6882
        %v6884 = vcombine.low %v6828, %v6860
        %v6885 = vcombine.high %v6828, %v6860
        %v6886 = vcombine.low %v6835, %v6867
        %v6887 = vcombine.high %v6835, %v6867
        %v6888 = vcombine.low %v6844, %v6876
        %v6889 = vcombine.high %v6844, %v6876
        %v6890 = vcombine.low %v6851, %v6883
        %v6891 = vcombine.high %v6851, %v6883
        %v6892 = vcombine.low %v6741, %v6745
        %v6893 = vcombine.high %v6741, %v6745
        %v6895 = vunpack.c.l.s4 1983009808
        %v6896 = vunpack.c.0.s8 %v6895
        %v6897 = vlaneseq
        %v6898 = vshrl.u32 %v6897, 7
        %v6899 = vsub.s32 %v6896, %v6898
        %v6900 = vrot.slane %v6892, %v6899
        %v6902 = vunpack.c.l.s4 1983009808
        %v6903 = vunpack.c.0.s8 %v6902
        %v6904 = vlaneseq
        %v6905 = vshrl.u32 %v6904, 7
        %v6906 = vsub.s32 %v6903, %v6905
        %v6907 = vrot.slane %v6893, %v6906
        %v6908 = vcombine.low %v6743, %v6747
        %v6909 = vcombine.high %v6743, %v6747
        %v6911 = vunpack.c.l.s4 1983009808
        %v6912 = vunpack.c.0.s8 %v6911
        %v6913 = vlaneseq
        %v6914 = vshrl.u32 %v6913, 7
        %v6915 = vsub.s32 %v6912, %v6914
        %v6916 = vrot.slane %v6908, %v6915
        %v6918 = vunpack.c.l.s4 1983009808
        %v6919 = vunpack.c.0.s8 %v6918
        %v6920 = vlaneseq
        %v6921 = vshrl.u32 %v6920, 7
        %v6922 = vsub.s32 %v6919, %v6921
        %v6923 = vrot.slane %v6909, %v6922
        %v6924 = vcombine.low %v6749, %v6753
        %v6925 = vcombine.high %v6749, %v6753
        %v6927 = vunpack.c.l.s4 1983009808
        %v6928 = vunpack.c.0.s8 %v6927
        %v6929 = vlaneseq
        %v6930 = vshrl.u32 %v6929, 7
        %v6931 = vsub.s32 %v6928, %v6930
        %v6932 = vrot.slane %v6924, %v6931
        %v6934 = vunpack.c.l.s4 1983009808
        %v6935 = vunpack.c.0.s8 %v6934
        %v6936 = vlaneseq
        %v6937 = vshrl.u32 %v6936, 7
        %v6938 = vsub.s32 %v6935, %v6937
        %v6939 = vrot.slane %v6925, %v6938
        %v6940 = vcombine.low %v6751, %v6755
        %v6941 = vcombine.high %v6751, %v6755
        %v6943 = vunpack.c.l.s4 1983009808
        %v6944 = vunpack.c.0.s8 %v6943
        %v6945 = vlaneseq
        %v6946 = vshrl.u32 %v6945, 7
        %v6947 = vsub.s32 %v6944, %v6946
        %v6948 = vrot.slane %v6940, %v6947
        %v6950 = vunpack.c.l.s4 1983009808
        %v6951 = vunpack.c.0.s8 %v6950
        %v6952 = vlaneseq
        %v6953 = vshrl.u32 %v6952, 7
        %v6954 = vsub.s32 %v6951, %v6953
        %v6955 = vrot.slane %v6941, %v6954
        %v6956 = vcombine.low %v6900, %v6916
        %v6957 = vcombine.high %v6900, %v6916
        %v6959 = vunpack.c.l.s4 1934713408
        %v6960 = vunpack.c.0.s8 %v6959
        %v6961 = vlaneseq
        %v6962 = vshrl.u32 %v6961, 7
        %v6963 = vsub.s32 %v6960, %v6962
        %v6964 = vrot.slane %v6956, %v6963
        %v6966 = vunpack.c.l.s4 1934713408
        %v6967 = vunpack.c.0.s8 %v6966
        %v6968 = vlaneseq
        %v6969 = vshrl.u32 %v6968, 7
        %v6970 = vsub.s32 %v6967, %v6969
        %v6971 = vrot.slane %v6957, %v6970
        %v6972 = vcombine.low %v6907, %v6923
        %v6973 = vcombine.high %v6907, %v6923
        %v6975 = vunpack.c.l.s4 1934713408
        %v6976 = vunpack.c.0.s8 %v6975
        %v6977 = vlaneseq
        %v6978 = vshrl.u32 %v6977, 7
        %v6979 = vsub.s32 %v6976, %v6978
        %v6980 = vrot.slane %v6972, %v6979
        %v6982 = vunpack.c.l.s4 1934713408
        %v6983 = vunpack.c.0.s8 %v6982
        %v6984 = vlaneseq
        %v6985 = vshrl.u32 %v6984, 7
        %v6986 = vsub.s32 %v6983, %v6985
        %v6987 = vrot.slane %v6973, %v6986
        %v6988 = vcombine.low %v6932, %v6948
        %v6989 = vcombine.high %v6932, %v6948
        %v6991 = vunpack.c.l.s4 1934713408
        %v6992 = vunpack.c.0.s8 %v6991
        %v6993 = vlaneseq
        %v6994 = vshrl.u32 %v6993, 7
        %v6995 = vsub.s32 %v6992, %v6994
        %v6996 = vrot.slane %v6988, %v6995
        %v6998 = vunpack.c.l.s4 1934713408
        %v6999 = vunpack.c.0.s8 %v6998
        %v7000 = vlaneseq
        %v7001 = vshrl.u32 %v7000, 7
        %v7002 = vsub.s32 %v6999, %v7001
        %v7003 = vrot.slane %v6989, %v7002
        %v7004 = vcombine.low %v6939, %v6955
        %v7005 = vcombine.high %v6939, %v6955
        %v7007 = vunpack.c.l.s4 1934713408
        %v7008 = vunpack.c.0.s8 %v7007
        %v7009 = vlaneseq
        %v7010 = vshrl.u32 %v7009, 7
        %v7011 = vsub.s32 %v7008, %v7010
        %v7012 = vrot.slane %v7004, %v7011
        %v7014 = vunpack.c.l.s4 1934713408
        %v7015 = vunpack.c.0.s8 %v7014
        %v7016 = vlaneseq
        %v7017 = vshrl.u32 %v7016, 7
        %v7018 = vsub.s32 %v7015, %v7017
        %v7019 = vrot.slane %v7005, %v7018
        %v7020 = vcombine.low %v6964, %v6996
        %v7021 = vcombine.high %v6964, %v6996
        %v7022 = vcombine.low %v6971, %v7003
        %v7023 = vcombine.high %v6971, %v7003
        %v7024 = vcombine.low %v6980, %v7012
        %v7025 = vcombine.high %v6980, %v7012
        %v7026 = vcombine.low %v6987, %v7019
        %v7027 = vcombine.high %v6987, %v7019
        %7029 = vrot.lane.b32.xlu0 %v6885, 16
        %v7030 = vpop.permute.xlu0 %7029
        %7033 = vrot.lane.b32.xlu0 %v6886, 32
        %v7034 = vpop.permute.xlu0 %7033
        %7037 = vrot.lane.b32.xlu0 %v6887, 48
        %v7038 = vpop.permute.xlu0 %7037
        %7041 = vrot.lane.b32.xlu0 %v6888, 64
        %v7042 = vpop.permute.xlu0 %7041
        %7045 = vrot.lane.b32.xlu0 %v6889, 80
        %v7046 = vpop.permute.xlu0 %7045
        %7049 = vrot.lane.b32.xlu0 %v6890, 96
        %v7050 = vpop.permute.xlu0 %7049
        %7053 = vrot.lane.b32.xlu0 %v6891, 112
        %v7054 = vpop.permute.xlu0 %7053
        %7057 = vrot.lane.b32.xlu0 %v7021, 16
        %v7058 = vpop.permute.xlu0 %7057
        %7061 = vrot.lane.b32.xlu0 %v7022, 32
        %v7062 = vpop.permute.xlu0 %7061
        %7065 = vrot.lane.b32.xlu0 %v7023, 48
        %v7066 = vpop.permute.xlu0 %7065
        %7069 = vrot.lane.b32.xlu0 %v7024, 64
        %v7070 = vpop.permute.xlu0 %7069
        %7073 = vrot.lane.b32.xlu0 %v7025, 80
        %v7074 = vpop.permute.xlu0 %7073
        %7077 = vrot.lane.b32.xlu0 %v7026, 96
        %v7078 = vpop.permute.xlu0 %7077
        %7081 = vrot.lane.b32.xlu0 %v7027, 112
        %v7082 = vpop.permute.xlu0 %7081
        %v7084 = vsel %vm559, %v6884, %v7030
        %vm7085 = vcmask 261120
        %v7086 = vsel %vm7085, %v7084, %v7034
        %vm7087 = vcmask 392192
        %v7088 = vsel %vm7087, %v7086, %v7038
        %vm7089 = vcmask 523264
        %v7090 = vsel %vm7089, %v7088, %v7042
        %vm7091 = vcmask 654336
        %v7092 = vsel %vm7091, %v7090, %v7046
        %vm7093 = vcmask 785408
        %v7094 = vsel %vm7093, %v7092, %v7050
        %vm7095 = vcmask 916480
        %v7096 = vsel %vm7095, %v7094, %v7054
        %v7097 = vsel %vm559, %v7020, %v7058
        %v7098 = vsel %vm7085, %v7097, %v7062
        %v7099 = vsel %vm7087, %v7098, %v7066
        %v7100 = vsel %vm7089, %v7099, %v7070
        %v7101 = vsel %vm7091, %v7100, %v7074
        %v7102 = vsel %vm7093, %v7101, %v7078
        %v7103 = vsel %vm7095, %v7102, %v7082
        %s7104 = scalar_lea.vmem %s5, 32
        %v7105 = vld [vmem:[%s7104] sm:$0xff]
        %7107 = vset.pattern.permute.xlu0 0
        %7108 = vperm.xlu0 %7107, %v7105
        %v7109 = vpop.permute.xlu0 %7108
        %v7111 = vadd.f32 %v7096, %v7109
        %v7112 = vadd.f32 %v7103, %v7109
        %v7113 = vld [vmem:[%s6] sm:$0xff]
        %v7114 = vld [vmem:[%s6 + $0x8] sm:$0xff]
        %v7115 = vld [vmem:[%s7] sm:$0xff]
        %v7116 = vld [vmem:[%s7 + $0x8] sm:$0xff]
        %7118 = vset.pattern.permute.xlu0 0
        %7119 = vperm.xlu0 %7118, %v7115
        %v7120 = vpop.permute.xlu0 %7119
        %7123 = vset.pattern.permute.xlu0 0
        %7124 = vperm.xlu0 %7123, %v7116
        %v7125 = vpop.permute.xlu0 %7124
        %7143 = vset.pattern.permute.xlu0 0
        %7144 = vperm.xlu0 %7143, %v2109
        %v7145 = vpop.permute.xlu0 %7144
        %7146 = vset.pattern.permute.xlu0 0
        %7147 = vperm.xlu0 %7146, %v2110
        %v7148 = vpop.permute.xlu0 %7147
        %7149 = vset.pattern.permute.xlu0 0
        %7150 = vperm.xlu0 %7149, %v2111
        %v7151 = vpop.permute.xlu0 %7150
        %7152 = vset.pattern.permute.xlu0 0
        %7153 = vperm.xlu0 %7152, %v2112
        %v7154 = vpop.permute.xlu0 %7153
        %7155 = vset.pattern.permute.xlu0 0
        %7156 = vperm.xlu0 %7155, %v2113
        %v7157 = vpop.permute.xlu0 %7156
        %7158 = vset.pattern.permute.xlu0 0
        %7159 = vperm.xlu0 %7158, %v2114
        %v7160 = vpop.permute.xlu0 %7159
        %7161 = vset.pattern.permute.xlu0 0
        %7162 = vperm.xlu0 %7161, %v2115
        %v7163 = vpop.permute.xlu0 %7162
        %7164 = vset.pattern.permute.xlu0 0
        %7165 = vperm.xlu0 %7164, %v2116
        %v7166 = vpop.permute.xlu0 %7165
        %7167 = vset.pattern.permute.xlu0 0
        %7168 = vperm.xlu0 %7167, %v2117
        %v7169 = vpop.permute.xlu0 %7168
        %7170 = vset.pattern.permute.xlu0 0
        %7171 = vperm.xlu0 %7170, %v2118
        %v7172 = vpop.permute.xlu0 %7171
        %7173 = vset.pattern.permute.xlu0 0
        %7174 = vperm.xlu0 %7173, %v2119
        %v7175 = vpop.permute.xlu0 %7174
        %7176 = vset.pattern.permute.xlu0 0
        %7177 = vperm.xlu0 %7176, %v2120
        %v7178 = vpop.permute.xlu0 %7177
        %7179 = vset.pattern.permute.xlu0 0
        %7180 = vperm.xlu0 %7179, %v2121
        %v7181 = vpop.permute.xlu0 %7180
        %7182 = vset.pattern.permute.xlu0 0
        %7183 = vperm.xlu0 %7182, %v2122
        %v7184 = vpop.permute.xlu0 %7183
        %7185 = vset.pattern.permute.xlu0 0
        %7186 = vperm.xlu0 %7185, %v2123
        %v7187 = vpop.permute.xlu0 %7186
        %7188 = vset.pattern.permute.xlu0 0
        %7189 = vperm.xlu0 %7188, %v2124
        %v7190 = vpop.permute.xlu0 %7189
        %v7191 = vlaneseq
        %v7192 = vshrl.u32 %v7191, 7
        %v7193 = vsub.s32 %v455, %v7192
        %v7194 = vrot.slane %v7145, %v7193
        %v7195 = vlaneseq
        %v7196 = vshrl.u32 %v7195, 7
        %v7197 = vsub.s32 %v1435, %v7196
        %v7198 = vrot.slane %v7148, %v7197
        %v7199 = vsel %vm1440, %v7198, %v7194
        %v7200 = vlaneseq
        %v7201 = vshrl.u32 %v7200, 7
        %v7202 = vsub.s32 %v455, %v7201
        %v7203 = vrot.slane %v7151, %v7202
        %v7204 = vlaneseq
        %v7205 = vshrl.u32 %v7204, 7
        %v7206 = vsub.s32 %v1435, %v7205
        %v7207 = vrot.slane %v7154, %v7206
        %v7208 = vsel %vm1440, %v7207, %v7203
        %v7209 = vlaneseq
        %v7210 = vshrl.u32 %v7209, 7
        %v7211 = vsub.s32 %v455, %v7210
        %v7212 = vrot.slane %v7157, %v7211
        %v7213 = vlaneseq
        %v7214 = vshrl.u32 %v7213, 7
        %v7215 = vsub.s32 %v1435, %v7214
        %v7216 = vrot.slane %v7160, %v7215
        %v7217 = vsel %vm1440, %v7216, %v7212
        %v7218 = vlaneseq
        %v7219 = vshrl.u32 %v7218, 7
        %v7220 = vsub.s32 %v455, %v7219
        %v7221 = vrot.slane %v7163, %v7220
        %v7222 = vlaneseq
        %v7223 = vshrl.u32 %v7222, 7
        %v7224 = vsub.s32 %v1435, %v7223
        %v7225 = vrot.slane %v7166, %v7224
        %v7226 = vsel %vm1440, %v7225, %v7221
        %v7227 = vlaneseq
        %v7228 = vshrl.u32 %v7227, 7
        %v7229 = vsub.s32 %v455, %v7228
        %v7230 = vrot.slane %v7169, %v7229
        %v7231 = vlaneseq
        %v7232 = vshrl.u32 %v7231, 7
        %v7233 = vsub.s32 %v1435, %v7232
        %v7234 = vrot.slane %v7172, %v7233
        %v7235 = vsel %vm1440, %v7234, %v7230
        %v7236 = vlaneseq
        %v7237 = vshrl.u32 %v7236, 7
        %v7238 = vsub.s32 %v455, %v7237
        %v7239 = vrot.slane %v7175, %v7238
        %v7240 = vlaneseq
        %v7241 = vshrl.u32 %v7240, 7
        %v7242 = vsub.s32 %v1435, %v7241
        %v7243 = vrot.slane %v7178, %v7242
        %v7244 = vsel %vm1440, %v7243, %v7239
        %v7245 = vlaneseq
        %v7246 = vshrl.u32 %v7245, 7
        %v7247 = vsub.s32 %v455, %v7246
        %v7248 = vrot.slane %v7181, %v7247
        %v7249 = vlaneseq
        %v7250 = vshrl.u32 %v7249, 7
        %v7251 = vsub.s32 %v1435, %v7250
        %v7252 = vrot.slane %v7184, %v7251
        %v7253 = vsel %vm1440, %v7252, %v7248
        %v7254 = vlaneseq
        %v7255 = vshrl.u32 %v7254, 7
        %v7256 = vsub.s32 %v455, %v7255
        %v7257 = vrot.slane %v7187, %v7256
        %v7258 = vlaneseq
        %v7259 = vshrl.u32 %v7258, 7
        %v7260 = vsub.s32 %v1435, %v7259
        %v7261 = vrot.slane %v7190, %v7260
        %v7262 = vsel %vm1440, %v7261, %v7257
        %v7263 = vsel %vm1505, %v7208, %v7199
        %v7264 = vsel %vm1507, %v7217, %v7263
        %v7265 = vsel %vm1509, %v7226, %v7264
        %v7266 = vsel %vm1511, %v7235, %v7265
        %v7267 = vsel %vm1513, %v7244, %v7266
        %v7268 = vsel %vm1515, %v7253, %v7267
        %v7269 = vsel %vm1517, %v7262, %v7268
        %vm7271 = vcmask 64512
        %v7273 = vsel %vm7271, %v7113, 0
        %v7276 = vsel %vm7271, %v7114, 0
        %7278 = vmatprep.subr.mxu0 0.0
        %7279 = vmatpush1.msra.mxu0 %v7269
        %7280 = vmatprep.subr.mxu0 0.0
        %7281 = vmatpush1.msra.mxu0 0.0
        %7282 = vmatprep.subr.mxu0 0.0
        %7283 = vmatpush1.msra.mxu0 0.0
        %7284 = vmatprep.subr.mxu0 0.0
        %7285 = vmatpush1.msra.mxu0 0.0
        %7286 = vmatprep.subr.mxu0 0.0
        %7287 = vmatpush1.msra.mxu0 0.0
        %7288 = vmatprep.subr.mxu0 0.0
        %7289 = vmatpush1.msra.mxu0 0.0
        %7290 = vmatprep.subr.mxu0 0.0
        %7291 = vmatpush1.msra.mxu0 0.0
        %7292 = vmatprep.subr.mxu0 0.0
        %7293 = vmatpush1.msra.mxu0 0.0
        %7294 = vmatprep.subr.mxu0 0.0
        %7295 = vmatpush1.msra.mxu0 0.0
        %7296 = vmatprep.subr.mxu0 0.0
        %7297 = vmatpush1.msra.mxu0 0.0
        %7298 = vmatprep.subr.mxu0 0.0
        %7299 = vmatpush1.msra.mxu0 0.0
        %7300 = vmatprep.subr.mxu0 0.0
        %7301 = vmatpush1.msra.mxu0 0.0
        %7302 = vmatprep.subr.mxu0 0.0
        %7303 = vmatpush1.msra.mxu0 0.0
        %7304 = vmatprep.subr.mxu0 0.0
        %7305 = vmatpush1.msra.mxu0 0.0
        %7306 = vmatprep.subr.mxu0 0.0
        %7307 = vmatpush1.msra.mxu0 0.0
        %7308 = vmatprep.subr.mxu0 0.0
        %7309 = vmatpush1.msra.mxu0 0.0
        %7310 = vmatprep.subr.mxu0 0.0
        %7311 = vmatpush1.msra.mxu0 0.0
        %7312 = vmatprep.subr.mxu0 0.0
        %7313 = vmatpush1.msra.mxu0 0.0
        %7314 = vmatprep.subr.mxu0 0.0
        %7315 = vmatpush1.msra.mxu0 0.0
        %7316 = vmatprep.subr.mxu0 0.0
        %7317 = vmatpush1.msra.mxu0 0.0
        %7318 = vmatprep.subr.mxu0 0.0
        %7319 = vmatpush1.msra.mxu0 0.0
        %7320 = vmatprep.subr.mxu0 0.0
        %7321 = vmatpush1.msra.mxu0 0.0
        %7322 = vmatprep.subr.mxu0 0.0
        %7323 = vmatpush1.msra.mxu0 0.0
        %7324 = vmatprep.subr.mxu0 0.0
        %7325 = vmatpush1.msra.mxu0 0.0
        %7326 = vmatprep.subr.mxu0 0.0
        %7327 = vmatpush1.msra.mxu0 0.0
        %7328 = vmatprep.subr.mxu0 0.0
        %7329 = vmatpush1.msra.mxu0 0.0
        %7330 = vmatprep.subr.mxu0 0.0
        %7331 = vmatpush1.msra.mxu0 0.0
        %7332 = vmatprep.subr.mxu0 0.0
        %7333 = vmatpush1.msra.mxu0 0.0
        %7334 = vmatprep.subr.mxu0 0.0
        %7335 = vmatpush1.msra.mxu0 0.0
        %7336 = vmatprep.subr.mxu0 0.0
        %7337 = vmatpush1.msra.mxu0 0.0
        %7338 = vmatprep.subr.mxu0 0.0
        %7339 = vmatpush1.msra.mxu0 0.0
        %7340 = vmatprep.subr.mxu0 0.0
        %7341 = vmatpush1.msra.mxu0 0.0
        %7342 = vmatprep.mubr.f32.mxu0 0.0
        %7343 = vmatmul.mubr.f32.gmra.mrb[0].mxu0 %v7273
        %v7344 = vpop.f32.mrb[0].mxu0
        %v7345 = vadd.f32 %v7120, %v7344
        %v7346 = vpop.f32.mrb[0].mxu0
        %7347 = vmatprep.mubr.f32.mxu0 0.0
        %7348 = vmatmul.mubr.f32.gmra.mrb[0].mxu0 %v7276
        %v7349 = vpop.f32.mrb[0].mxu0
        %v7350 = vadd.f32 %v7125, %v7349
        %v7351 = vpop.f32.mrb[0].mxu0
        %7352 = vdwg.mxu0
        %v7353 = vmul.f32 %v7345, %v7345
        %v7354 = vmul.f32 %v7350, %v7350
        %v7355 = vsel %vm559, %v7353, 0.0
        %7356 = vadd.xlane.f32.xlu0 %v7355
        %v7357 = vpop.xlane.xlu0 %7356
        %v7358 = vsel %vm559, %v7354, 0.0
        %7359 = vadd.xlane.f32.xlu0 %v7358
        %v7360 = vpop.xlane.xlu0 %7359
        %v7361 = vmax.f32 %v7357, 1e-24
        %v7362 = vmax.f32 %v7360, 1e-24
        %v7363 = vrsqrt.pop %v7361
        %v7364 = vrsqrt.pop %v7362
        %v7365 = vmul.f32 %v7345, %v7363
        %v7366 = vmul.f32 %v7350, %v7364
        %s7367 = scalar_lea.vmem %s6, 16
        %v7368 = vld [vmem:[%s7367] sm:$0xff]
        %v7369 = vld [vmem:[%s7367 + $0x8] sm:$0xff]
        %s7370 = scalar_lea.vmem %s7, 16
        %v7371 = vld [vmem:[%s7370] sm:$0xff]
        %v7372 = vld [vmem:[%s7370 + $0x8] sm:$0xff]
        %7374 = vset.pattern.permute.xlu0 0
        %7375 = vperm.xlu0 %7374, %v7371
        %v7376 = vpop.permute.xlu0 %7375
        %7379 = vset.pattern.permute.xlu0 0
        %7380 = vperm.xlu0 %7379, %v7372
        %v7381 = vpop.permute.xlu0 %7380
        %7399 = vset.pattern.permute.xlu0 0
        %7400 = vperm.xlu0 %7399, %v3665
        %v7401 = vpop.permute.xlu0 %7400
        %7402 = vset.pattern.permute.xlu0 0
        %7403 = vperm.xlu0 %7402, %v3666
        %v7404 = vpop.permute.xlu0 %7403
        %7405 = vset.pattern.permute.xlu0 0
        %7406 = vperm.xlu0 %7405, %v3667
        %v7407 = vpop.permute.xlu0 %7406
        %7408 = vset.pattern.permute.xlu0 0
        %7409 = vperm.xlu0 %7408, %v3668
        %v7410 = vpop.permute.xlu0 %7409
        %7411 = vset.pattern.permute.xlu0 0
        %7412 = vperm.xlu0 %7411, %v3669
        %v7413 = vpop.permute.xlu0 %7412
        %7414 = vset.pattern.permute.xlu0 0
        %7415 = vperm.xlu0 %7414, %v3670
        %v7416 = vpop.permute.xlu0 %7415
        %7417 = vset.pattern.permute.xlu0 0
        %7418 = vperm.xlu0 %7417, %v3671
        %v7419 = vpop.permute.xlu0 %7418
        %7420 = vset.pattern.permute.xlu0 0
        %7421 = vperm.xlu0 %7420, %v3672
        %v7422 = vpop.permute.xlu0 %7421
        %7423 = vset.pattern.permute.xlu0 0
        %7424 = vperm.xlu0 %7423, %v3673
        %v7425 = vpop.permute.xlu0 %7424
        %7426 = vset.pattern.permute.xlu0 0
        %7427 = vperm.xlu0 %7426, %v3674
        %v7428 = vpop.permute.xlu0 %7427
        %7429 = vset.pattern.permute.xlu0 0
        %7430 = vperm.xlu0 %7429, %v3675
        %v7431 = vpop.permute.xlu0 %7430
        %7432 = vset.pattern.permute.xlu0 0
        %7433 = vperm.xlu0 %7432, %v3676
        %v7434 = vpop.permute.xlu0 %7433
        %7435 = vset.pattern.permute.xlu0 0
        %7436 = vperm.xlu0 %7435, %v3677
        %v7437 = vpop.permute.xlu0 %7436
        %7438 = vset.pattern.permute.xlu0 0
        %7439 = vperm.xlu0 %7438, %v3678
        %v7440 = vpop.permute.xlu0 %7439
        %7441 = vset.pattern.permute.xlu0 0
        %7442 = vperm.xlu0 %7441, %v3679
        %v7443 = vpop.permute.xlu0 %7442
        %7444 = vset.pattern.permute.xlu0 0
        %7445 = vperm.xlu0 %7444, %v3680
        %v7446 = vpop.permute.xlu0 %7445
        %v7447 = vlaneseq
        %v7448 = vshrl.u32 %v7447, 7
        %v7449 = vsub.s32 %v455, %v7448
        %v7450 = vrot.slane %v7401, %v7449
        %v7451 = vlaneseq
        %v7452 = vshrl.u32 %v7451, 7
        %v7453 = vsub.s32 %v1435, %v7452
        %v7454 = vrot.slane %v7404, %v7453
        %v7455 = vsel %vm1440, %v7454, %v7450
        %v7456 = vlaneseq
        %v7457 = vshrl.u32 %v7456, 7
        %v7458 = vsub.s32 %v455, %v7457
        %v7459 = vrot.slane %v7407, %v7458
        %v7460 = vlaneseq
        %v7461 = vshrl.u32 %v7460, 7
        %v7462 = vsub.s32 %v1435, %v7461
        %v7463 = vrot.slane %v7410, %v7462
        %v7464 = vsel %vm1440, %v7463, %v7459
        %v7465 = vlaneseq
        %v7466 = vshrl.u32 %v7465, 7
        %v7467 = vsub.s32 %v455, %v7466
        %v7468 = vrot.slane %v7413, %v7467
        %v7469 = vlaneseq
        %v7470 = vshrl.u32 %v7469, 7
        %v7471 = vsub.s32 %v1435, %v7470
        %v7472 = vrot.slane %v7416, %v7471
        %v7473 = vsel %vm1440, %v7472, %v7468
        %v7474 = vlaneseq
        %v7475 = vshrl.u32 %v7474, 7
        %v7476 = vsub.s32 %v455, %v7475
        %v7477 = vrot.slane %v7419, %v7476
        %v7478 = vlaneseq
        %v7479 = vshrl.u32 %v7478, 7
        %v7480 = vsub.s32 %v1435, %v7479
        %v7481 = vrot.slane %v7422, %v7480
        %v7482 = vsel %vm1440, %v7481, %v7477
        %v7483 = vlaneseq
        %v7484 = vshrl.u32 %v7483, 7
        %v7485 = vsub.s32 %v455, %v7484
        %v7486 = vrot.slane %v7425, %v7485
        %v7487 = vlaneseq
        %v7488 = vshrl.u32 %v7487, 7
        %v7489 = vsub.s32 %v1435, %v7488
        %v7490 = vrot.slane %v7428, %v7489
        %v7491 = vsel %vm1440, %v7490, %v7486
        %v7492 = vlaneseq
        %v7493 = vshrl.u32 %v7492, 7
        %v7494 = vsub.s32 %v455, %v7493
        %v7495 = vrot.slane %v7431, %v7494
        %v7496 = vlaneseq
        %v7497 = vshrl.u32 %v7496, 7
        %v7498 = vsub.s32 %v1435, %v7497
        %v7499 = vrot.slane %v7434, %v7498
        %v7500 = vsel %vm1440, %v7499, %v7495
        %v7501 = vlaneseq
        %v7502 = vshrl.u32 %v7501, 7
        %v7503 = vsub.s32 %v455, %v7502
        %v7504 = vrot.slane %v7437, %v7503
        %v7505 = vlaneseq
        %v7506 = vshrl.u32 %v7505, 7
        %v7507 = vsub.s32 %v1435, %v7506
        %v7508 = vrot.slane %v7440, %v7507
        %v7509 = vsel %vm1440, %v7508, %v7504
        %v7510 = vlaneseq
        %v7511 = vshrl.u32 %v7510, 7
        %v7512 = vsub.s32 %v455, %v7511
        %v7513 = vrot.slane %v7443, %v7512
        %v7514 = vlaneseq
        %v7515 = vshrl.u32 %v7514, 7
        %v7516 = vsub.s32 %v1435, %v7515
        %v7517 = vrot.slane %v7446, %v7516
        %v7518 = vsel %vm1440, %v7517, %v7513
        %v7519 = vsel %vm1505, %v7464, %v7455
        %v7520 = vsel %vm1507, %v7473, %v7519
        %v7521 = vsel %vm1509, %v7482, %v7520
        %v7522 = vsel %vm1511, %v7491, %v7521
        %v7523 = vsel %vm1513, %v7500, %v7522
        %v7524 = vsel %vm1515, %v7509, %v7523
        %v7525 = vsel %vm1517, %v7518, %v7524
        %v7528 = vsel %vm7271, %v7368, 0
        %v7531 = vsel %vm7271, %v7369, 0
        %7533 = vmatprep.subr.mxu0 0.0
        %7534 = vmatpush1.msra.mxu0 %v7525
        %7535 = vmatprep.subr.mxu0 0.0
        %7536 = vmatpush1.msra.mxu0 0.0
        %7537 = vmatprep.subr.mxu0 0.0
        %7538 = vmatpush1.msra.mxu0 0.0
        %7539 = vmatprep.subr.mxu0 0.0
        %7540 = vmatpush1.msra.mxu0 0.0
        %7541 = vmatprep.subr.mxu0 0.0
        %7542 = vmatpush1.msra.mxu0 0.0
        %7543 = vmatprep.subr.mxu0 0.0
        %7544 = vmatpush1.msra.mxu0 0.0
        %7545 = vmatprep.subr.mxu0 0.0
        %7546 = vmatpush1.msra.mxu0 0.0
        %7547 = vmatprep.subr.mxu0 0.0
        %7548 = vmatpush1.msra.mxu0 0.0
        %7549 = vmatprep.subr.mxu0 0.0
        %7550 = vmatpush1.msra.mxu0 0.0
        %7551 = vmatprep.subr.mxu0 0.0
        %7552 = vmatpush1.msra.mxu0 0.0
        %7553 = vmatprep.subr.mxu0 0.0
        %7554 = vmatpush1.msra.mxu0 0.0
        %7555 = vmatprep.subr.mxu0 0.0
        %7556 = vmatpush1.msra.mxu0 0.0
        %7557 = vmatprep.subr.mxu0 0.0
        %7558 = vmatpush1.msra.mxu0 0.0
        %7559 = vmatprep.subr.mxu0 0.0
        %7560 = vmatpush1.msra.mxu0 0.0
        %7561 = vmatprep.subr.mxu0 0.0
        %7562 = vmatpush1.msra.mxu0 0.0
        %7563 = vmatprep.subr.mxu0 0.0
        %7564 = vmatpush1.msra.mxu0 0.0
        %7565 = vmatprep.subr.mxu0 0.0
        %7566 = vmatpush1.msra.mxu0 0.0
        %7567 = vmatprep.subr.mxu0 0.0
        %7568 = vmatpush1.msra.mxu0 0.0
        %7569 = vmatprep.subr.mxu0 0.0
        %7570 = vmatpush1.msra.mxu0 0.0
        %7571 = vmatprep.subr.mxu0 0.0
        %7572 = vmatpush1.msra.mxu0 0.0
        %7573 = vmatprep.subr.mxu0 0.0
        %7574 = vmatpush1.msra.mxu0 0.0
        %7575 = vmatprep.subr.mxu0 0.0
        %7576 = vmatpush1.msra.mxu0 0.0
        %7577 = vmatprep.subr.mxu0 0.0
        %7578 = vmatpush1.msra.mxu0 0.0
        %7579 = vmatprep.subr.mxu0 0.0
        %7580 = vmatpush1.msra.mxu0 0.0
        %7581 = vmatprep.subr.mxu0 0.0
        %7582 = vmatpush1.msra.mxu0 0.0
        %7583 = vmatprep.subr.mxu0 0.0
        %7584 = vmatpush1.msra.mxu0 0.0
        %7585 = vmatprep.subr.mxu0 0.0
        %7586 = vmatpush1.msra.mxu0 0.0
        %7587 = vmatprep.subr.mxu0 0.0
        %7588 = vmatpush1.msra.mxu0 0.0
        %7589 = vmatprep.subr.mxu0 0.0
        %7590 = vmatpush1.msra.mxu0 0.0
        %7591 = vmatprep.subr.mxu0 0.0
        %7592 = vmatpush1.msra.mxu0 0.0
        %7593 = vmatprep.subr.mxu0 0.0
        %7594 = vmatpush1.msra.mxu0 0.0
        %7595 = vmatprep.subr.mxu0 0.0
        %7596 = vmatpush1.msra.mxu0 0.0
        %7597 = vmatprep.mubr.f32.mxu0 0.0
        %7598 = vmatmul.mubr.f32.gmra.mrb[0].mxu0 %v7528
        %v7599 = vpop.f32.mrb[0].mxu0
        %v7600 = vadd.f32 %v7376, %v7599
        %v7601 = vpop.f32.mrb[0].mxu0
        %7602 = vmatprep.mubr.f32.mxu0 0.0
        %7603 = vmatmul.mubr.f32.gmra.mrb[0].mxu0 %v7531
        %v7604 = vpop.f32.mrb[0].mxu0
        %v7605 = vadd.f32 %v7381, %v7604
        %v7606 = vpop.f32.mrb[0].mxu0
        %7607 = vdwg.mxu0
        %v7608 = vmul.f32 %v7600, %v7600
        %v7609 = vmul.f32 %v7605, %v7605
        %v7610 = vsel %vm559, %v7608, 0.0
        %7611 = vadd.xlane.f32.xlu0 %v7610
        %v7612 = vpop.xlane.xlu0 %7611
        %v7613 = vsel %vm559, %v7609, 0.0
        %7614 = vadd.xlane.f32.xlu0 %v7613
        %v7615 = vpop.xlane.xlu0 %7614
        %v7616 = vmax.f32 %v7612, 1e-24
        %v7617 = vmax.f32 %v7615, 1e-24
        %v7618 = vrsqrt.pop %v7616
        %v7619 = vrsqrt.pop %v7617
        %v7620 = vmul.f32 %v7600, %v7618
        %v7621 = vmul.f32 %v7605, %v7619
        %s7622 = scalar_lea.vmem %s6, 32
        %v7623 = vld [vmem:[%s7622] sm:$0xff]
        %v7624 = vld [vmem:[%s7622 + $0x8] sm:$0xff]
        %s7625 = scalar_lea.vmem %s7, 32
        %v7626 = vld [vmem:[%s7625] sm:$0xff]
        %v7627 = vld [vmem:[%s7625 + $0x8] sm:$0xff]
        %7629 = vset.pattern.permute.xlu0 0
        %7630 = vperm.xlu0 %7629, %v7626
        %v7631 = vpop.permute.xlu0 %7630
        %7634 = vset.pattern.permute.xlu0 0
        %7635 = vperm.xlu0 %7634, %v7627
        %v7636 = vpop.permute.xlu0 %7635
        %v7646 = vrot.slane %v4468, 7
        %v7647 = vsel %vm1505, %v7646, %v4467
        %v7648 = vrot.slane %v4469, 6
        %v7649 = vsel %vm1507, %v7648, %v7647
        %v7650 = vrot.slane %v4470, 5
        %v7651 = vsel %vm1509, %v7650, %v7649
        %v7652 = vrot.slane %v4471, 4
        %v7653 = vsel %vm1511, %v7652, %v7651
        %v7654 = vrot.slane %v4472, 3
        %v7655 = vsel %vm1513, %v7654, %v7653
        %v7656 = vrot.slane %v4473, 2
        %v7657 = vsel %vm1515, %v7656, %v7655
        %v7658 = vrot.slane %v4474, 1
        %v7659 = vsel %vm1517, %v7658, %v7657
        %v7662 = vsel %vm7271, %v7623, 0
        %v7665 = vsel %vm7271, %v7624, 0
        %7667 = vmatprep.subr.mxu0 0.0
        %7668 = vmatpush1.msra.mxu0 %v7659
        %7669 = vmatprep.subr.mxu0 0.0
        %7670 = vmatpush1.msra.mxu0 0.0
        %7671 = vmatprep.subr.mxu0 0.0
        %7672 = vmatpush1.msra.mxu0 0.0
        %7673 = vmatprep.subr.mxu0 0.0
        %7674 = vmatpush1.msra.mxu0 0.0
        %7675 = vmatprep.subr.mxu0 0.0
        %7676 = vmatpush1.msra.mxu0 0.0
        %7677 = vmatprep.subr.mxu0 0.0
        %7678 = vmatpush1.msra.mxu0 0.0
        %7679 = vmatprep.subr.mxu0 0.0
        %7680 = vmatpush1.msra.mxu0 0.0
        %7681 = vmatprep.subr.mxu0 0.0
        %7682 = vmatpush1.msra.mxu0 0.0
        %7683 = vmatprep.subr.mxu0 0.0
        %7684 = vmatpush1.msra.mxu0 0.0
        %7685 = vmatprep.subr.mxu0 0.0
        %7686 = vmatpush1.msra.mxu0 0.0
        %7687 = vmatprep.subr.mxu0 0.0
        %7688 = vmatpush1.msra.mxu0 0.0
        %7689 = vmatprep.subr.mxu0 0.0
        %7690 = vmatpush1.msra.mxu0 0.0
        %7691 = vmatprep.subr.mxu0 0.0
        %7692 = vmatpush1.msra.mxu0 0.0
        %7693 = vmatprep.subr.mxu0 0.0
        %7694 = vmatpush1.msra.mxu0 0.0
        %7695 = vmatprep.subr.mxu0 0.0
        %7696 = vmatpush1.msra.mxu0 0.0
        %7697 = vmatprep.subr.mxu0 0.0
        %7698 = vmatpush1.msra.mxu0 0.0
        %7699 = vmatprep.subr.mxu0 0.0
        %7700 = vmatpush1.msra.mxu0 0.0
        %7701 = vmatprep.subr.mxu0 0.0
        %7702 = vmatpush1.msra.mxu0 0.0
        %7703 = vmatprep.subr.mxu0 0.0
        %7704 = vmatpush1.msra.mxu0 0.0
        %7705 = vmatprep.subr.mxu0 0.0
        %7706 = vmatpush1.msra.mxu0 0.0
        %7707 = vmatprep.subr.mxu0 0.0
        %7708 = vmatpush1.msra.mxu0 0.0
        %7709 = vmatprep.subr.mxu0 0.0
        %7710 = vmatpush1.msra.mxu0 0.0
        %7711 = vmatprep.subr.mxu0 0.0
        %7712 = vmatpush1.msra.mxu0 0.0
        %7713 = vmatprep.subr.mxu0 0.0
        %7714 = vmatpush1.msra.mxu0 0.0
        %7715 = vmatprep.subr.mxu0 0.0
        %7716 = vmatpush1.msra.mxu0 0.0
        %7717 = vmatprep.subr.mxu0 0.0
        %7718 = vmatpush1.msra.mxu0 0.0
        %7719 = vmatprep.subr.mxu0 0.0
        %7720 = vmatpush1.msra.mxu0 0.0
        %7721 = vmatprep.subr.mxu0 0.0
        %7722 = vmatpush1.msra.mxu0 0.0
        %7723 = vmatprep.subr.mxu0 0.0
        %7724 = vmatpush1.msra.mxu0 0.0
        %7725 = vmatprep.subr.mxu0 0.0
        %7726 = vmatpush1.msra.mxu0 0.0
        %7727 = vmatprep.subr.mxu0 0.0
        %7728 = vmatpush1.msra.mxu0 0.0
        %7729 = vmatprep.subr.mxu0 0.0
        %7730 = vmatpush1.msra.mxu0 0.0
        %7731 = vmatprep.mubr.f32.mxu0 0.0
        %7732 = vmatmul.mubr.f32.gmra.mrb[0].mxu0 %v7662
        %v7733 = vpop.f32.mrb[0].mxu0
        %v7734 = vadd.f32 %v7631, %v7733
        %v7735 = vpop.f32.mrb[0].mxu0
        %7736 = vmatprep.mubr.f32.mxu0 0.0
        %7737 = vmatmul.mubr.f32.gmra.mrb[0].mxu0 %v7665
        %v7738 = vpop.f32.mrb[0].mxu0
        %v7739 = vadd.f32 %v7636, %v7738
        %v7740 = vpop.f32.mrb[0].mxu0
        %7741 = vdwg.mxu0
        %v7742 = vmul.f32 %v7734, %v7734
        %v7743 = vmul.f32 %v7739, %v7739
        %v7744 = vsel %vm559, %v7742, 0.0
        %7745 = vadd.xlane.f32.xlu0 %v7744
        %v7746 = vpop.xlane.xlu0 %7745
        %v7747 = vsel %vm559, %v7743, 0.0
        %7748 = vadd.xlane.f32.xlu0 %v7747
        %v7749 = vpop.xlane.xlu0 %7748
        %v7750 = vmax.f32 %v7746, 1e-24
        %v7751 = vmax.f32 %v7749, 1e-24
        %v7752 = vrsqrt.pop %v7750
        %v7753 = vrsqrt.pop %v7751
        %v7754 = vmul.f32 %v7734, %v7752
        %v7755 = vmul.f32 %v7739, %v7753
        %s7756 = scalar_lea.vmem %s6, 48
        %v7757 = vld [vmem:[%s7756] sm:$0xff]
        %v7758 = vld [vmem:[%s7756 + $0x8] sm:$0xff]
        %s7759 = scalar_lea.vmem %s7, 48
        %v7760 = vld [vmem:[%s7759] sm:$0xff]
        %v7761 = vld [vmem:[%s7759 + $0x8] sm:$0xff]
        %7763 = vset.pattern.permute.xlu0 0
        %7764 = vperm.xlu0 %7763, %v7760
        %v7765 = vpop.permute.xlu0 %7764
        %7768 = vset.pattern.permute.xlu0 0
        %7769 = vperm.xlu0 %7768, %v7761
        %v7770 = vpop.permute.xlu0 %7769
        %v7780 = vrot.slane %v5258, 7
        %v7781 = vsel %vm1505, %v7780, %v5257
        %v7782 = vrot.slane %v5259, 6
        %v7783 = vsel %vm1507, %v7782, %v7781
        %v7784 = vrot.slane %v5260, 5
        %v7785 = vsel %vm1509, %v7784, %v7783
        %v7786 = vrot.slane %v5261, 4
        %v7787 = vsel %vm1511, %v7786, %v7785
        %v7788 = vrot.slane %v5262, 3
        %v7789 = vsel %vm1513, %v7788, %v7787
        %v7790 = vrot.slane %v5263, 2
        %v7791 = vsel %vm1515, %v7790, %v7789
        %v7792 = vrot.slane %v5264, 1
        %v7793 = vsel %vm1517, %v7792, %v7791
        %v7796 = vsel %vm7271, %v7757, 0
        %v7799 = vsel %vm7271, %v7758, 0
        %7801 = vmatprep.subr.mxu0 0.0
        %7802 = vmatpush1.msra.mxu0 %v7793
        %7803 = vmatprep.subr.mxu0 0.0
        %7804 = vmatpush1.msra.mxu0 0.0
        %7805 = vmatprep.subr.mxu0 0.0
        %7806 = vmatpush1.msra.mxu0 0.0
        %7807 = vmatprep.subr.mxu0 0.0
        %7808 = vmatpush1.msra.mxu0 0.0
        %7809 = vmatprep.subr.mxu0 0.0
        %7810 = vmatpush1.msra.mxu0 0.0
        %7811 = vmatprep.subr.mxu0 0.0
        %7812 = vmatpush1.msra.mxu0 0.0
        %7813 = vmatprep.subr.mxu0 0.0
        %7814 = vmatpush1.msra.mxu0 0.0
        %7815 = vmatprep.subr.mxu0 0.0
        %7816 = vmatpush1.msra.mxu0 0.0
        %7817 = vmatprep.subr.mxu0 0.0
        %7818 = vmatpush1.msra.mxu0 0.0
        %7819 = vmatprep.subr.mxu0 0.0
        %7820 = vmatpush1.msra.mxu0 0.0
        %7821 = vmatprep.subr.mxu0 0.0
        %7822 = vmatpush1.msra.mxu0 0.0
        %7823 = vmatprep.subr.mxu0 0.0
        %7824 = vmatpush1.msra.mxu0 0.0
        %7825 = vmatprep.subr.mxu0 0.0
        %7826 = vmatpush1.msra.mxu0 0.0
        %7827 = vmatprep.subr.mxu0 0.0
        %7828 = vmatpush1.msra.mxu0 0.0
        %7829 = vmatprep.subr.mxu0 0.0
        %7830 = vmatpush1.msra.mxu0 0.0
        %7831 = vmatprep.subr.mxu0 0.0
        %7832 = vmatpush1.msra.mxu0 0.0
        %7833 = vmatprep.subr.mxu0 0.0
        %7834 = vmatpush1.msra.mxu0 0.0
        %7835 = vmatprep.subr.mxu0 0.0
        %7836 = vmatpush1.msra.mxu0 0.0
        %7837 = vmatprep.subr.mxu0 0.0
        %7838 = vmatpush1.msra.mxu0 0.0
        %7839 = vmatprep.subr.mxu0 0.0
        %7840 = vmatpush1.msra.mxu0 0.0
        %7841 = vmatprep.subr.mxu0 0.0
        %7842 = vmatpush1.msra.mxu0 0.0
        %7843 = vmatprep.subr.mxu0 0.0
        %7844 = vmatpush1.msra.mxu0 0.0
        %7845 = vmatprep.subr.mxu0 0.0
        %7846 = vmatpush1.msra.mxu0 0.0
        %7847 = vmatprep.subr.mxu0 0.0
        %7848 = vmatpush1.msra.mxu0 0.0
        %7849 = vmatprep.subr.mxu0 0.0
        %7850 = vmatpush1.msra.mxu0 0.0
        %7851 = vmatprep.subr.mxu0 0.0
        %7852 = vmatpush1.msra.mxu0 0.0
        %7853 = vmatprep.subr.mxu0 0.0
        %7854 = vmatpush1.msra.mxu0 0.0
        %7855 = vmatprep.subr.mxu0 0.0
        %7856 = vmatpush1.msra.mxu0 0.0
        %7857 = vmatprep.subr.mxu0 0.0
        %7858 = vmatpush1.msra.mxu0 0.0
        %7859 = vmatprep.subr.mxu0 0.0
        %7860 = vmatpush1.msra.mxu0 0.0
        %7861 = vmatprep.subr.mxu0 0.0
        %7862 = vmatpush1.msra.mxu0 0.0
        %7863 = vmatprep.subr.mxu0 0.0
        %7864 = vmatpush1.msra.mxu0 0.0
        %7865 = vmatprep.mubr.f32.mxu0 0.0
        %7866 = vmatmul.mubr.f32.gmra.mrb[0].mxu0 %v7796
        %v7867 = vpop.f32.mrb[0].mxu0
        %v7868 = vadd.f32 %v7765, %v7867
        %v7869 = vpop.f32.mrb[0].mxu0
        %7870 = vmatprep.mubr.f32.mxu0 0.0
        %7871 = vmatmul.mubr.f32.gmra.mrb[0].mxu0 %v7799
        %v7872 = vpop.f32.mrb[0].mxu0
        %v7873 = vadd.f32 %v7770, %v7872
        %v7874 = vpop.f32.mrb[0].mxu0
        %7875 = vdwg.mxu0
        %v7876 = vmul.f32 %v7868, %v7868
        %v7877 = vmul.f32 %v7873, %v7873
        %v7878 = vsel %vm559, %v7876, 0.0
        %7879 = vadd.xlane.f32.xlu0 %v7878
        %v7880 = vpop.xlane.xlu0 %7879
        %v7881 = vsel %vm559, %v7877, 0.0
        %7882 = vadd.xlane.f32.xlu0 %v7881
        %v7883 = vpop.xlane.xlu0 %7882
        %v7884 = vmax.f32 %v7880, 1e-24
        %v7885 = vmax.f32 %v7883, 1e-24
        %v7886 = vrsqrt.pop %v7884
        %v7887 = vrsqrt.pop %v7885
        %v7888 = vmul.f32 %v7868, %v7886
        %v7889 = vmul.f32 %v7873, %v7887
        %s7890 = scalar_lea.vmem %s6, 64
        %v7891 = vld [vmem:[%s7890] sm:$0xff]
        %v7892 = vld [vmem:[%s7890 + $0x8] sm:$0xff]
        %s7893 = scalar_lea.vmem %s7, 64
        %v7894 = vld [vmem:[%s7893] sm:$0xff]
        %v7895 = vld [vmem:[%s7893 + $0x8] sm:$0xff]
        %7897 = vset.pattern.permute.xlu0 0
        %7898 = vperm.xlu0 %7897, %v7894
        %v7899 = vpop.permute.xlu0 %7898
        %7902 = vset.pattern.permute.xlu0 0
        %7903 = vperm.xlu0 %7902, %v7895
        %v7904 = vpop.permute.xlu0 %7903
        %v7907 = vsel %vm7271, %v7891, 0
        %v7910 = vsel %vm7271, %v7892, 0
        %7912 = vmatprep.subr.mxu0 %v7112
        %7913 = vmatpush1.msra.mxu0 %v7111
        %7914 = vmatprep.subr.mxu0 0.0
        %7915 = vmatpush1.msra.mxu0 0.0
        %7916 = vmatprep.subr.mxu0 0.0
        %7917 = vmatpush1.msra.mxu0 0.0
        %7918 = vmatprep.subr.mxu0 0.0
        %7919 = vmatpush1.msra.mxu0 0.0
        %7920 = vmatprep.subr.mxu0 0.0
        %7921 = vmatpush1.msra.mxu0 0.0
        %7922 = vmatprep.subr.mxu0 0.0
        %7923 = vmatpush1.msra.mxu0 0.0
        %7924 = vmatprep.subr.mxu0 0.0
        %7925 = vmatpush1.msra.mxu0 0.0
        %7926 = vmatprep.subr.mxu0 0.0
        %7927 = vmatpush1.msra.mxu0 0.0
        %7928 = vmatprep.subr.mxu0 0.0
        %7929 = vmatpush1.msra.mxu0 0.0
        %7930 = vmatprep.subr.mxu0 0.0
        %7931 = vmatpush1.msra.mxu0 0.0
        %7932 = vmatprep.subr.mxu0 0.0
        %7933 = vmatpush1.msra.mxu0 0.0
        %7934 = vmatprep.subr.mxu0 0.0
        %7935 = vmatpush1.msra.mxu0 0.0
        %7936 = vmatprep.subr.mxu0 0.0
        %7937 = vmatpush1.msra.mxu0 0.0
        %7938 = vmatprep.subr.mxu0 0.0
        %7939 = vmatpush1.msra.mxu0 0.0
        %7940 = vmatprep.subr.mxu0 0.0
        %7941 = vmatpush1.msra.mxu0 0.0
        %7942 = vmatprep.subr.mxu0 0.0
        %7943 = vmatpush1.msra.mxu0 0.0
        %7944 = vmatprep.subr.mxu0 0.0
        %7945 = vmatpush1.msra.mxu0 0.0
        %7946 = vmatprep.subr.mxu0 0.0
        %7947 = vmatpush1.msra.mxu0 0.0
        %7948 = vmatprep.subr.mxu0 0.0
        %7949 = vmatpush1.msra.mxu0 0.0
        %7950 = vmatprep.subr.mxu0 0.0
        %7951 = vmatpush1.msra.mxu0 0.0
        %7952 = vmatprep.subr.mxu0 0.0
        %7953 = vmatpush1.msra.mxu0 0.0
        %7954 = vmatprep.subr.mxu0 0.0
        %7955 = vmatpush1.msra.mxu0 0.0
        %7956 = vmatprep.subr.mxu0 0.0
        %7957 = vmatpush1.msra.mxu0 0.0
        %7958 = vmatprep.subr.mxu0 0.0
        %7959 = vmatpush1.msra.mxu0 0.0
        %7960 = vmatprep.subr.mxu0 0.0
        %7961 = vmatpush1.msra.mxu0 0.0
        %7962 = vmatprep.subr.mxu0 0.0
        %7963 = vmatpush1.msra.mxu0 0.0
        %7964 = vmatprep.subr.mxu0 0.0
        %7965 = vmatpush1.msra.mxu0 0.0
        %7966 = vmatprep.subr.mxu0 0.0
        %7967 = vmatpush1.msra.mxu0 0.0
        %7968 = vmatprep.subr.mxu0 0.0
        %7969 = vmatpush1.msra.mxu0 0.0
        %7970 = vmatprep.subr.mxu0 0.0
        %7971 = vmatpush1.msra.mxu0 0.0
        %7972 = vmatprep.subr.mxu0 0.0
        %7973 = vmatpush1.msra.mxu0 0.0
        %7974 = vmatprep.subr.mxu0 0.0
        %7975 = vmatpush1.msra.mxu0 0.0
        %7976 = vmatprep.mubr.f32.mxu0 0.0
        %7977 = vmatmul.mubr.f32.gmra.mrb[0].mxu0 %v7907
        %v7978 = vpop.f32.mrb[0].mxu0
        %v7979 = vadd.f32 %v7899, %v7978
        %v7980 = vpop.f32.mrb[0].mxu0
        %v7981 = vadd.f32 %v7899, %v7980
        %7982 = vmatprep.mubr.f32.mxu0 0.0
        %7983 = vmatmul.mubr.f32.gmra.mrb[0].mxu0 %v7910
        %v7984 = vpop.f32.mrb[0].mxu0
        %v7985 = vadd.f32 %v7904, %v7984
        %v7986 = vpop.f32.mrb[0].mxu0
        %v7987 = vadd.f32 %v7904, %v7986
        %7988 = vdwg.mxu0
        %v7990 = vsel %vm559, %v7365, 0
        %v7993 = vsel %vm559, %v7620, 0
        %7995 = vmatprep.subr.mxu0 0.0
        %7996 = vmatpush1.xpose.msra.mxu0 %v7993
        %7997 = vmatprep.subr.mxu0 0.0
        %7998 = vmatpush1.xpose.msra.mxu0 0.0
        %7999 = vmatprep.subr.mxu0 0.0
        %8000 = vmatpush1.xpose.msra.mxu0 0.0
        %8001 = vmatprep.subr.mxu0 0.0
        %8002 = vmatpush1.xpose.msra.mxu0 0.0
        %8003 = vmatprep.subr.mxu0 0.0
        %8004 = vmatpush1.xpose.msra.mxu0 0.0
        %8005 = vmatprep.subr.mxu0 0.0
        %8006 = vmatpush1.xpose.msra.mxu0 0.0
        %8007 = vmatprep.subr.mxu0 0.0
        %8008 = vmatpush1.xpose.msra.mxu0 0.0
        %8009 = vmatprep.subr.mxu0 0.0
        %8010 = vmatpush1.xpose.msra.mxu0 0.0
        %8011 = vmatprep.subr.mxu0 0.0
        %8012 = vmatpush1.xpose.msra.mxu0 0.0
        %8013 = vmatprep.subr.mxu0 0.0
        %8014 = vmatpush1.xpose.msra.mxu0 0.0
        %8015 = vmatprep.subr.mxu0 0.0
        %8016 = vmatpush1.xpose.msra.mxu0 0.0
        %8017 = vmatprep.subr.mxu0 0.0
        %8018 = vmatpush1.xpose.msra.mxu0 0.0
        %8019 = vmatprep.subr.mxu0 0.0
        %8020 = vmatpush1.xpose.msra.mxu0 0.0
        %8021 = vmatprep.subr.mxu0 0.0
        %8022 = vmatpush1.xpose.msra.mxu0 0.0
        %8023 = vmatprep.subr.mxu0 0.0
        %8024 = vmatpush1.xpose.msra.mxu0 0.0
        %8025 = vmatprep.subr.mxu0 0.0
        %8026 = vmatpush1.xpose.msra.mxu0 0.0
        %8027 = vmatprep.subr.mxu0 0.0
        %8028 = vmatpush1.xpose.msra.mxu0 0.0
        %8029 = vmatprep.subr.mxu0 0.0
        %8030 = vmatpush1.xpose.msra.mxu0 0.0
        %8031 = vmatprep.subr.mxu0 0.0
        %8032 = vmatpush1.xpose.msra.mxu0 0.0
        %8033 = vmatprep.subr.mxu0 0.0
        %8034 = vmatpush1.xpose.msra.mxu0 0.0
        %8035 = vmatprep.subr.mxu0 0.0
        %8036 = vmatpush1.xpose.msra.mxu0 0.0
        %8037 = vmatprep.subr.mxu0 0.0
        %8038 = vmatpush1.xpose.msra.mxu0 0.0
        %8039 = vmatprep.subr.mxu0 0.0
        %8040 = vmatpush1.xpose.msra.mxu0 0.0
        %8041 = vmatprep.subr.mxu0 0.0
        %8042 = vmatpush1.xpose.msra.mxu0 0.0
        %8043 = vmatprep.subr.mxu0 0.0
        %8044 = vmatpush1.xpose.msra.mxu0 0.0
        %8045 = vmatprep.subr.mxu0 0.0
        %8046 = vmatpush1.xpose.msra.mxu0 0.0
        %8047 = vmatprep.subr.mxu0 0.0
        %8048 = vmatpush1.xpose.msra.mxu0 0.0
        %8049 = vmatprep.subr.mxu0 0.0
        %8050 = vmatpush1.xpose.msra.mxu0 0.0
        %8051 = vmatprep.subr.mxu0 0.0
        %8052 = vmatpush1.xpose.msra.mxu0 0.0
        %8053 = vmatprep.subr.mxu0 0.0
        %8054 = vmatpush1.xpose.msra.mxu0 0.0
        %8055 = vmatprep.subr.mxu0 0.0
        %8056 = vmatpush1.xpose.msra.mxu0 0.0
        %8057 = vmatprep.subr.mxu0 0.0
        %8058 = vmatpush1.xpose.msra.mxu0 0.0
        %8059 = vmatprep.mubr.f32.mxu0 0.0
        %8060 = vmatmul.mubr.f32.gmra.mrb[0].mxu0 %v7990
        %v8061 = vpop.f32.mrb[0].mxu0
        %v8062 = vadd.f32 0.0, %v8061
        %v8063 = vpop.f32.mrb[0].mxu0
        %8064 = vdwg.mxu0
        %v8065 = vsel %vm7271, %v8062, -inf
        %8066 = vmax.xlane.f32.xlu0 %v8065
        %v8067 = vpop.xlane.xlu0 %8066
        %v8068 = vsub.f32 %v8062, %v8067
        %v8069 = vmul.f32 %v8068, 1.442695
        %v8070 = vpow.pop %v8069
        %v8071 = vsel %vm7271, %v8070, 0.0
        %8072 = vadd.xlane.f32.xlu0 %v8071
        %v8073 = vpop.xlane.xlu0 %8072
        %v8074 = vrcp.pop %v8073
        %v8075 = vmul.f32 %v8070, %v8074
        %v8077 = vsel %vm559, %v7754, 0
        %v8080 = vsel %vm559, %v7888, 0
        %8082 = vmatprep.subr.mxu0 0.0
        %8083 = vmatpush1.xpose.msra.mxu0 %v8080
        %8084 = vmatprep.subr.mxu0 0.0
        %8085 = vmatpush1.xpose.msra.mxu0 0.0
        %8086 = vmatprep.subr.mxu0 0.0
        %8087 = vmatpush1.xpose.msra.mxu0 0.0
        %8088 = vmatprep.subr.mxu0 0.0
        %8089 = vmatpush1.xpose.msra.mxu0 0.0
        %8090 = vmatprep.subr.mxu0 0.0
        %8091 = vmatpush1.xpose.msra.mxu0 0.0
        %8092 = vmatprep.subr.mxu0 0.0
        %8093 = vmatpush1.xpose.msra.mxu0 0.0
        %8094 = vmatprep.subr.mxu0 0.0
        %8095 = vmatpush1.xpose.msra.mxu0 0.0
        %8096 = vmatprep.subr.mxu0 0.0
        %8097 = vmatpush1.xpose.msra.mxu0 0.0
        %8098 = vmatprep.subr.mxu0 0.0
        %8099 = vmatpush1.xpose.msra.mxu0 0.0
        %8100 = vmatprep.subr.mxu0 0.0
        %8101 = vmatpush1.xpose.msra.mxu0 0.0
        %8102 = vmatprep.subr.mxu0 0.0
        %8103 = vmatpush1.xpose.msra.mxu0 0.0
        %8104 = vmatprep.subr.mxu0 0.0
        %8105 = vmatpush1.xpose.msra.mxu0 0.0
        %8106 = vmatprep.subr.mxu0 0.0
        %8107 = vmatpush1.xpose.msra.mxu0 0.0
        %8108 = vmatprep.subr.mxu0 0.0
        %8109 = vmatpush1.xpose.msra.mxu0 0.0
        %8110 = vmatprep.subr.mxu0 0.0
        %8111 = vmatpush1.xpose.msra.mxu0 0.0
        %8112 = vmatprep.subr.mxu0 0.0
        %8113 = vmatpush1.xpose.msra.mxu0 0.0
        %8114 = vmatprep.subr.mxu0 0.0
        %8115 = vmatpush1.xpose.msra.mxu0 0.0
        %8116 = vmatprep.subr.mxu0 0.0
        %8117 = vmatpush1.xpose.msra.mxu0 0.0
        %8118 = vmatprep.subr.mxu0 0.0
        %8119 = vmatpush1.xpose.msra.mxu0 0.0
        %8120 = vmatprep.subr.mxu0 0.0
        %8121 = vmatpush1.xpose.msra.mxu0 0.0
        %8122 = vmatprep.subr.mxu0 0.0
        %8123 = vmatpush1.xpose.msra.mxu0 0.0
        %8124 = vmatprep.subr.mxu0 0.0
        %8125 = vmatpush1.xpose.msra.mxu0 0.0
        %8126 = vmatprep.subr.mxu0 0.0
        %8127 = vmatpush1.xpose.msra.mxu0 0.0
        %8128 = vmatprep.subr.mxu0 0.0
        %8129 = vmatpush1.xpose.msra.mxu0 0.0
        %8130 = vmatprep.subr.mxu0 0.0
        %8131 = vmatpush1.xpose.msra.mxu0 0.0
        %8132 = vmatprep.subr.mxu0 0.0
        %8133 = vmatpush1.xpose.msra.mxu0 0.0
        %8134 = vmatprep.subr.mxu0 0.0
        %8135 = vmatpush1.xpose.msra.mxu0 0.0
        %8136 = vmatprep.subr.mxu0 0.0
        %8137 = vmatpush1.xpose.msra.mxu0 0.0
        %8138 = vmatprep.subr.mxu0 0.0
        %8139 = vmatpush1.xpose.msra.mxu0 0.0
        %8140 = vmatprep.subr.mxu0 0.0
        %8141 = vmatpush1.xpose.msra.mxu0 0.0
        %8142 = vmatprep.subr.mxu0 0.0
        %8143 = vmatpush1.xpose.msra.mxu0 0.0
        %8144 = vmatprep.subr.mxu0 0.0
        %8145 = vmatpush1.xpose.msra.mxu0 0.0
        %8146 = vmatprep.mubr.f32.mxu0 0.0
        %8147 = vmatmul.mubr.f32.gmra.mrb[0].mxu0 %v8077
        %v8148 = vpop.f32.mrb[0].mxu0
        %v8149 = vadd.f32 0.0, %v8148
        %v8150 = vpop.f32.mrb[0].mxu0
        %8151 = vdwg.mxu0
        %v8152 = vsel %vm7271, %v8149, -inf
        %8153 = vmax.xlane.f32.xlu0 %v8152
        %v8154 = vpop.xlane.xlu0 %8153
        %v8155 = vsub.f32 %v8149, %v8154
        %v8156 = vmul.f32 %v8155, 1.442695
        %v8157 = vpow.pop %v8156
        %v8158 = vsel %vm7271, %v8157, 0.0
        %8159 = vadd.xlane.f32.xlu0 %v8158
        %v8160 = vpop.xlane.xlu0 %8159
        %v8161 = vrcp.pop %v8160
        %v8162 = vmul.f32 %v8157, %v8161
        %v8164 = vsel %vm7271, %v8075, 0
        %8166 = vmatprep.subr.mxu0 %v7981
        %8167 = vmatpush1.msra.mxu0 %v7979
        %8168 = vmatprep.subr.mxu0 0.0
        %8169 = vmatpush1.msra.mxu0 0.0
        %8170 = vmatprep.subr.mxu0 0.0
        %8171 = vmatpush1.msra.mxu0 0.0
        %8172 = vmatprep.subr.mxu0 0.0
        %8173 = vmatpush1.msra.mxu0 0.0
        %8174 = vmatprep.subr.mxu0 0.0
        %8175 = vmatpush1.msra.mxu0 0.0
        %8176 = vmatprep.subr.mxu0 0.0
        %8177 = vmatpush1.msra.mxu0 0.0
        %8178 = vmatprep.subr.mxu0 0.0
        %8179 = vmatpush1.msra.mxu0 0.0
        %8180 = vmatprep.subr.mxu0 0.0
        %8181 = vmatpush1.msra.mxu0 0.0
        %8182 = vmatprep.subr.mxu0 0.0
        %8183 = vmatpush1.msra.mxu0 0.0
        %8184 = vmatprep.subr.mxu0 0.0
        %8185 = vmatpush1.msra.mxu0 0.0
        %8186 = vmatprep.subr.mxu0 0.0
        %8187 = vmatpush1.msra.mxu0 0.0
        %8188 = vmatprep.subr.mxu0 0.0
        %8189 = vmatpush1.msra.mxu0 0.0
        %8190 = vmatprep.subr.mxu0 0.0
        %8191 = vmatpush1.msra.mxu0 0.0
        %8192 = vmatprep.subr.mxu0 0.0
        %8193 = vmatpush1.msra.mxu0 0.0
        %8194 = vmatprep.subr.mxu0 0.0
        %8195 = vmatpush1.msra.mxu0 0.0
        %8196 = vmatprep.subr.mxu0 0.0
        %8197 = vmatpush1.msra.mxu0 0.0
        %8198 = vmatprep.subr.mxu0 0.0
        %8199 = vmatpush1.msra.mxu0 0.0
        %8200 = vmatprep.subr.mxu0 0.0
        %8201 = vmatpush1.msra.mxu0 0.0
        %8202 = vmatprep.subr.mxu0 0.0
        %8203 = vmatpush1.msra.mxu0 0.0
        %8204 = vmatprep.subr.mxu0 0.0
        %8205 = vmatpush1.msra.mxu0 0.0
        %8206 = vmatprep.subr.mxu0 0.0
        %8207 = vmatpush1.msra.mxu0 0.0
        %8208 = vmatprep.subr.mxu0 0.0
        %8209 = vmatpush1.msra.mxu0 0.0
        %8210 = vmatprep.subr.mxu0 0.0
        %8211 = vmatpush1.msra.mxu0 0.0
        %8212 = vmatprep.subr.mxu0 0.0
        %8213 = vmatpush1.msra.mxu0 0.0
        %8214 = vmatprep.subr.mxu0 0.0
        %8215 = vmatpush1.msra.mxu0 0.0
        %8216 = vmatprep.subr.mxu0 0.0
        %8217 = vmatpush1.msra.mxu0 0.0
        %8218 = vmatprep.subr.mxu0 0.0
        %8219 = vmatpush1.msra.mxu0 0.0
        %8220 = vmatprep.subr.mxu0 0.0
        %8221 = vmatpush1.msra.mxu0 0.0
        %8222 = vmatprep.subr.mxu0 0.0
        %8223 = vmatpush1.msra.mxu0 0.0
        %8224 = vmatprep.subr.mxu0 0.0
        %8225 = vmatpush1.msra.mxu0 0.0
        %8226 = vmatprep.subr.mxu0 0.0
        %8227 = vmatpush1.msra.mxu0 0.0
        %8228 = vmatprep.subr.mxu0 0.0
        %8229 = vmatpush1.msra.mxu0 0.0
        %8230 = vmatprep.mubr.f32.mxu0 0.0
        %8231 = vmatmul.mubr.f32.gmra.mrb[0].mxu0 %v8164
        %v8232 = vpop.f32.mrb[0].mxu0
        %v8233 = vadd.f32 0.0, %v8232
        %v8234 = vpop.f32.mrb[0].mxu0
        %v8235 = vadd.f32 0.0, %v8234
        %8236 = vdwg.mxu0
        %8237 = vxpose.xlu0.b32.start [1/16] %v8162, 128
        %8238 = vxpose.xlu0.b32.cont [2/16] 0.0, 128
        %8239 = vxpose.xlu0.b32.cont [3/16] 0.0, 128
        %8240 = vxpose.xlu0.b32.cont [4/16] 0.0, 128
        %8241 = vxpose.xlu0.b32.cont [5/16] 0.0, 128
        %8242 = vxpose.xlu0.b32.cont [6/16] 0.0, 128
        %8243 = vxpose.xlu0.b32.cont [7/16] 0.0, 128
        %8244 = vxpose.xlu0.b32.cont [8/16] 0.0, 128
        %8245 = vxpose.xlu0.b32.cont [9/16] 0.0, 128
        %8246 = vxpose.xlu0.b32.cont [10/16] 0.0, 128
        %8247 = vxpose.xlu0.b32.cont [11/16] 0.0, 128
        %8248 = vxpose.xlu0.b32.cont [12/16] 0.0, 128
        %8249 = vxpose.xlu0.b32.cont [13/16] 0.0, 128
        %8250 = vxpose.xlu0.b32.cont [14/16] 0.0, 128
        %8251 = vxpose.xlu0.b32.cont [15/16] 0.0, 128
        %8252 = vxpose.xlu0.b32.end [16/16] 0.0, 128
        %v8253 = vpop.trf.xlu0
        %v8254 = vpop.trf.xlu0
        %v8255 = vpop.trf.xlu0
        %v8256 = vpop.trf.xlu0
        %v8257 = vpop.trf.xlu0
        %v8258 = vpop.trf.xlu0
        %v8259 = vpop.trf.xlu0
        %v8260 = vpop.trf.xlu0
        %v8261 = vpop.trf.xlu0
        %v8262 = vpop.trf.xlu0
        %v8263 = vpop.trf.xlu0
        %v8264 = vpop.trf.xlu0
        %v8265 = vpop.trf.xlu0
        %v8266 = vpop.trf.xlu0
        %v8267 = vpop.trf.xlu0
        %v8268 = vpop.trf.xlu0
        %v8270 = vsel %vm7271, %v8253, 0
        %8272 = vmatprep.subr.mxu0 %v8235
        %8273 = vmatpush1.msra.mxu0 %v8233
        %8274 = vmatprep.subr.mxu0 0.0
        %8275 = vmatpush1.msra.mxu0 0.0
        %8276 = vmatprep.subr.mxu0 0.0
        %8277 = vmatpush1.msra.mxu0 0.0
        %8278 = vmatprep.subr.mxu0 0.0
        %8279 = vmatpush1.msra.mxu0 0.0
        %8280 = vmatprep.subr.mxu0 0.0
        %8281 = vmatpush1.msra.mxu0 0.0
        %8282 = vmatprep.subr.mxu0 0.0
        %8283 = vmatpush1.msra.mxu0 0.0
        %8284 = vmatprep.subr.mxu0 0.0
        %8285 = vmatpush1.msra.mxu0 0.0
        %8286 = vmatprep.subr.mxu0 0.0
        %8287 = vmatpush1.msra.mxu0 0.0
        %8288 = vmatprep.subr.mxu0 0.0
        %8289 = vmatpush1.msra.mxu0 0.0
        %8290 = vmatprep.subr.mxu0 0.0
        %8291 = vmatpush1.msra.mxu0 0.0
        %8292 = vmatprep.subr.mxu0 0.0
        %8293 = vmatpush1.msra.mxu0 0.0
        %8294 = vmatprep.subr.mxu0 0.0
        %8295 = vmatpush1.msra.mxu0 0.0
        %8296 = vmatprep.subr.mxu0 0.0
        %8297 = vmatpush1.msra.mxu0 0.0
        %8298 = vmatprep.subr.mxu0 0.0
        %8299 = vmatpush1.msra.mxu0 0.0
        %8300 = vmatprep.subr.mxu0 0.0
        %8301 = vmatpush1.msra.mxu0 0.0
        %8302 = vmatprep.subr.mxu0 0.0
        %8303 = vmatpush1.msra.mxu0 0.0
        %8304 = vmatprep.subr.mxu0 0.0
        %8305 = vmatpush1.msra.mxu0 0.0
        %8306 = vmatprep.subr.mxu0 0.0
        %8307 = vmatpush1.msra.mxu0 0.0
        %8308 = vmatprep.subr.mxu0 0.0
        %8309 = vmatpush1.msra.mxu0 0.0
        %8310 = vmatprep.subr.mxu0 0.0
        %8311 = vmatpush1.msra.mxu0 0.0
        %8312 = vmatprep.subr.mxu0 0.0
        %8313 = vmatpush1.msra.mxu0 0.0
        %8314 = vmatprep.subr.mxu0 0.0
        %8315 = vmatpush1.msra.mxu0 0.0
        %8316 = vmatprep.subr.mxu0 0.0
        %8317 = vmatpush1.msra.mxu0 0.0
        %8318 = vmatprep.subr.mxu0 0.0
        %8319 = vmatpush1.msra.mxu0 0.0
        %8320 = vmatprep.subr.mxu0 0.0
        %8321 = vmatpush1.msra.mxu0 0.0
        %8322 = vmatprep.subr.mxu0 0.0
        %8323 = vmatpush1.msra.mxu0 0.0
        %8324 = vmatprep.subr.mxu0 0.0
        %8325 = vmatpush1.msra.mxu0 0.0
        %8326 = vmatprep.subr.mxu0 0.0
        %8327 = vmatpush1.msra.mxu0 0.0
        %8328 = vmatprep.subr.mxu0 0.0
        %8329 = vmatpush1.msra.mxu0 0.0
        %8330 = vmatprep.subr.mxu0 0.0
        %8331 = vmatpush1.msra.mxu0 0.0
        %8332 = vmatprep.subr.mxu0 0.0
        %8333 = vmatpush1.msra.mxu0 0.0
        %8334 = vmatprep.subr.mxu0 0.0
        %8335 = vmatpush1.msra.mxu0 0.0
        %8336 = vmatprep.mubr.f32.mxu0 0.0
        %8337 = vmatmul.mubr.f32.gmra.mrb[0].mxu0 %v8270
        %v8338 = vpop.f32.mrb[0].mxu0
        %v8339 = vadd.f32 0.0, %v8338
        %v8340 = vpop.f32.mrb[0].mxu0
        %v8341 = vadd.f32 0.0, %v8340
        %8342 = vdwg.mxu0
        %v8344 = vsel %vm559, %v7366, 0
        %v8347 = vsel %vm559, %v7621, 0
        %8349 = vmatprep.subr.mxu0 0.0
        %8350 = vmatpush1.xpose.msra.mxu0 %v8347
        %8351 = vmatprep.subr.mxu0 0.0
        %8352 = vmatpush1.xpose.msra.mxu0 0.0
        %8353 = vmatprep.subr.mxu0 0.0
        %8354 = vmatpush1.xpose.msra.mxu0 0.0
        %8355 = vmatprep.subr.mxu0 0.0
        %8356 = vmatpush1.xpose.msra.mxu0 0.0
        %8357 = vmatprep.subr.mxu0 0.0
        %8358 = vmatpush1.xpose.msra.mxu0 0.0
        %8359 = vmatprep.subr.mxu0 0.0
        %8360 = vmatpush1.xpose.msra.mxu0 0.0
        %8361 = vmatprep.subr.mxu0 0.0
        %8362 = vmatpush1.xpose.msra.mxu0 0.0
        %8363 = vmatprep.subr.mxu0 0.0
        %8364 = vmatpush1.xpose.msra.mxu0 0.0
        %8365 = vmatprep.subr.mxu0 0.0
        %8366 = vmatpush1.xpose.msra.mxu0 0.0
        %8367 = vmatprep.subr.mxu0 0.0
        %8368 = vmatpush1.xpose.msra.mxu0 0.0
        %8369 = vmatprep.subr.mxu0 0.0
        %8370 = vmatpush1.xpose.msra.mxu0 0.0
        %8371 = vmatprep.subr.mxu0 0.0
        %8372 = vmatpush1.xpose.msra.mxu0 0.0
        %8373 = vmatprep.subr.mxu0 0.0
        %8374 = vmatpush1.xpose.msra.mxu0 0.0
        %8375 = vmatprep.subr.mxu0 0.0
        %8376 = vmatpush1.xpose.msra.mxu0 0.0
        %8377 = vmatprep.subr.mxu0 0.0
        %8378 = vmatpush1.xpose.msra.mxu0 0.0
        %8379 = vmatprep.subr.mxu0 0.0
        %8380 = vmatpush1.xpose.msra.mxu0 0.0
        %8381 = vmatprep.subr.mxu0 0.0
        %8382 = vmatpush1.xpose.msra.mxu0 0.0
        %8383 = vmatprep.subr.mxu0 0.0
        %8384 = vmatpush1.xpose.msra.mxu0 0.0
        %8385 = vmatprep.subr.mxu0 0.0
        %8386 = vmatpush1.xpose.msra.mxu0 0.0
        %8387 = vmatprep.subr.mxu0 0.0
        %8388 = vmatpush1.xpose.msra.mxu0 0.0
        %8389 = vmatprep.subr.mxu0 0.0
        %8390 = vmatpush1.xpose.msra.mxu0 0.0
        %8391 = vmatprep.subr.mxu0 0.0
        %8392 = vmatpush1.xpose.msra.mxu0 0.0
        %8393 = vmatprep.subr.mxu0 0.0
        %8394 = vmatpush1.xpose.msra.mxu0 0.0
        %8395 = vmatprep.subr.mxu0 0.0
        %8396 = vmatpush1.xpose.msra.mxu0 0.0
        %8397 = vmatprep.subr.mxu0 0.0
        %8398 = vmatpush1.xpose.msra.mxu0 0.0
        %8399 = vmatprep.subr.mxu0 0.0
        %8400 = vmatpush1.xpose.msra.mxu0 0.0
        %8401 = vmatprep.subr.mxu0 0.0
        %8402 = vmatpush1.xpose.msra.mxu0 0.0
        %8403 = vmatprep.subr.mxu0 0.0
        %8404 = vmatpush1.xpose.msra.mxu0 0.0
        %8405 = vmatprep.subr.mxu0 0.0
        %8406 = vmatpush1.xpose.msra.mxu0 0.0
        %8407 = vmatprep.subr.mxu0 0.0
        %8408 = vmatpush1.xpose.msra.mxu0 0.0
        %8409 = vmatprep.subr.mxu0 0.0
        %8410 = vmatpush1.xpose.msra.mxu0 0.0
        %8411 = vmatprep.subr.mxu0 0.0
        %8412 = vmatpush1.xpose.msra.mxu0 0.0
        %8413 = vmatprep.mubr.f32.mxu0 0.0
        %8414 = vmatmul.mubr.f32.gmra.mrb[0].mxu0 %v8344
        %v8415 = vpop.f32.mrb[0].mxu0
        %v8416 = vadd.f32 0.0, %v8415
        %v8417 = vpop.f32.mrb[0].mxu0
        %8418 = vdwg.mxu0
        %v8419 = vsel %vm7271, %v8416, -inf
        %8420 = vmax.xlane.f32.xlu0 %v8419
        %v8421 = vpop.xlane.xlu0 %8420
        %v8422 = vsub.f32 %v8416, %v8421
        %v8423 = vmul.f32 %v8422, 1.442695
        %v8424 = vpow.pop %v8423
        %v8425 = vsel %vm7271, %v8424, 0.0
        %8426 = vadd.xlane.f32.xlu0 %v8425
        %v8427 = vpop.xlane.xlu0 %8426
        %v8428 = vrcp.pop %v8427
        %v8429 = vmul.f32 %v8424, %v8428
        %v8431 = vsel %vm559, %v7755, 0
        %v8434 = vsel %vm559, %v7889, 0
        %8436 = vmatprep.subr.mxu0 0.0
        %8437 = vmatpush1.xpose.msra.mxu0 %v8434
        %8438 = vmatprep.subr.mxu0 0.0
        %8439 = vmatpush1.xpose.msra.mxu0 0.0
        %8440 = vmatprep.subr.mxu0 0.0
        %8441 = vmatpush1.xpose.msra.mxu0 0.0
        %8442 = vmatprep.subr.mxu0 0.0
        %8443 = vmatpush1.xpose.msra.mxu0 0.0
        %8444 = vmatprep.subr.mxu0 0.0
        %8445 = vmatpush1.xpose.msra.mxu0 0.0
        %8446 = vmatprep.subr.mxu0 0.0
        %8447 = vmatpush1.xpose.msra.mxu0 0.0
        %8448 = vmatprep.subr.mxu0 0.0
        %8449 = vmatpush1.xpose.msra.mxu0 0.0
        %8450 = vmatprep.subr.mxu0 0.0
        %8451 = vmatpush1.xpose.msra.mxu0 0.0
        %8452 = vmatprep.subr.mxu0 0.0
        %8453 = vmatpush1.xpose.msra.mxu0 0.0
        %8454 = vmatprep.subr.mxu0 0.0
        %8455 = vmatpush1.xpose.msra.mxu0 0.0
        %8456 = vmatprep.subr.mxu0 0.0
        %8457 = vmatpush1.xpose.msra.mxu0 0.0
        %8458 = vmatprep.subr.mxu0 0.0
        %8459 = vmatpush1.xpose.msra.mxu0 0.0
        %8460 = vmatprep.subr.mxu0 0.0
        %8461 = vmatpush1.xpose.msra.mxu0 0.0
        %8462 = vmatprep.subr.mxu0 0.0
        %8463 = vmatpush1.xpose.msra.mxu0 0.0
        %8464 = vmatprep.subr.mxu0 0.0
        %8465 = vmatpush1.xpose.msra.mxu0 0.0
        %8466 = vmatprep.subr.mxu0 0.0
        %8467 = vmatpush1.xpose.msra.mxu0 0.0
        %8468 = vmatprep.subr.mxu0 0.0
        %8469 = vmatpush1.xpose.msra.mxu0 0.0
        %8470 = vmatprep.subr.mxu0 0.0
        %8471 = vmatpush1.xpose.msra.mxu0 0.0
        %8472 = vmatprep.subr.mxu0 0.0
        %8473 = vmatpush1.xpose.msra.mxu0 0.0
        %8474 = vmatprep.subr.mxu0 0.0
        %8475 = vmatpush1.xpose.msra.mxu0 0.0
        %8476 = vmatprep.subr.mxu0 0.0
        %8477 = vmatpush1.xpose.msra.mxu0 0.0
        %8478 = vmatprep.subr.mxu0 0.0
        %8479 = vmatpush1.xpose.msra.mxu0 0.0
        %8480 = vmatprep.subr.mxu0 0.0
        %8481 = vmatpush1.xpose.msra.mxu0 0.0
        %8482 = vmatprep.subr.mxu0 0.0
        %8483 = vmatpush1.xpose.msra.mxu0 0.0
        %8484 = vmatprep.subr.mxu0 0.0
        %8485 = vmatpush1.xpose.msra.mxu0 0.0
        %8486 = vmatprep.subr.mxu0 0.0
        %8487 = vmatpush1.xpose.msra.mxu0 0.0
        %8488 = vmatprep.subr.mxu0 0.0
        %8489 = vmatpush1.xpose.msra.mxu0 0.0
        %8490 = vmatprep.subr.mxu0 0.0
        %8491 = vmatpush1.xpose.msra.mxu0 0.0
        %8492 = vmatprep.subr.mxu0 0.0
        %8493 = vmatpush1.xpose.msra.mxu0 0.0
        %8494 = vmatprep.subr.mxu0 0.0
        %8495 = vmatpush1.xpose.msra.mxu0 0.0
        %8496 = vmatprep.subr.mxu0 0.0
        %8497 = vmatpush1.xpose.msra.mxu0 0.0
        %8498 = vmatprep.subr.mxu0 0.0
        %8499 = vmatpush1.xpose.msra.mxu0 0.0
        %8500 = vmatprep.mubr.f32.mxu0 0.0
        %8501 = vmatmul.mubr.f32.gmra.mrb[0].mxu0 %v8431
        %v8502 = vpop.f32.mrb[0].mxu0
        %v8503 = vadd.f32 0.0, %v8502
        %v8504 = vpop.f32.mrb[0].mxu0
        %8505 = vdwg.mxu0
        %v8506 = vsel %vm7271, %v8503, -inf
        %8507 = vmax.xlane.f32.xlu0 %v8506
        %v8508 = vpop.xlane.xlu0 %8507
        %v8509 = vsub.f32 %v8503, %v8508
        %v8510 = vmul.f32 %v8509, 1.442695
        %v8511 = vpow.pop %v8510
        %v8512 = vsel %vm7271, %v8511, 0.0
        %8513 = vadd.xlane.f32.xlu0 %v8512
        %v8514 = vpop.xlane.xlu0 %8513
        %v8515 = vrcp.pop %v8514
        %v8516 = vmul.f32 %v8511, %v8515
        %v8518 = vsel %vm7271, %v8429, 0
        %8520 = vmatprep.subr.mxu0 %v7987
        %8521 = vmatpush1.msra.mxu0 %v7985
        %8522 = vmatprep.subr.mxu0 0.0
        %8523 = vmatpush1.msra.mxu0 0.0
        %8524 = vmatprep.subr.mxu0 0.0
        %8525 = vmatpush1.msra.mxu0 0.0
        %8526 = vmatprep.subr.mxu0 0.0
        %8527 = vmatpush1.msra.mxu0 0.0
        %8528 = vmatprep.subr.mxu0 0.0
        %8529 = vmatpush1.msra.mxu0 0.0
        %8530 = vmatprep.subr.mxu0 0.0
        %8531 = vmatpush1.msra.mxu0 0.0
        %8532 = vmatprep.subr.mxu0 0.0
        %8533 = vmatpush1.msra.mxu0 0.0
        %8534 = vmatprep.subr.mxu0 0.0
        %8535 = vmatpush1.msra.mxu0 0.0
        %8536 = vmatprep.subr.mxu0 0.0
        %8537 = vmatpush1.msra.mxu0 0.0
        %8538 = vmatprep.subr.mxu0 0.0
        %8539 = vmatpush1.msra.mxu0 0.0
        %8540 = vmatprep.subr.mxu0 0.0
        %8541 = vmatpush1.msra.mxu0 0.0
        %8542 = vmatprep.subr.mxu0 0.0
        %8543 = vmatpush1.msra.mxu0 0.0
        %8544 = vmatprep.subr.mxu0 0.0
        %8545 = vmatpush1.msra.mxu0 0.0
        %8546 = vmatprep.subr.mxu0 0.0
        %8547 = vmatpush1.msra.mxu0 0.0
        %8548 = vmatprep.subr.mxu0 0.0
        %8549 = vmatpush1.msra.mxu0 0.0
        %8550 = vmatprep.subr.mxu0 0.0
        %8551 = vmatpush1.msra.mxu0 0.0
        %8552 = vmatprep.subr.mxu0 0.0
        %8553 = vmatpush1.msra.mxu0 0.0
        %8554 = vmatprep.subr.mxu0 0.0
        %8555 = vmatpush1.msra.mxu0 0.0
        %8556 = vmatprep.subr.mxu0 0.0
        %8557 = vmatpush1.msra.mxu0 0.0
        %8558 = vmatprep.subr.mxu0 0.0
        %8559 = vmatpush1.msra.mxu0 0.0
        %8560 = vmatprep.subr.mxu0 0.0
        %8561 = vmatpush1.msra.mxu0 0.0
        %8562 = vmatprep.subr.mxu0 0.0
        %8563 = vmatpush1.msra.mxu0 0.0
        %8564 = vmatprep.subr.mxu0 0.0
        %8565 = vmatpush1.msra.mxu0 0.0
        %8566 = vmatprep.subr.mxu0 0.0
        %8567 = vmatpush1.msra.mxu0 0.0
        %8568 = vmatprep.subr.mxu0 0.0
        %8569 = vmatpush1.msra.mxu0 0.0
        %8570 = vmatprep.subr.mxu0 0.0
        %8571 = vmatpush1.msra.mxu0 0.0
        %8572 = vmatprep.subr.mxu0 0.0
        %8573 = vmatpush1.msra.mxu0 0.0
        %8574 = vmatprep.subr.mxu0 0.0
        %8575 = vmatpush1.msra.mxu0 0.0
        %8576 = vmatprep.subr.mxu0 0.0
        %8577 = vmatpush1.msra.mxu0 0.0
        %8578 = vmatprep.subr.mxu0 0.0
        %8579 = vmatpush1.msra.mxu0 0.0
        %8580 = vmatprep.subr.mxu0 0.0
        %8581 = vmatpush1.msra.mxu0 0.0
        %8582 = vmatprep.subr.mxu0 0.0
        %8583 = vmatpush1.msra.mxu0 0.0
        %8584 = vmatprep.mubr.f32.mxu0 0.0
        %8585 = vmatmul.mubr.f32.gmra.mrb[0].mxu0 %v8518
        %v8586 = vpop.f32.mrb[0].mxu0
        %v8587 = vadd.f32 0.0, %v8586
        %v8588 = vpop.f32.mrb[0].mxu0
        %v8589 = vadd.f32 0.0, %v8588
        %8590 = vdwg.mxu0
        %8591 = vxpose.xlu0.b32.start [1/16] %v8516, 128
        %8592 = vxpose.xlu0.b32.cont [2/16] 0.0, 128
        %8593 = vxpose.xlu0.b32.cont [3/16] 0.0, 128
        %8594 = vxpose.xlu0.b32.cont [4/16] 0.0, 128
        %8595 = vxpose.xlu0.b32.cont [5/16] 0.0, 128
        %8596 = vxpose.xlu0.b32.cont [6/16] 0.0, 128
        %8597 = vxpose.xlu0.b32.cont [7/16] 0.0, 128
        %8598 = vxpose.xlu0.b32.cont [8/16] 0.0, 128
        %8599 = vxpose.xlu0.b32.cont [9/16] 0.0, 128
        %8600 = vxpose.xlu0.b32.cont [10/16] 0.0, 128
        %8601 = vxpose.xlu0.b32.cont [11/16] 0.0, 128
        %8602 = vxpose.xlu0.b32.cont [12/16] 0.0, 128
        %8603 = vxpose.xlu0.b32.cont [13/16] 0.0, 128
        %8604 = vxpose.xlu0.b32.cont [14/16] 0.0, 128
        %8605 = vxpose.xlu0.b32.cont [15/16] 0.0, 128
        %8606 = vxpose.xlu0.b32.end [16/16] 0.0, 128
        %v8607 = vpop.trf.xlu0
        %v8608 = vpop.trf.xlu0
        %v8609 = vpop.trf.xlu0
        %v8610 = vpop.trf.xlu0
        %v8611 = vpop.trf.xlu0
        %v8612 = vpop.trf.xlu0
        %v8613 = vpop.trf.xlu0
        %v8614 = vpop.trf.xlu0
        %v8615 = vpop.trf.xlu0
        %v8616 = vpop.trf.xlu0
        %v8617 = vpop.trf.xlu0
        %v8618 = vpop.trf.xlu0
        %v8619 = vpop.trf.xlu0
        %v8620 = vpop.trf.xlu0
        %v8621 = vpop.trf.xlu0
        %v8622 = vpop.trf.xlu0
        %v8624 = vsel %vm7271, %v8607, 0
        %8626 = vmatprep.subr.mxu0 %v8589
        %8627 = vmatpush1.msra.mxu0 %v8587
        %8628 = vmatprep.subr.mxu0 0.0
        %8629 = vmatpush1.msra.mxu0 0.0
        %8630 = vmatprep.subr.mxu0 0.0
        %8631 = vmatpush1.msra.mxu0 0.0
        %8632 = vmatprep.subr.mxu0 0.0
        %8633 = vmatpush1.msra.mxu0 0.0
        %8634 = vmatprep.subr.mxu0 0.0
        %8635 = vmatpush1.msra.mxu0 0.0
        %8636 = vmatprep.subr.mxu0 0.0
        %8637 = vmatpush1.msra.mxu0 0.0
        %8638 = vmatprep.subr.mxu0 0.0
        %8639 = vmatpush1.msra.mxu0 0.0
        %8640 = vmatprep.subr.mxu0 0.0
        %8641 = vmatpush1.msra.mxu0 0.0
        %8642 = vmatprep.subr.mxu0 0.0
        %8643 = vmatpush1.msra.mxu0 0.0
        %8644 = vmatprep.subr.mxu0 0.0
        %8645 = vmatpush1.msra.mxu0 0.0
        %8646 = vmatprep.subr.mxu0 0.0
        %8647 = vmatpush1.msra.mxu0 0.0
        %8648 = vmatprep.subr.mxu0 0.0
        %8649 = vmatpush1.msra.mxu0 0.0
        %8650 = vmatprep.subr.mxu0 0.0
        %8651 = vmatpush1.msra.mxu0 0.0
        %8652 = vmatprep.subr.mxu0 0.0
        %8653 = vmatpush1.msra.mxu0 0.0
        %8654 = vmatprep.subr.mxu0 0.0
        %8655 = vmatpush1.msra.mxu0 0.0
        %8656 = vmatprep.subr.mxu0 0.0
        %8657 = vmatpush1.msra.mxu0 0.0
        %8658 = vmatprep.subr.mxu0 0.0
        %8659 = vmatpush1.msra.mxu0 0.0
        %8660 = vmatprep.subr.mxu0 0.0
        %8661 = vmatpush1.msra.mxu0 0.0
        %8662 = vmatprep.subr.mxu0 0.0
        %8663 = vmatpush1.msra.mxu0 0.0
        %8664 = vmatprep.subr.mxu0 0.0
        %8665 = vmatpush1.msra.mxu0 0.0
        %8666 = vmatprep.subr.mxu0 0.0
        %8667 = vmatpush1.msra.mxu0 0.0
        %8668 = vmatprep.subr.mxu0 0.0
        %8669 = vmatpush1.msra.mxu0 0.0
        %8670 = vmatprep.subr.mxu0 0.0
        %8671 = vmatpush1.msra.mxu0 0.0
        %8672 = vmatprep.subr.mxu0 0.0
        %8673 = vmatpush1.msra.mxu0 0.0
        %8674 = vmatprep.subr.mxu0 0.0
        %8675 = vmatpush1.msra.mxu0 0.0
        %8676 = vmatprep.subr.mxu0 0.0
        %8677 = vmatpush1.msra.mxu0 0.0
        %8678 = vmatprep.subr.mxu0 0.0
        %8679 = vmatpush1.msra.mxu0 0.0
        %8680 = vmatprep.subr.mxu0 0.0
        %8681 = vmatpush1.msra.mxu0 0.0
        %8682 = vmatprep.subr.mxu0 0.0
        %8683 = vmatpush1.msra.mxu0 0.0
        %8684 = vmatprep.subr.mxu0 0.0
        %8685 = vmatpush1.msra.mxu0 0.0
        %8686 = vmatprep.subr.mxu0 0.0
        %8687 = vmatpush1.msra.mxu0 0.0
        %8688 = vmatprep.subr.mxu0 0.0
        %8689 = vmatpush1.msra.mxu0 0.0
        %8690 = vmatprep.mubr.f32.mxu0 0.0
        %8691 = vmatmul.mubr.f32.gmra.mrb[0].mxu0 %v8624
        %v8692 = vpop.f32.mrb[0].mxu0
        %v8693 = vadd.f32 0.0, %v8692
        %v8694 = vpop.f32.mrb[0].mxu0
        %v8695 = vadd.f32 0.0, %v8694
        %8696 = vdwg.mxu0
        %8698 = vset.pattern.permute.xlu0 0
        %8699 = vperm.xlu0 %8698, %v502
        %v8700 = vpop.permute.xlu0 %8699
        %v8703 = vsel %vm559, %v501, 0
        %8705 = vmatprep.subr.mxu0 %v8341
        %8706 = vmatpush1.msra.mxu0 %v8339
        %8707 = vmatprep.subr.mxu0 %v8695
        %8708 = vmatpush1.msra.mxu0 %v8693
        %8709 = vmatprep.subr.mxu0 0.0
        %8710 = vmatpush1.msra.mxu0 0.0
        %8711 = vmatprep.subr.mxu0 0.0
        %8712 = vmatpush1.msra.mxu0 0.0
        %8713 = vmatprep.subr.mxu0 0.0
        %8714 = vmatpush1.msra.mxu0 0.0
        %8715 = vmatprep.subr.mxu0 0.0
        %8716 = vmatpush1.msra.mxu0 0.0
        %8717 = vmatprep.subr.mxu0 0.0
        %8718 = vmatpush1.msra.mxu0 0.0
        %8719 = vmatprep.subr.mxu0 0.0
        %8720 = vmatpush1.msra.mxu0 0.0
        %8721 = vmatprep.subr.mxu0 0.0
        %8722 = vmatpush1.msra.mxu0 0.0
        %8723 = vmatprep.subr.mxu0 0.0
        %8724 = vmatpush1.msra.mxu0 0.0
        %8725 = vmatprep.subr.mxu0 0.0
        %8726 = vmatpush1.msra.mxu0 0.0
        %8727 = vmatprep.subr.mxu0 0.0
        %8728 = vmatpush1.msra.mxu0 0.0
        %8729 = vmatprep.subr.mxu0 0.0
        %8730 = vmatpush1.msra.mxu0 0.0
        %8731 = vmatprep.subr.mxu0 0.0
        %8732 = vmatpush1.msra.mxu0 0.0
        %8733 = vmatprep.subr.mxu0 0.0
        %8734 = vmatpush1.msra.mxu0 0.0
        %8735 = vmatprep.subr.mxu0 0.0
        %8736 = vmatpush1.msra.mxu0 0.0
        %8737 = vmatprep.subr.mxu0 0.0
        %8738 = vmatpush1.msra.mxu0 0.0
        %8739 = vmatprep.subr.mxu0 0.0
        %8740 = vmatpush1.msra.mxu0 0.0
        %8741 = vmatprep.subr.mxu0 0.0
        %8742 = vmatpush1.msra.mxu0 0.0
        %8743 = vmatprep.subr.mxu0 0.0
        %8744 = vmatpush1.msra.mxu0 0.0
        %8745 = vmatprep.subr.mxu0 0.0
        %8746 = vmatpush1.msra.mxu0 0.0
        %8747 = vmatprep.subr.mxu0 0.0
        %8748 = vmatpush1.msra.mxu0 0.0
        %8749 = vmatprep.subr.mxu0 0.0
        %8750 = vmatpush1.msra.mxu0 0.0
        %8751 = vmatprep.subr.mxu0 0.0
        %8752 = vmatpush1.msra.mxu0 0.0
        %8753 = vmatprep.subr.mxu0 0.0
        %8754 = vmatpush1.msra.mxu0 0.0
        %8755 = vmatprep.subr.mxu0 0.0
        %8756 = vmatpush1.msra.mxu0 0.0
        %8757 = vmatprep.subr.mxu0 0.0
        %8758 = vmatpush1.msra.mxu0 0.0
        %8759 = vmatprep.subr.mxu0 0.0
        %8760 = vmatpush1.msra.mxu0 0.0
        %8761 = vmatprep.subr.mxu0 0.0
        %8762 = vmatpush1.msra.mxu0 0.0
        %8763 = vmatprep.subr.mxu0 0.0
        %8764 = vmatpush1.msra.mxu0 0.0
        %8765 = vmatprep.subr.mxu0 0.0
        %8766 = vmatpush1.msra.mxu0 0.0
        %8767 = vmatprep.subr.mxu0 0.0
        %8768 = vmatpush1.msra.mxu0 0.0
        %8769 = vmatprep.mubr.f32.mxu0 0.0
        %8770 = vmatmul.mubr.f32.gmra.mrb[0].mxu0 %v8703
        %v8771 = vpop.f32.mrb[0].mxu0
        %v8772 = vadd.f32 %v8700, %v8771
        %v8773 = vpop.f32.mrb[0].mxu0
        %v8774 = vadd.f32 %v8700, %v8773
        %8775 = vdwg.mxu0
        %8776 = vst [vmem:[%s453] sm:$0xff] %v8772
        %8777 = vst [vmem:[%s453 + $0x8] sm:$0xff] %v8774
        %p8778 = scmp.lt.s32.totalorder %s27, 1
        %s8779 = scalar_select %p8778, %s27, 1
        %s8780 = smul.addr %s8779, 2
        %s8781 = smul.addr %s8780, 8
        %s8782 = scalar_lea.vmem %s10, %s8781
        // Predicated region
        $region73: #{dual_axis_forward.1} parent=59 // pred_check
          %p8783 = pneg %p270
        $region74: #{dual_axis_forward.1} parent=59 // pred_check_branch
          %8785 = sbr.rel (%p8783) target = $region76
        $region75: #{dual_axis_forward.1} parent=59 // pred_region
          _
        $region76: #{dual_axis_forward.1} parent=59 // pred_fallthru
          _
      $region60: #{dual_axis_forward.1} parent=5 // pred_fallthru
        _
      %p8786 = scmp.le.s32.totalorder 2, %s22
      // Predicated region
      $region77: #{dual_axis_forward.1} parent=5 // pred_check
        %p8787 = pneg %p8786
      $region78: #{dual_axis_forward.1} parent=5 // pred_check_branch
        %8789 = sbr.rel (%p8787) target = $region80
      $region79: #{dual_axis_forward.1} parent=5 // pred_region
        %s8790 = ssub.s32 %s22, 2
        // Predicated region
        $region81: #{dual_axis_forward.1} parent=79 // pred_check
          %p8791 = pneg %p276
        $region82: #{dual_axis_forward.1} parent=79 // pred_check_branch
          %8793 = sbr.rel (%p8791) target = $region84
        $region83: #{dual_axis_forward.1} parent=79 // pred_region
          %p8794 = scmp.lt.s32.totalorder %s28, 1
          %s8795 = scalar_select %p8794, %s28, 1
          %s8796 = smul.addr %s8795, 2
          %s8797 = smul.addr %s8796, 8
          %s8798 = scalar_lea.vmem %s10, %s8797
        $region84: #{dual_axis_forward.1} parent=79 // pred_fallthru
          _
      $region80: #{dual_axis_forward.1} parent=5 // pred_fallthru
        _
    $region6: #{dual_axis_forward.1} parent=1 // loop_footer
      %s26 = sadd.s32 1, %s22
    $region7: #{dual_axis_forward.1} parent=1 // loop_footer_branch
      %21 = sbr.rel target = $region3
    $region8: #{dual_axis_forward.1} parent=1 // loop_exit
      _
    %8799 = vsyncpa [#allocation4], 1
    %s8800 = scalar_lea.sflag [#allocation4], 1
    %8801 = vsyncpa %s8800, 1
    %8802 = vsyncpa [#allocation6], 1
    %s8803 = scalar_lea.sflag [#allocation6], 1
    %8804 = vsyncpa %s8803, 1

</llo_original>
